<compile_context>
chip_gen: v7x
topology: tpu7x:2x2x1
jax: 0.10.0
libtpu: 0.0.40
codegen_flags: <defaults>
</compile_context>

<pallas_src>
import jax
import jax.numpy as jnp
from jax import lax
from jax.experimental import pallas as pl
from jax.experimental.pallas import tpu as pltpu

_BT = 128  # batch tile == lane width


# --------------------------- fused Pallas kernel ---------------------------

def _fused_lenet_kernel(x_ref, c1w_ref, c1b_ref, c2w_ref, c2b_ref,
                        f1w_ref, f1b_ref, f2w_ref, f2b_ref, f3w_ref, f3b_ref,
                        out_ref,
                        a1_ref, p1_ref, a2_ref, p2_ref):
    B = x_ref.shape[-1]  # batch tile on lanes

    # ---- Conv1: 1->6, 5x5 VALID. x (28,28,B) -> a1 (6,24,24,B) (+bias).
    # ReLU is deferred to the pooling stage (relu commutes with max).
    @pl.loop(0, 6)
    def _conv1(co):
        def dy_body(dy, acc):
            band = x_ref[pl.ds(dy, 24), :, :]                 # (24, 28, B)
            for dx in range(5):
                w = c1w_ref[co * 25 + dy * 5 + dx]            # SMEM scalar
                acc = acc + band[:, dx:dx + 24, :] * w
            return acc
        acc = lax.fori_loop(0, 5, dy_body,
                            jnp.zeros((24, 24, B), jnp.float32))
        a1_ref[co] = acc + c1b_ref[co]

    # ---- Pool1 (2x2 / stride 2) + ReLU -> p1 (6,12,12,B)
    @pl.loop(0, 6)
    def _pool1(ci):
        m = jnp.maximum(
            jnp.maximum(a1_ref[ci, pl.ds(0, 12, stride=2), pl.ds(0, 12, stride=2), :],
                        a1_ref[ci, pl.ds(0, 12, stride=2), pl.ds(1, 12, stride=2), :]),
            jnp.maximum(a1_ref[ci, pl.ds(1, 12, stride=2), pl.ds(0, 12, stride=2), :],
                        a1_ref[ci, pl.ds(1, 12, stride=2), pl.ds(1, 12, stride=2), :]))
        p1_ref[ci] = jnp.maximum(m, 0.0)

    # ---- Conv2: 6->16, 3x3 VALID. p1 -> a2 (16,10,10,B) (+bias).
    @pl.loop(0, 16)
    def _conv2(co):
        acc = jnp.zeros((10, 10, B), jnp.float32)
        for ci in range(6):
            for dy in range(3):
                band = p1_ref[ci, dy:dy + 10, :, :]           # (10, 12, B)
                for dx in range(3):
                    w = c2w_ref[co * 54 + ci * 9 + dy * 3 + dx]
                    acc = acc + band[:, dx:dx + 10, :] * w
        a2_ref[co] = acc + c2b_ref[co]

    # ---- Pool2 + ReLU, scattered directly into the flattened (padded) FC
    # input p2 (640, B); row index = c*40 + h*8 + w (w < 5), pad rows stay 0.
    p2_ref[...] = jnp.zeros_like(p2_ref)

    @pl.loop(0, 16)
    def _pool2(co):
        m = jnp.maximum(
            jnp.maximum(a2_ref[co, pl.ds(0, 5, stride=2), pl.ds(0, 5, stride=2), :],
                        a2_ref[co, pl.ds(0, 5, stride=2), pl.ds(1, 5, stride=2), :]),
            jnp.maximum(a2_ref[co, pl.ds(1, 5, stride=2), pl.ds(0, 5, stride=2), :],
                        a2_ref[co, pl.ds(1, 5, stride=2), pl.ds(1, 5, stride=2), :]))
        m = jnp.maximum(m, 0.0)                               # (5, 5, B)
        for i in range(5):
            base = pl.multiple_of(co * 40 + i * 8, 8)         # 8-aligned rows
            p2_ref[pl.ds(base, 5), :] = m[i]

    # ---- MLP on the MXU, transposed layout (features on sublanes, batch on
    # lanes): h.T = W @ x.T + b[:, None] uses the torch weights as-is.
    flat = p2_ref[...]                                        # (640, B)
    h = jnp.dot(f1w_ref[...], flat,
                preferred_element_type=jnp.float32) + f1b_ref[...]
    h = jnp.maximum(h, 0.0)
    h = jnp.dot(f2w_ref[...], h,
                preferred_element_type=jnp.float32) + f2b_ref[...]
    h = jnp.maximum(h, 0.0)
    out_ref[...] = (jnp.dot(f3w_ref[...], h,
                            preferred_element_type=jnp.float32) + f3b_ref[...])


# ------------------------------ wrapper -----------------------------------

def net_forward(params, x_nchw):
    """x_nchw: (B, 1, 28, 28) float32 -> logits (B, 10)."""
    B = x_nchw.shape[0]
    Bp = ((B + _BT - 1) // _BT) * _BT

    # One small input transpose + pad (batch onto lanes); no per-forward
    # activation transposes happen anywhere else.
    xT = jnp.transpose(x_nchw[:, 0, :, :], (1, 2, 0))         # (28, 28, B)
    xT = jnp.pad(xT, ((0, 0), (0, 0), (0, Bp - B)))

    # One-time weight re-layouts (pure parameter shuffles, zero runtime cost
    # relative to activations).
    c1w = params['conv1_w'].astype(jnp.float32).reshape(-1)   # (150,) co,dy,dx
    c1b = params['conv1_b'].astype(jnp.float32)               # (6,)
    c2w = params['conv2_w'].astype(jnp.float32).reshape(-1)   # (864,) co,ci,dy,dx
    c2b = params['conv2_b'].astype(jnp.float32)               # (16,)

    w1 = params['fc1_w'].astype(jnp.float32)                  # (120, 400)
    # Permute/pad fc1 columns to the kernel's flat layout: col = c*40 + h*8 + w.
    w1p = jnp.zeros((120, 16, 5, 8), jnp.float32)
    w1p = w1p.at[:, :, :, :5].set(w1.reshape(120, 16, 5, 5))
    w1p = w1p.reshape(120, 640)
    b1 = params['fc1_b'].astype(jnp.float32)[:, None]          # (120, 1)
    w2 = params['fc2_w'].astype(jnp.float32)                   # (84, 120)
    b2 = params['fc2_b'].astype(jnp.float32)[:, None]          # (84, 1)
    w3 = params['fc3_w'].astype(jnp.float32)                   # (10, 84)
    b3 = params['fc3_b'].astype(jnp.float32)[:, None]          # (10, 1)

    flops_per_img = 2 * (24 * 24 * 25 * 6 + 10 * 10 * 54 * 16
                         + 640 * 120 + 120 * 84 + 84 * 10)
    weight_bytes = 4 * (150 + 6 + 864 + 16 + 120 * 640 + 120
                        + 84 * 120 + 84 + 10 * 84 + 10)
    cost = pl.CostEstimate(
        flops=int(flops_per_img * Bp),
        transcendentals=0,
        bytes_accessed=int(4 * Bp * (28 * 28 + 10) + weight_bytes))

    smem = pl.BlockSpec(memory_space=pltpu.MemorySpace.SMEM)

    outT = pl.pallas_call(
        _fused_lenet_kernel,
        out_shape=jax.ShapeDtypeStruct((10, Bp), jnp.float32),
        grid=(Bp // _BT,),
        in_specs=[
            pl.BlockSpec((28, 28, _BT), lambda i: (0, 0, i)),   # image tile
            smem, smem, smem, smem,                             # conv w/b scalars
            pl.BlockSpec((120, 640), lambda i: (0, 0)),         # fc1 (resident)
            pl.BlockSpec((120, 1), lambda i: (0, 0)),
            pl.BlockSpec((84, 120), lambda i: (0, 0)),          # fc2
            pl.BlockSpec((84, 1), lambda i: (0, 0)),
            pl.BlockSpec((10, 84), lambda i: (0, 0)),           # fc3
            pl.BlockSpec((10, 1), lambda i: (0, 0)),
        ],
        out_specs=pl.BlockSpec((10, _BT), lambda i: (0, i)),    # lane-dense out
        scratch_shapes=[
            pltpu.VMEM((6, 24, 24, _BT), jnp.float32),          # conv1 maps
            pltpu.VMEM((6, 12, 12, _BT), jnp.float32),          # pooled1
            pltpu.VMEM((16, 10, 10, _BT), jnp.float32),         # conv2 maps
            pltpu.VMEM((640, _BT), jnp.float32),                # flat FC input
        ],
        compiler_params=pltpu.CompilerParams(
            dimension_semantics=("parallel",)),
        cost_estimate=cost,
    )(xT, c1w, c1b, c2w, c2b, w1p, b1, w2, b2, w3, b3)

    return outT[:, :B].T                                        # (B, 10)


# ---------------- deterministic parameter init ----------------

def init_params(key):
    ks = jax.random.split(key, 10)

    def u(k, shape, fan_in):
        bound = 1.0 / jnp.sqrt(jnp.float32(fan_in))
        return jax.random.uniform(k, shape, jnp.float32, -bound, bound)

    return dict(
        conv1_w=u(ks[0], (6, 1, 5, 5), 1 * 5 * 5),
        conv1_b=u(ks[1], (6,), 1 * 5 * 5),
        conv2_w=u(ks[2], (16, 6, 3, 3), 6 * 3 * 3),
        conv2_b=u(ks[3], (16,), 6 * 3 * 3),
        fc1_w=u(ks[4], (120, 400), 400),
        fc1_b=u(ks[5], (120,), 400),
        fc2_w=u(ks[6], (84, 120), 120),
        fc2_b=u(ks[7], (84,), 120),
        fc3_w=u(ks[8], (10, 84), 84),
        fc3_b=u(ks[9], (10,), 84),
    )


# ---------------- pure-JAX reference for verification ----------------

def net_forward_ref(params, x):
    def conv(x, w, b):
        y = lax.conv_general_dilated(
            x, w, (1, 1), 'VALID',
            dimension_numbers=('NCHW', 'OIHW', 'NCHW'))
        return jax.nn.relu(y + b[None, :, None, None])

    def pool(x):
        return lax.reduce_window(x, -jnp.inf, lax.max,
                                 (1, 1, 2, 2), (1, 1, 2, 2), 'VALID')

    y = pool(conv(x, params['conv1_w'], params['conv1_b']))
    y = pool(conv(y, params['conv2_w'], params['conv2_b']))
    y = y.reshape(y.shape[0], -1)
    y = jax.nn.relu(y @ params['fc1_w'].T + params['fc1_b'])
    y = jax.nn.relu(y @ params['fc2_w'].T + params['fc2_b'])
    return y @ params['fc3_w'].T + params['fc3_b']


if __name__ == "__main__":
    key = jax.random.PRNGKey(0)
    kx, kp = jax.random.split(key)
    params = init_params(kp)
    # The module's view(-1, 16*5*5) requires 28x28 single-channel input.
    x = jax.random.normal(kx, (2, 1, 28, 28), jnp.float32)

    out = jax.jit(net_forward)(params, x)
    out = jax.block_until_ready(out)

    ref = net_forward_ref(params, x)
    assert out.shape == (2, 10), out.shape
    max_err = float(jnp.max(jnp.abs(out - ref)))
    assert jnp.allclose(out, ref, atol=2e-3, rtol=2e-3), max_err
    print("KERNEL_OK")
</pallas_src>

<mosaic_0001>
module attributes {stable_mosaic.version = 11 : i64} {
  func.func @_fused_lenet_kernel(%arg0: i32, %arg1: memref<28x28x128xf32, #tpu.memory_space<vmem>>, %arg2: memref<150xf32, #tpu.memory_space<smem>>, %arg3: memref<6xf32, #tpu.memory_space<smem>>, %arg4: memref<864xf32, #tpu.memory_space<smem>>, %arg5: memref<16xf32, #tpu.memory_space<smem>>, %arg6: memref<120x640xf32, #tpu.memory_space<vmem>>, %arg7: memref<120x1xf32, #tpu.memory_space<vmem>>, %arg8: memref<84x120xf32, #tpu.memory_space<vmem>>, %arg9: memref<84x1xf32, #tpu.memory_space<vmem>>, %arg10: memref<10x84xf32, #tpu.memory_space<vmem>>, %arg11: memref<10x1xf32, #tpu.memory_space<vmem>>, %arg12: memref<10x128xf32, #tpu.memory_space<vmem>>, %arg13: memref<6x24x24x128xf32, #tpu.memory_space<vmem>>, %arg14: memref<6x12x12x128xf32, #tpu.memory_space<vmem>>, %arg15: memref<16x10x10x128xf32, #tpu.memory_space<vmem>>, %arg16: memref<640x128xf32, #tpu.memory_space<vmem>>) attributes {dimension_semantics = [#tpu.dimension_semantics<parallel>], iteration_bounds = array<i64: 1>, scalar_prefetch = 0 : i64, scratch_operands = 4 : i64, tpu.core_type = #tpu.core_type<tc>, window_params = [{transform_indices = @transform_0, window_bounds = array<i64: 28, 28, 128>}, {transform_indices = @transform_1, window_bounds = array<i64: 150>}, {transform_indices = @transform_2, window_bounds = array<i64: 6>}, {transform_indices = @transform_3, window_bounds = array<i64: 864>}, {transform_indices = @transform_4, window_bounds = array<i64: 16>}, {pipeline_mode = #tpu.pipeline_mode<synchronous>, transform_indices = @transform_5, window_bounds = array<i64: 120, 640>}, {pipeline_mode = #tpu.pipeline_mode<synchronous>, transform_indices = @transform_6, window_bounds = array<i64: 120, 1>}, {pipeline_mode = #tpu.pipeline_mode<synchronous>, transform_indices = @transform_7, window_bounds = array<i64: 84, 120>}, {pipeline_mode = #tpu.pipeline_mode<synchronous>, transform_indices = @transform_8, window_bounds = array<i64: 84, 1>}, {pipeline_mode = #tpu.pipeline_mode<synchronous>, transform_indices = @transform_9, window_bounds = array<i64: 10, 84>}, {pipeline_mode = #tpu.pipeline_mode<synchronous>, transform_indices = @transform_10, window_bounds = array<i64: 10, 1>}, {transform_indices = @transform_11, window_bounds = array<i64: 10, 128>}]} {
    %c0_i32 = arith.constant 0 : i32
    %c6_i32 = arith.constant 6 : i32
    %0 = arith.addi %c0_i32, %c6_i32 : i32
    %c1_i32 = arith.constant 1 : i32
    scf.for %arg17 = %c0_i32 to %0 step %c1_i32  : i32 {
      %c1_i32_34 = arith.constant 1 : i32
      %27 = arith.muli %arg17, %c1_i32_34 : i32
      %c0_i32_35 = arith.constant 0 : i32
      %28 = arith.addi %c0_i32_35, %27 : i32
      %cst_36 = arith.constant 0.000000e+00 : f32
      %29 = vector.broadcast %cst_36 : f32 to vector<24x24x128xf32>
      %c0_i32_37 = arith.constant 0 : i32
      %c5_i32 = arith.constant 5 : i32
      %30 = arith.addi %c0_i32_37, %c5_i32 : i32
      %c1_i32_38 = arith.constant 1 : i32
      %31 = scf.for %arg18 = %c0_i32_37 to %30 step %c1_i32_38 iter_args(%arg19 = %29) -> (vector<24x24x128xf32>)  : i32 {
        %40 = arith.index_cast %arg18 : i32 to index
        %c0_43 = arith.constant 0 : index
        %c0_44 = arith.constant 0 : index
        %41 = vector.load %arg1[%40, %c0_43, %c0_44] : memref<28x28x128xf32, #tpu.memory_space<vmem>>, vector<24x28x128xf32>
        %c25_i32 = arith.constant 25 : i32
        %42 = arith.muli %28, %c25_i32 : i32
        %c5_i32_45 = arith.constant 5 : i32
        %43 = arith.muli %arg18, %c5_i32_45 : i32
        %44 = arith.addi %42, %43 : i32
        %c0_i32_46 = arith.constant 0 : i32
        %45 = arith.addi %44, %c0_i32_46 : i32
        %46 = arith.index_cast %45 : i32 to index
        %47 = memref.load %arg2[%46] : memref<150xf32, #tpu.memory_space<smem>>
        %48 = vector.extract_strided_slice %41 {offsets = [0, 0, 0], sizes = [24, 24, 128], strides = [1, 1, 1]} : vector<24x28x128xf32> to vector<24x24x128xf32>
        %49 = vector.broadcast %47 : f32 to vector<24x24x128xf32>
        %50 = arith.mulf %48, %49 : vector<24x24x128xf32>
        %51 = arith.addf %arg19, %50 : vector<24x24x128xf32>
        %c25_i32_47 = arith.constant 25 : i32
        %52 = arith.muli %28, %c25_i32_47 : i32
        %c5_i32_48 = arith.constant 5 : i32
        %53 = arith.muli %arg18, %c5_i32_48 : i32
        %54 = arith.addi %52, %53 : i32
        %c1_i32_49 = arith.constant 1 : i32
        %55 = arith.addi %54, %c1_i32_49 : i32
        %56 = arith.index_cast %55 : i32 to index
        %57 = memref.load %arg2[%56] : memref<150xf32, #tpu.memory_space<smem>>
        %58 = vector.extract_strided_slice %41 {offsets = [0, 1, 0], sizes = [24, 24, 128], strides = [1, 1, 1]} : vector<24x28x128xf32> to vector<24x24x128xf32>
        %59 = vector.broadcast %57 : f32 to vector<24x24x128xf32>
        %60 = arith.mulf %58, %59 : vector<24x24x128xf32>
        %61 = arith.addf %51, %60 : vector<24x24x128xf32>
        %c25_i32_50 = arith.constant 25 : i32
        %62 = arith.muli %28, %c25_i32_50 : i32
        %c5_i32_51 = arith.constant 5 : i32
        %63 = arith.muli %arg18, %c5_i32_51 : i32
        %64 = arith.addi %62, %63 : i32
        %c2_i32 = arith.constant 2 : i32
        %65 = arith.addi %64, %c2_i32 : i32
        %66 = arith.index_cast %65 : i32 to index
        %67 = memref.load %arg2[%66] : memref<150xf32, #tpu.memory_space<smem>>
        %68 = vector.extract_strided_slice %41 {offsets = [0, 2, 0], sizes = [24, 24, 128], strides = [1, 1, 1]} : vector<24x28x128xf32> to vector<24x24x128xf32>
        %69 = vector.broadcast %67 : f32 to vector<24x24x128xf32>
        %70 = arith.mulf %68, %69 : vector<24x24x128xf32>
        %71 = arith.addf %61, %70 : vector<24x24x128xf32>
        %c25_i32_52 = arith.constant 25 : i32
        %72 = arith.muli %28, %c25_i32_52 : i32
        %c5_i32_53 = arith.constant 5 : i32
        %73 = arith.muli %arg18, %c5_i32_53 : i32
        %74 = arith.addi %72, %73 : i32
        %c3_i32 = arith.constant 3 : i32
        %75 = arith.addi %74, %c3_i32 : i32
        %76 = arith.index_cast %75 : i32 to index
        %77 = memref.load %arg2[%76] : memref<150xf32, #tpu.memory_space<smem>>
        %78 = vector.extract_strided_slice %41 {offsets = [0, 3, 0], sizes = [24, 24, 128], strides = [1, 1, 1]} : vector<24x28x128xf32> to vector<24x24x128xf32>
        %79 = vector.broadcast %77 : f32 to vector<24x24x128xf32>
        %80 = arith.mulf %78, %79 : vector<24x24x128xf32>
        %81 = arith.addf %71, %80 : vector<24x24x128xf32>
        %c25_i32_54 = arith.constant 25 : i32
        %82 = arith.muli %28, %c25_i32_54 : i32
        %c5_i32_55 = arith.constant 5 : i32
        %83 = arith.muli %arg18, %c5_i32_55 : i32
        %84 = arith.addi %82, %83 : i32
        %c4_i32 = arith.constant 4 : i32
        %85 = arith.addi %84, %c4_i32 : i32
        %86 = arith.index_cast %85 : i32 to index
        %87 = memref.load %arg2[%86] : memref<150xf32, #tpu.memory_space<smem>>
        %88 = vector.extract_strided_slice %41 {offsets = [0, 4, 0], sizes = [24, 24, 128], strides = [1, 1, 1]} : vector<24x28x128xf32> to vector<24x24x128xf32>
        %89 = vector.broadcast %87 : f32 to vector<24x24x128xf32>
        %90 = arith.mulf %88, %89 : vector<24x24x128xf32>
        %91 = arith.addf %81, %90 : vector<24x24x128xf32>
        scf.yield %91 : vector<24x24x128xf32>
      }
      %c5_i32_39 = arith.constant 5 : i32
      %32 = arith.index_cast %28 : i32 to index
      %33 = memref.load %arg3[%32] : memref<6xf32, #tpu.memory_space<smem>>
      %34 = vector.broadcast %33 : f32 to vector<24x24x128xf32>
      %35 = arith.addf %31, %34 : vector<24x24x128xf32>
      %36 = arith.index_cast %28 : i32 to index
      %c0_40 = arith.constant 0 : index
      %c0_41 = arith.constant 0 : index
      %c0_42 = arith.constant 0 : index
      %37 = vector.load %arg13[%36, %c0_40, %c0_41, %c0_42] : memref<6x24x24x128xf32, #tpu.memory_space<vmem>>, vector<1x24x24x128xf32>
      %38 = vector.shape_cast %37 : vector<1x24x24x128xf32> to vector<24x24x128xf32>
      %39 = vector.shape_cast %35 : vector<24x24x128xf32> to vector<1x24x24x128xf32>
      tpu.vector_store %arg13[%36, %c0_40, %c0_41, %c0_42], %39 {strides = array<i32>} : memref<6x24x24x128xf32, #tpu.memory_space<vmem>>, vector<1x24x24x128xf32>,
    }
    %c6_i32_0 = arith.constant 6 : i32
    %c0_i32_1 = arith.constant 0 : i32
    %c6_i32_2 = arith.constant 6 : i32
    %1 = arith.addi %c0_i32_1, %c6_i32_2 : i32
    %c1_i32_3 = arith.constant 1 : i32
    scf.for %arg17 = %c0_i32_1 to %1 step %c1_i32_3  : i32 {
      %c1_i32_34 = arith.constant 1 : i32
      %27 = arith.muli %arg17, %c1_i32_34 : i32
      %c0_i32_35 = arith.constant 0 : i32
      %28 = arith.addi %c0_i32_35, %27 : i32
      %29 = arith.index_cast %28 : i32 to index
      %c0_36 = arith.constant 0 : index
      %c0_37 = arith.constant 0 : index
      %c0_38 = arith.constant 0 : index
      %30 = tpu.strided_load %arg13[%29, %c0_36, %c0_37, %c0_38] {strides = array<i32: 1, 2, 2, 1>} : memref<6x24x24x128xf32, #tpu.memory_space<vmem>>, vector<1x12x12x128xf32>
      %31 = vector.shape_cast %30 : vector<1x12x12x128xf32> to vector<12x12x128xf32>
      %32 = arith.index_cast %28 : i32 to index
      %c0_39 = arith.constant 0 : index
      %c1 = arith.constant 1 : index
      %c0_40 = arith.constant 0 : index
      %33 = tpu.strided_load %arg13[%32, %c0_39, %c1, %c0_40] {strides = array<i32: 1, 2, 2, 1>} : memref<6x24x24x128xf32, #tpu.memory_space<vmem>>, vector<1x12x12x128xf32>
      %34 = vector.shape_cast %33 : vector<1x12x12x128xf32> to vector<12x12x128xf32>
      %35 = arith.maximumf %31, %34 : vector<12x12x128xf32>
      %36 = arith.index_cast %28 : i32 to index
      %c1_41 = arith.constant 1 : index
      %c0_42 = arith.constant 0 : index
      %c0_43 = arith.constant 0 : index
      %37 = tpu.strided_load %arg13[%36, %c1_41, %c0_42, %c0_43] {strides = array<i32: 1, 2, 2, 1>} : memref<6x24x24x128xf32, #tpu.memory_space<vmem>>, vector<1x12x12x128xf32>
      %38 = vector.shape_cast %37 : vector<1x12x12x128xf32> to vector<12x12x128xf32>
      %39 = arith.index_cast %28 : i32 to index
      %c1_44 = arith.constant 1 : index
      %c1_45 = arith.constant 1 : index
      %c0_46 = arith.constant 0 : index
      %40 = tpu.strided_load %arg13[%39, %c1_44, %c1_45, %c0_46] {strides = array<i32: 1, 2, 2, 1>} : memref<6x24x24x128xf32, #tpu.memory_space<vmem>>, vector<1x12x12x128xf32>
      %41 = vector.shape_cast %40 : vector<1x12x12x128xf32> to vector<12x12x128xf32>
      %42 = arith.maximumf %38, %41 : vector<12x12x128xf32>
      %43 = arith.maximumf %35, %42 : vector<12x12x128xf32>
      %cst_47 = arith.constant 0.000000e+00 : f32
      %44 = vector.broadcast %cst_47 : f32 to vector<12x12x128xf32>
      %45 = arith.maximumf %43, %44 : vector<12x12x128xf32>
      %46 = arith.index_cast %28 : i32 to index
      %c0_48 = arith.constant 0 : index
      %c0_49 = arith.constant 0 : index
      %c0_50 = arith.constant 0 : index
      %47 = vector.load %arg14[%46, %c0_48, %c0_49, %c0_50] : memref<6x12x12x128xf32, #tpu.memory_space<vmem>>, vector<1x12x12x128xf32>
      %48 = vector.shape_cast %47 : vector<1x12x12x128xf32> to vector<12x12x128xf32>
      %49 = vector.shape_cast %45 : vector<12x12x128xf32> to vector<1x12x12x128xf32>
      tpu.vector_store %arg14[%46, %c0_48, %c0_49, %c0_50], %49 {strides = array<i32>} : memref<6x12x12x128xf32, #tpu.memory_space<vmem>>, vector<1x12x12x128xf32>,
    }
    %c6_i32_4 = arith.constant 6 : i32
    %c0_i32_5 = arith.constant 0 : i32
    %c16_i32 = arith.constant 16 : i32
    %2 = arith.addi %c0_i32_5, %c16_i32 : i32
    %c1_i32_6 = arith.constant 1 : i32
    scf.for %arg17 = %c0_i32_5 to %2 step %c1_i32_6  : i32 {
      %c1_i32_34 = arith.constant 1 : i32
      %27 = arith.muli %arg17, %c1_i32_34 : i32
      %c0_i32_35 = arith.constant 0 : i32
      %28 = arith.addi %c0_i32_35, %27 : i32
      %cst_36 = arith.constant 0.000000e+00 : f32
      %29 = vector.broadcast %cst_36 : f32 to vector<10x10x128xf32>
      %c0_37 = arith.constant 0 : index
      %c0_38 = arith.constant 0 : index
      %c0_39 = arith.constant 0 : index
      %c0_40 = arith.constant 0 : index
      %30 = vector.load %arg14[%c0_37, %c0_38, %c0_39, %c0_40] : memref<6x12x12x128xf32, #tpu.memory_space<vmem>>, vector<1x10x12x128xf32>
      %31 = vector.shape_cast %30 : vector<1x10x12x128xf32> to vector<10x12x128xf32>
      %c54_i32 = arith.constant 54 : i32
      %32 = arith.muli %28, %c54_i32 : i32
      %c0_i32_41 = arith.constant 0 : i32
      %33 = arith.addi %32, %c0_i32_41 : i32
      %c0_i32_42 = arith.constant 0 : i32
      %34 = arith.addi %33, %c0_i32_42 : i32
      %c0_i32_43 = arith.constant 0 : i32
      %35 = arith.addi %34, %c0_i32_43 : i32
      %36 = arith.index_cast %35 : i32 to index
      %37 = memref.load %arg4[%36] : memref<864xf32, #tpu.memory_space<smem>>
      %38 = vector.extract_strided_slice %31 {offsets = [0, 0, 0], sizes = [10, 10, 128], strides = [1, 1, 1]} : vector<10x12x128xf32> to vector<10x10x128xf32>
      %39 = vector.broadcast %37 : f32 to vector<10x10x128xf32>
      %40 = arith.mulf %38, %39 : vector<10x10x128xf32>
      %41 = arith.addf %29, %40 : vector<10x10x128xf32>
      %c54_i32_44 = arith.constant 54 : i32
      %42 = arith.muli %28, %c54_i32_44 : i32
      %c0_i32_45 = arith.constant 0 : i32
      %43 = arith.addi %42, %c0_i32_45 : i32
      %c0_i32_46 = arith.constant 0 : i32
      %44 = arith.addi %43, %c0_i32_46 : i32
      %c1_i32_47 = arith.constant 1 : i32
      %45 = arith.addi %44, %c1_i32_47 : i32
      %46 = arith.index_cast %45 : i32 to index
      %47 = memref.load %arg4[%46] : memref<864xf32, #tpu.memory_space<smem>>
      %48 = vector.extract_strided_slice %31 {offsets = [0, 1, 0], sizes = [10, 10, 128], strides = [1, 1, 1]} : vector<10x12x128xf32> to vector<10x10x128xf32>
      %49 = vector.broadcast %47 : f32 to vector<10x10x128xf32>
      %50 = arith.mulf %48, %49 : vector<10x10x128xf32>
      %51 = arith.addf %41, %50 : vector<10x10x128xf32>
      %c54_i32_48 = arith.constant 54 : i32
      %52 = arith.muli %28, %c54_i32_48 : i32
      %c0_i32_49 = arith.constant 0 : i32
      %53 = arith.addi %52, %c0_i32_49 : i32
      %c0_i32_50 = arith.constant 0 : i32
      %54 = arith.addi %53, %c0_i32_50 : i32
      %c2_i32 = arith.constant 2 : i32
      %55 = arith.addi %54, %c2_i32 : i32
      %56 = arith.index_cast %55 : i32 to index
      %57 = memref.load %arg4[%56] : memref<864xf32, #tpu.memory_space<smem>>
      %58 = vector.extract_strided_slice %31 {offsets = [0, 2, 0], sizes = [10, 10, 128], strides = [1, 1, 1]} : vector<10x12x128xf32> to vector<10x10x128xf32>
      %59 = vector.broadcast %57 : f32 to vector<10x10x128xf32>
      %60 = arith.mulf %58, %59 : vector<10x10x128xf32>
      %61 = arith.addf %51, %60 : vector<10x10x128xf32>
      %c0_51 = arith.constant 0 : index
      %c1 = arith.constant 1 : index
      %c0_52 = arith.constant 0 : index
      %c0_53 = arith.constant 0 : index
      %62 = vector.load %arg14[%c0_51, %c1, %c0_52, %c0_53] : memref<6x12x12x128xf32, #tpu.memory_space<vmem>>, vector<1x10x12x128xf32>
      %63 = vector.shape_cast %62 : vector<1x10x12x128xf32> to vector<10x12x128xf32>
      %c54_i32_54 = arith.constant 54 : i32
      %64 = arith.muli %28, %c54_i32_54 : i32
      %c0_i32_55 = arith.constant 0 : i32
      %65 = arith.addi %64, %c0_i32_55 : i32
      %c3_i32 = arith.constant 3 : i32
      %66 = arith.addi %65, %c3_i32 : i32
      %c0_i32_56 = arith.constant 0 : i32
      %67 = arith.addi %66, %c0_i32_56 : i32
      %68 = arith.index_cast %67 : i32 to index
      %69 = memref.load %arg4[%68] : memref<864xf32, #tpu.memory_space<smem>>
      %70 = vector.extract_strided_slice %63 {offsets = [0, 0, 0], sizes = [10, 10, 128], strides = [1, 1, 1]} : vector<10x12x128xf32> to vector<10x10x128xf32>
      %71 = vector.broadcast %69 : f32 to vector<10x10x128xf32>
      %72 = arith.mulf %70, %71 : vector<10x10x128xf32>
      %73 = arith.addf %61, %72 : vector<10x10x128xf32>
      %c54_i32_57 = arith.constant 54 : i32
      %74 = arith.muli %28, %c54_i32_57 : i32
      %c0_i32_58 = arith.constant 0 : i32
      %75 = arith.addi %74, %c0_i32_58 : i32
      %c3_i32_59 = arith.constant 3 : i32
      %76 = arith.addi %75, %c3_i32_59 : i32
      %c1_i32_60 = arith.constant 1 : i32
      %77 = arith.addi %76, %c1_i32_60 : i32
      %78 = arith.index_cast %77 : i32 to index
      %79 = memref.load %arg4[%78] : memref<864xf32, #tpu.memory_space<smem>>
      %80 = vector.extract_strided_slice %63 {offsets = [0, 1, 0], sizes = [10, 10, 128], strides = [1, 1, 1]} : vector<10x12x128xf32> to vector<10x10x128xf32>
      %81 = vector.broadcast %79 : f32 to vector<10x10x128xf32>
      %82 = arith.mulf %80, %81 : vector<10x10x128xf32>
      %83 = arith.addf %73, %82 : vector<10x10x128xf32>
      %c54_i32_61 = arith.constant 54 : i32
      %84 = arith.muli %28, %c54_i32_61 : i32
      %c0_i32_62 = arith.constant 0 : i32
      %85 = arith.addi %84, %c0_i32_62 : i32
      %c3_i32_63 = arith.constant 3 : i32
      %86 = arith.addi %85, %c3_i32_63 : i32
      %c2_i32_64 = arith.constant 2 : i32
      %87 = arith.addi %86, %c2_i32_64 : i32
      %88 = arith.index_cast %87 : i32 to index
      %89 = memref.load %arg4[%88] : memref<864xf32, #tpu.memory_space<smem>>
      %90 = vector.extract_strided_slice %63 {offsets = [0, 2, 0], sizes = [10, 10, 128], strides = [1, 1, 1]} : vector<10x12x128xf32> to vector<10x10x128xf32>
      %91 = vector.broadcast %89 : f32 to vector<10x10x128xf32>
      %92 = arith.mulf %90, %91 : vector<10x10x128xf32>
      %93 = arith.addf %83, %92 : vector<10x10x128xf32>
      %c0_65 = arith.constant 0 : index
      %c2 = arith.constant 2 : index
      %c0_66 = arith.constant 0 : index
      %c0_67 = arith.constant 0 : index
      %94 = vector.load %arg14[%c0_65, %c2, %c0_66, %c0_67] : memref<6x12x12x128xf32, #tpu.memory_space<vmem>>, vector<1x10x12x128xf32>
      %95 = vector.shape_cast %94 : vector<1x10x12x128xf32> to vector<10x12x128xf32>
      %c54_i32_68 = arith.constant 54 : i32
      %96 = arith.muli %28, %c54_i32_68 : i32
      %c0_i32_69 = arith.constant 0 : i32
      %97 = arith.addi %96, %c0_i32_69 : i32
      %c6_i32_70 = arith.constant 6 : i32
      %98 = arith.addi %97, %c6_i32_70 : i32
      %c0_i32_71 = arith.constant 0 : i32
      %99 = arith.addi %98, %c0_i32_71 : i32
      %100 = arith.index_cast %99 : i32 to index
      %101 = memref.load %arg4[%100] : memref<864xf32, #tpu.memory_space<smem>>
      %102 = vector.extract_strided_slice %95 {offsets = [0, 0, 0], sizes = [10, 10, 128], strides = [1, 1, 1]} : vector<10x12x128xf32> to vector<10x10x128xf32>
      %103 = vector.broadcast %101 : f32 to vector<10x10x128xf32>
      %104 = arith.mulf %102, %103 : vector<10x10x128xf32>
      %105 = arith.addf %93, %104 : vector<10x10x128xf32>
      %c54_i32_72 = arith.constant 54 : i32
      %106 = arith.muli %28, %c54_i32_72 : i32
      %c0_i32_73 = arith.constant 0 : i32
      %107 = arith.addi %106, %c0_i32_73 : i32
      %c6_i32_74 = arith.constant 6 : i32
      %108 = arith.addi %107, %c6_i32_74 : i32
      %c1_i32_75 = arith.constant 1 : i32
      %109 = arith.addi %108, %c1_i32_75 : i32
      %110 = arith.index_cast %109 : i32 to index
      %111 = memref.load %arg4[%110] : memref<864xf32, #tpu.memory_space<smem>>
      %112 = vector.extract_strided_slice %95 {offsets = [0, 1, 0], sizes = [10, 10, 128], strides = [1, 1, 1]} : vector<10x12x128xf32> to vector<10x10x128xf32>
      %113 = vector.broadcast %111 : f32 to vector<10x10x128xf32>
      %114 = arith.mulf %112, %113 : vector<10x10x128xf32>
      %115 = arith.addf %105, %114 : vector<10x10x128xf32>
      %c54_i32_76 = arith.constant 54 : i32
      %116 = arith.muli %28, %c54_i32_76 : i32
      %c0_i32_77 = arith.constant 0 : i32
      %117 = arith.addi %116, %c0_i32_77 : i32
      %c6_i32_78 = arith.constant 6 : i32
      %118 = arith.addi %117, %c6_i32_78 : i32
      %c2_i32_79 = arith.constant 2 : i32
      %119 = arith.addi %118, %c2_i32_79 : i32
      %120 = arith.index_cast %119 : i32 to index
      %121 = memref.load %arg4[%120] : memref<864xf32, #tpu.memory_space<smem>>
      %122 = vector.extract_strided_slice %95 {offsets = [0, 2, 0], sizes = [10, 10, 128], strides = [1, 1, 1]} : vector<10x12x128xf32> to vector<10x10x128xf32>
      %123 = vector.broadcast %121 : f32 to vector<10x10x128xf32>
      %124 = arith.mulf %122, %123 : vector<10x10x128xf32>
      %125 = arith.addf %115, %124 : vector<10x10x128xf32>
      %c1_80 = arith.constant 1 : index
      %c0_81 = arith.constant 0 : index
      %c0_82 = arith.constant 0 : index
      %c0_83 = arith.constant 0 : index
      %126 = vector.load %arg14[%c1_80, %c0_81, %c0_82, %c0_83] : memref<6x12x12x128xf32, #tpu.memory_space<vmem>>, vector<1x10x12x128xf32>
      %127 = vector.shape_cast %126 : vector<1x10x12x128xf32> to vector<10x12x128xf32>
      %c54_i32_84 = arith.constant 54 : i32
      %128 = arith.muli %28, %c54_i32_84 : i32
      %c9_i32 = arith.constant 9 : i32
      %129 = arith.addi %128, %c9_i32 : i32
      %c0_i32_85 = arith.constant 0 : i32
      %130 = arith.addi %129, %c0_i32_85 : i32
      %c0_i32_86 = arith.constant 0 : i32
      %131 = arith.addi %130, %c0_i32_86 : i32
      %132 = arith.index_cast %131 : i32 to index
      %133 = memref.load %arg4[%132] : memref<864xf32, #tpu.memory_space<smem>>
      %134 = vector.extract_strided_slice %127 {offsets = [0, 0, 0], sizes = [10, 10, 128], strides = [1, 1, 1]} : vector<10x12x128xf32> to vector<10x10x128xf32>
      %135 = vector.broadcast %133 : f32 to vector<10x10x128xf32>
      %136 = arith.mulf %134, %135 : vector<10x10x128xf32>
      %137 = arith.addf %125, %136 : vector<10x10x128xf32>
      %c54_i32_87 = arith.constant 54 : i32
      %138 = arith.muli %28, %c54_i32_87 : i32
      %c9_i32_88 = arith.constant 9 : i32
      %139 = arith.addi %138, %c9_i32_88 : i32
      %c0_i32_89 = arith.constant 0 : i32
      %140 = arith.addi %139, %c0_i32_89 : i32
      %c1_i32_90 = arith.constant 1 : i32
      %141 = arith.addi %140, %c1_i32_90 : i32
      %142 = arith.index_cast %141 : i32 to index
      %143 = memref.load %arg4[%142] : memref<864xf32, #tpu.memory_space<smem>>
      %144 = vector.extract_strided_slice %127 {offsets = [0, 1, 0], sizes = [10, 10, 128], strides = [1, 1, 1]} : vector<10x12x128xf32> to vector<10x10x128xf32>
      %145 = vector.broadcast %143 : f32 to vector<10x10x128xf32>
      %146 = arith.mulf %144, %145 : vector<10x10x128xf32>
      %147 = arith.addf %137, %146 : vector<10x10x128xf32>
      %c54_i32_91 = arith.constant 54 : i32
      %148 = arith.muli %28, %c54_i32_91 : i32
      %c9_i32_92 = arith.constant 9 : i32
      %149 = arith.addi %148, %c9_i32_92 : i32
      %c0_i32_93 = arith.constant 0 : i32
      %150 = arith.addi %149, %c0_i32_93 : i32
      %c2_i32_94 = arith.constant 2 : i32
      %151 = arith.addi %150, %c2_i32_94 : i32
      %152 = arith.index_cast %151 : i32 to index
      %153 = memref.load %arg4[%152] : memref<864xf32, #tpu.memory_space<smem>>
      %154 = vector.extract_strided_slice %127 {offsets = [0, 2, 0], sizes = [10, 10, 128], strides = [1, 1, 1]} : vector<10x12x128xf32> to vector<10x10x128xf32>
      %155 = vector.broadcast %153 : f32 to vector<10x10x128xf32>
      %156 = arith.mulf %154, %155 : vector<10x10x128xf32>
      %157 = arith.addf %147, %156 : vector<10x10x128xf32>
      %c1_95 = arith.constant 1 : index
      %c1_96 = arith.constant 1 : index
      %c0_97 = arith.constant 0 : index
      %c0_98 = arith.constant 0 : index
      %158 = vector.load %arg14[%c1_95, %c1_96, %c0_97, %c0_98] : memref<6x12x12x128xf32, #tpu.memory_space<vmem>>, vector<1x10x12x128xf32>
      %159 = vector.shape_cast %158 : vector<1x10x12x128xf32> to vector<10x12x128xf32>
      %c54_i32_99 = arith.constant 54 : i32
      %160 = arith.muli %28, %c54_i32_99 : i32
      %c9_i32_100 = arith.constant 9 : i32
      %161 = arith.addi %160, %c9_i32_100 : i32
      %c3_i32_101 = arith.constant 3 : i32
      %162 = arith.addi %161, %c3_i32_101 : i32
      %c0_i32_102 = arith.constant 0 : i32
      %163 = arith.addi %162, %c0_i32_102 : i32
      %164 = arith.index_cast %163 : i32 to index
      %165 = memref.load %arg4[%164] : memref<864xf32, #tpu.memory_space<smem>>
      %166 = vector.extract_strided_slice %159 {offsets = [0, 0, 0], sizes = [10, 10, 128], strides = [1, 1, 1]} : vector<10x12x128xf32> to vector<10x10x128xf32>
      %167 = vector.broadcast %165 : f32 to vector<10x10x128xf32>
      %168 = arith.mulf %166, %167 : vector<10x10x128xf32>
      %169 = arith.addf %157, %168 : vector<10x10x128xf32>
      %c54_i32_103 = arith.constant 54 : i32
      %170 = arith.muli %28, %c54_i32_103 : i32
      %c9_i32_104 = arith.constant 9 : i32
      %171 = arith.addi %170, %c9_i32_104 : i32
      %c3_i32_105 = arith.constant 3 : i32
      %172 = arith.addi %171, %c3_i32_105 : i32
      %c1_i32_106 = arith.constant 1 : i32
      %173 = arith.addi %172, %c1_i32_106 : i32
      %174 = arith.index_cast %173 : i32 to index
      %175 = memref.load %arg4[%174] : memref<864xf32, #tpu.memory_space<smem>>
      %176 = vector.extract_strided_slice %159 {offsets = [0, 1, 0], sizes = [10, 10, 128], strides = [1, 1, 1]} : vector<10x12x128xf32> to vector<10x10x128xf32>
      %177 = vector.broadcast %175 : f32 to vector<10x10x128xf32>
      %178 = arith.mulf %176, %177 : vector<10x10x128xf32>
      %179 = arith.addf %169, %178 : vector<10x10x128xf32>
      %c54_i32_107 = arith.constant 54 : i32
      %180 = arith.muli %28, %c54_i32_107 : i32
      %c9_i32_108 = arith.constant 9 : i32
      %181 = arith.addi %180, %c9_i32_108 : i32
      %c3_i32_109 = arith.constant 3 : i32
      %182 = arith.addi %181, %c3_i32_109 : i32
      %c2_i32_110 = arith.constant 2 : i32
      %183 = arith.addi %182, %c2_i32_110 : i32
      %184 = arith.index_cast %183 : i32 to index
      %185 = memref.load %arg4[%184] : memref<864xf32, #tpu.memory_space<smem>>
      %186 = vector.extract_strided_slice %159 {offsets = [0, 2, 0], sizes = [10, 10, 128], strides = [1, 1, 1]} : vector<10x12x128xf32> to vector<10x10x128xf32>
      %187 = vector.broadcast %185 : f32 to vector<10x10x128xf32>
      %188 = arith.mulf %186, %187 : vector<10x10x128xf32>
      %189 = arith.addf %179, %188 : vector<10x10x128xf32>
      %c1_111 = arith.constant 1 : index
      %c2_112 = arith.constant 2 : index
      %c0_113 = arith.constant 0 : index
      %c0_114 = arith.constant 0 : index
      %190 = vector.load %arg14[%c1_111, %c2_112, %c0_113, %c0_114] : memref<6x12x12x128xf32, #tpu.memory_space<vmem>>, vector<1x10x12x128xf32>
      %191 = vector.shape_cast %190 : vector<1x10x12x128xf32> to vector<10x12x128xf32>
      %c54_i32_115 = arith.constant 54 : i32
      %192 = arith.muli %28, %c54_i32_115 : i32
      %c9_i32_116 = arith.constant 9 : i32
      %193 = arith.addi %192, %c9_i32_116 : i32
      %c6_i32_117 = arith.constant 6 : i32
      %194 = arith.addi %193, %c6_i32_117 : i32
      %c0_i32_118 = arith.constant 0 : i32
      %195 = arith.addi %194, %c0_i32_118 : i32
      %196 = arith.index_cast %195 : i32 to index
      %197 = memref.load %arg4[%196] : memref<864xf32, #tpu.memory_space<smem>>
      %198 = vector.extract_strided_slice %191 {offsets = [0, 0, 0], sizes = [10, 10, 128], strides = [1, 1, 1]} : vector<10x12x128xf32> to vector<10x10x128xf32>
      %199 = vector.broadcast %197 : f32 to vector<10x10x128xf32>
      %200 = arith.mulf %198, %199 : vector<10x10x128xf32>
      %201 = arith.addf %189, %200 : vector<10x10x128xf32>
      %c54_i32_119 = arith.constant 54 : i32
      %202 = arith.muli %28, %c54_i32_119 : i32
      %c9_i32_120 = arith.constant 9 : i32
      %203 = arith.addi %202, %c9_i32_120 : i32
      %c6_i32_121 = arith.constant 6 : i32
      %204 = arith.addi %203, %c6_i32_121 : i32
      %c1_i32_122 = arith.constant 1 : i32
      %205 = arith.addi %204, %c1_i32_122 : i32
      %206 = arith.index_cast %205 : i32 to index
      %207 = memref.load %arg4[%206] : memref<864xf32, #tpu.memory_space<smem>>
      %208 = vector.extract_strided_slice %191 {offsets = [0, 1, 0], sizes = [10, 10, 128], strides = [1, 1, 1]} : vector<10x12x128xf32> to vector<10x10x128xf32>
      %209 = vector.broadcast %207 : f32 to vector<10x10x128xf32>
      %210 = arith.mulf %208, %209 : vector<10x10x128xf32>
      %211 = arith.addf %201, %210 : vector<10x10x128xf32>
      %c54_i32_123 = arith.constant 54 : i32
      %212 = arith.muli %28, %c54_i32_123 : i32
      %c9_i32_124 = arith.constant 9 : i32
      %213 = arith.addi %212, %c9_i32_124 : i32
      %c6_i32_125 = arith.constant 6 : i32
      %214 = arith.addi %213, %c6_i32_125 : i32
      %c2_i32_126 = arith.constant 2 : i32
      %215 = arith.addi %214, %c2_i32_126 : i32
      %216 = arith.index_cast %215 : i32 to index
      %217 = memref.load %arg4[%216] : memref<864xf32, #tpu.memory_space<smem>>
      %218 = vector.extract_strided_slice %191 {offsets = [0, 2, 0], sizes = [10, 10, 128], strides = [1, 1, 1]} : vector<10x12x128xf32> to vector<10x10x128xf32>
      %219 = vector.broadcast %217 : f32 to vector<10x10x128xf32>
      %220 = arith.mulf %218, %219 : vector<10x10x128xf32>
      %221 = arith.addf %211, %220 : vector<10x10x128xf32>
      %c2_127 = arith.constant 2 : index
      %c0_128 = arith.constant 0 : index
      %c0_129 = arith.constant 0 : index
      %c0_130 = arith.constant 0 : index
      %222 = vector.load %arg14[%c2_127, %c0_128, %c0_129, %c0_130] : memref<6x12x12x128xf32, #tpu.memory_space<vmem>>, vector<1x10x12x128xf32>
      %223 = vector.shape_cast %222 : vector<1x10x12x128xf32> to vector<10x12x128xf32>
      %c54_i32_131 = arith.constant 54 : i32
      %224 = arith.muli %28, %c54_i32_131 : i32
      %c18_i32 = arith.constant 18 : i32
      %225 = arith.addi %224, %c18_i32 : i32
      %c0_i32_132 = arith.constant 0 : i32
      %226 = arith.addi %225, %c0_i32_132 : i32
      %c0_i32_133 = arith.constant 0 : i32
      %227 = arith.addi %226, %c0_i32_133 : i32
      %228 = arith.index_cast %227 : i32 to index
      %229 = memref.load %arg4[%228] : memref<864xf32, #tpu.memory_space<smem>>
      %230 = vector.extract_strided_slice %223 {offsets = [0, 0, 0], sizes = [10, 10, 128], strides = [1, 1, 1]} : vector<10x12x128xf32> to vector<10x10x128xf32>
      %231 = vector.broadcast %229 : f32 to vector<10x10x128xf32>
      %232 = arith.mulf %230, %231 : vector<10x10x128xf32>
      %233 = arith.addf %221, %232 : vector<10x10x128xf32>
      %c54_i32_134 = arith.constant 54 : i32
      %234 = arith.muli %28, %c54_i32_134 : i32
      %c18_i32_135 = arith.constant 18 : i32
      %235 = arith.addi %234, %c18_i32_135 : i32
      %c0_i32_136 = arith.constant 0 : i32
      %236 = arith.addi %235, %c0_i32_136 : i32
      %c1_i32_137 = arith.constant 1 : i32
      %237 = arith.addi %236, %c1_i32_137 : i32
      %238 = arith.index_cast %237 : i32 to index
      %239 = memref.load %arg4[%238] : memref<864xf32, #tpu.memory_space<smem>>
      %240 = vector.extract_strided_slice %223 {offsets = [0, 1, 0], sizes = [10, 10, 128], strides = [1, 1, 1]} : vector<10x12x128xf32> to vector<10x10x128xf32>
      %241 = vector.broadcast %239 : f32 to vector<10x10x128xf32>
      %242 = arith.mulf %240, %241 : vector<10x10x128xf32>
      %243 = arith.addf %233, %242 : vector<10x10x128xf32>
      %c54_i32_138 = arith.constant 54 : i32
      %244 = arith.muli %28, %c54_i32_138 : i32
      %c18_i32_139 = arith.constant 18 : i32
      %245 = arith.addi %244, %c18_i32_139 : i32
      %c0_i32_140 = arith.constant 0 : i32
      %246 = arith.addi %245, %c0_i32_140 : i32
      %c2_i32_141 = arith.constant 2 : i32
      %247 = arith.addi %246, %c2_i32_141 : i32
      %248 = arith.index_cast %247 : i32 to index
      %249 = memref.load %arg4[%248] : memref<864xf32, #tpu.memory_space<smem>>
      %250 = vector.extract_strided_slice %223 {offsets = [0, 2, 0], sizes = [10, 10, 128], strides = [1, 1, 1]} : vector<10x12x128xf32> to vector<10x10x128xf32>
      %251 = vector.broadcast %249 : f32 to vector<10x10x128xf32>
      %252 = arith.mulf %250, %251 : vector<10x10x128xf32>
      %253 = arith.addf %243, %252 : vector<10x10x128xf32>
      %c2_142 = arith.constant 2 : index
      %c1_143 = arith.constant 1 : index
      %c0_144 = arith.constant 0 : index
      %c0_145 = arith.constant 0 : index
      %254 = vector.load %arg14[%c2_142, %c1_143, %c0_144, %c0_145] : memref<6x12x12x128xf32, #tpu.memory_space<vmem>>, vector<1x10x12x128xf32>
      %255 = vector.shape_cast %254 : vector<1x10x12x128xf32> to vector<10x12x128xf32>
      %c54_i32_146 = arith.constant 54 : i32
      %256 = arith.muli %28, %c54_i32_146 : i32
      %c18_i32_147 = arith.constant 18 : i32
      %257 = arith.addi %256, %c18_i32_147 : i32
      %c3_i32_148 = arith.constant 3 : i32
      %258 = arith.addi %257, %c3_i32_148 : i32
      %c0_i32_149 = arith.constant 0 : i32
      %259 = arith.addi %258, %c0_i32_149 : i32
      %260 = arith.index_cast %259 : i32 to index
      %261 = memref.load %arg4[%260] : memref<864xf32, #tpu.memory_space<smem>>
      %262 = vector.extract_strided_slice %255 {offsets = [0, 0, 0], sizes = [10, 10, 128], strides = [1, 1, 1]} : vector<10x12x128xf32> to vector<10x10x128xf32>
      %263 = vector.broadcast %261 : f32 to vector<10x10x128xf32>
      %264 = arith.mulf %262, %263 : vector<10x10x128xf32>
      %265 = arith.addf %253, %264 : vector<10x10x128xf32>
      %c54_i32_150 = arith.constant 54 : i32
      %266 = arith.muli %28, %c54_i32_150 : i32
      %c18_i32_151 = arith.constant 18 : i32
      %267 = arith.addi %266, %c18_i32_151 : i32
      %c3_i32_152 = arith.constant 3 : i32
      %268 = arith.addi %267, %c3_i32_152 : i32
      %c1_i32_153 = arith.constant 1 : i32
      %269 = arith.addi %268, %c1_i32_153 : i32
      %270 = arith.index_cast %269 : i32 to index
      %271 = memref.load %arg4[%270] : memref<864xf32, #tpu.memory_space<smem>>
      %272 = vector.extract_strided_slice %255 {offsets = [0, 1, 0], sizes = [10, 10, 128], strides = [1, 1, 1]} : vector<10x12x128xf32> to vector<10x10x128xf32>
      %273 = vector.broadcast %271 : f32 to vector<10x10x128xf32>
      %274 = arith.mulf %272, %273 : vector<10x10x128xf32>
      %275 = arith.addf %265, %274 : vector<10x10x128xf32>
      %c54_i32_154 = arith.constant 54 : i32
      %276 = arith.muli %28, %c54_i32_154 : i32
      %c18_i32_155 = arith.constant 18 : i32
      %277 = arith.addi %276, %c18_i32_155 : i32
      %c3_i32_156 = arith.constant 3 : i32
      %278 = arith.addi %277, %c3_i32_156 : i32
      %c2_i32_157 = arith.constant 2 : i32
      %279 = arith.addi %278, %c2_i32_157 : i32
      %280 = arith.index_cast %279 : i32 to index
      %281 = memref.load %arg4[%280] : memref<864xf32, #tpu.memory_space<smem>>
      %282 = vector.extract_strided_slice %255 {offsets = [0, 2, 0], sizes = [10, 10, 128], strides = [1, 1, 1]} : vector<10x12x128xf32> to vector<10x10x128xf32>
      %283 = vector.broadcast %281 : f32 to vector<10x10x128xf32>
      %284 = arith.mulf %282, %283 : vector<10x10x128xf32>
      %285 = arith.addf %275, %284 : vector<10x10x128xf32>
      %c2_158 = arith.constant 2 : index
      %c2_159 = arith.constant 2 : index
      %c0_160 = arith.constant 0 : index
      %c0_161 = arith.constant 0 : index
      %286 = vector.load %arg14[%c2_158, %c2_159, %c0_160, %c0_161] : memref<6x12x12x128xf32, #tpu.memory_space<vmem>>, vector<1x10x12x128xf32>
      %287 = vector.shape_cast %286 : vector<1x10x12x128xf32> to vector<10x12x128xf32>
      %c54_i32_162 = arith.constant 54 : i32
      %288 = arith.muli %28, %c54_i32_162 : i32
      %c18_i32_163 = arith.constant 18 : i32
      %289 = arith.addi %288, %c18_i32_163 : i32
      %c6_i32_164 = arith.constant 6 : i32
      %290 = arith.addi %289, %c6_i32_164 : i32
      %c0_i32_165 = arith.constant 0 : i32
      %291 = arith.addi %290, %c0_i32_165 : i32
      %292 = arith.index_cast %291 : i32 to index
      %293 = memref.load %arg4[%292] : memref<864xf32, #tpu.memory_space<smem>>
      %294 = vector.extract_strided_slice %287 {offsets = [0, 0, 0], sizes = [10, 10, 128], strides = [1, 1, 1]} : vector<10x12x128xf32> to vector<10x10x128xf32>
      %295 = vector.broadcast %293 : f32 to vector<10x10x128xf32>
      %296 = arith.mulf %294, %295 : vector<10x10x128xf32>
      %297 = arith.addf %285, %296 : vector<10x10x128xf32>
      %c54_i32_166 = arith.constant 54 : i32
      %298 = arith.muli %28, %c54_i32_166 : i32
      %c18_i32_167 = arith.constant 18 : i32
      %299 = arith.addi %298, %c18_i32_167 : i32
      %c6_i32_168 = arith.constant 6 : i32
      %300 = arith.addi %299, %c6_i32_168 : i32
      %c1_i32_169 = arith.constant 1 : i32
      %301 = arith.addi %300, %c1_i32_169 : i32
      %302 = arith.index_cast %301 : i32 to index
      %303 = memref.load %arg4[%302] : memref<864xf32, #tpu.memory_space<smem>>
      %304 = vector.extract_strided_slice %287 {offsets = [0, 1, 0], sizes = [10, 10, 128], strides = [1, 1, 1]} : vector<10x12x128xf32> to vector<10x10x128xf32>
      %305 = vector.broadcast %303 : f32 to vector<10x10x128xf32>
      %306 = arith.mulf %304, %305 : vector<10x10x128xf32>
      %307 = arith.addf %297, %306 : vector<10x10x128xf32>
      %c54_i32_170 = arith.constant 54 : i32
      %308 = arith.muli %28, %c54_i32_170 : i32
      %c18_i32_171 = arith.constant 18 : i32
      %309 = arith.addi %308, %c18_i32_171 : i32
      %c6_i32_172 = arith.constant 6 : i32
      %310 = arith.addi %309, %c6_i32_172 : i32
      %c2_i32_173 = arith.constant 2 : i32
      %311 = arith.addi %310, %c2_i32_173 : i32
      %312 = arith.index_cast %311 : i32 to index
      %313 = memref.load %arg4[%312] : memref<864xf32, #tpu.memory_space<smem>>
      %314 = vector.extract_strided_slice %287 {offsets = [0, 2, 0], sizes = [10, 10, 128], strides = [1, 1, 1]} : vector<10x12x128xf32> to vector<10x10x128xf32>
      %315 = vector.broadcast %313 : f32 to vector<10x10x128xf32>
      %316 = arith.mulf %314, %315 : vector<10x10x128xf32>
      %317 = arith.addf %307, %316 : vector<10x10x128xf32>
      %c3 = arith.constant 3 : index
      %c0_174 = arith.constant 0 : index
      %c0_175 = arith.constant 0 : index
      %c0_176 = arith.constant 0 : index
      %318 = vector.load %arg14[%c3, %c0_174, %c0_175, %c0_176] : memref<6x12x12x128xf32, #tpu.memory_space<vmem>>, vector<1x10x12x128xf32>
      %319 = vector.shape_cast %318 : vector<1x10x12x128xf32> to vector<10x12x128xf32>
      %c54_i32_177 = arith.constant 54 : i32
      %320 = arith.muli %28, %c54_i32_177 : i32
      %c27_i32 = arith.constant 27 : i32
      %321 = arith.addi %320, %c27_i32 : i32
      %c0_i32_178 = arith.constant 0 : i32
      %322 = arith.addi %321, %c0_i32_178 : i32
      %c0_i32_179 = arith.constant 0 : i32
      %323 = arith.addi %322, %c0_i32_179 : i32
      %324 = arith.index_cast %323 : i32 to index
      %325 = memref.load %arg4[%324] : memref<864xf32, #tpu.memory_space<smem>>
      %326 = vector.extract_strided_slice %319 {offsets = [0, 0, 0], sizes = [10, 10, 128], strides = [1, 1, 1]} : vector<10x12x128xf32> to vector<10x10x128xf32>
      %327 = vector.broadcast %325 : f32 to vector<10x10x128xf32>
      %328 = arith.mulf %326, %327 : vector<10x10x128xf32>
      %329 = arith.addf %317, %328 : vector<10x10x128xf32>
      %c54_i32_180 = arith.constant 54 : i32
      %330 = arith.muli %28, %c54_i32_180 : i32
      %c27_i32_181 = arith.constant 27 : i32
      %331 = arith.addi %330, %c27_i32_181 : i32
      %c0_i32_182 = arith.constant 0 : i32
      %332 = arith.addi %331, %c0_i32_182 : i32
      %c1_i32_183 = arith.constant 1 : i32
      %333 = arith.addi %332, %c1_i32_183 : i32
      %334 = arith.index_cast %333 : i32 to index
      %335 = memref.load %arg4[%334] : memref<864xf32, #tpu.memory_space<smem>>
      %336 = vector.extract_strided_slice %319 {offsets = [0, 1, 0], sizes = [10, 10, 128], strides = [1, 1, 1]} : vector<10x12x128xf32> to vector<10x10x128xf32>
      %337 = vector.broadcast %335 : f32 to vector<10x10x128xf32>
      %338 = arith.mulf %336, %337 : vector<10x10x128xf32>
      %339 = arith.addf %329, %338 : vector<10x10x128xf32>
      %c54_i32_184 = arith.constant 54 : i32
      %340 = arith.muli %28, %c54_i32_184 : i32
      %c27_i32_185 = arith.constant 27 : i32
      %341 = arith.addi %340, %c27_i32_185 : i32
      %c0_i32_186 = arith.constant 0 : i32
      %342 = arith.addi %341, %c0_i32_186 : i32
      %c2_i32_187 = arith.constant 2 : i32
      %343 = arith.addi %342, %c2_i32_187 : i32
      %344 = arith.index_cast %343 : i32 to index
      %345 = memref.load %arg4[%344] : memref<864xf32, #tpu.memory_space<smem>>
      %346 = vector.extract_strided_slice %319 {offsets = [0, 2, 0], sizes = [10, 10, 128], strides = [1, 1, 1]} : vector<10x12x128xf32> to vector<10x10x128xf32>
      %347 = vector.broadcast %345 : f32 to vector<10x10x128xf32>
      %348 = arith.mulf %346, %347 : vector<10x10x128xf32>
      %349 = arith.addf %339, %348 : vector<10x10x128xf32>
      %c3_188 = arith.constant 3 : index
      %c1_189 = arith.constant 1 : index
      %c0_190 = arith.constant 0 : index
      %c0_191 = arith.constant 0 : index
      %350 = vector.load %arg14[%c3_188, %c1_189, %c0_190, %c0_191] : memref<6x12x12x128xf32, #tpu.memory_space<vmem>>, vector<1x10x12x128xf32>
      %351 = vector.shape_cast %350 : vector<1x10x12x128xf32> to vector<10x12x128xf32>
      %c54_i32_192 = arith.constant 54 : i32
      %352 = arith.muli %28, %c54_i32_192 : i32
      %c27_i32_193 = arith.constant 27 : i32
      %353 = arith.addi %352, %c27_i32_193 : i32
      %c3_i32_194 = arith.constant 3 : i32
      %354 = arith.addi %353, %c3_i32_194 : i32
      %c0_i32_195 = arith.constant 0 : i32
      %355 = arith.addi %354, %c0_i32_195 : i32
      %356 = arith.index_cast %355 : i32 to index
      %357 = memref.load %arg4[%356] : memref<864xf32, #tpu.memory_space<smem>>
      %358 = vector.extract_strided_slice %351 {offsets = [0, 0, 0], sizes = [10, 10, 128], strides = [1, 1, 1]} : vector<10x12x128xf32> to vector<10x10x128xf32>
      %359 = vector.broadcast %357 : f32 to vector<10x10x128xf32>
      %360 = arith.mulf %358, %359 : vector<10x10x128xf32>
      %361 = arith.addf %349, %360 : vector<10x10x128xf32>
      %c54_i32_196 = arith.constant 54 : i32
      %362 = arith.muli %28, %c54_i32_196 : i32
      %c27_i32_197 = arith.constant 27 : i32
      %363 = arith.addi %362, %c27_i32_197 : i32
      %c3_i32_198 = arith.constant 3 : i32
      %364 = arith.addi %363, %c3_i32_198 : i32
      %c1_i32_199 = arith.constant 1 : i32
      %365 = arith.addi %364, %c1_i32_199 : i32
      %366 = arith.index_cast %365 : i32 to index
      %367 = memref.load %arg4[%366] : memref<864xf32, #tpu.memory_space<smem>>
      %368 = vector.extract_strided_slice %351 {offsets = [0, 1, 0], sizes = [10, 10, 128], strides = [1, 1, 1]} : vector<10x12x128xf32> to vector<10x10x128xf32>
      %369 = vector.broadcast %367 : f32 to vector<10x10x128xf32>
      %370 = arith.mulf %368, %369 : vector<10x10x128xf32>
      %371 = arith.addf %361, %370 : vector<10x10x128xf32>
      %c54_i32_200 = arith.constant 54 : i32
      %372 = arith.muli %28, %c54_i32_200 : i32
      %c27_i32_201 = arith.constant 27 : i32
      %373 = arith.addi %372, %c27_i32_201 : i32
      %c3_i32_202 = arith.constant 3 : i32
      %374 = arith.addi %373, %c3_i32_202 : i32
      %c2_i32_203 = arith.constant 2 : i32
      %375 = arith.addi %374, %c2_i32_203 : i32
      %376 = arith.index_cast %375 : i32 to index
      %377 = memref.load %arg4[%376] : memref<864xf32, #tpu.memory_space<smem>>
      %378 = vector.extract_strided_slice %351 {offsets = [0, 2, 0], sizes = [10, 10, 128], strides = [1, 1, 1]} : vector<10x12x128xf32> to vector<10x10x128xf32>
      %379 = vector.broadcast %377 : f32 to vector<10x10x128xf32>
      %380 = arith.mulf %378, %379 : vector<10x10x128xf32>
      %381 = arith.addf %371, %380 : vector<10x10x128xf32>
      %c3_204 = arith.constant 3 : index
      %c2_205 = arith.constant 2 : index
      %c0_206 = arith.constant 0 : index
      %c0_207 = arith.constant 0 : index
      %382 = vector.load %arg14[%c3_204, %c2_205, %c0_206, %c0_207] : memref<6x12x12x128xf32, #tpu.memory_space<vmem>>, vector<1x10x12x128xf32>
      %383 = vector.shape_cast %382 : vector<1x10x12x128xf32> to vector<10x12x128xf32>
      %c54_i32_208 = arith.constant 54 : i32
      %384 = arith.muli %28, %c54_i32_208 : i32
      %c27_i32_209 = arith.constant 27 : i32
      %385 = arith.addi %384, %c27_i32_209 : i32
      %c6_i32_210 = arith.constant 6 : i32
      %386 = arith.addi %385, %c6_i32_210 : i32
      %c0_i32_211 = arith.constant 0 : i32
      %387 = arith.addi %386, %c0_i32_211 : i32
      %388 = arith.index_cast %387 : i32 to index
      %389 = memref.load %arg4[%388] : memref<864xf32, #tpu.memory_space<smem>>
      %390 = vector.extract_strided_slice %383 {offsets = [0, 0, 0], sizes = [10, 10, 128], strides = [1, 1, 1]} : vector<10x12x128xf32> to vector<10x10x128xf32>
      %391 = vector.broadcast %389 : f32 to vector<10x10x128xf32>
      %392 = arith.mulf %390, %391 : vector<10x10x128xf32>
      %393 = arith.addf %381, %392 : vector<10x10x128xf32>
      %c54_i32_212 = arith.constant 54 : i32
      %394 = arith.muli %28, %c54_i32_212 : i32
      %c27_i32_213 = arith.constant 27 : i32
      %395 = arith.addi %394, %c27_i32_213 : i32
      %c6_i32_214 = arith.constant 6 : i32
      %396 = arith.addi %395, %c6_i32_214 : i32
      %c1_i32_215 = arith.constant 1 : i32
      %397 = arith.addi %396, %c1_i32_215 : i32
      %398 = arith.index_cast %397 : i32 to index
      %399 = memref.load %arg4[%398] : memref<864xf32, #tpu.memory_space<smem>>
      %400 = vector.extract_strided_slice %383 {offsets = [0, 1, 0], sizes = [10, 10, 128], strides = [1, 1, 1]} : vector<10x12x128xf32> to vector<10x10x128xf32>
      %401 = vector.broadcast %399 : f32 to vector<10x10x128xf32>
      %402 = arith.mulf %400, %401 : vector<10x10x128xf32>
      %403 = arith.addf %393, %402 : vector<10x10x128xf32>
      %c54_i32_216 = arith.constant 54 : i32
      %404 = arith.muli %28, %c54_i32_216 : i32
      %c27_i32_217 = arith.constant 27 : i32
      %405 = arith.addi %404, %c27_i32_217 : i32
      %c6_i32_218 = arith.constant 6 : i32
      %406 = arith.addi %405, %c6_i32_218 : i32
      %c2_i32_219 = arith.constant 2 : i32
      %407 = arith.addi %406, %c2_i32_219 : i32
      %408 = arith.index_cast %407 : i32 to index
      %409 = memref.load %arg4[%408] : memref<864xf32, #tpu.memory_space<smem>>
      %410 = vector.extract_strided_slice %383 {offsets = [0, 2, 0], sizes = [10, 10, 128], strides = [1, 1, 1]} : vector<10x12x128xf32> to vector<10x10x128xf32>
      %411 = vector.broadcast %409 : f32 to vector<10x10x128xf32>
      %412 = arith.mulf %410, %411 : vector<10x10x128xf32>
      %413 = arith.addf %403, %412 : vector<10x10x128xf32>
      %c4 = arith.constant 4 : index
      %c0_220 = arith.constant 0 : index
      %c0_221 = arith.constant 0 : index
      %c0_222 = arith.constant 0 : index
      %414 = vector.load %arg14[%c4, %c0_220, %c0_221, %c0_222] : memref<6x12x12x128xf32, #tpu.memory_space<vmem>>, vector<1x10x12x128xf32>
      %415 = vector.shape_cast %414 : vector<1x10x12x128xf32> to vector<10x12x128xf32>
      %c54_i32_223 = arith.constant 54 : i32
      %416 = arith.muli %28, %c54_i32_223 : i32
      %c36_i32 = arith.constant 36 : i32
      %417 = arith.addi %416, %c36_i32 : i32
      %c0_i32_224 = arith.constant 0 : i32
      %418 = arith.addi %417, %c0_i32_224 : i32
      %c0_i32_225 = arith.constant 0 : i32
      %419 = arith.addi %418, %c0_i32_225 : i32
      %420 = arith.index_cast %419 : i32 to index
      %421 = memref.load %arg4[%420] : memref<864xf32, #tpu.memory_space<smem>>
      %422 = vector.extract_strided_slice %415 {offsets = [0, 0, 0], sizes = [10, 10, 128], strides = [1, 1, 1]} : vector<10x12x128xf32> to vector<10x10x128xf32>
      %423 = vector.broadcast %421 : f32 to vector<10x10x128xf32>
      %424 = arith.mulf %422, %423 : vector<10x10x128xf32>
      %425 = arith.addf %413, %424 : vector<10x10x128xf32>
      %c54_i32_226 = arith.constant 54 : i32
      %426 = arith.muli %28, %c54_i32_226 : i32
      %c36_i32_227 = arith.constant 36 : i32
      %427 = arith.addi %426, %c36_i32_227 : i32
      %c0_i32_228 = arith.constant 0 : i32
      %428 = arith.addi %427, %c0_i32_228 : i32
      %c1_i32_229 = arith.constant 1 : i32
      %429 = arith.addi %428, %c1_i32_229 : i32
      %430 = arith.index_cast %429 : i32 to index
      %431 = memref.load %arg4[%430] : memref<864xf32, #tpu.memory_space<smem>>
      %432 = vector.extract_strided_slice %415 {offsets = [0, 1, 0], sizes = [10, 10, 128], strides = [1, 1, 1]} : vector<10x12x128xf32> to vector<10x10x128xf32>
      %433 = vector.broadcast %431 : f32 to vector<10x10x128xf32>
      %434 = arith.mulf %432, %433 : vector<10x10x128xf32>
      %435 = arith.addf %425, %434 : vector<10x10x128xf32>
      %c54_i32_230 = arith.constant 54 : i32
      %436 = arith.muli %28, %c54_i32_230 : i32
      %c36_i32_231 = arith.constant 36 : i32
      %437 = arith.addi %436, %c36_i32_231 : i32
      %c0_i32_232 = arith.constant 0 : i32
      %438 = arith.addi %437, %c0_i32_232 : i32
      %c2_i32_233 = arith.constant 2 : i32
      %439 = arith.addi %438, %c2_i32_233 : i32
      %440 = arith.index_cast %439 : i32 to index
      %441 = memref.load %arg4[%440] : memref<864xf32, #tpu.memory_space<smem>>
      %442 = vector.extract_strided_slice %415 {offsets = [0, 2, 0], sizes = [10, 10, 128], strides = [1, 1, 1]} : vector<10x12x128xf32> to vector<10x10x128xf32>
      %443 = vector.broadcast %441 : f32 to vector<10x10x128xf32>
      %444 = arith.mulf %442, %443 : vector<10x10x128xf32>
      %445 = arith.addf %435, %444 : vector<10x10x128xf32>
      %c4_234 = arith.constant 4 : index
      %c1_235 = arith.constant 1 : index
      %c0_236 = arith.constant 0 : index
      %c0_237 = arith.constant 0 : index
      %446 = vector.load %arg14[%c4_234, %c1_235, %c0_236, %c0_237] : memref<6x12x12x128xf32, #tpu.memory_space<vmem>>, vector<1x10x12x128xf32>
      %447 = vector.shape_cast %446 : vector<1x10x12x128xf32> to vector<10x12x128xf32>
      %c54_i32_238 = arith.constant 54 : i32
      %448 = arith.muli %28, %c54_i32_238 : i32
      %c36_i32_239 = arith.constant 36 : i32
      %449 = arith.addi %448, %c36_i32_239 : i32
      %c3_i32_240 = arith.constant 3 : i32
      %450 = arith.addi %449, %c3_i32_240 : i32
      %c0_i32_241 = arith.constant 0 : i32
      %451 = arith.addi %450, %c0_i32_241 : i32
      %452 = arith.index_cast %451 : i32 to index
      %453 = memref.load %arg4[%452] : memref<864xf32, #tpu.memory_space<smem>>
      %454 = vector.extract_strided_slice %447 {offsets = [0, 0, 0], sizes = [10, 10, 128], strides = [1, 1, 1]} : vector<10x12x128xf32> to vector<10x10x128xf32>
      %455 = vector.broadcast %453 : f32 to vector<10x10x128xf32>
      %456 = arith.mulf %454, %455 : vector<10x10x128xf32>
      %457 = arith.addf %445, %456 : vector<10x10x128xf32>
      %c54_i32_242 = arith.constant 54 : i32
      %458 = arith.muli %28, %c54_i32_242 : i32
      %c36_i32_243 = arith.constant 36 : i32
      %459 = arith.addi %458, %c36_i32_243 : i32
      %c3_i32_244 = arith.constant 3 : i32
      %460 = arith.addi %459, %c3_i32_244 : i32
      %c1_i32_245 = arith.constant 1 : i32
      %461 = arith.addi %460, %c1_i32_245 : i32
      %462 = arith.index_cast %461 : i32 to index
      %463 = memref.load %arg4[%462] : memref<864xf32, #tpu.memory_space<smem>>
      %464 = vector.extract_strided_slice %447 {offsets = [0, 1, 0], sizes = [10, 10, 128], strides = [1, 1, 1]} : vector<10x12x128xf32> to vector<10x10x128xf32>
      %465 = vector.broadcast %463 : f32 to vector<10x10x128xf32>
      %466 = arith.mulf %464, %465 : vector<10x10x128xf32>
      %467 = arith.addf %457, %466 : vector<10x10x128xf32>
      %c54_i32_246 = arith.constant 54 : i32
      %468 = arith.muli %28, %c54_i32_246 : i32
      %c36_i32_247 = arith.constant 36 : i32
      %469 = arith.addi %468, %c36_i32_247 : i32
      %c3_i32_248 = arith.constant 3 : i32
      %470 = arith.addi %469, %c3_i32_248 : i32
      %c2_i32_249 = arith.constant 2 : i32
      %471 = arith.addi %470, %c2_i32_249 : i32
      %472 = arith.index_cast %471 : i32 to index
      %473 = memref.load %arg4[%472] : memref<864xf32, #tpu.memory_space<smem>>
      %474 = vector.extract_strided_slice %447 {offsets = [0, 2, 0], sizes = [10, 10, 128], strides = [1, 1, 1]} : vector<10x12x128xf32> to vector<10x10x128xf32>
      %475 = vector.broadcast %473 : f32 to vector<10x10x128xf32>
      %476 = arith.mulf %474, %475 : vector<10x10x128xf32>
      %477 = arith.addf %467, %476 : vector<10x10x128xf32>
      %c4_250 = arith.constant 4 : index
      %c2_251 = arith.constant 2 : index
      %c0_252 = arith.constant 0 : index
      %c0_253 = arith.constant 0 : index
      %478 = vector.load %arg14[%c4_250, %c2_251, %c0_252, %c0_253] : memref<6x12x12x128xf32, #tpu.memory_space<vmem>>, vector<1x10x12x128xf32>
      %479 = vector.shape_cast %478 : vector<1x10x12x128xf32> to vector<10x12x128xf32>
      %c54_i32_254 = arith.constant 54 : i32
      %480 = arith.muli %28, %c54_i32_254 : i32
      %c36_i32_255 = arith.constant 36 : i32
      %481 = arith.addi %480, %c36_i32_255 : i32
      %c6_i32_256 = arith.constant 6 : i32
      %482 = arith.addi %481, %c6_i32_256 : i32
      %c0_i32_257 = arith.constant 0 : i32
      %483 = arith.addi %482, %c0_i32_257 : i32
      %484 = arith.index_cast %483 : i32 to index
      %485 = memref.load %arg4[%484] : memref<864xf32, #tpu.memory_space<smem>>
      %486 = vector.extract_strided_slice %479 {offsets = [0, 0, 0], sizes = [10, 10, 128], strides = [1, 1, 1]} : vector<10x12x128xf32> to vector<10x10x128xf32>
      %487 = vector.broadcast %485 : f32 to vector<10x10x128xf32>
      %488 = arith.mulf %486, %487 : vector<10x10x128xf32>
      %489 = arith.addf %477, %488 : vector<10x10x128xf32>
      %c54_i32_258 = arith.constant 54 : i32
      %490 = arith.muli %28, %c54_i32_258 : i32
      %c36_i32_259 = arith.constant 36 : i32
      %491 = arith.addi %490, %c36_i32_259 : i32
      %c6_i32_260 = arith.constant 6 : i32
      %492 = arith.addi %491, %c6_i32_260 : i32
      %c1_i32_261 = arith.constant 1 : i32
      %493 = arith.addi %492, %c1_i32_261 : i32
      %494 = arith.index_cast %493 : i32 to index
      %495 = memref.load %arg4[%494] : memref<864xf32, #tpu.memory_space<smem>>
      %496 = vector.extract_strided_slice %479 {offsets = [0, 1, 0], sizes = [10, 10, 128], strides = [1, 1, 1]} : vector<10x12x128xf32> to vector<10x10x128xf32>
      %497 = vector.broadcast %495 : f32 to vector<10x10x128xf32>
      %498 = arith.mulf %496, %497 : vector<10x10x128xf32>
      %499 = arith.addf %489, %498 : vector<10x10x128xf32>
      %c54_i32_262 = arith.constant 54 : i32
      %500 = arith.muli %28, %c54_i32_262 : i32
      %c36_i32_263 = arith.constant 36 : i32
      %501 = arith.addi %500, %c36_i32_263 : i32
      %c6_i32_264 = arith.constant 6 : i32
      %502 = arith.addi %501, %c6_i32_264 : i32
      %c2_i32_265 = arith.constant 2 : i32
      %503 = arith.addi %502, %c2_i32_265 : i32
      %504 = arith.index_cast %503 : i32 to index
      %505 = memref.load %arg4[%504] : memref<864xf32, #tpu.memory_space<smem>>
      %506 = vector.extract_strided_slice %479 {offsets = [0, 2, 0], sizes = [10, 10, 128], strides = [1, 1, 1]} : vector<10x12x128xf32> to vector<10x10x128xf32>
      %507 = vector.broadcast %505 : f32 to vector<10x10x128xf32>
      %508 = arith.mulf %506, %507 : vector<10x10x128xf32>
      %509 = arith.addf %499, %508 : vector<10x10x128xf32>
      %c5 = arith.constant 5 : index
      %c0_266 = arith.constant 0 : index
      %c0_267 = arith.constant 0 : index
      %c0_268 = arith.constant 0 : index
      %510 = vector.load %arg14[%c5, %c0_266, %c0_267, %c0_268] : memref<6x12x12x128xf32, #tpu.memory_space<vmem>>, vector<1x10x12x128xf32>
      %511 = vector.shape_cast %510 : vector<1x10x12x128xf32> to vector<10x12x128xf32>
      %c54_i32_269 = arith.constant 54 : i32
      %512 = arith.muli %28, %c54_i32_269 : i32
      %c45_i32 = arith.constant 45 : i32
      %513 = arith.addi %512, %c45_i32 : i32
      %c0_i32_270 = arith.constant 0 : i32
      %514 = arith.addi %513, %c0_i32_270 : i32
      %c0_i32_271 = arith.constant 0 : i32
      %515 = arith.addi %514, %c0_i32_271 : i32
      %516 = arith.index_cast %515 : i32 to index
      %517 = memref.load %arg4[%516] : memref<864xf32, #tpu.memory_space<smem>>
      %518 = vector.extract_strided_slice %511 {offsets = [0, 0, 0], sizes = [10, 10, 128], strides = [1, 1, 1]} : vector<10x12x128xf32> to vector<10x10x128xf32>
      %519 = vector.broadcast %517 : f32 to vector<10x10x128xf32>
      %520 = arith.mulf %518, %519 : vector<10x10x128xf32>
      %521 = arith.addf %509, %520 : vector<10x10x128xf32>
      %c54_i32_272 = arith.constant 54 : i32
      %522 = arith.muli %28, %c54_i32_272 : i32
      %c45_i32_273 = arith.constant 45 : i32
      %523 = arith.addi %522, %c45_i32_273 : i32
      %c0_i32_274 = arith.constant 0 : i32
      %524 = arith.addi %523, %c0_i32_274 : i32
      %c1_i32_275 = arith.constant 1 : i32
      %525 = arith.addi %524, %c1_i32_275 : i32
      %526 = arith.index_cast %525 : i32 to index
      %527 = memref.load %arg4[%526] : memref<864xf32, #tpu.memory_space<smem>>
      %528 = vector.extract_strided_slice %511 {offsets = [0, 1, 0], sizes = [10, 10, 128], strides = [1, 1, 1]} : vector<10x12x128xf32> to vector<10x10x128xf32>
      %529 = vector.broadcast %527 : f32 to vector<10x10x128xf32>
      %530 = arith.mulf %528, %529 : vector<10x10x128xf32>
      %531 = arith.addf %521, %530 : vector<10x10x128xf32>
      %c54_i32_276 = arith.constant 54 : i32
      %532 = arith.muli %28, %c54_i32_276 : i32
      %c45_i32_277 = arith.constant 45 : i32
      %533 = arith.addi %532, %c45_i32_277 : i32
      %c0_i32_278 = arith.constant 0 : i32
      %534 = arith.addi %533, %c0_i32_278 : i32
      %c2_i32_279 = arith.constant 2 : i32
      %535 = arith.addi %534, %c2_i32_279 : i32
      %536 = arith.index_cast %535 : i32 to index
      %537 = memref.load %arg4[%536] : memref<864xf32, #tpu.memory_space<smem>>
      %538 = vector.extract_strided_slice %511 {offsets = [0, 2, 0], sizes = [10, 10, 128], strides = [1, 1, 1]} : vector<10x12x128xf32> to vector<10x10x128xf32>
      %539 = vector.broadcast %537 : f32 to vector<10x10x128xf32>
      %540 = arith.mulf %538, %539 : vector<10x10x128xf32>
      %541 = arith.addf %531, %540 : vector<10x10x128xf32>
      %c5_280 = arith.constant 5 : index
      %c1_281 = arith.constant 1 : index
      %c0_282 = arith.constant 0 : index
      %c0_283 = arith.constant 0 : index
      %542 = vector.load %arg14[%c5_280, %c1_281, %c0_282, %c0_283] : memref<6x12x12x128xf32, #tpu.memory_space<vmem>>, vector<1x10x12x128xf32>
      %543 = vector.shape_cast %542 : vector<1x10x12x128xf32> to vector<10x12x128xf32>
      %c54_i32_284 = arith.constant 54 : i32
      %544 = arith.muli %28, %c54_i32_284 : i32
      %c45_i32_285 = arith.constant 45 : i32
      %545 = arith.addi %544, %c45_i32_285 : i32
      %c3_i32_286 = arith.constant 3 : i32
      %546 = arith.addi %545, %c3_i32_286 : i32
      %c0_i32_287 = arith.constant 0 : i32
      %547 = arith.addi %546, %c0_i32_287 : i32
      %548 = arith.index_cast %547 : i32 to index
      %549 = memref.load %arg4[%548] : memref<864xf32, #tpu.memory_space<smem>>
      %550 = vector.extract_strided_slice %543 {offsets = [0, 0, 0], sizes = [10, 10, 128], strides = [1, 1, 1]} : vector<10x12x128xf32> to vector<10x10x128xf32>
      %551 = vector.broadcast %549 : f32 to vector<10x10x128xf32>
      %552 = arith.mulf %550, %551 : vector<10x10x128xf32>
      %553 = arith.addf %541, %552 : vector<10x10x128xf32>
      %c54_i32_288 = arith.constant 54 : i32
      %554 = arith.muli %28, %c54_i32_288 : i32
      %c45_i32_289 = arith.constant 45 : i32
      %555 = arith.addi %554, %c45_i32_289 : i32
      %c3_i32_290 = arith.constant 3 : i32
      %556 = arith.addi %555, %c3_i32_290 : i32
      %c1_i32_291 = arith.constant 1 : i32
      %557 = arith.addi %556, %c1_i32_291 : i32
      %558 = arith.index_cast %557 : i32 to index
      %559 = memref.load %arg4[%558] : memref<864xf32, #tpu.memory_space<smem>>
      %560 = vector.extract_strided_slice %543 {offsets = [0, 1, 0], sizes = [10, 10, 128], strides = [1, 1, 1]} : vector<10x12x128xf32> to vector<10x10x128xf32>
      %561 = vector.broadcast %559 : f32 to vector<10x10x128xf32>
      %562 = arith.mulf %560, %561 : vector<10x10x128xf32>
      %563 = arith.addf %553, %562 : vector<10x10x128xf32>
      %c54_i32_292 = arith.constant 54 : i32
      %564 = arith.muli %28, %c54_i32_292 : i32
      %c45_i32_293 = arith.constant 45 : i32
      %565 = arith.addi %564, %c45_i32_293 : i32
      %c3_i32_294 = arith.constant 3 : i32
      %566 = arith.addi %565, %c3_i32_294 : i32
      %c2_i32_295 = arith.constant 2 : i32
      %567 = arith.addi %566, %c2_i32_295 : i32
      %568 = arith.index_cast %567 : i32 to index
      %569 = memref.load %arg4[%568] : memref<864xf32, #tpu.memory_space<smem>>
      %570 = vector.extract_strided_slice %543 {offsets = [0, 2, 0], sizes = [10, 10, 128], strides = [1, 1, 1]} : vector<10x12x128xf32> to vector<10x10x128xf32>
      %571 = vector.broadcast %569 : f32 to vector<10x10x128xf32>
      %572 = arith.mulf %570, %571 : vector<10x10x128xf32>
      %573 = arith.addf %563, %572 : vector<10x10x128xf32>
      %c5_296 = arith.constant 5 : index
      %c2_297 = arith.constant 2 : index
      %c0_298 = arith.constant 0 : index
      %c0_299 = arith.constant 0 : index
      %574 = vector.load %arg14[%c5_296, %c2_297, %c0_298, %c0_299] : memref<6x12x12x128xf32, #tpu.memory_space<vmem>>, vector<1x10x12x128xf32>
      %575 = vector.shape_cast %574 : vector<1x10x12x128xf32> to vector<10x12x128xf32>
      %c54_i32_300 = arith.constant 54 : i32
      %576 = arith.muli %28, %c54_i32_300 : i32
      %c45_i32_301 = arith.constant 45 : i32
      %577 = arith.addi %576, %c45_i32_301 : i32
      %c6_i32_302 = arith.constant 6 : i32
      %578 = arith.addi %577, %c6_i32_302 : i32
      %c0_i32_303 = arith.constant 0 : i32
      %579 = arith.addi %578, %c0_i32_303 : i32
      %580 = arith.index_cast %579 : i32 to index
      %581 = memref.load %arg4[%580] : memref<864xf32, #tpu.memory_space<smem>>
      %582 = vector.extract_strided_slice %575 {offsets = [0, 0, 0], sizes = [10, 10, 128], strides = [1, 1, 1]} : vector<10x12x128xf32> to vector<10x10x128xf32>
      %583 = vector.broadcast %581 : f32 to vector<10x10x128xf32>
      %584 = arith.mulf %582, %583 : vector<10x10x128xf32>
      %585 = arith.addf %573, %584 : vector<10x10x128xf32>
      %c54_i32_304 = arith.constant 54 : i32
      %586 = arith.muli %28, %c54_i32_304 : i32
      %c45_i32_305 = arith.constant 45 : i32
      %587 = arith.addi %586, %c45_i32_305 : i32
      %c6_i32_306 = arith.constant 6 : i32
      %588 = arith.addi %587, %c6_i32_306 : i32
      %c1_i32_307 = arith.constant 1 : i32
      %589 = arith.addi %588, %c1_i32_307 : i32
      %590 = arith.index_cast %589 : i32 to index
      %591 = memref.load %arg4[%590] : memref<864xf32, #tpu.memory_space<smem>>
      %592 = vector.extract_strided_slice %575 {offsets = [0, 1, 0], sizes = [10, 10, 128], strides = [1, 1, 1]} : vector<10x12x128xf32> to vector<10x10x128xf32>
      %593 = vector.broadcast %591 : f32 to vector<10x10x128xf32>
      %594 = arith.mulf %592, %593 : vector<10x10x128xf32>
      %595 = arith.addf %585, %594 : vector<10x10x128xf32>
      %c54_i32_308 = arith.constant 54 : i32
      %596 = arith.muli %28, %c54_i32_308 : i32
      %c45_i32_309 = arith.constant 45 : i32
      %597 = arith.addi %596, %c45_i32_309 : i32
      %c6_i32_310 = arith.constant 6 : i32
      %598 = arith.addi %597, %c6_i32_310 : i32
      %c2_i32_311 = arith.constant 2 : i32
      %599 = arith.addi %598, %c2_i32_311 : i32
      %600 = arith.index_cast %599 : i32 to index
      %601 = memref.load %arg4[%600] : memref<864xf32, #tpu.memory_space<smem>>
      %602 = vector.extract_strided_slice %575 {offsets = [0, 2, 0], sizes = [10, 10, 128], strides = [1, 1, 1]} : vector<10x12x128xf32> to vector<10x10x128xf32>
      %603 = vector.broadcast %601 : f32 to vector<10x10x128xf32>
      %604 = arith.mulf %602, %603 : vector<10x10x128xf32>
      %605 = arith.addf %595, %604 : vector<10x10x128xf32>
      %606 = arith.index_cast %28 : i32 to index
      %607 = memref.load %arg5[%606] : memref<16xf32, #tpu.memory_space<smem>>
      %608 = vector.broadcast %607 : f32 to vector<10x10x128xf32>
      %609 = arith.addf %605, %608 : vector<10x10x128xf32>
      %610 = arith.index_cast %28 : i32 to index
      %c0_312 = arith.constant 0 : index
      %c0_313 = arith.constant 0 : index
      %c0_314 = arith.constant 0 : index
      %611 = vector.load %arg15[%610, %c0_312, %c0_313, %c0_314] : memref<16x10x10x128xf32, #tpu.memory_space<vmem>>, vector<1x10x10x128xf32>
      %612 = vector.shape_cast %611 : vector<1x10x10x128xf32> to vector<10x10x128xf32>
      %613 = vector.shape_cast %609 : vector<10x10x128xf32> to vector<1x10x10x128xf32>
      tpu.vector_store %arg15[%610, %c0_312, %c0_313, %c0_314], %613 {strides = array<i32>} : memref<16x10x10x128xf32, #tpu.memory_space<vmem>>, vector<1x10x10x128xf32>,
    }
    %c16_i32_7 = arith.constant 16 : i32
    %cst = arith.constant 0.000000e+00 : f32
    %3 = vector.broadcast %cst : f32 to vector<640x128xf32>
    %c0 = arith.constant 0 : index
    %c0_8 = arith.constant 0 : index
    %4 = vector.load %arg16[%c0, %c0_8] : memref<640x128xf32, #tpu.memory_space<vmem>>, vector<640x128xf32>
    tpu.vector_store %arg16[%c0, %c0_8], %3 {strides = array<i32>} : memref<640x128xf32, #tpu.memory_space<vmem>>, vector<640x128xf32>,
    %c0_i32_9 = arith.constant 0 : i32
    %c16_i32_10 = arith.constant 16 : i32
    %5 = arith.addi %c0_i32_9, %c16_i32_10 : i32
    %c1_i32_11 = arith.constant 1 : i32
    scf.for %arg17 = %c0_i32_9 to %5 step %c1_i32_11  : i32 {
      %c1_i32_34 = arith.constant 1 : i32
      %27 = arith.muli %arg17, %c1_i32_34 : i32
      %c0_i32_35 = arith.constant 0 : i32
      %28 = arith.addi %c0_i32_35, %27 : i32
      %29 = arith.index_cast %28 : i32 to index
      %c0_36 = arith.constant 0 : index
      %c0_37 = arith.constant 0 : index
      %c0_38 = arith.constant 0 : index
      %30 = tpu.strided_load %arg15[%29, %c0_36, %c0_37, %c0_38] {strides = array<i32: 1, 2, 2, 1>} : memref<16x10x10x128xf32, #tpu.memory_space<vmem>>, vector<1x5x5x128xf32>
      %31 = vector.shape_cast %30 : vector<1x5x5x128xf32> to vector<5x5x128xf32>
      %32 = arith.index_cast %28 : i32 to index
      %c0_39 = arith.constant 0 : index
      %c1 = arith.constant 1 : index
      %c0_40 = arith.constant 0 : index
      %33 = tpu.strided_load %arg15[%32, %c0_39, %c1, %c0_40] {strides = array<i32: 1, 2, 2, 1>} : memref<16x10x10x128xf32, #tpu.memory_space<vmem>>, vector<1x5x5x128xf32>
      %34 = vector.shape_cast %33 : vector<1x5x5x128xf32> to vector<5x5x128xf32>
      %35 = arith.maximumf %31, %34 : vector<5x5x128xf32>
      %36 = arith.index_cast %28 : i32 to index
      %c1_41 = arith.constant 1 : index
      %c0_42 = arith.constant 0 : index
      %c0_43 = arith.constant 0 : index
      %37 = tpu.strided_load %arg15[%36, %c1_41, %c0_42, %c0_43] {strides = array<i32: 1, 2, 2, 1>} : memref<16x10x10x128xf32, #tpu.memory_space<vmem>>, vector<1x5x5x128xf32>
      %38 = vector.shape_cast %37 : vector<1x5x5x128xf32> to vector<5x5x128xf32>
      %39 = arith.index_cast %28 : i32 to index
      %c1_44 = arith.constant 1 : index
      %c1_45 = arith.constant 1 : index
      %c0_46 = arith.constant 0 : index
      %40 = tpu.strided_load %arg15[%39, %c1_44, %c1_45, %c0_46] {strides = array<i32: 1, 2, 2, 1>} : memref<16x10x10x128xf32, #tpu.memory_space<vmem>>, vector<1x5x5x128xf32>
      %41 = vector.shape_cast %40 : vector<1x5x5x128xf32> to vector<5x5x128xf32>
      %42 = arith.maximumf %38, %41 : vector<5x5x128xf32>
      %43 = arith.maximumf %35, %42 : vector<5x5x128xf32>
      %cst_47 = arith.constant 0.000000e+00 : f32
      %44 = vector.broadcast %cst_47 : f32 to vector<5x5x128xf32>
      %45 = arith.maximumf %43, %44 : vector<5x5x128xf32>
      %c40_i32 = arith.constant 40 : i32
      %46 = arith.muli %28, %c40_i32 : i32
      %c0_i32_48 = arith.constant 0 : i32
      %47 = arith.addi %46, %c0_i32_48 : i32
      %48 = tpu.assume_multiple %47, 8 : i32
      %49 = vector.extract_strided_slice %45 {offsets = [0, 0, 0], sizes = [1, 5, 128], strides = [1, 1, 1]} : vector<5x5x128xf32> to vector<1x5x128xf32>
      %50 = vector.shape_cast %49 : vector<1x5x128xf32> to vector<5x128xf32>
      %51 = arith.index_cast %48 : i32 to index
      %c0_49 = arith.constant 0 : index
      %52 = vector.load %arg16[%51, %c0_49] : memref<640x128xf32, #tpu.memory_space<vmem>>, vector<5x128xf32>
      tpu.vector_store %arg16[%51, %c0_49], %50 {strides = array<i32>} : memref<640x128xf32, #tpu.memory_space<vmem>>, vector<5x128xf32>,
      %c40_i32_50 = arith.constant 40 : i32
      %53 = arith.muli %28, %c40_i32_50 : i32
      %c8_i32 = arith.constant 8 : i32
      %54 = arith.addi %53, %c8_i32 : i32
      %55 = tpu.assume_multiple %54, 8 : i32
      %56 = vector.extract_strided_slice %45 {offsets = [1, 0, 0], sizes = [1, 5, 128], strides = [1, 1, 1]} : vector<5x5x128xf32> to vector<1x5x128xf32>
      %57 = vector.shape_cast %56 : vector<1x5x128xf32> to vector<5x128xf32>
      %58 = arith.index_cast %55 : i32 to index
      %c0_51 = arith.constant 0 : index
      %59 = vector.load %arg16[%58, %c0_51] : memref<640x128xf32, #tpu.memory_space<vmem>>, vector<5x128xf32>
      tpu.vector_store %arg16[%58, %c0_51], %57 {strides = array<i32>} : memref<640x128xf32, #tpu.memory_space<vmem>>, vector<5x128xf32>,
      %c40_i32_52 = arith.constant 40 : i32
      %60 = arith.muli %28, %c40_i32_52 : i32
      %c16_i32_53 = arith.constant 16 : i32
      %61 = arith.addi %60, %c16_i32_53 : i32
      %62 = tpu.assume_multiple %61, 8 : i32
      %63 = vector.extract_strided_slice %45 {offsets = [2, 0, 0], sizes = [1, 5, 128], strides = [1, 1, 1]} : vector<5x5x128xf32> to vector<1x5x128xf32>
      %64 = vector.shape_cast %63 : vector<1x5x128xf32> to vector<5x128xf32>
      %65 = arith.index_cast %62 : i32 to index
      %c0_54 = arith.constant 0 : index
      %66 = vector.load %arg16[%65, %c0_54] : memref<640x128xf32, #tpu.memory_space<vmem>>, vector<5x128xf32>
      tpu.vector_store %arg16[%65, %c0_54], %64 {strides = array<i32>} : memref<640x128xf32, #tpu.memory_space<vmem>>, vector<5x128xf32>,
      %c40_i32_55 = arith.constant 40 : i32
      %67 = arith.muli %28, %c40_i32_55 : i32
      %c24_i32 = arith.constant 24 : i32
      %68 = arith.addi %67, %c24_i32 : i32
      %69 = tpu.assume_multiple %68, 8 : i32
      %70 = vector.extract_strided_slice %45 {offsets = [3, 0, 0], sizes = [1, 5, 128], strides = [1, 1, 1]} : vector<5x5x128xf32> to vector<1x5x128xf32>
      %71 = vector.shape_cast %70 : vector<1x5x128xf32> to vector<5x128xf32>
      %72 = arith.index_cast %69 : i32 to index
      %c0_56 = arith.constant 0 : index
      %73 = vector.load %arg16[%72, %c0_56] : memref<640x128xf32, #tpu.memory_space<vmem>>, vector<5x128xf32>
      tpu.vector_store %arg16[%72, %c0_56], %71 {strides = array<i32>} : memref<640x128xf32, #tpu.memory_space<vmem>>, vector<5x128xf32>,
      %c40_i32_57 = arith.constant 40 : i32
      %74 = arith.muli %28, %c40_i32_57 : i32
      %c32_i32 = arith.constant 32 : i32
      %75 = arith.addi %74, %c32_i32 : i32
      %76 = tpu.assume_multiple %75, 8 : i32
      %77 = vector.extract_strided_slice %45 {offsets = [4, 0, 0], sizes = [1, 5, 128], strides = [1, 1, 1]} : vector<5x5x128xf32> to vector<1x5x128xf32>
      %78 = vector.shape_cast %77 : vector<1x5x128xf32> to vector<5x128xf32>
      %79 = arith.index_cast %76 : i32 to index
      %c0_58 = arith.constant 0 : index
      %80 = vector.load %arg16[%79, %c0_58] : memref<640x128xf32, #tpu.memory_space<vmem>>, vector<5x128xf32>
      tpu.vector_store %arg16[%79, %c0_58], %78 {strides = array<i32>} : memref<640x128xf32, #tpu.memory_space<vmem>>, vector<5x128xf32>,
    }
    %c16_i32_12 = arith.constant 16 : i32
    %c0_13 = arith.constant 0 : index
    %c0_14 = arith.constant 0 : index
    %6 = vector.load %arg16[%c0_13, %c0_14] : memref<640x128xf32, #tpu.memory_space<vmem>>, vector<640x128xf32>
    %c0_15 = arith.constant 0 : index
    %c0_16 = arith.constant 0 : index
    %7 = vector.load %arg6[%c0_15, %c0_16] : memref<120x640xf32, #tpu.memory_space<vmem>>, vector<120x640xf32>
    %cst_17 = arith.constant dense<0.000000e+00> : vector<120x128xf32>
    %8 = tpu.matmul %7, %6, %cst_17 {dimension_numbers = #tpu.dot_dimension_numbers<[1], [0], [0], [1], [0, 0, 1, 1], [], []>} : vector<120x640xf32>, vector<640x128xf32>, vector<120x128xf32> -> vector<120x128xf32>
    %c0_18 = arith.constant 0 : index
    %c0_19 = arith.constant 0 : index
    %9 = vector.load %arg7[%c0_18, %c0_19] : memref<120x1xf32, #tpu.memory_space<vmem>>, vector<120x1xf32>
    %10 = vector.broadcast %9 : vector<120x1xf32> to vector<120x128xf32>
    %11 = arith.addf %8, %10 : vector<120x128xf32>
    %cst_20 = arith.constant 0.000000e+00 : f32
    %12 = vector.broadcast %cst_20 : f32 to vector<120x128xf32>
    %13 = arith.maximumf %11, %12 : vector<120x128xf32>
    %c0_21 = arith.constant 0 : index
    %c0_22 = arith.constant 0 : index
    %14 = vector.load %arg8[%c0_21, %c0_22] : memref<84x120xf32, #tpu.memory_space<vmem>>, vector<84x120xf32>
    %cst_23 = arith.constant dense<0.000000e+00> : vector<84x128xf32>
    %15 = tpu.matmul %14, %13, %cst_23 {dimension_numbers = #tpu.dot_dimension_numbers<[1], [0], [0], [1], [0, 0, 1, 1], [], []>} : vector<84x120xf32>, vector<120x128xf32>, vector<84x128xf32> -> vector<84x128xf32>
    %c0_24 = arith.constant 0 : index
    %c0_25 = arith.constant 0 : index
    %16 = vector.load %arg9[%c0_24, %c0_25] : memref<84x1xf32, #tpu.memory_space<vmem>>, vector<84x1xf32>
    %17 = vector.broadcast %16 : vector<84x1xf32> to vector<84x128xf32>
    %18 = arith.addf %15, %17 : vector<84x128xf32>
    %cst_26 = arith.constant 0.000000e+00 : f32
    %19 = vector.broadcast %cst_26 : f32 to vector<84x128xf32>
    %20 = arith.maximumf %18, %19 : vector<84x128xf32>
    %c0_27 = arith.constant 0 : index
    %c0_28 = arith.constant 0 : index
    %21 = vector.load %arg10[%c0_27, %c0_28] : memref<10x84xf32, #tpu.memory_space<vmem>>, vector<10x84xf32>
    %cst_29 = arith.constant dense<0.000000e+00> : vector<10x128xf32>
    %22 = tpu.matmul %21, %20, %cst_29 {dimension_numbers = #tpu.dot_dimension_numbers<[1], [0], [0], [1], [0, 0, 1, 1], [], []>} : vector<10x84xf32>, vector<84x128xf32>, vector<10x128xf32> -> vector<10x128xf32>
    %c0_30 = arith.constant 0 : index
    %c0_31 = arith.constant 0 : index
    %23 = vector.load %arg11[%c0_30, %c0_31] : memref<10x1xf32, #tpu.memory_space<vmem>>, vector<10x1xf32>
    %24 = vector.broadcast %23 : vector<10x1xf32> to vector<10x128xf32>
    %25 = arith.addf %22, %24 : vector<10x128xf32>
    %c0_32 = arith.constant 0 : index
    %c0_33 = arith.constant 0 : index
    %26 = vector.load %arg12[%c0_32, %c0_33] : memref<10x128xf32, #tpu.memory_space<vmem>>, vector<10x128xf32>
    tpu.vector_store %arg12[%c0_32, %c0_33], %25 {strides = array<i32>} : memref<10x128xf32, #tpu.memory_space<vmem>>, vector<10x128xf32>,
    return
  }
  func.func @transform_0(%arg0: i32) -> (i32, i32, i32) {
    %c0_i32 = arith.constant 0 : i32
    %c0_i32_0 = arith.constant 0 : i32
    %c0_i32_1 = arith.constant 0 : i32
    return %c0_i32, %c0_i32_0, %arg0 : i32, i32, i32
  }
  func.func @transform_1(%arg0: i32) -> i32 {
    %c0_i32 = arith.constant 0 : i32
    %c0_i32_0 = arith.constant 0 : i32
    return %c0_i32 : i32
  }
  func.func @transform_2(%arg0: i32) -> i32 {
    %c0_i32 = arith.constant 0 : i32
    %c0_i32_0 = arith.constant 0 : i32
    return %c0_i32 : i32
  }
  func.func @transform_3(%arg0: i32) -> i32 {
    %c0_i32 = arith.constant 0 : i32
    %c0_i32_0 = arith.constant 0 : i32
    return %c0_i32 : i32
  }
  func.func @transform_4(%arg0: i32) -> i32 {
    %c0_i32 = arith.constant 0 : i32
    %c0_i32_0 = arith.constant 0 : i32
    return %c0_i32 : i32
  }
  func.func @transform_5(%arg0: i32) -> (i32, i32) {
    %c0_i32 = arith.constant 0 : i32
    %c0_i32_0 = arith.constant 0 : i32
    %c0_i32_1 = arith.constant 0 : i32
    return %c0_i32, %c0_i32_0 : i32, i32
  }
  func.func @transform_6(%arg0: i32) -> (i32, i32) {
    %c0_i32 = arith.constant 0 : i32
    %c0_i32_0 = arith.constant 0 : i32
    %c0_i32_1 = arith.constant 0 : i32
    return %c0_i32, %c0_i32_0 : i32, i32
  }
  func.func @transform_7(%arg0: i32) -> (i32, i32) {
    %c0_i32 = arith.constant 0 : i32
    %c0_i32_0 = arith.constant 0 : i32
    %c0_i32_1 = arith.constant 0 : i32
    return %c0_i32, %c0_i32_0 : i32, i32
  }
  func.func @transform_8(%arg0: i32) -> (i32, i32) {
    %c0_i32 = arith.constant 0 : i32
    %c0_i32_0 = arith.constant 0 : i32
    %c0_i32_1 = arith.constant 0 : i32
    return %c0_i32, %c0_i32_0 : i32, i32
  }
  func.func @transform_9(%arg0: i32) -> (i32, i32) {
    %c0_i32 = arith.constant 0 : i32
    %c0_i32_0 = arith.constant 0 : i32
    %c0_i32_1 = arith.constant 0 : i32
    return %c0_i32, %c0_i32_0 : i32, i32
  }
  func.func @transform_10(%arg0: i32) -> (i32, i32) {
    %c0_i32 = arith.constant 0 : i32
    %c0_i32_0 = arith.constant 0 : i32
    %c0_i32_1 = arith.constant 0 : i32
    return %c0_i32, %c0_i32_0 : i32, i32
  }
  func.func @transform_11(%arg0: i32) -> (i32, i32) {
    %c0_i32 = arith.constant 0 : i32
    %c0_i32_0 = arith.constant 0 : i32
    return %c0_i32, %arg0 : i32, i32
  }
}

</mosaic_0001>

<llo_original>
// kernel: net_forward.1
$region0: #{net_forward.1}
  #allocation0 [shape = 'u32[]', space=smem, size = 0x4, offset = 0x4, fixed_abs, tag = 'smem constant byte address 0x4 - core index']
  #allocation1 [shape = 'u32[144,128]{1,0:T(1,128)}', space=vmem, size = 0x12000, scoped, tag = 'internal scratch']
  #allocation2 [shape = 'f32[6,24,24,128]{3,2,1,0:T(8,128)}', space=vmem, size = 0x1b0000, scoped, tag = 'scratch operand']
  #allocation3 [shape = 'f32[6,12,12,128]{3,2,1,0:T(8,128)}', space=vmem, size = 0x90000, scoped, tag = 'scratch operand']
  #allocation4 [shape = 'f32[16,10,10,128]{3,2,1,0:T(8,128)}', space=vmem, size = 0x140000, scoped, tag = 'scratch operand']
  #allocation5 [shape = 'f32[640,128]{1,0:T(8,128)}', space=vmem, size = 0x50000, scoped, tag = 'scratch operand']
  %s0 = inlined_call_operand.vmem [shape: f32[28,28,128], index: 0, kind: input, shape index: {}]
  %s1 = inlined_call_operand.vmem [shape: f32[150], index: 1, kind: input, shape index: {}]
  %s2 = inlined_call_operand.vmem [shape: f32[6], index: 2, kind: input, shape index: {}]
  %s3 = inlined_call_operand.vmem [shape: f32[864], index: 3, kind: input, shape index: {}]
  %s4 = inlined_call_operand.vmem [shape: f32[16], index: 4, kind: input, shape index: {}]
  %s5 = inlined_call_operand.vmem [shape: f32[120,640], index: 5, kind: input, shape index: {}]
  %s6 = inlined_call_operand.vmem [shape: f32[120,1], index: 6, kind: input, shape index: {}]
  %s7 = inlined_call_operand.vmem [shape: f32[84,120], index: 7, kind: input, shape index: {}]
  %s8 = inlined_call_operand.vmem [shape: f32[84,1], index: 8, kind: input, shape index: {}]
  %s9 = inlined_call_operand.vmem [shape: f32[10,84], index: 9, kind: input, shape index: {}]
  %s10 = inlined_call_operand.vmem [shape: f32[10,1], index: 10, kind: input, shape index: {}]
  %s11 = inlined_call_operand.vmem [shape: f32[10,128], index: 11, kind: output, shape index: {}]
  %s12 = sld [smem:[#allocation0]]
  $region105: #{net_forward.1} parent=0
    _
  %s14 = ssub.s32 1, %s12
  %s15 = scalar_select 0, %s14, %s12
  $region1: #{net_forward.1} parent=0
    #allocation6 [shape = 'u8[1024]{0}', space=smem, size = 0x400, scoped, tag = 'input window, operand 1, single buffered']
    #allocation7 [shape = 's32[1]{0}', space=sflag, size = 0x4, scoped, tag = 'scoped memory for net_forward.1']
    #allocation8 [shape = 'u8[512]{0}', space=smem, size = 0x200, scoped, tag = 'input window, operand 2, single buffered']
    #allocation9 [shape = 's32[1]{0}', space=sflag, size = 0x4, scoped, tag = 'scoped memory for net_forward.1']
    #allocation10 [shape = 'u8[3584]{0}', space=smem, size = 0xe00, scoped, tag = 'input window, operand 3, single buffered']
    #allocation11 [shape = 'u8[512]{0}', space=smem, size = 0x200, scoped, tag = 'input window, operand 4, single buffered']
    #allocation12 [shape = 's32[1]{0}', space=sflag, size = 0x4, scoped, tag = 'scoped memory for net_forward.1']
    %16 = vsyncpa [#allocation7], 0
    %17 = vsyncpa [#allocation9], 0
    %18 = vsyncpa [#allocation12], 0
    // Predicated region
    $region2: #{net_forward.1} parent=1 // pred_check
      _
    $region3: #{net_forward.1} parent=1 // pred_check_branch
      %20 = sbr.rel (0) target = $region5
    $region4: #{net_forward.1} parent=1 // pred_region
      _
    $region5: #{net_forward.1} parent=1 // pred_fallthru
      _
    // Predicated region
    $region6: #{net_forward.1} parent=1 // pred_check
      _
    $region7: #{net_forward.1} parent=1 // pred_check_branch
      %22 = sbr.rel (0) target = $region9
    $region8: #{net_forward.1} parent=1 // pred_region
      %s24 = ssub.s32 32, 32
      %25 = vsyncadd [#allocation7], %s24
      %s27 = sshll.u32 %s1, 4
      %s28 = int_to_ptr.vmem [resolvable:$true] %s27
      %30 = dma.vmem_to_smem %s28, 32, [#allocation6], [#allocation7]
    $region9: #{net_forward.1} parent=1 // pred_fallthru
      _
    // Predicated region
    $region10: #{net_forward.1} parent=1 // pred_check
      _
    $region11: #{net_forward.1} parent=1 // pred_check_branch
      %32 = sbr.rel (0) target = $region13
    $region12: #{net_forward.1} parent=1 // pred_region
      %s34 = ssub.s32 16, 16
      %35 = vsyncadd [#allocation9], %s34
      %s37 = sshll.u32 %s2, 4
      %s38 = int_to_ptr.vmem [resolvable:$true] %s37
      %40 = dma.vmem_to_smem %s38, 16, [#allocation8], [#allocation9]
    $region13: #{net_forward.1} parent=1 // pred_fallthru
      _
    // Predicated region
    $region14: #{net_forward.1} parent=1 // pred_check
      _
    $region15: #{net_forward.1} parent=1 // pred_check_branch
      %42 = sbr.rel (0) target = $region17
    $region16: #{net_forward.1} parent=1 // pred_region
      %s44 = ssub.s32 112, 112
      %45 = vsyncadd [#allocation9], %s44
      %s47 = sshll.u32 %s3, 4
      %s48 = int_to_ptr.vmem [resolvable:$true] %s47
      %50 = dma.vmem_to_smem %s48, 112, [#allocation10], [#allocation9]
    $region17: #{net_forward.1} parent=1 // pred_fallthru
      _
    // Predicated region
    $region18: #{net_forward.1} parent=1 // pred_check
      _
    $region19: #{net_forward.1} parent=1 // pred_check_branch
      %52 = sbr.rel (0) target = $region21
    $region20: #{net_forward.1} parent=1 // pred_region
      %s54 = ssub.s32 16, 16
      %55 = vsyncadd [#allocation12], %s54
      %s57 = sshll.u32 %s4, 4
      %s58 = int_to_ptr.vmem [resolvable:$true] %s57
      %60 = dma.vmem_to_smem %s58, 16, [#allocation11], [#allocation12]
    $region21: #{net_forward.1} parent=1 // pred_fallthru
      _
    // Predicated region
    $region22: #{net_forward.1} parent=1 // pred_check
      _
    $region23: #{net_forward.1} parent=1 // pred_check_branch
      %62 = sbr.rel (0) target = $region25
    $region24: #{net_forward.1} parent=1 // pred_region
      _
    $region25: #{net_forward.1} parent=1 // pred_fallthru
      _
    // Predicated region
    $region26: #{net_forward.1} parent=1 // pred_check
      _
    $region27: #{net_forward.1} parent=1 // pred_check_branch
      %64 = sbr.rel (0) target = $region29
    $region28: #{net_forward.1} parent=1 // pred_region
      _
    $region29: #{net_forward.1} parent=1 // pred_fallthru
      _
    // Predicated region
    $region30: #{net_forward.1} parent=1 // pred_check
      _
    $region31: #{net_forward.1} parent=1 // pred_check_branch
      %66 = sbr.rel (0) target = $region33
    $region32: #{net_forward.1} parent=1 // pred_region
      _
    $region33: #{net_forward.1} parent=1 // pred_fallthru
      _
    // Predicated region
    $region34: #{net_forward.1} parent=1 // pred_check
      _
    $region35: #{net_forward.1} parent=1 // pred_check_branch
      %68 = sbr.rel (0) target = $region37
    $region36: #{net_forward.1} parent=1 // pred_region
      _
    $region37: #{net_forward.1} parent=1 // pred_fallthru
      _
    // Predicated region
    $region38: #{net_forward.1} parent=1 // pred_check
      _
    $region39: #{net_forward.1} parent=1 // pred_check_branch
      %70 = sbr.rel (0) target = $region41
    $region40: #{net_forward.1} parent=1 // pred_region
      _
    $region41: #{net_forward.1} parent=1 // pred_fallthru
      _
    // Predicated region
    $region42: #{net_forward.1} parent=1 // pred_check
      _
    $region43: #{net_forward.1} parent=1 // pred_check_branch
      %72 = sbr.rel (0) target = $region45
    $region44: #{net_forward.1} parent=1 // pred_region
      _
    $region45: #{net_forward.1} parent=1 // pred_fallthru
      _
    // Predicated region
    $region46: #{net_forward.1} parent=1 // pred_check
      _
    $region47: #{net_forward.1} parent=1 // pred_check_branch
      %74 = sbr.rel (0) target = $region49
    $region48: #{net_forward.1} parent=1 // pred_region
      %75 = dma.done [#allocation7], 32
    $region49: #{net_forward.1} parent=1 // pred_fallthru
      _
    // Predicated region
    $region50: #{net_forward.1} parent=1 // pred_check
      _
    $region51: #{net_forward.1} parent=1 // pred_check_branch
      %77 = sbr.rel (0) target = $region53
    $region52: #{net_forward.1} parent=1 // pred_region
      %78 = dma.done [#allocation9], 16
    $region53: #{net_forward.1} parent=1 // pred_fallthru
      _
    // Predicated region
    $region54: #{net_forward.1} parent=1 // pred_check
      _
    $region55: #{net_forward.1} parent=1 // pred_check_branch
      %80 = sbr.rel (0) target = $region57
    $region56: #{net_forward.1} parent=1 // pred_region
      %81 = dma.done [#allocation9], 112
    $region57: #{net_forward.1} parent=1 // pred_fallthru
      _
    // Predicated region
    $region58: #{net_forward.1} parent=1 // pred_check
      _
    $region59: #{net_forward.1} parent=1 // pred_check_branch
      %83 = sbr.rel (0) target = $region61
    $region60: #{net_forward.1} parent=1 // pred_region
      %84 = dma.done [#allocation12], 16
    $region61: #{net_forward.1} parent=1 // pred_fallthru
      _
    %85 = sfence
    loop: start=0, step=1, limit=6
    $region62: #{net_forward.1} parent=1 // loop_pre_header
      _
    $region63: #{net_forward.1} parent=1 // loop_header
      %s87 = sphi 0, %s91
      %p88 = scmp.ge.s32.totalorder %s87, 6
    $region64: #{net_forward.1} parent=1 // loop_header_branch
      %90 = sbr.rel (%p88) target = $region68
    $region65: #{net_forward.1} parent=1 // loop_body
      loop: start=0, step=1, limit=5
      $region69: #{net_forward.1} parent=65 // loop_pre_header
        _
      $region70: #{net_forward.1} parent=65 // loop_header
        %s93 = sphi 0, %s97
        %p94 = scmp.ge.s32.totalorder %s93, 5
        %v98 = vphi 0.0, %v2377
        %v99 = vphi 0.0, %v2378
        %v100 = vphi 0.0, %v2379
        %v101 = vphi 0.0, %v2380
        %v102 = vphi 0.0, %v2381
        %v103 = vphi 0.0, %v2382
        %v104 = vphi 0.0, %v2383
        %v105 = vphi 0.0, %v2384
        %v106 = vphi 0.0, %v2385
        %v107 = vphi 0.0, %v2386
        %v108 = vphi 0.0, %v2387
        %v109 = vphi 0.0, %v2388
        %v110 = vphi 0.0, %v2389
        %v111 = vphi 0.0, %v2390
        %v112 = vphi 0.0, %v2391
        %v113 = vphi 0.0, %v2392
        %v114 = vphi 0.0, %v2393
        %v115 = vphi 0.0, %v2394
        %v116 = vphi 0.0, %v2395
        %v117 = vphi 0.0, %v2396
        %v118 = vphi 0.0, %v2397
        %v119 = vphi 0.0, %v2398
        %v120 = vphi 0.0, %v2399
        %v121 = vphi 0.0, %v2400
        %v122 = vphi 0.0, %v2401
        %v123 = vphi 0.0, %v2402
        %v124 = vphi 0.0, %v2403
        %v125 = vphi 0.0, %v2404
        %v126 = vphi 0.0, %v2405
        %v127 = vphi 0.0, %v2406
        %v128 = vphi 0.0, %v2407
        %v129 = vphi 0.0, %v2408
        %v130 = vphi 0.0, %v2409
        %v131 = vphi 0.0, %v2410
        %v132 = vphi 0.0, %v2411
        %v133 = vphi 0.0, %v2412
        %v134 = vphi 0.0, %v2413
        %v135 = vphi 0.0, %v2414
        %v136 = vphi 0.0, %v2415
        %v137 = vphi 0.0, %v2416
        %v138 = vphi 0.0, %v2417
        %v139 = vphi 0.0, %v2418
        %v140 = vphi 0.0, %v2419
        %v141 = vphi 0.0, %v2420
        %v142 = vphi 0.0, %v2421
        %v143 = vphi 0.0, %v2422
        %v144 = vphi 0.0, %v2423
        %v145 = vphi 0.0, %v2424
        %v146 = vphi 0.0, %v2425
        %v147 = vphi 0.0, %v2426
        %v148 = vphi 0.0, %v2427
        %v149 = vphi 0.0, %v2428
        %v150 = vphi 0.0, %v2429
        %v151 = vphi 0.0, %v2430
        %v152 = vphi 0.0, %v2431
        %v153 = vphi 0.0, %v2432
        %v154 = vphi 0.0, %v2433
        %v155 = vphi 0.0, %v2434
        %v156 = vphi 0.0, %v2435
        %v157 = vphi 0.0, %v2436
        %v158 = vphi 0.0, %v2437
        %v159 = vphi 0.0, %v2438
        %v160 = vphi 0.0, %v2439
        %v161 = vphi 0.0, %v2440
        %v162 = vphi 0.0, %v2441
        %v163 = vphi 0.0, %v2442
        %v164 = vphi 0.0, %v2443
        %v165 = vphi 0.0, %v2444
        %v166 = vphi 0.0, %v2445
        %v167 = vphi 0.0, %v2446
        %v168 = vphi 0.0, %v2447
        %v169 = vphi 0.0, %v2448
      $region71: #{net_forward.1} parent=65 // loop_header_branch
        %96 = sbr.rel (%p94) target = $region75
      $region72: #{net_forward.1} parent=65 // loop_body
        %s170 = smul.u32 %s93, 32
        %s171 = scalar_lea.vmem %s0, %s170
        %v172 = vld [vmem:[%s171] sm:$0xff]
        %v173 = vld [vmem:[%s171 + $0x8] sm:$0xff]
        %v174 = vld [vmem:[%s171 + $0x10] sm:$0xff]
        %v175 = vld [vmem:[%s171 + $0x18] sm:$0xf]
        %v176 = vld [vmem:[%s171 + $0x20] sm:$0xff]
        %v177 = vld [vmem:[%s171 + $0x28] sm:$0xff]
        %v178 = vld [vmem:[%s171 + $0x30] sm:$0xff]
        %v179 = vld [vmem:[%s171 + $0x38] sm:$0xf]
        %v180 = vld [vmem:[%s171 + $0x40] sm:$0xff]
        %v181 = vld [vmem:[%s171 + $0x48] sm:$0xff]
        %v182 = vld [vmem:[%s171 + $0x50] sm:$0xff]
        %v183 = vld [vmem:[%s171 + $0x58] sm:$0xf]
        %v184 = vld [vmem:[%s171 + $0x60] sm:$0xff]
        %v185 = vld [vmem:[%s171 + $0x68] sm:$0xff]
        %v186 = vld [vmem:[%s171 + $0x70] sm:$0xff]
        %v187 = vld [vmem:[%s171 + $0x78] sm:$0xf]
        %v188 = vld [vmem:[%s171 + $0x80] sm:$0xff]
        %v189 = vld [vmem:[%s171 + $0x88] sm:$0xff]
        %v190 = vld [vmem:[%s171 + $0x90] sm:$0xff]
        %v191 = vld [vmem:[%s171 + $0x98] sm:$0xf]
        %v192 = vld [vmem:[%s171 + $0xa0] sm:$0xff]
        %v193 = vld [vmem:[%s171 + $0xa8] sm:$0xff]
        %v194 = vld [vmem:[%s171 + $0xb0] sm:$0xff]
        %v195 = vld [vmem:[%s171 + $0xb8] sm:$0xf]
        %v196 = vld [vmem:[%s171 + $0xc0] sm:$0xff]
        %v197 = vld [vmem:[%s171 + $0xc8] sm:$0xff]
        %v198 = vld [vmem:[%s171 + $0xd0] sm:$0xff]
        %v199 = vld [vmem:[%s171 + $0xd8] sm:$0xf]
        %v200 = vld [vmem:[%s171 + $0xe0] sm:$0xff]
        %v201 = vld [vmem:[%s171 + $0xe8] sm:$0xff]
        %v202 = vld [vmem:[%s171 + $0xf0] sm:$0xff]
        %v203 = vld [vmem:[%s171 + $0xf8] sm:$0xf]
        %v204 = vld [vmem:[%s171 + $0x100] sm:$0xff]
        %v205 = vld [vmem:[%s171 + $0x108] sm:$0xff]
        %v206 = vld [vmem:[%s171 + $0x110] sm:$0xff]
        %v207 = vld [vmem:[%s171 + $0x118] sm:$0xf]
        %v208 = vld [vmem:[%s171 + $0x120] sm:$0xff]
        %v209 = vld [vmem:[%s171 + $0x128] sm:$0xff]
        %v210 = vld [vmem:[%s171 + $0x130] sm:$0xff]
        %v211 = vld [vmem:[%s171 + $0x138] sm:$0xf]
        %v212 = vld [vmem:[%s171 + $0x140] sm:$0xff]
        %v213 = vld [vmem:[%s171 + $0x148] sm:$0xff]
        %v214 = vld [vmem:[%s171 + $0x150] sm:$0xff]
        %v215 = vld [vmem:[%s171 + $0x158] sm:$0xf]
        %v216 = vld [vmem:[%s171 + $0x160] sm:$0xff]
        %v217 = vld [vmem:[%s171 + $0x168] sm:$0xff]
        %v218 = vld [vmem:[%s171 + $0x170] sm:$0xff]
        %v219 = vld [vmem:[%s171 + $0x178] sm:$0xf]
        %v220 = vld [vmem:[%s171 + $0x180] sm:$0xff]
        %v221 = vld [vmem:[%s171 + $0x188] sm:$0xff]
        %v222 = vld [vmem:[%s171 + $0x190] sm:$0xff]
        %v223 = vld [vmem:[%s171 + $0x198] sm:$0xf]
        %v224 = vld [vmem:[%s171 + $0x1a0] sm:$0xff]
        %v225 = vld [vmem:[%s171 + $0x1a8] sm:$0xff]
        %v226 = vld [vmem:[%s171 + $0x1b0] sm:$0xff]
        %v227 = vld [vmem:[%s171 + $0x1b8] sm:$0xf]
        %v228 = vld [vmem:[%s171 + $0x1c0] sm:$0xff]
        %v229 = vld [vmem:[%s171 + $0x1c8] sm:$0xff]
        %v230 = vld [vmem:[%s171 + $0x1d0] sm:$0xff]
        %v231 = vld [vmem:[%s171 + $0x1d8] sm:$0xf]
        %v232 = vld [vmem:[%s171 + $0x1e0] sm:$0xff]
        %v233 = vld [vmem:[%s171 + $0x1e8] sm:$0xff]
        %v234 = vld [vmem:[%s171 + $0x1f0] sm:$0xff]
        %v235 = vld [vmem:[%s171 + $0x1f8] sm:$0xf]
        %v236 = vld [vmem:[%s171 + $0x200] sm:$0xff]
        %v237 = vld [vmem:[%s171 + $0x208] sm:$0xff]
        %v238 = vld [vmem:[%s171 + $0x210] sm:$0xff]
        %v239 = vld [vmem:[%s171 + $0x218] sm:$0xf]
        %v240 = vld [vmem:[%s171 + $0x220] sm:$0xff]
        %v241 = vld [vmem:[%s171 + $0x228] sm:$0xff]
        %v242 = vld [vmem:[%s171 + $0x230] sm:$0xff]
        %v243 = vld [vmem:[%s171 + $0x238] sm:$0xf]
        %v244 = vld [vmem:[%s171 + $0x240] sm:$0xff]
        %v245 = vld [vmem:[%s171 + $0x248] sm:$0xff]
        %v246 = vld [vmem:[%s171 + $0x250] sm:$0xff]
        %v247 = vld [vmem:[%s171 + $0x258] sm:$0xf]
        %v248 = vld [vmem:[%s171 + $0x260] sm:$0xff]
        %v249 = vld [vmem:[%s171 + $0x268] sm:$0xff]
        %v250 = vld [vmem:[%s171 + $0x270] sm:$0xff]
        %v251 = vld [vmem:[%s171 + $0x278] sm:$0xf]
        %v252 = vld [vmem:[%s171 + $0x280] sm:$0xff]
        %v253 = vld [vmem:[%s171 + $0x288] sm:$0xff]
        %v254 = vld [vmem:[%s171 + $0x290] sm:$0xff]
        %v255 = vld [vmem:[%s171 + $0x298] sm:$0xf]
        %v256 = vld [vmem:[%s171 + $0x2a0] sm:$0xff]
        %v257 = vld [vmem:[%s171 + $0x2a8] sm:$0xff]
        %v258 = vld [vmem:[%s171 + $0x2b0] sm:$0xff]
        %v259 = vld [vmem:[%s171 + $0x2b8] sm:$0xf]
        %v260 = vld [vmem:[%s171 + $0x2c0] sm:$0xff]
        %v261 = vld [vmem:[%s171 + $0x2c8] sm:$0xff]
        %v262 = vld [vmem:[%s171 + $0x2d0] sm:$0xff]
        %v263 = vld [vmem:[%s171 + $0x2d8] sm:$0xf]
        %v264 = vld [vmem:[%s171 + $0x2e0] sm:$0xff]
        %v265 = vld [vmem:[%s171 + $0x2e8] sm:$0xff]
        %v266 = vld [vmem:[%s171 + $0x2f0] sm:$0xff]
        %v267 = vld [vmem:[%s171 + $0x2f8] sm:$0xf]
        %s268 = smul.u32 %s87, 25
        %s269 = smul.u32 %s93, 5
        %s270 = sadd.s32 %s268, %s269
        %s271 = sld [smem:[#allocation6 + %s270]]
        %v272 = vstv %s271
        %v273 = vmul.f32 %v172, %v272
        %v274 = vmul.f32 %v173, %v272
        %v275 = vmul.f32 %v174, %v272
        %v276 = vmul.f32 %v176, %v272
        %v277 = vmul.f32 %v177, %v272
        %v278 = vmul.f32 %v178, %v272
        %v279 = vmul.f32 %v180, %v272
        %v280 = vmul.f32 %v181, %v272
        %v281 = vmul.f32 %v182, %v272
        %v282 = vmul.f32 %v184, %v272
        %v283 = vmul.f32 %v185, %v272
        %v284 = vmul.f32 %v186, %v272
        %v285 = vmul.f32 %v188, %v272
        %v286 = vmul.f32 %v189, %v272
        %v287 = vmul.f32 %v190, %v272
        %v288 = vmul.f32 %v192, %v272
        %v289 = vmul.f32 %v193, %v272
        %v290 = vmul.f32 %v194, %v272
        %v291 = vmul.f32 %v196, %v272
        %v292 = vmul.f32 %v197, %v272
        %v293 = vmul.f32 %v198, %v272
        %v294 = vmul.f32 %v200, %v272
        %v295 = vmul.f32 %v201, %v272
        %v296 = vmul.f32 %v202, %v272
        %v297 = vmul.f32 %v204, %v272
        %v298 = vmul.f32 %v205, %v272
        %v299 = vmul.f32 %v206, %v272
        %v300 = vmul.f32 %v208, %v272
        %v301 = vmul.f32 %v209, %v272
        %v302 = vmul.f32 %v210, %v272
        %v303 = vmul.f32 %v212, %v272
        %v304 = vmul.f32 %v213, %v272
        %v305 = vmul.f32 %v214, %v272
        %v306 = vmul.f32 %v216, %v272
        %v307 = vmul.f32 %v217, %v272
        %v308 = vmul.f32 %v218, %v272
        %v309 = vmul.f32 %v220, %v272
        %v310 = vmul.f32 %v221, %v272
        %v311 = vmul.f32 %v222, %v272
        %v312 = vmul.f32 %v224, %v272
        %v313 = vmul.f32 %v225, %v272
        %v314 = vmul.f32 %v226, %v272
        %v315 = vmul.f32 %v228, %v272
        %v316 = vmul.f32 %v229, %v272
        %v317 = vmul.f32 %v230, %v272
        %v318 = vmul.f32 %v232, %v272
        %v319 = vmul.f32 %v233, %v272
        %v320 = vmul.f32 %v234, %v272
        %v321 = vmul.f32 %v236, %v272
        %v322 = vmul.f32 %v237, %v272
        %v323 = vmul.f32 %v238, %v272
        %v324 = vmul.f32 %v240, %v272
        %v325 = vmul.f32 %v241, %v272
        %v326 = vmul.f32 %v242, %v272
        %v327 = vmul.f32 %v244, %v272
        %v328 = vmul.f32 %v245, %v272
        %v329 = vmul.f32 %v246, %v272
        %v330 = vmul.f32 %v248, %v272
        %v331 = vmul.f32 %v249, %v272
        %v332 = vmul.f32 %v250, %v272
        %v333 = vmul.f32 %v252, %v272
        %v334 = vmul.f32 %v253, %v272
        %v335 = vmul.f32 %v254, %v272
        %v336 = vmul.f32 %v256, %v272
        %v337 = vmul.f32 %v257, %v272
        %v338 = vmul.f32 %v258, %v272
        %v339 = vmul.f32 %v260, %v272
        %v340 = vmul.f32 %v261, %v272
        %v341 = vmul.f32 %v262, %v272
        %v342 = vmul.f32 %v264, %v272
        %v343 = vmul.f32 %v265, %v272
        %v344 = vmul.f32 %v266, %v272
        %v345 = vadd.f32 %v98, %v273
        %v346 = vadd.f32 %v99, %v274
        %v347 = vadd.f32 %v100, %v275
        %v348 = vadd.f32 %v101, %v276
        %v349 = vadd.f32 %v102, %v277
        %v350 = vadd.f32 %v103, %v278
        %v351 = vadd.f32 %v104, %v279
        %v352 = vadd.f32 %v105, %v280
        %v353 = vadd.f32 %v106, %v281
        %v354 = vadd.f32 %v107, %v282
        %v355 = vadd.f32 %v108, %v283
        %v356 = vadd.f32 %v109, %v284
        %v357 = vadd.f32 %v110, %v285
        %v358 = vadd.f32 %v111, %v286
        %v359 = vadd.f32 %v112, %v287
        %v360 = vadd.f32 %v113, %v288
        %v361 = vadd.f32 %v114, %v289
        %v362 = vadd.f32 %v115, %v290
        %v363 = vadd.f32 %v116, %v291
        %v364 = vadd.f32 %v117, %v292
        %v365 = vadd.f32 %v118, %v293
        %v366 = vadd.f32 %v119, %v294
        %v367 = vadd.f32 %v120, %v295
        %v368 = vadd.f32 %v121, %v296
        %v369 = vadd.f32 %v122, %v297
        %v370 = vadd.f32 %v123, %v298
        %v371 = vadd.f32 %v124, %v299
        %v372 = vadd.f32 %v125, %v300
        %v373 = vadd.f32 %v126, %v301
        %v374 = vadd.f32 %v127, %v302
        %v375 = vadd.f32 %v128, %v303
        %v376 = vadd.f32 %v129, %v304
        %v377 = vadd.f32 %v130, %v305
        %v378 = vadd.f32 %v131, %v306
        %v379 = vadd.f32 %v132, %v307
        %v380 = vadd.f32 %v133, %v308
        %v381 = vadd.f32 %v134, %v309
        %v382 = vadd.f32 %v135, %v310
        %v383 = vadd.f32 %v136, %v311
        %v384 = vadd.f32 %v137, %v312
        %v385 = vadd.f32 %v138, %v313
        %v386 = vadd.f32 %v139, %v314
        %v387 = vadd.f32 %v140, %v315
        %v388 = vadd.f32 %v141, %v316
        %v389 = vadd.f32 %v142, %v317
        %v390 = vadd.f32 %v143, %v318
        %v391 = vadd.f32 %v144, %v319
        %v392 = vadd.f32 %v145, %v320
        %v393 = vadd.f32 %v146, %v321
        %v394 = vadd.f32 %v147, %v322
        %v395 = vadd.f32 %v148, %v323
        %v396 = vadd.f32 %v149, %v324
        %v397 = vadd.f32 %v150, %v325
        %v398 = vadd.f32 %v151, %v326
        %v399 = vadd.f32 %v152, %v327
        %v400 = vadd.f32 %v153, %v328
        %v401 = vadd.f32 %v154, %v329
        %v402 = vadd.f32 %v155, %v330
        %v403 = vadd.f32 %v156, %v331
        %v404 = vadd.f32 %v157, %v332
        %v405 = vadd.f32 %v158, %v333
        %v406 = vadd.f32 %v159, %v334
        %v407 = vadd.f32 %v160, %v335
        %v408 = vadd.f32 %v161, %v336
        %v409 = vadd.f32 %v162, %v337
        %v410 = vadd.f32 %v163, %v338
        %v411 = vadd.f32 %v164, %v339
        %v412 = vadd.f32 %v165, %v340
        %v413 = vadd.f32 %v166, %v341
        %v414 = vadd.f32 %v167, %v342
        %v415 = vadd.f32 %v168, %v343
        %v416 = vadd.f32 %v169, %v344
        %s417 = sadd.s32 %s270, 1
        %s418 = sld [smem:[#allocation6 + %s417]]
        %v419 = vstv %s418
        %v420 = vmul.f32 %v172, %v419
        %v421 = vmul.f32 %v173, %v419
        %v422 = vmul.f32 %v174, %v419
        %v423 = vmul.f32 %v175, %v419
        %v424 = vmul.f32 %v176, %v419
        %v425 = vmul.f32 %v177, %v419
        %v426 = vmul.f32 %v178, %v419
        %v427 = vmul.f32 %v179, %v419
        %v428 = vmul.f32 %v180, %v419
        %v429 = vmul.f32 %v181, %v419
        %v430 = vmul.f32 %v182, %v419
        %v431 = vmul.f32 %v183, %v419
        %v432 = vmul.f32 %v184, %v419
        %v433 = vmul.f32 %v185, %v419
        %v434 = vmul.f32 %v186, %v419
        %v435 = vmul.f32 %v187, %v419
        %v436 = vmul.f32 %v188, %v419
        %v437 = vmul.f32 %v189, %v419
        %v438 = vmul.f32 %v190, %v419
        %v439 = vmul.f32 %v191, %v419
        %v440 = vmul.f32 %v192, %v419
        %v441 = vmul.f32 %v193, %v419
        %v442 = vmul.f32 %v194, %v419
        %v443 = vmul.f32 %v195, %v419
        %v444 = vmul.f32 %v196, %v419
        %v445 = vmul.f32 %v197, %v419
        %v446 = vmul.f32 %v198, %v419
        %v447 = vmul.f32 %v199, %v419
        %v448 = vmul.f32 %v200, %v419
        %v449 = vmul.f32 %v201, %v419
        %v450 = vmul.f32 %v202, %v419
        %v451 = vmul.f32 %v203, %v419
        %v452 = vmul.f32 %v204, %v419
        %v453 = vmul.f32 %v205, %v419
        %v454 = vmul.f32 %v206, %v419
        %v455 = vmul.f32 %v207, %v419
        %v456 = vmul.f32 %v208, %v419
        %v457 = vmul.f32 %v209, %v419
        %v458 = vmul.f32 %v210, %v419
        %v459 = vmul.f32 %v211, %v419
        %v460 = vmul.f32 %v212, %v419
        %v461 = vmul.f32 %v213, %v419
        %v462 = vmul.f32 %v214, %v419
        %v463 = vmul.f32 %v215, %v419
        %v464 = vmul.f32 %v216, %v419
        %v465 = vmul.f32 %v217, %v419
        %v466 = vmul.f32 %v218, %v419
        %v467 = vmul.f32 %v219, %v419
        %v468 = vmul.f32 %v220, %v419
        %v469 = vmul.f32 %v221, %v419
        %v470 = vmul.f32 %v222, %v419
        %v471 = vmul.f32 %v223, %v419
        %v472 = vmul.f32 %v224, %v419
        %v473 = vmul.f32 %v225, %v419
        %v474 = vmul.f32 %v226, %v419
        %v475 = vmul.f32 %v227, %v419
        %v476 = vmul.f32 %v228, %v419
        %v477 = vmul.f32 %v229, %v419
        %v478 = vmul.f32 %v230, %v419
        %v479 = vmul.f32 %v231, %v419
        %v480 = vmul.f32 %v232, %v419
        %v481 = vmul.f32 %v233, %v419
        %v482 = vmul.f32 %v234, %v419
        %v483 = vmul.f32 %v235, %v419
        %v484 = vmul.f32 %v236, %v419
        %v485 = vmul.f32 %v237, %v419
        %v486 = vmul.f32 %v238, %v419
        %v487 = vmul.f32 %v239, %v419
        %v488 = vmul.f32 %v240, %v419
        %v489 = vmul.f32 %v241, %v419
        %v490 = vmul.f32 %v242, %v419
        %v491 = vmul.f32 %v243, %v419
        %v492 = vmul.f32 %v244, %v419
        %v493 = vmul.f32 %v245, %v419
        %v494 = vmul.f32 %v246, %v419
        %v495 = vmul.f32 %v247, %v419
        %v496 = vmul.f32 %v248, %v419
        %v497 = vmul.f32 %v249, %v419
        %v498 = vmul.f32 %v250, %v419
        %v499 = vmul.f32 %v251, %v419
        %v500 = vmul.f32 %v252, %v419
        %v501 = vmul.f32 %v253, %v419
        %v502 = vmul.f32 %v254, %v419
        %v503 = vmul.f32 %v255, %v419
        %v504 = vmul.f32 %v256, %v419
        %v505 = vmul.f32 %v257, %v419
        %v506 = vmul.f32 %v258, %v419
        %v507 = vmul.f32 %v259, %v419
        %v508 = vmul.f32 %v260, %v419
        %v509 = vmul.f32 %v261, %v419
        %v510 = vmul.f32 %v262, %v419
        %v511 = vmul.f32 %v263, %v419
        %v512 = vmul.f32 %v264, %v419
        %v513 = vmul.f32 %v265, %v419
        %v514 = vmul.f32 %v266, %v419
        %v515 = vmul.f32 %v267, %v419
        %vm612 = vcmask 1046528
        %v613 = vrot.slane %v420, 1
        %v614 = vrot.slane %v421, 1
        %v615 = vsel %vm612, %v613, %v614
        %v616 = vrot.slane %v422, 1
        %v617 = vsel %vm612, %v614, %v616
        %v618 = vrot.slane %v423, 1
        %v619 = vsel %vm612, %v616, %v618
        %v620 = vrot.slane %v424, 1
        %v621 = vrot.slane %v425, 1
        %v622 = vsel %vm612, %v620, %v621
        %v623 = vrot.slane %v426, 1
        %v624 = vsel %vm612, %v621, %v623
        %v625 = vrot.slane %v427, 1
        %v626 = vsel %vm612, %v623, %v625
        %v627 = vrot.slane %v428, 1
        %v628 = vrot.slane %v429, 1
        %v629 = vsel %vm612, %v627, %v628
        %v630 = vrot.slane %v430, 1
        %v631 = vsel %vm612, %v628, %v630
        %v632 = vrot.slane %v431, 1
        %v633 = vsel %vm612, %v630, %v632
        %v634 = vrot.slane %v432, 1
        %v635 = vrot.slane %v433, 1
        %v636 = vsel %vm612, %v634, %v635
        %v637 = vrot.slane %v434, 1
        %v638 = vsel %vm612, %v635, %v637
        %v639 = vrot.slane %v435, 1
        %v640 = vsel %vm612, %v637, %v639
        %v641 = vrot.slane %v436, 1
        %v642 = vrot.slane %v437, 1
        %v643 = vsel %vm612, %v641, %v642
        %v644 = vrot.slane %v438, 1
        %v645 = vsel %vm612, %v642, %v644
        %v646 = vrot.slane %v439, 1
        %v647 = vsel %vm612, %v644, %v646
        %v648 = vrot.slane %v440, 1
        %v649 = vrot.slane %v441, 1
        %v650 = vsel %vm612, %v648, %v649
        %v651 = vrot.slane %v442, 1
        %v652 = vsel %vm612, %v649, %v651
        %v653 = vrot.slane %v443, 1
        %v654 = vsel %vm612, %v651, %v653
        %v655 = vrot.slane %v444, 1
        %v656 = vrot.slane %v445, 1
        %v657 = vsel %vm612, %v655, %v656
        %v658 = vrot.slane %v446, 1
        %v659 = vsel %vm612, %v656, %v658
        %v660 = vrot.slane %v447, 1
        %v661 = vsel %vm612, %v658, %v660
        %v662 = vrot.slane %v448, 1
        %v663 = vrot.slane %v449, 1
        %v664 = vsel %vm612, %v662, %v663
        %v665 = vrot.slane %v450, 1
        %v666 = vsel %vm612, %v663, %v665
        %v667 = vrot.slane %v451, 1
        %v668 = vsel %vm612, %v665, %v667
        %v669 = vrot.slane %v452, 1
        %v670 = vrot.slane %v453, 1
        %v671 = vsel %vm612, %v669, %v670
        %v672 = vrot.slane %v454, 1
        %v673 = vsel %vm612, %v670, %v672
        %v674 = vrot.slane %v455, 1
        %v675 = vsel %vm612, %v672, %v674
        %v676 = vrot.slane %v456, 1
        %v677 = vrot.slane %v457, 1
        %v678 = vsel %vm612, %v676, %v677
        %v679 = vrot.slane %v458, 1
        %v680 = vsel %vm612, %v677, %v679
        %v681 = vrot.slane %v459, 1
        %v682 = vsel %vm612, %v679, %v681
        %v683 = vrot.slane %v460, 1
        %v684 = vrot.slane %v461, 1
        %v685 = vsel %vm612, %v683, %v684
        %v686 = vrot.slane %v462, 1
        %v687 = vsel %vm612, %v684, %v686
        %v688 = vrot.slane %v463, 1
        %v689 = vsel %vm612, %v686, %v688
        %v690 = vrot.slane %v464, 1
        %v691 = vrot.slane %v465, 1
        %v692 = vsel %vm612, %v690, %v691
        %v693 = vrot.slane %v466, 1
        %v694 = vsel %vm612, %v691, %v693
        %v695 = vrot.slane %v467, 1
        %v696 = vsel %vm612, %v693, %v695
        %v697 = vrot.slane %v468, 1
        %v698 = vrot.slane %v469, 1
        %v699 = vsel %vm612, %v697, %v698
        %v700 = vrot.slane %v470, 1
        %v701 = vsel %vm612, %v698, %v700
        %v702 = vrot.slane %v471, 1
        %v703 = vsel %vm612, %v700, %v702
        %v704 = vrot.slane %v472, 1
        %v705 = vrot.slane %v473, 1
        %v706 = vsel %vm612, %v704, %v705
        %v707 = vrot.slane %v474, 1
        %v708 = vsel %vm612, %v705, %v707
        %v709 = vrot.slane %v475, 1
        %v710 = vsel %vm612, %v707, %v709
        %v711 = vrot.slane %v476, 1
        %v712 = vrot.slane %v477, 1
        %v713 = vsel %vm612, %v711, %v712
        %v714 = vrot.slane %v478, 1
        %v715 = vsel %vm612, %v712, %v714
        %v716 = vrot.slane %v479, 1
        %v717 = vsel %vm612, %v714, %v716
        %v718 = vrot.slane %v480, 1
        %v719 = vrot.slane %v481, 1
        %v720 = vsel %vm612, %v718, %v719
        %v721 = vrot.slane %v482, 1
        %v722 = vsel %vm612, %v719, %v721
        %v723 = vrot.slane %v483, 1
        %v724 = vsel %vm612, %v721, %v723
        %v725 = vrot.slane %v484, 1
        %v726 = vrot.slane %v485, 1
        %v727 = vsel %vm612, %v725, %v726
        %v728 = vrot.slane %v486, 1
        %v729 = vsel %vm612, %v726, %v728
        %v730 = vrot.slane %v487, 1
        %v731 = vsel %vm612, %v728, %v730
        %v732 = vrot.slane %v488, 1
        %v733 = vrot.slane %v489, 1
        %v734 = vsel %vm612, %v732, %v733
        %v735 = vrot.slane %v490, 1
        %v736 = vsel %vm612, %v733, %v735
        %v737 = vrot.slane %v491, 1
        %v738 = vsel %vm612, %v735, %v737
        %v739 = vrot.slane %v492, 1
        %v740 = vrot.slane %v493, 1
        %v741 = vsel %vm612, %v739, %v740
        %v742 = vrot.slane %v494, 1
        %v743 = vsel %vm612, %v740, %v742
        %v744 = vrot.slane %v495, 1
        %v745 = vsel %vm612, %v742, %v744
        %v746 = vrot.slane %v496, 1
        %v747 = vrot.slane %v497, 1
        %v748 = vsel %vm612, %v746, %v747
        %v749 = vrot.slane %v498, 1
        %v750 = vsel %vm612, %v747, %v749
        %v751 = vrot.slane %v499, 1
        %v752 = vsel %vm612, %v749, %v751
        %v753 = vrot.slane %v500, 1
        %v754 = vrot.slane %v501, 1
        %v755 = vsel %vm612, %v753, %v754
        %v756 = vrot.slane %v502, 1
        %v757 = vsel %vm612, %v754, %v756
        %v758 = vrot.slane %v503, 1
        %v759 = vsel %vm612, %v756, %v758
        %v760 = vrot.slane %v504, 1
        %v761 = vrot.slane %v505, 1
        %v762 = vsel %vm612, %v760, %v761
        %v763 = vrot.slane %v506, 1
        %v764 = vsel %vm612, %v761, %v763
        %v765 = vrot.slane %v507, 1
        %v766 = vsel %vm612, %v763, %v765
        %v767 = vrot.slane %v508, 1
        %v768 = vrot.slane %v509, 1
        %v769 = vsel %vm612, %v767, %v768
        %v770 = vrot.slane %v510, 1
        %v771 = vsel %vm612, %v768, %v770
        %v772 = vrot.slane %v511, 1
        %v773 = vsel %vm612, %v770, %v772
        %v774 = vrot.slane %v512, 1
        %v775 = vrot.slane %v513, 1
        %v776 = vsel %vm612, %v774, %v775
        %v777 = vrot.slane %v514, 1
        %v778 = vsel %vm612, %v775, %v777
        %v779 = vrot.slane %v515, 1
        %v780 = vsel %vm612, %v777, %v779
        %v853 = vadd.f32 %v345, %v615
        %v854 = vadd.f32 %v346, %v617
        %v855 = vadd.f32 %v347, %v619
        %v856 = vadd.f32 %v348, %v622
        %v857 = vadd.f32 %v349, %v624
        %v858 = vadd.f32 %v350, %v626
        %v859 = vadd.f32 %v351, %v629
        %v860 = vadd.f32 %v352, %v631
        %v861 = vadd.f32 %v353, %v633
        %v862 = vadd.f32 %v354, %v636
        %v863 = vadd.f32 %v355, %v638
        %v864 = vadd.f32 %v356, %v640
        %v865 = vadd.f32 %v357, %v643
        %v866 = vadd.f32 %v358, %v645
        %v867 = vadd.f32 %v359, %v647
        %v868 = vadd.f32 %v360, %v650
        %v869 = vadd.f32 %v361, %v652
        %v870 = vadd.f32 %v362, %v654
        %v871 = vadd.f32 %v363, %v657
        %v872 = vadd.f32 %v364, %v659
        %v873 = vadd.f32 %v365, %v661
        %v874 = vadd.f32 %v366, %v664
        %v875 = vadd.f32 %v367, %v666
        %v876 = vadd.f32 %v368, %v668
        %v877 = vadd.f32 %v369, %v671
        %v878 = vadd.f32 %v370, %v673
        %v879 = vadd.f32 %v371, %v675
        %v880 = vadd.f32 %v372, %v678
        %v881 = vadd.f32 %v373, %v680
        %v882 = vadd.f32 %v374, %v682
        %v883 = vadd.f32 %v375, %v685
        %v884 = vadd.f32 %v376, %v687
        %v885 = vadd.f32 %v377, %v689
        %v886 = vadd.f32 %v378, %v692
        %v887 = vadd.f32 %v379, %v694
        %v888 = vadd.f32 %v380, %v696
        %v889 = vadd.f32 %v381, %v699
        %v890 = vadd.f32 %v382, %v701
        %v891 = vadd.f32 %v383, %v703
        %v892 = vadd.f32 %v384, %v706
        %v893 = vadd.f32 %v385, %v708
        %v894 = vadd.f32 %v386, %v710
        %v895 = vadd.f32 %v387, %v713
        %v896 = vadd.f32 %v388, %v715
        %v897 = vadd.f32 %v389, %v717
        %v898 = vadd.f32 %v390, %v720
        %v899 = vadd.f32 %v391, %v722
        %v900 = vadd.f32 %v392, %v724
        %v901 = vadd.f32 %v393, %v727
        %v902 = vadd.f32 %v394, %v729
        %v903 = vadd.f32 %v395, %v731
        %v904 = vadd.f32 %v396, %v734
        %v905 = vadd.f32 %v397, %v736
        %v906 = vadd.f32 %v398, %v738
        %v907 = vadd.f32 %v399, %v741
        %v908 = vadd.f32 %v400, %v743
        %v909 = vadd.f32 %v401, %v745
        %v910 = vadd.f32 %v402, %v748
        %v911 = vadd.f32 %v403, %v750
        %v912 = vadd.f32 %v404, %v752
        %v913 = vadd.f32 %v405, %v755
        %v914 = vadd.f32 %v406, %v757
        %v915 = vadd.f32 %v407, %v759
        %v916 = vadd.f32 %v408, %v762
        %v917 = vadd.f32 %v409, %v764
        %v918 = vadd.f32 %v410, %v766
        %v919 = vadd.f32 %v411, %v769
        %v920 = vadd.f32 %v412, %v771
        %v921 = vadd.f32 %v413, %v773
        %v922 = vadd.f32 %v414, %v776
        %v923 = vadd.f32 %v415, %v778
        %v924 = vadd.f32 %v416, %v780
        %s925 = sadd.s32 %s270, 2
        %s926 = sld [smem:[#allocation6 + %s925]]
        %v927 = vstv %s926
        %v928 = vmul.f32 %v172, %v927
        %v929 = vmul.f32 %v173, %v927
        %v930 = vmul.f32 %v174, %v927
        %v931 = vmul.f32 %v175, %v927
        %v932 = vmul.f32 %v176, %v927
        %v933 = vmul.f32 %v177, %v927
        %v934 = vmul.f32 %v178, %v927
        %v935 = vmul.f32 %v179, %v927
        %v936 = vmul.f32 %v180, %v927
        %v937 = vmul.f32 %v181, %v927
        %v938 = vmul.f32 %v182, %v927
        %v939 = vmul.f32 %v183, %v927
        %v940 = vmul.f32 %v184, %v927
        %v941 = vmul.f32 %v185, %v927
        %v942 = vmul.f32 %v186, %v927
        %v943 = vmul.f32 %v187, %v927
        %v944 = vmul.f32 %v188, %v927
        %v945 = vmul.f32 %v189, %v927
        %v946 = vmul.f32 %v190, %v927
        %v947 = vmul.f32 %v191, %v927
        %v948 = vmul.f32 %v192, %v927
        %v949 = vmul.f32 %v193, %v927
        %v950 = vmul.f32 %v194, %v927
        %v951 = vmul.f32 %v195, %v927
        %v952 = vmul.f32 %v196, %v927
        %v953 = vmul.f32 %v197, %v927
        %v954 = vmul.f32 %v198, %v927
        %v955 = vmul.f32 %v199, %v927
        %v956 = vmul.f32 %v200, %v927
        %v957 = vmul.f32 %v201, %v927
        %v958 = vmul.f32 %v202, %v927
        %v959 = vmul.f32 %v203, %v927
        %v960 = vmul.f32 %v204, %v927
        %v961 = vmul.f32 %v205, %v927
        %v962 = vmul.f32 %v206, %v927
        %v963 = vmul.f32 %v207, %v927
        %v964 = vmul.f32 %v208, %v927
        %v965 = vmul.f32 %v209, %v927
        %v966 = vmul.f32 %v210, %v927
        %v967 = vmul.f32 %v211, %v927
        %v968 = vmul.f32 %v212, %v927
        %v969 = vmul.f32 %v213, %v927
        %v970 = vmul.f32 %v214, %v927
        %v971 = vmul.f32 %v215, %v927
        %v972 = vmul.f32 %v216, %v927
        %v973 = vmul.f32 %v217, %v927
        %v974 = vmul.f32 %v218, %v927
        %v975 = vmul.f32 %v219, %v927
        %v976 = vmul.f32 %v220, %v927
        %v977 = vmul.f32 %v221, %v927
        %v978 = vmul.f32 %v222, %v927
        %v979 = vmul.f32 %v223, %v927
        %v980 = vmul.f32 %v224, %v927
        %v981 = vmul.f32 %v225, %v927
        %v982 = vmul.f32 %v226, %v927
        %v983 = vmul.f32 %v227, %v927
        %v984 = vmul.f32 %v228, %v927
        %v985 = vmul.f32 %v229, %v927
        %v986 = vmul.f32 %v230, %v927
        %v987 = vmul.f32 %v231, %v927
        %v988 = vmul.f32 %v232, %v927
        %v989 = vmul.f32 %v233, %v927
        %v990 = vmul.f32 %v234, %v927
        %v991 = vmul.f32 %v235, %v927
        %v992 = vmul.f32 %v236, %v927
        %v993 = vmul.f32 %v237, %v927
        %v994 = vmul.f32 %v238, %v927
        %v995 = vmul.f32 %v239, %v927
        %v996 = vmul.f32 %v240, %v927
        %v997 = vmul.f32 %v241, %v927
        %v998 = vmul.f32 %v242, %v927
        %v999 = vmul.f32 %v243, %v927
        %v1000 = vmul.f32 %v244, %v927
        %v1001 = vmul.f32 %v245, %v927
        %v1002 = vmul.f32 %v246, %v927
        %v1003 = vmul.f32 %v247, %v927
        %v1004 = vmul.f32 %v248, %v927
        %v1005 = vmul.f32 %v249, %v927
        %v1006 = vmul.f32 %v250, %v927
        %v1007 = vmul.f32 %v251, %v927
        %v1008 = vmul.f32 %v252, %v927
        %v1009 = vmul.f32 %v253, %v927
        %v1010 = vmul.f32 %v254, %v927
        %v1011 = vmul.f32 %v255, %v927
        %v1012 = vmul.f32 %v256, %v927
        %v1013 = vmul.f32 %v257, %v927
        %v1014 = vmul.f32 %v258, %v927
        %v1015 = vmul.f32 %v259, %v927
        %v1016 = vmul.f32 %v260, %v927
        %v1017 = vmul.f32 %v261, %v927
        %v1018 = vmul.f32 %v262, %v927
        %v1019 = vmul.f32 %v263, %v927
        %v1020 = vmul.f32 %v264, %v927
        %v1021 = vmul.f32 %v265, %v927
        %v1022 = vmul.f32 %v266, %v927
        %v1023 = vmul.f32 %v267, %v927
        %vm1120 = vcmask 1045504
        %v1121 = vrot.slane %v928, 2
        %v1122 = vrot.slane %v929, 2
        %v1123 = vsel %vm1120, %v1121, %v1122
        %v1124 = vrot.slane %v930, 2
        %v1125 = vsel %vm1120, %v1122, %v1124
        %v1126 = vrot.slane %v931, 2
        %v1127 = vsel %vm1120, %v1124, %v1126
        %v1128 = vrot.slane %v932, 2
        %v1129 = vrot.slane %v933, 2
        %v1130 = vsel %vm1120, %v1128, %v1129
        %v1131 = vrot.slane %v934, 2
        %v1132 = vsel %vm1120, %v1129, %v1131
        %v1133 = vrot.slane %v935, 2
        %v1134 = vsel %vm1120, %v1131, %v1133
        %v1135 = vrot.slane %v936, 2
        %v1136 = vrot.slane %v937, 2
        %v1137 = vsel %vm1120, %v1135, %v1136
        %v1138 = vrot.slane %v938, 2
        %v1139 = vsel %vm1120, %v1136, %v1138
        %v1140 = vrot.slane %v939, 2
        %v1141 = vsel %vm1120, %v1138, %v1140
        %v1142 = vrot.slane %v940, 2
        %v1143 = vrot.slane %v941, 2
        %v1144 = vsel %vm1120, %v1142, %v1143
        %v1145 = vrot.slane %v942, 2
        %v1146 = vsel %vm1120, %v1143, %v1145
        %v1147 = vrot.slane %v943, 2
        %v1148 = vsel %vm1120, %v1145, %v1147
        %v1149 = vrot.slane %v944, 2
        %v1150 = vrot.slane %v945, 2
        %v1151 = vsel %vm1120, %v1149, %v1150
        %v1152 = vrot.slane %v946, 2
        %v1153 = vsel %vm1120, %v1150, %v1152
        %v1154 = vrot.slane %v947, 2
        %v1155 = vsel %vm1120, %v1152, %v1154
        %v1156 = vrot.slane %v948, 2
        %v1157 = vrot.slane %v949, 2
        %v1158 = vsel %vm1120, %v1156, %v1157
        %v1159 = vrot.slane %v950, 2
        %v1160 = vsel %vm1120, %v1157, %v1159
        %v1161 = vrot.slane %v951, 2
        %v1162 = vsel %vm1120, %v1159, %v1161
        %v1163 = vrot.slane %v952, 2
        %v1164 = vrot.slane %v953, 2
        %v1165 = vsel %vm1120, %v1163, %v1164
        %v1166 = vrot.slane %v954, 2
        %v1167 = vsel %vm1120, %v1164, %v1166
        %v1168 = vrot.slane %v955, 2
        %v1169 = vsel %vm1120, %v1166, %v1168
        %v1170 = vrot.slane %v956, 2
        %v1171 = vrot.slane %v957, 2
        %v1172 = vsel %vm1120, %v1170, %v1171
        %v1173 = vrot.slane %v958, 2
        %v1174 = vsel %vm1120, %v1171, %v1173
        %v1175 = vrot.slane %v959, 2
        %v1176 = vsel %vm1120, %v1173, %v1175
        %v1177 = vrot.slane %v960, 2
        %v1178 = vrot.slane %v961, 2
        %v1179 = vsel %vm1120, %v1177, %v1178
        %v1180 = vrot.slane %v962, 2
        %v1181 = vsel %vm1120, %v1178, %v1180
        %v1182 = vrot.slane %v963, 2
        %v1183 = vsel %vm1120, %v1180, %v1182
        %v1184 = vrot.slane %v964, 2
        %v1185 = vrot.slane %v965, 2
        %v1186 = vsel %vm1120, %v1184, %v1185
        %v1187 = vrot.slane %v966, 2
        %v1188 = vsel %vm1120, %v1185, %v1187
        %v1189 = vrot.slane %v967, 2
        %v1190 = vsel %vm1120, %v1187, %v1189
        %v1191 = vrot.slane %v968, 2
        %v1192 = vrot.slane %v969, 2
        %v1193 = vsel %vm1120, %v1191, %v1192
        %v1194 = vrot.slane %v970, 2
        %v1195 = vsel %vm1120, %v1192, %v1194
        %v1196 = vrot.slane %v971, 2
        %v1197 = vsel %vm1120, %v1194, %v1196
        %v1198 = vrot.slane %v972, 2
        %v1199 = vrot.slane %v973, 2
        %v1200 = vsel %vm1120, %v1198, %v1199
        %v1201 = vrot.slane %v974, 2
        %v1202 = vsel %vm1120, %v1199, %v1201
        %v1203 = vrot.slane %v975, 2
        %v1204 = vsel %vm1120, %v1201, %v1203
        %v1205 = vrot.slane %v976, 2
        %v1206 = vrot.slane %v977, 2
        %v1207 = vsel %vm1120, %v1205, %v1206
        %v1208 = vrot.slane %v978, 2
        %v1209 = vsel %vm1120, %v1206, %v1208
        %v1210 = vrot.slane %v979, 2
        %v1211 = vsel %vm1120, %v1208, %v1210
        %v1212 = vrot.slane %v980, 2
        %v1213 = vrot.slane %v981, 2
        %v1214 = vsel %vm1120, %v1212, %v1213
        %v1215 = vrot.slane %v982, 2
        %v1216 = vsel %vm1120, %v1213, %v1215
        %v1217 = vrot.slane %v983, 2
        %v1218 = vsel %vm1120, %v1215, %v1217
        %v1219 = vrot.slane %v984, 2
        %v1220 = vrot.slane %v985, 2
        %v1221 = vsel %vm1120, %v1219, %v1220
        %v1222 = vrot.slane %v986, 2
        %v1223 = vsel %vm1120, %v1220, %v1222
        %v1224 = vrot.slane %v987, 2
        %v1225 = vsel %vm1120, %v1222, %v1224
        %v1226 = vrot.slane %v988, 2
        %v1227 = vrot.slane %v989, 2
        %v1228 = vsel %vm1120, %v1226, %v1227
        %v1229 = vrot.slane %v990, 2
        %v1230 = vsel %vm1120, %v1227, %v1229
        %v1231 = vrot.slane %v991, 2
        %v1232 = vsel %vm1120, %v1229, %v1231
        %v1233 = vrot.slane %v992, 2
        %v1234 = vrot.slane %v993, 2
        %v1235 = vsel %vm1120, %v1233, %v1234
        %v1236 = vrot.slane %v994, 2
        %v1237 = vsel %vm1120, %v1234, %v1236
        %v1238 = vrot.slane %v995, 2
        %v1239 = vsel %vm1120, %v1236, %v1238
        %v1240 = vrot.slane %v996, 2
        %v1241 = vrot.slane %v997, 2
        %v1242 = vsel %vm1120, %v1240, %v1241
        %v1243 = vrot.slane %v998, 2
        %v1244 = vsel %vm1120, %v1241, %v1243
        %v1245 = vrot.slane %v999, 2
        %v1246 = vsel %vm1120, %v1243, %v1245
        %v1247 = vrot.slane %v1000, 2
        %v1248 = vrot.slane %v1001, 2
        %v1249 = vsel %vm1120, %v1247, %v1248
        %v1250 = vrot.slane %v1002, 2
        %v1251 = vsel %vm1120, %v1248, %v1250
        %v1252 = vrot.slane %v1003, 2
        %v1253 = vsel %vm1120, %v1250, %v1252
        %v1254 = vrot.slane %v1004, 2
        %v1255 = vrot.slane %v1005, 2
        %v1256 = vsel %vm1120, %v1254, %v1255
        %v1257 = vrot.slane %v1006, 2
        %v1258 = vsel %vm1120, %v1255, %v1257
        %v1259 = vrot.slane %v1007, 2
        %v1260 = vsel %vm1120, %v1257, %v1259
        %v1261 = vrot.slane %v1008, 2
        %v1262 = vrot.slane %v1009, 2
        %v1263 = vsel %vm1120, %v1261, %v1262
        %v1264 = vrot.slane %v1010, 2
        %v1265 = vsel %vm1120, %v1262, %v1264
        %v1266 = vrot.slane %v1011, 2
        %v1267 = vsel %vm1120, %v1264, %v1266
        %v1268 = vrot.slane %v1012, 2
        %v1269 = vrot.slane %v1013, 2
        %v1270 = vsel %vm1120, %v1268, %v1269
        %v1271 = vrot.slane %v1014, 2
        %v1272 = vsel %vm1120, %v1269, %v1271
        %v1273 = vrot.slane %v1015, 2
        %v1274 = vsel %vm1120, %v1271, %v1273
        %v1275 = vrot.slane %v1016, 2
        %v1276 = vrot.slane %v1017, 2
        %v1277 = vsel %vm1120, %v1275, %v1276
        %v1278 = vrot.slane %v1018, 2
        %v1279 = vsel %vm1120, %v1276, %v1278
        %v1280 = vrot.slane %v1019, 2
        %v1281 = vsel %vm1120, %v1278, %v1280
        %v1282 = vrot.slane %v1020, 2
        %v1283 = vrot.slane %v1021, 2
        %v1284 = vsel %vm1120, %v1282, %v1283
        %v1285 = vrot.slane %v1022, 2
        %v1286 = vsel %vm1120, %v1283, %v1285
        %v1287 = vrot.slane %v1023, 2
        %v1288 = vsel %vm1120, %v1285, %v1287
        %v1361 = vadd.f32 %v853, %v1123
        %v1362 = vadd.f32 %v854, %v1125
        %v1363 = vadd.f32 %v855, %v1127
        %v1364 = vadd.f32 %v856, %v1130
        %v1365 = vadd.f32 %v857, %v1132
        %v1366 = vadd.f32 %v858, %v1134
        %v1367 = vadd.f32 %v859, %v1137
        %v1368 = vadd.f32 %v860, %v1139
        %v1369 = vadd.f32 %v861, %v1141
        %v1370 = vadd.f32 %v862, %v1144
        %v1371 = vadd.f32 %v863, %v1146
        %v1372 = vadd.f32 %v864, %v1148
        %v1373 = vadd.f32 %v865, %v1151
        %v1374 = vadd.f32 %v866, %v1153
        %v1375 = vadd.f32 %v867, %v1155
        %v1376 = vadd.f32 %v868, %v1158
        %v1377 = vadd.f32 %v869, %v1160
        %v1378 = vadd.f32 %v870, %v1162
        %v1379 = vadd.f32 %v871, %v1165
        %v1380 = vadd.f32 %v872, %v1167
        %v1381 = vadd.f32 %v873, %v1169
        %v1382 = vadd.f32 %v874, %v1172
        %v1383 = vadd.f32 %v875, %v1174
        %v1384 = vadd.f32 %v876, %v1176
        %v1385 = vadd.f32 %v877, %v1179
        %v1386 = vadd.f32 %v878, %v1181
        %v1387 = vadd.f32 %v879, %v1183
        %v1388 = vadd.f32 %v880, %v1186
        %v1389 = vadd.f32 %v881, %v1188
        %v1390 = vadd.f32 %v882, %v1190
        %v1391 = vadd.f32 %v883, %v1193
        %v1392 = vadd.f32 %v884, %v1195
        %v1393 = vadd.f32 %v885, %v1197
        %v1394 = vadd.f32 %v886, %v1200
        %v1395 = vadd.f32 %v887, %v1202
        %v1396 = vadd.f32 %v888, %v1204
        %v1397 = vadd.f32 %v889, %v1207
        %v1398 = vadd.f32 %v890, %v1209
        %v1399 = vadd.f32 %v891, %v1211
        %v1400 = vadd.f32 %v892, %v1214
        %v1401 = vadd.f32 %v893, %v1216
        %v1402 = vadd.f32 %v894, %v1218
        %v1403 = vadd.f32 %v895, %v1221
        %v1404 = vadd.f32 %v896, %v1223
        %v1405 = vadd.f32 %v897, %v1225
        %v1406 = vadd.f32 %v898, %v1228
        %v1407 = vadd.f32 %v899, %v1230
        %v1408 = vadd.f32 %v900, %v1232
        %v1409 = vadd.f32 %v901, %v1235
        %v1410 = vadd.f32 %v902, %v1237
        %v1411 = vadd.f32 %v903, %v1239
        %v1412 = vadd.f32 %v904, %v1242
        %v1413 = vadd.f32 %v905, %v1244
        %v1414 = vadd.f32 %v906, %v1246
        %v1415 = vadd.f32 %v907, %v1249
        %v1416 = vadd.f32 %v908, %v1251
        %v1417 = vadd.f32 %v909, %v1253
        %v1418 = vadd.f32 %v910, %v1256
        %v1419 = vadd.f32 %v911, %v1258
        %v1420 = vadd.f32 %v912, %v1260
        %v1421 = vadd.f32 %v913, %v1263
        %v1422 = vadd.f32 %v914, %v1265
        %v1423 = vadd.f32 %v915, %v1267
        %v1424 = vadd.f32 %v916, %v1270
        %v1425 = vadd.f32 %v917, %v1272
        %v1426 = vadd.f32 %v918, %v1274
        %v1427 = vadd.f32 %v919, %v1277
        %v1428 = vadd.f32 %v920, %v1279
        %v1429 = vadd.f32 %v921, %v1281
        %v1430 = vadd.f32 %v922, %v1284
        %v1431 = vadd.f32 %v923, %v1286
        %v1432 = vadd.f32 %v924, %v1288
        %s1433 = sadd.s32 %s270, 3
        %s1434 = sld [smem:[#allocation6 + %s1433]]
        %v1435 = vstv %s1434
        %v1436 = vmul.f32 %v172, %v1435
        %v1437 = vmul.f32 %v173, %v1435
        %v1438 = vmul.f32 %v174, %v1435
        %v1439 = vmul.f32 %v175, %v1435
        %v1440 = vmul.f32 %v176, %v1435
        %v1441 = vmul.f32 %v177, %v1435
        %v1442 = vmul.f32 %v178, %v1435
        %v1443 = vmul.f32 %v179, %v1435
        %v1444 = vmul.f32 %v180, %v1435
        %v1445 = vmul.f32 %v181, %v1435
        %v1446 = vmul.f32 %v182, %v1435
        %v1447 = vmul.f32 %v183, %v1435
        %v1448 = vmul.f32 %v184, %v1435
        %v1449 = vmul.f32 %v185, %v1435
        %v1450 = vmul.f32 %v186, %v1435
        %v1451 = vmul.f32 %v187, %v1435
        %v1452 = vmul.f32 %v188, %v1435
        %v1453 = vmul.f32 %v189, %v1435
        %v1454 = vmul.f32 %v190, %v1435
        %v1455 = vmul.f32 %v191, %v1435
        %v1456 = vmul.f32 %v192, %v1435
        %v1457 = vmul.f32 %v193, %v1435
        %v1458 = vmul.f32 %v194, %v1435
        %v1459 = vmul.f32 %v195, %v1435
        %v1460 = vmul.f32 %v196, %v1435
        %v1461 = vmul.f32 %v197, %v1435
        %v1462 = vmul.f32 %v198, %v1435
        %v1463 = vmul.f32 %v199, %v1435
        %v1464 = vmul.f32 %v200, %v1435
        %v1465 = vmul.f32 %v201, %v1435
        %v1466 = vmul.f32 %v202, %v1435
        %v1467 = vmul.f32 %v203, %v1435
        %v1468 = vmul.f32 %v204, %v1435
        %v1469 = vmul.f32 %v205, %v1435
        %v1470 = vmul.f32 %v206, %v1435
        %v1471 = vmul.f32 %v207, %v1435
        %v1472 = vmul.f32 %v208, %v1435
        %v1473 = vmul.f32 %v209, %v1435
        %v1474 = vmul.f32 %v210, %v1435
        %v1475 = vmul.f32 %v211, %v1435
        %v1476 = vmul.f32 %v212, %v1435
        %v1477 = vmul.f32 %v213, %v1435
        %v1478 = vmul.f32 %v214, %v1435
        %v1479 = vmul.f32 %v215, %v1435
        %v1480 = vmul.f32 %v216, %v1435
        %v1481 = vmul.f32 %v217, %v1435
        %v1482 = vmul.f32 %v218, %v1435
        %v1483 = vmul.f32 %v219, %v1435
        %v1484 = vmul.f32 %v220, %v1435
        %v1485 = vmul.f32 %v221, %v1435
        %v1486 = vmul.f32 %v222, %v1435
        %v1487 = vmul.f32 %v223, %v1435
        %v1488 = vmul.f32 %v224, %v1435
        %v1489 = vmul.f32 %v225, %v1435
        %v1490 = vmul.f32 %v226, %v1435
        %v1491 = vmul.f32 %v227, %v1435
        %v1492 = vmul.f32 %v228, %v1435
        %v1493 = vmul.f32 %v229, %v1435
        %v1494 = vmul.f32 %v230, %v1435
        %v1495 = vmul.f32 %v231, %v1435
        %v1496 = vmul.f32 %v232, %v1435
        %v1497 = vmul.f32 %v233, %v1435
        %v1498 = vmul.f32 %v234, %v1435
        %v1499 = vmul.f32 %v235, %v1435
        %v1500 = vmul.f32 %v236, %v1435
        %v1501 = vmul.f32 %v237, %v1435
        %v1502 = vmul.f32 %v238, %v1435
        %v1503 = vmul.f32 %v239, %v1435
        %v1504 = vmul.f32 %v240, %v1435
        %v1505 = vmul.f32 %v241, %v1435
        %v1506 = vmul.f32 %v242, %v1435
        %v1507 = vmul.f32 %v243, %v1435
        %v1508 = vmul.f32 %v244, %v1435
        %v1509 = vmul.f32 %v245, %v1435
        %v1510 = vmul.f32 %v246, %v1435
        %v1511 = vmul.f32 %v247, %v1435
        %v1512 = vmul.f32 %v248, %v1435
        %v1513 = vmul.f32 %v249, %v1435
        %v1514 = vmul.f32 %v250, %v1435
        %v1515 = vmul.f32 %v251, %v1435
        %v1516 = vmul.f32 %v252, %v1435
        %v1517 = vmul.f32 %v253, %v1435
        %v1518 = vmul.f32 %v254, %v1435
        %v1519 = vmul.f32 %v255, %v1435
        %v1520 = vmul.f32 %v256, %v1435
        %v1521 = vmul.f32 %v257, %v1435
        %v1522 = vmul.f32 %v258, %v1435
        %v1523 = vmul.f32 %v259, %v1435
        %v1524 = vmul.f32 %v260, %v1435
        %v1525 = vmul.f32 %v261, %v1435
        %v1526 = vmul.f32 %v262, %v1435
        %v1527 = vmul.f32 %v263, %v1435
        %v1528 = vmul.f32 %v264, %v1435
        %v1529 = vmul.f32 %v265, %v1435
        %v1530 = vmul.f32 %v266, %v1435
        %v1531 = vmul.f32 %v267, %v1435
        %vm1628 = vcmask 1044480
        %v1629 = vrot.slane %v1436, 3
        %v1630 = vrot.slane %v1437, 3
        %v1631 = vsel %vm1628, %v1629, %v1630
        %v1632 = vrot.slane %v1438, 3
        %v1633 = vsel %vm1628, %v1630, %v1632
        %v1634 = vrot.slane %v1439, 3
        %v1635 = vsel %vm1628, %v1632, %v1634
        %v1636 = vrot.slane %v1440, 3
        %v1637 = vrot.slane %v1441, 3
        %v1638 = vsel %vm1628, %v1636, %v1637
        %v1639 = vrot.slane %v1442, 3
        %v1640 = vsel %vm1628, %v1637, %v1639
        %v1641 = vrot.slane %v1443, 3
        %v1642 = vsel %vm1628, %v1639, %v1641
        %v1643 = vrot.slane %v1444, 3
        %v1644 = vrot.slane %v1445, 3
        %v1645 = vsel %vm1628, %v1643, %v1644
        %v1646 = vrot.slane %v1446, 3
        %v1647 = vsel %vm1628, %v1644, %v1646
        %v1648 = vrot.slane %v1447, 3
        %v1649 = vsel %vm1628, %v1646, %v1648
        %v1650 = vrot.slane %v1448, 3
        %v1651 = vrot.slane %v1449, 3
        %v1652 = vsel %vm1628, %v1650, %v1651
        %v1653 = vrot.slane %v1450, 3
        %v1654 = vsel %vm1628, %v1651, %v1653
        %v1655 = vrot.slane %v1451, 3
        %v1656 = vsel %vm1628, %v1653, %v1655
        %v1657 = vrot.slane %v1452, 3
        %v1658 = vrot.slane %v1453, 3
        %v1659 = vsel %vm1628, %v1657, %v1658
        %v1660 = vrot.slane %v1454, 3
        %v1661 = vsel %vm1628, %v1658, %v1660
        %v1662 = vrot.slane %v1455, 3
        %v1663 = vsel %vm1628, %v1660, %v1662
        %v1664 = vrot.slane %v1456, 3
        %v1665 = vrot.slane %v1457, 3
        %v1666 = vsel %vm1628, %v1664, %v1665
        %v1667 = vrot.slane %v1458, 3
        %v1668 = vsel %vm1628, %v1665, %v1667
        %v1669 = vrot.slane %v1459, 3
        %v1670 = vsel %vm1628, %v1667, %v1669
        %v1671 = vrot.slane %v1460, 3
        %v1672 = vrot.slane %v1461, 3
        %v1673 = vsel %vm1628, %v1671, %v1672
        %v1674 = vrot.slane %v1462, 3
        %v1675 = vsel %vm1628, %v1672, %v1674
        %v1676 = vrot.slane %v1463, 3
        %v1677 = vsel %vm1628, %v1674, %v1676
        %v1678 = vrot.slane %v1464, 3
        %v1679 = vrot.slane %v1465, 3
        %v1680 = vsel %vm1628, %v1678, %v1679
        %v1681 = vrot.slane %v1466, 3
        %v1682 = vsel %vm1628, %v1679, %v1681
        %v1683 = vrot.slane %v1467, 3
        %v1684 = vsel %vm1628, %v1681, %v1683
        %v1685 = vrot.slane %v1468, 3
        %v1686 = vrot.slane %v1469, 3
        %v1687 = vsel %vm1628, %v1685, %v1686
        %v1688 = vrot.slane %v1470, 3
        %v1689 = vsel %vm1628, %v1686, %v1688
        %v1690 = vrot.slane %v1471, 3
        %v1691 = vsel %vm1628, %v1688, %v1690
        %v1692 = vrot.slane %v1472, 3
        %v1693 = vrot.slane %v1473, 3
        %v1694 = vsel %vm1628, %v1692, %v1693
        %v1695 = vrot.slane %v1474, 3
        %v1696 = vsel %vm1628, %v1693, %v1695
        %v1697 = vrot.slane %v1475, 3
        %v1698 = vsel %vm1628, %v1695, %v1697
        %v1699 = vrot.slane %v1476, 3
        %v1700 = vrot.slane %v1477, 3
        %v1701 = vsel %vm1628, %v1699, %v1700
        %v1702 = vrot.slane %v1478, 3
        %v1703 = vsel %vm1628, %v1700, %v1702
        %v1704 = vrot.slane %v1479, 3
        %v1705 = vsel %vm1628, %v1702, %v1704
        %v1706 = vrot.slane %v1480, 3
        %v1707 = vrot.slane %v1481, 3
        %v1708 = vsel %vm1628, %v1706, %v1707
        %v1709 = vrot.slane %v1482, 3
        %v1710 = vsel %vm1628, %v1707, %v1709
        %v1711 = vrot.slane %v1483, 3
        %v1712 = vsel %vm1628, %v1709, %v1711
        %v1713 = vrot.slane %v1484, 3
        %v1714 = vrot.slane %v1485, 3
        %v1715 = vsel %vm1628, %v1713, %v1714
        %v1716 = vrot.slane %v1486, 3
        %v1717 = vsel %vm1628, %v1714, %v1716
        %v1718 = vrot.slane %v1487, 3
        %v1719 = vsel %vm1628, %v1716, %v1718
        %v1720 = vrot.slane %v1488, 3
        %v1721 = vrot.slane %v1489, 3
        %v1722 = vsel %vm1628, %v1720, %v1721
        %v1723 = vrot.slane %v1490, 3
        %v1724 = vsel %vm1628, %v1721, %v1723
        %v1725 = vrot.slane %v1491, 3
        %v1726 = vsel %vm1628, %v1723, %v1725
        %v1727 = vrot.slane %v1492, 3
        %v1728 = vrot.slane %v1493, 3
        %v1729 = vsel %vm1628, %v1727, %v1728
        %v1730 = vrot.slane %v1494, 3
        %v1731 = vsel %vm1628, %v1728, %v1730
        %v1732 = vrot.slane %v1495, 3
        %v1733 = vsel %vm1628, %v1730, %v1732
        %v1734 = vrot.slane %v1496, 3
        %v1735 = vrot.slane %v1497, 3
        %v1736 = vsel %vm1628, %v1734, %v1735
        %v1737 = vrot.slane %v1498, 3
        %v1738 = vsel %vm1628, %v1735, %v1737
        %v1739 = vrot.slane %v1499, 3
        %v1740 = vsel %vm1628, %v1737, %v1739
        %v1741 = vrot.slane %v1500, 3
        %v1742 = vrot.slane %v1501, 3
        %v1743 = vsel %vm1628, %v1741, %v1742
        %v1744 = vrot.slane %v1502, 3
        %v1745 = vsel %vm1628, %v1742, %v1744
        %v1746 = vrot.slane %v1503, 3
        %v1747 = vsel %vm1628, %v1744, %v1746
        %v1748 = vrot.slane %v1504, 3
        %v1749 = vrot.slane %v1505, 3
        %v1750 = vsel %vm1628, %v1748, %v1749
        %v1751 = vrot.slane %v1506, 3
        %v1752 = vsel %vm1628, %v1749, %v1751
        %v1753 = vrot.slane %v1507, 3
        %v1754 = vsel %vm1628, %v1751, %v1753
        %v1755 = vrot.slane %v1508, 3
        %v1756 = vrot.slane %v1509, 3
        %v1757 = vsel %vm1628, %v1755, %v1756
        %v1758 = vrot.slane %v1510, 3
        %v1759 = vsel %vm1628, %v1756, %v1758
        %v1760 = vrot.slane %v1511, 3
        %v1761 = vsel %vm1628, %v1758, %v1760
        %v1762 = vrot.slane %v1512, 3
        %v1763 = vrot.slane %v1513, 3
        %v1764 = vsel %vm1628, %v1762, %v1763
        %v1765 = vrot.slane %v1514, 3
        %v1766 = vsel %vm1628, %v1763, %v1765
        %v1767 = vrot.slane %v1515, 3
        %v1768 = vsel %vm1628, %v1765, %v1767
        %v1769 = vrot.slane %v1516, 3
        %v1770 = vrot.slane %v1517, 3
        %v1771 = vsel %vm1628, %v1769, %v1770
        %v1772 = vrot.slane %v1518, 3
        %v1773 = vsel %vm1628, %v1770, %v1772
        %v1774 = vrot.slane %v1519, 3
        %v1775 = vsel %vm1628, %v1772, %v1774
        %v1776 = vrot.slane %v1520, 3
        %v1777 = vrot.slane %v1521, 3
        %v1778 = vsel %vm1628, %v1776, %v1777
        %v1779 = vrot.slane %v1522, 3
        %v1780 = vsel %vm1628, %v1777, %v1779
        %v1781 = vrot.slane %v1523, 3
        %v1782 = vsel %vm1628, %v1779, %v1781
        %v1783 = vrot.slane %v1524, 3
        %v1784 = vrot.slane %v1525, 3
        %v1785 = vsel %vm1628, %v1783, %v1784
        %v1786 = vrot.slane %v1526, 3
        %v1787 = vsel %vm1628, %v1784, %v1786
        %v1788 = vrot.slane %v1527, 3
        %v1789 = vsel %vm1628, %v1786, %v1788
        %v1790 = vrot.slane %v1528, 3
        %v1791 = vrot.slane %v1529, 3
        %v1792 = vsel %vm1628, %v1790, %v1791
        %v1793 = vrot.slane %v1530, 3
        %v1794 = vsel %vm1628, %v1791, %v1793
        %v1795 = vrot.slane %v1531, 3
        %v1796 = vsel %vm1628, %v1793, %v1795
        %v1869 = vadd.f32 %v1361, %v1631
        %v1870 = vadd.f32 %v1362, %v1633
        %v1871 = vadd.f32 %v1363, %v1635
        %v1872 = vadd.f32 %v1364, %v1638
        %v1873 = vadd.f32 %v1365, %v1640
        %v1874 = vadd.f32 %v1366, %v1642
        %v1875 = vadd.f32 %v1367, %v1645
        %v1876 = vadd.f32 %v1368, %v1647
        %v1877 = vadd.f32 %v1369, %v1649
        %v1878 = vadd.f32 %v1370, %v1652
        %v1879 = vadd.f32 %v1371, %v1654
        %v1880 = vadd.f32 %v1372, %v1656
        %v1881 = vadd.f32 %v1373, %v1659
        %v1882 = vadd.f32 %v1374, %v1661
        %v1883 = vadd.f32 %v1375, %v1663
        %v1884 = vadd.f32 %v1376, %v1666
        %v1885 = vadd.f32 %v1377, %v1668
        %v1886 = vadd.f32 %v1378, %v1670
        %v1887 = vadd.f32 %v1379, %v1673
        %v1888 = vadd.f32 %v1380, %v1675
        %v1889 = vadd.f32 %v1381, %v1677
        %v1890 = vadd.f32 %v1382, %v1680
        %v1891 = vadd.f32 %v1383, %v1682
        %v1892 = vadd.f32 %v1384, %v1684
        %v1893 = vadd.f32 %v1385, %v1687
        %v1894 = vadd.f32 %v1386, %v1689
        %v1895 = vadd.f32 %v1387, %v1691
        %v1896 = vadd.f32 %v1388, %v1694
        %v1897 = vadd.f32 %v1389, %v1696
        %v1898 = vadd.f32 %v1390, %v1698
        %v1899 = vadd.f32 %v1391, %v1701
        %v1900 = vadd.f32 %v1392, %v1703
        %v1901 = vadd.f32 %v1393, %v1705
        %v1902 = vadd.f32 %v1394, %v1708
        %v1903 = vadd.f32 %v1395, %v1710
        %v1904 = vadd.f32 %v1396, %v1712
        %v1905 = vadd.f32 %v1397, %v1715
        %v1906 = vadd.f32 %v1398, %v1717
        %v1907 = vadd.f32 %v1399, %v1719
        %v1908 = vadd.f32 %v1400, %v1722
        %v1909 = vadd.f32 %v1401, %v1724
        %v1910 = vadd.f32 %v1402, %v1726
        %v1911 = vadd.f32 %v1403, %v1729
        %v1912 = vadd.f32 %v1404, %v1731
        %v1913 = vadd.f32 %v1405, %v1733
        %v1914 = vadd.f32 %v1406, %v1736
        %v1915 = vadd.f32 %v1407, %v1738
        %v1916 = vadd.f32 %v1408, %v1740
        %v1917 = vadd.f32 %v1409, %v1743
        %v1918 = vadd.f32 %v1410, %v1745
        %v1919 = vadd.f32 %v1411, %v1747
        %v1920 = vadd.f32 %v1412, %v1750
        %v1921 = vadd.f32 %v1413, %v1752
        %v1922 = vadd.f32 %v1414, %v1754
        %v1923 = vadd.f32 %v1415, %v1757
        %v1924 = vadd.f32 %v1416, %v1759
        %v1925 = vadd.f32 %v1417, %v1761
        %v1926 = vadd.f32 %v1418, %v1764
        %v1927 = vadd.f32 %v1419, %v1766
        %v1928 = vadd.f32 %v1420, %v1768
        %v1929 = vadd.f32 %v1421, %v1771
        %v1930 = vadd.f32 %v1422, %v1773
        %v1931 = vadd.f32 %v1423, %v1775
        %v1932 = vadd.f32 %v1424, %v1778
        %v1933 = vadd.f32 %v1425, %v1780
        %v1934 = vadd.f32 %v1426, %v1782
        %v1935 = vadd.f32 %v1427, %v1785
        %v1936 = vadd.f32 %v1428, %v1787
        %v1937 = vadd.f32 %v1429, %v1789
        %v1938 = vadd.f32 %v1430, %v1792
        %v1939 = vadd.f32 %v1431, %v1794
        %v1940 = vadd.f32 %v1432, %v1796
        %s1941 = sadd.s32 %s270, 4
        %s1942 = sld [smem:[#allocation6 + %s1941]]
        %v1943 = vstv %s1942
        %v1944 = vmul.f32 %v172, %v1943
        %v1945 = vmul.f32 %v173, %v1943
        %v1946 = vmul.f32 %v174, %v1943
        %v1947 = vmul.f32 %v175, %v1943
        %v1948 = vmul.f32 %v176, %v1943
        %v1949 = vmul.f32 %v177, %v1943
        %v1950 = vmul.f32 %v178, %v1943
        %v1951 = vmul.f32 %v179, %v1943
        %v1952 = vmul.f32 %v180, %v1943
        %v1953 = vmul.f32 %v181, %v1943
        %v1954 = vmul.f32 %v182, %v1943
        %v1955 = vmul.f32 %v183, %v1943
        %v1956 = vmul.f32 %v184, %v1943
        %v1957 = vmul.f32 %v185, %v1943
        %v1958 = vmul.f32 %v186, %v1943
        %v1959 = vmul.f32 %v187, %v1943
        %v1960 = vmul.f32 %v188, %v1943
        %v1961 = vmul.f32 %v189, %v1943
        %v1962 = vmul.f32 %v190, %v1943
        %v1963 = vmul.f32 %v191, %v1943
        %v1964 = vmul.f32 %v192, %v1943
        %v1965 = vmul.f32 %v193, %v1943
        %v1966 = vmul.f32 %v194, %v1943
        %v1967 = vmul.f32 %v195, %v1943
        %v1968 = vmul.f32 %v196, %v1943
        %v1969 = vmul.f32 %v197, %v1943
        %v1970 = vmul.f32 %v198, %v1943
        %v1971 = vmul.f32 %v199, %v1943
        %v1972 = vmul.f32 %v200, %v1943
        %v1973 = vmul.f32 %v201, %v1943
        %v1974 = vmul.f32 %v202, %v1943
        %v1975 = vmul.f32 %v203, %v1943
        %v1976 = vmul.f32 %v204, %v1943
        %v1977 = vmul.f32 %v205, %v1943
        %v1978 = vmul.f32 %v206, %v1943
        %v1979 = vmul.f32 %v207, %v1943
        %v1980 = vmul.f32 %v208, %v1943
        %v1981 = vmul.f32 %v209, %v1943
        %v1982 = vmul.f32 %v210, %v1943
        %v1983 = vmul.f32 %v211, %v1943
        %v1984 = vmul.f32 %v212, %v1943
        %v1985 = vmul.f32 %v213, %v1943
        %v1986 = vmul.f32 %v214, %v1943
        %v1987 = vmul.f32 %v215, %v1943
        %v1988 = vmul.f32 %v216, %v1943
        %v1989 = vmul.f32 %v217, %v1943
        %v1990 = vmul.f32 %v218, %v1943
        %v1991 = vmul.f32 %v219, %v1943
        %v1992 = vmul.f32 %v220, %v1943
        %v1993 = vmul.f32 %v221, %v1943
        %v1994 = vmul.f32 %v222, %v1943
        %v1995 = vmul.f32 %v223, %v1943
        %v1996 = vmul.f32 %v224, %v1943
        %v1997 = vmul.f32 %v225, %v1943
        %v1998 = vmul.f32 %v226, %v1943
        %v1999 = vmul.f32 %v227, %v1943
        %v2000 = vmul.f32 %v228, %v1943
        %v2001 = vmul.f32 %v229, %v1943
        %v2002 = vmul.f32 %v230, %v1943
        %v2003 = vmul.f32 %v231, %v1943
        %v2004 = vmul.f32 %v232, %v1943
        %v2005 = vmul.f32 %v233, %v1943
        %v2006 = vmul.f32 %v234, %v1943
        %v2007 = vmul.f32 %v235, %v1943
        %v2008 = vmul.f32 %v236, %v1943
        %v2009 = vmul.f32 %v237, %v1943
        %v2010 = vmul.f32 %v238, %v1943
        %v2011 = vmul.f32 %v239, %v1943
        %v2012 = vmul.f32 %v240, %v1943
        %v2013 = vmul.f32 %v241, %v1943
        %v2014 = vmul.f32 %v242, %v1943
        %v2015 = vmul.f32 %v243, %v1943
        %v2016 = vmul.f32 %v244, %v1943
        %v2017 = vmul.f32 %v245, %v1943
        %v2018 = vmul.f32 %v246, %v1943
        %v2019 = vmul.f32 %v247, %v1943
        %v2020 = vmul.f32 %v248, %v1943
        %v2021 = vmul.f32 %v249, %v1943
        %v2022 = vmul.f32 %v250, %v1943
        %v2023 = vmul.f32 %v251, %v1943
        %v2024 = vmul.f32 %v252, %v1943
        %v2025 = vmul.f32 %v253, %v1943
        %v2026 = vmul.f32 %v254, %v1943
        %v2027 = vmul.f32 %v255, %v1943
        %v2028 = vmul.f32 %v256, %v1943
        %v2029 = vmul.f32 %v257, %v1943
        %v2030 = vmul.f32 %v258, %v1943
        %v2031 = vmul.f32 %v259, %v1943
        %v2032 = vmul.f32 %v260, %v1943
        %v2033 = vmul.f32 %v261, %v1943
        %v2034 = vmul.f32 %v262, %v1943
        %v2035 = vmul.f32 %v263, %v1943
        %v2036 = vmul.f32 %v264, %v1943
        %v2037 = vmul.f32 %v265, %v1943
        %v2038 = vmul.f32 %v266, %v1943
        %v2039 = vmul.f32 %v267, %v1943
        %vm2136 = vcmask 1043456
        %v2137 = vrot.slane %v1944, 4
        %v2138 = vrot.slane %v1945, 4
        %v2139 = vsel %vm2136, %v2137, %v2138
        %v2140 = vrot.slane %v1946, 4
        %v2141 = vsel %vm2136, %v2138, %v2140
        %v2142 = vrot.slane %v1947, 4
        %v2143 = vsel %vm2136, %v2140, %v2142
        %v2144 = vrot.slane %v1948, 4
        %v2145 = vrot.slane %v1949, 4
        %v2146 = vsel %vm2136, %v2144, %v2145
        %v2147 = vrot.slane %v1950, 4
        %v2148 = vsel %vm2136, %v2145, %v2147
        %v2149 = vrot.slane %v1951, 4
        %v2150 = vsel %vm2136, %v2147, %v2149
        %v2151 = vrot.slane %v1952, 4
        %v2152 = vrot.slane %v1953, 4
        %v2153 = vsel %vm2136, %v2151, %v2152
        %v2154 = vrot.slane %v1954, 4
        %v2155 = vsel %vm2136, %v2152, %v2154
        %v2156 = vrot.slane %v1955, 4
        %v2157 = vsel %vm2136, %v2154, %v2156
        %v2158 = vrot.slane %v1956, 4
        %v2159 = vrot.slane %v1957, 4
        %v2160 = vsel %vm2136, %v2158, %v2159
        %v2161 = vrot.slane %v1958, 4
        %v2162 = vsel %vm2136, %v2159, %v2161
        %v2163 = vrot.slane %v1959, 4
        %v2164 = vsel %vm2136, %v2161, %v2163
        %v2165 = vrot.slane %v1960, 4
        %v2166 = vrot.slane %v1961, 4
        %v2167 = vsel %vm2136, %v2165, %v2166
        %v2168 = vrot.slane %v1962, 4
        %v2169 = vsel %vm2136, %v2166, %v2168
        %v2170 = vrot.slane %v1963, 4
        %v2171 = vsel %vm2136, %v2168, %v2170
        %v2172 = vrot.slane %v1964, 4
        %v2173 = vrot.slane %v1965, 4
        %v2174 = vsel %vm2136, %v2172, %v2173
        %v2175 = vrot.slane %v1966, 4
        %v2176 = vsel %vm2136, %v2173, %v2175
        %v2177 = vrot.slane %v1967, 4
        %v2178 = vsel %vm2136, %v2175, %v2177
        %v2179 = vrot.slane %v1968, 4
        %v2180 = vrot.slane %v1969, 4
        %v2181 = vsel %vm2136, %v2179, %v2180
        %v2182 = vrot.slane %v1970, 4
        %v2183 = vsel %vm2136, %v2180, %v2182
        %v2184 = vrot.slane %v1971, 4
        %v2185 = vsel %vm2136, %v2182, %v2184
        %v2186 = vrot.slane %v1972, 4
        %v2187 = vrot.slane %v1973, 4
        %v2188 = vsel %vm2136, %v2186, %v2187
        %v2189 = vrot.slane %v1974, 4
        %v2190 = vsel %vm2136, %v2187, %v2189
        %v2191 = vrot.slane %v1975, 4
        %v2192 = vsel %vm2136, %v2189, %v2191
        %v2193 = vrot.slane %v1976, 4
        %v2194 = vrot.slane %v1977, 4
        %v2195 = vsel %vm2136, %v2193, %v2194
        %v2196 = vrot.slane %v1978, 4
        %v2197 = vsel %vm2136, %v2194, %v2196
        %v2198 = vrot.slane %v1979, 4
        %v2199 = vsel %vm2136, %v2196, %v2198
        %v2200 = vrot.slane %v1980, 4
        %v2201 = vrot.slane %v1981, 4
        %v2202 = vsel %vm2136, %v2200, %v2201
        %v2203 = vrot.slane %v1982, 4
        %v2204 = vsel %vm2136, %v2201, %v2203
        %v2205 = vrot.slane %v1983, 4
        %v2206 = vsel %vm2136, %v2203, %v2205
        %v2207 = vrot.slane %v1984, 4
        %v2208 = vrot.slane %v1985, 4
        %v2209 = vsel %vm2136, %v2207, %v2208
        %v2210 = vrot.slane %v1986, 4
        %v2211 = vsel %vm2136, %v2208, %v2210
        %v2212 = vrot.slane %v1987, 4
        %v2213 = vsel %vm2136, %v2210, %v2212
        %v2214 = vrot.slane %v1988, 4
        %v2215 = vrot.slane %v1989, 4
        %v2216 = vsel %vm2136, %v2214, %v2215
        %v2217 = vrot.slane %v1990, 4
        %v2218 = vsel %vm2136, %v2215, %v2217
        %v2219 = vrot.slane %v1991, 4
        %v2220 = vsel %vm2136, %v2217, %v2219
        %v2221 = vrot.slane %v1992, 4
        %v2222 = vrot.slane %v1993, 4
        %v2223 = vsel %vm2136, %v2221, %v2222
        %v2224 = vrot.slane %v1994, 4
        %v2225 = vsel %vm2136, %v2222, %v2224
        %v2226 = vrot.slane %v1995, 4
        %v2227 = vsel %vm2136, %v2224, %v2226
        %v2228 = vrot.slane %v1996, 4
        %v2229 = vrot.slane %v1997, 4
        %v2230 = vsel %vm2136, %v2228, %v2229
        %v2231 = vrot.slane %v1998, 4
        %v2232 = vsel %vm2136, %v2229, %v2231
        %v2233 = vrot.slane %v1999, 4
        %v2234 = vsel %vm2136, %v2231, %v2233
        %v2235 = vrot.slane %v2000, 4
        %v2236 = vrot.slane %v2001, 4
        %v2237 = vsel %vm2136, %v2235, %v2236
        %v2238 = vrot.slane %v2002, 4
        %v2239 = vsel %vm2136, %v2236, %v2238
        %v2240 = vrot.slane %v2003, 4
        %v2241 = vsel %vm2136, %v2238, %v2240
        %v2242 = vrot.slane %v2004, 4
        %v2243 = vrot.slane %v2005, 4
        %v2244 = vsel %vm2136, %v2242, %v2243
        %v2245 = vrot.slane %v2006, 4
        %v2246 = vsel %vm2136, %v2243, %v2245
        %v2247 = vrot.slane %v2007, 4
        %v2248 = vsel %vm2136, %v2245, %v2247
        %v2249 = vrot.slane %v2008, 4
        %v2250 = vrot.slane %v2009, 4
        %v2251 = vsel %vm2136, %v2249, %v2250
        %v2252 = vrot.slane %v2010, 4
        %v2253 = vsel %vm2136, %v2250, %v2252
        %v2254 = vrot.slane %v2011, 4
        %v2255 = vsel %vm2136, %v2252, %v2254
        %v2256 = vrot.slane %v2012, 4
        %v2257 = vrot.slane %v2013, 4
        %v2258 = vsel %vm2136, %v2256, %v2257
        %v2259 = vrot.slane %v2014, 4
        %v2260 = vsel %vm2136, %v2257, %v2259
        %v2261 = vrot.slane %v2015, 4
        %v2262 = vsel %vm2136, %v2259, %v2261
        %v2263 = vrot.slane %v2016, 4
        %v2264 = vrot.slane %v2017, 4
        %v2265 = vsel %vm2136, %v2263, %v2264
        %v2266 = vrot.slane %v2018, 4
        %v2267 = vsel %vm2136, %v2264, %v2266
        %v2268 = vrot.slane %v2019, 4
        %v2269 = vsel %vm2136, %v2266, %v2268
        %v2270 = vrot.slane %v2020, 4
        %v2271 = vrot.slane %v2021, 4
        %v2272 = vsel %vm2136, %v2270, %v2271
        %v2273 = vrot.slane %v2022, 4
        %v2274 = vsel %vm2136, %v2271, %v2273
        %v2275 = vrot.slane %v2023, 4
        %v2276 = vsel %vm2136, %v2273, %v2275
        %v2277 = vrot.slane %v2024, 4
        %v2278 = vrot.slane %v2025, 4
        %v2279 = vsel %vm2136, %v2277, %v2278
        %v2280 = vrot.slane %v2026, 4
        %v2281 = vsel %vm2136, %v2278, %v2280
        %v2282 = vrot.slane %v2027, 4
        %v2283 = vsel %vm2136, %v2280, %v2282
        %v2284 = vrot.slane %v2028, 4
        %v2285 = vrot.slane %v2029, 4
        %v2286 = vsel %vm2136, %v2284, %v2285
        %v2287 = vrot.slane %v2030, 4
        %v2288 = vsel %vm2136, %v2285, %v2287
        %v2289 = vrot.slane %v2031, 4
        %v2290 = vsel %vm2136, %v2287, %v2289
        %v2291 = vrot.slane %v2032, 4
        %v2292 = vrot.slane %v2033, 4
        %v2293 = vsel %vm2136, %v2291, %v2292
        %v2294 = vrot.slane %v2034, 4
        %v2295 = vsel %vm2136, %v2292, %v2294
        %v2296 = vrot.slane %v2035, 4
        %v2297 = vsel %vm2136, %v2294, %v2296
        %v2298 = vrot.slane %v2036, 4
        %v2299 = vrot.slane %v2037, 4
        %v2300 = vsel %vm2136, %v2298, %v2299
        %v2301 = vrot.slane %v2038, 4
        %v2302 = vsel %vm2136, %v2299, %v2301
        %v2303 = vrot.slane %v2039, 4
        %v2304 = vsel %vm2136, %v2301, %v2303
        %v2377 = vadd.f32 %v1869, %v2139
        %v2378 = vadd.f32 %v1870, %v2141
        %v2379 = vadd.f32 %v1871, %v2143
        %v2380 = vadd.f32 %v1872, %v2146
        %v2381 = vadd.f32 %v1873, %v2148
        %v2382 = vadd.f32 %v1874, %v2150
        %v2383 = vadd.f32 %v1875, %v2153
        %v2384 = vadd.f32 %v1876, %v2155
        %v2385 = vadd.f32 %v1877, %v2157
        %v2386 = vadd.f32 %v1878, %v2160
        %v2387 = vadd.f32 %v1879, %v2162
        %v2388 = vadd.f32 %v1880, %v2164
        %v2389 = vadd.f32 %v1881, %v2167
        %v2390 = vadd.f32 %v1882, %v2169
        %v2391 = vadd.f32 %v1883, %v2171
        %v2392 = vadd.f32 %v1884, %v2174
        %v2393 = vadd.f32 %v1885, %v2176
        %v2394 = vadd.f32 %v1886, %v2178
        %v2395 = vadd.f32 %v1887, %v2181
        %v2396 = vadd.f32 %v1888, %v2183
        %v2397 = vadd.f32 %v1889, %v2185
        %v2398 = vadd.f32 %v1890, %v2188
        %v2399 = vadd.f32 %v1891, %v2190
        %v2400 = vadd.f32 %v1892, %v2192
        %v2401 = vadd.f32 %v1893, %v2195
        %v2402 = vadd.f32 %v1894, %v2197
        %v2403 = vadd.f32 %v1895, %v2199
        %v2404 = vadd.f32 %v1896, %v2202
        %v2405 = vadd.f32 %v1897, %v2204
        %v2406 = vadd.f32 %v1898, %v2206
        %v2407 = vadd.f32 %v1899, %v2209
        %v2408 = vadd.f32 %v1900, %v2211
        %v2409 = vadd.f32 %v1901, %v2213
        %v2410 = vadd.f32 %v1902, %v2216
        %v2411 = vadd.f32 %v1903, %v2218
        %v2412 = vadd.f32 %v1904, %v2220
        %v2413 = vadd.f32 %v1905, %v2223
        %v2414 = vadd.f32 %v1906, %v2225
        %v2415 = vadd.f32 %v1907, %v2227
        %v2416 = vadd.f32 %v1908, %v2230
        %v2417 = vadd.f32 %v1909, %v2232
        %v2418 = vadd.f32 %v1910, %v2234
        %v2419 = vadd.f32 %v1911, %v2237
        %v2420 = vadd.f32 %v1912, %v2239
        %v2421 = vadd.f32 %v1913, %v2241
        %v2422 = vadd.f32 %v1914, %v2244
        %v2423 = vadd.f32 %v1915, %v2246
        %v2424 = vadd.f32 %v1916, %v2248
        %v2425 = vadd.f32 %v1917, %v2251
        %v2426 = vadd.f32 %v1918, %v2253
        %v2427 = vadd.f32 %v1919, %v2255
        %v2428 = vadd.f32 %v1920, %v2258
        %v2429 = vadd.f32 %v1921, %v2260
        %v2430 = vadd.f32 %v1922, %v2262
        %v2431 = vadd.f32 %v1923, %v2265
        %v2432 = vadd.f32 %v1924, %v2267
        %v2433 = vadd.f32 %v1925, %v2269
        %v2434 = vadd.f32 %v1926, %v2272
        %v2435 = vadd.f32 %v1927, %v2274
        %v2436 = vadd.f32 %v1928, %v2276
        %v2437 = vadd.f32 %v1929, %v2279
        %v2438 = vadd.f32 %v1930, %v2281
        %v2439 = vadd.f32 %v1931, %v2283
        %v2440 = vadd.f32 %v1932, %v2286
        %v2441 = vadd.f32 %v1933, %v2288
        %v2442 = vadd.f32 %v1934, %v2290
        %v2443 = vadd.f32 %v1935, %v2293
        %v2444 = vadd.f32 %v1936, %v2295
        %v2445 = vadd.f32 %v1937, %v2297
        %v2446 = vadd.f32 %v1938, %v2300
        %v2447 = vadd.f32 %v1939, %v2302
        %v2448 = vadd.f32 %v1940, %v2304
      $region73: #{net_forward.1} parent=65 // loop_footer
        %s97 = sadd.s32 1, %s93
      $region74: #{net_forward.1} parent=65 // loop_footer_branch
        %92 = sbr.rel target = $region70
      $region75: #{net_forward.1} parent=65 // loop_exit
        _
      %s2449 = sld [smem:[#allocation8 + %s87]]
      %v2450 = vstv %s2449
      %v2451 = vadd.f32 %v98, %v2450
      %v2452 = vadd.f32 %v99, %v2450
      %v2453 = vadd.f32 %v100, %v2450
      %v2454 = vadd.f32 %v101, %v2450
      %v2455 = vadd.f32 %v102, %v2450
      %v2456 = vadd.f32 %v103, %v2450
      %v2457 = vadd.f32 %v104, %v2450
      %v2458 = vadd.f32 %v105, %v2450
      %v2459 = vadd.f32 %v106, %v2450
      %v2460 = vadd.f32 %v107, %v2450
      %v2461 = vadd.f32 %v108, %v2450
      %v2462 = vadd.f32 %v109, %v2450
      %v2463 = vadd.f32 %v110, %v2450
      %v2464 = vadd.f32 %v111, %v2450
      %v2465 = vadd.f32 %v112, %v2450
      %v2466 = vadd.f32 %v113, %v2450
      %v2467 = vadd.f32 %v114, %v2450
      %v2468 = vadd.f32 %v115, %v2450
      %v2469 = vadd.f32 %v116, %v2450
      %v2470 = vadd.f32 %v117, %v2450
      %v2471 = vadd.f32 %v118, %v2450
      %v2472 = vadd.f32 %v119, %v2450
      %v2473 = vadd.f32 %v120, %v2450
      %v2474 = vadd.f32 %v121, %v2450
      %v2475 = vadd.f32 %v122, %v2450
      %v2476 = vadd.f32 %v123, %v2450
      %v2477 = vadd.f32 %v124, %v2450
      %v2478 = vadd.f32 %v125, %v2450
      %v2479 = vadd.f32 %v126, %v2450
      %v2480 = vadd.f32 %v127, %v2450
      %v2481 = vadd.f32 %v128, %v2450
      %v2482 = vadd.f32 %v129, %v2450
      %v2483 = vadd.f32 %v130, %v2450
      %v2484 = vadd.f32 %v131, %v2450
      %v2485 = vadd.f32 %v132, %v2450
      %v2486 = vadd.f32 %v133, %v2450
      %v2487 = vadd.f32 %v134, %v2450
      %v2488 = vadd.f32 %v135, %v2450
      %v2489 = vadd.f32 %v136, %v2450
      %v2490 = vadd.f32 %v137, %v2450
      %v2491 = vadd.f32 %v138, %v2450
      %v2492 = vadd.f32 %v139, %v2450
      %v2493 = vadd.f32 %v140, %v2450
      %v2494 = vadd.f32 %v141, %v2450
      %v2495 = vadd.f32 %v142, %v2450
      %v2496 = vadd.f32 %v143, %v2450
      %v2497 = vadd.f32 %v144, %v2450
      %v2498 = vadd.f32 %v145, %v2450
      %v2499 = vadd.f32 %v146, %v2450
      %v2500 = vadd.f32 %v147, %v2450
      %v2501 = vadd.f32 %v148, %v2450
      %v2502 = vadd.f32 %v149, %v2450
      %v2503 = vadd.f32 %v150, %v2450
      %v2504 = vadd.f32 %v151, %v2450
      %v2505 = vadd.f32 %v152, %v2450
      %v2506 = vadd.f32 %v153, %v2450
      %v2507 = vadd.f32 %v154, %v2450
      %v2508 = vadd.f32 %v155, %v2450
      %v2509 = vadd.f32 %v156, %v2450
      %v2510 = vadd.f32 %v157, %v2450
      %v2511 = vadd.f32 %v158, %v2450
      %v2512 = vadd.f32 %v159, %v2450
      %v2513 = vadd.f32 %v160, %v2450
      %v2514 = vadd.f32 %v161, %v2450
      %v2515 = vadd.f32 %v162, %v2450
      %v2516 = vadd.f32 %v163, %v2450
      %v2517 = vadd.f32 %v164, %v2450
      %v2518 = vadd.f32 %v165, %v2450
      %v2519 = vadd.f32 %v166, %v2450
      %v2520 = vadd.f32 %v167, %v2450
      %v2521 = vadd.f32 %v168, %v2450
      %v2522 = vadd.f32 %v169, %v2450
      %s2523 = smul.u32 %s87, 576
      %s2524 = scalar_lea.vmem [#allocation2], %s2523
      %2525 = vst [vmem:[%s2524] sm:$0xff] %v2451
      %2526 = vst [vmem:[%s2524 + $0x8] sm:$0xff] %v2452
      %2527 = vst [vmem:[%s2524 + $0x10] sm:$0xff] %v2453
      %2528 = vst [vmem:[%s2524 + $0x18] sm:$0xff] %v2454
      %2529 = vst [vmem:[%s2524 + $0x20] sm:$0xff] %v2455
      %2530 = vst [vmem:[%s2524 + $0x28] sm:$0xff] %v2456
      %2531 = vst [vmem:[%s2524 + $0x30] sm:$0xff] %v2457
      %2532 = vst [vmem:[%s2524 + $0x38] sm:$0xff] %v2458
      %2533 = vst [vmem:[%s2524 + $0x40] sm:$0xff] %v2459
      %2534 = vst [vmem:[%s2524 + $0x48] sm:$0xff] %v2460
      %2535 = vst [vmem:[%s2524 + $0x50] sm:$0xff] %v2461
      %2536 = vst [vmem:[%s2524 + $0x58] sm:$0xff] %v2462
      %2537 = vst [vmem:[%s2524 + $0x60] sm:$0xff] %v2463
      %2538 = vst [vmem:[%s2524 + $0x68] sm:$0xff] %v2464
      %2539 = vst [vmem:[%s2524 + $0x70] sm:$0xff] %v2465
      %2540 = vst [vmem:[%s2524 + $0x78] sm:$0xff] %v2466
      %2541 = vst [vmem:[%s2524 + $0x80] sm:$0xff] %v2467
      %2542 = vst [vmem:[%s2524 + $0x88] sm:$0xff] %v2468
      %2543 = vst [vmem:[%s2524 + $0x90] sm:$0xff] %v2469
      %2544 = vst [vmem:[%s2524 + $0x98] sm:$0xff] %v2470
      %2545 = vst [vmem:[%s2524 + $0xa0] sm:$0xff] %v2471
      %2546 = vst [vmem:[%s2524 + $0xa8] sm:$0xff] %v2472
      %2547 = vst [vmem:[%s2524 + $0xb0] sm:$0xff] %v2473
      %2548 = vst [vmem:[%s2524 + $0xb8] sm:$0xff] %v2474
      %2549 = vst [vmem:[%s2524 + $0xc0] sm:$0xff] %v2475
      %2550 = vst [vmem:[%s2524 + $0xc8] sm:$0xff] %v2476
      %2551 = vst [vmem:[%s2524 + $0xd0] sm:$0xff] %v2477
      %2552 = vst [vmem:[%s2524 + $0xd8] sm:$0xff] %v2478
      %2553 = vst [vmem:[%s2524 + $0xe0] sm:$0xff] %v2479
      %2554 = vst [vmem:[%s2524 + $0xe8] sm:$0xff] %v2480
      %2555 = vst [vmem:[%s2524 + $0xf0] sm:$0xff] %v2481
      %2556 = vst [vmem:[%s2524 + $0xf8] sm:$0xff] %v2482
      %2557 = vst [vmem:[%s2524 + $0x100] sm:$0xff] %v2483
      %2558 = vst [vmem:[%s2524 + $0x108] sm:$0xff] %v2484
      %2559 = vst [vmem:[%s2524 + $0x110] sm:$0xff] %v2485
      %2560 = vst [vmem:[%s2524 + $0x118] sm:$0xff] %v2486
      %2561 = vst [vmem:[%s2524 + $0x120] sm:$0xff] %v2487
      %2562 = vst [vmem:[%s2524 + $0x128] sm:$0xff] %v2488
      %2563 = vst [vmem:[%s2524 + $0x130] sm:$0xff] %v2489
      %2564 = vst [vmem:[%s2524 + $0x138] sm:$0xff] %v2490
      %2565 = vst [vmem:[%s2524 + $0x140] sm:$0xff] %v2491
      %2566 = vst [vmem:[%s2524 + $0x148] sm:$0xff] %v2492
      %2567 = vst [vmem:[%s2524 + $0x150] sm:$0xff] %v2493
      %2568 = vst [vmem:[%s2524 + $0x158] sm:$0xff] %v2494
      %2569 = vst [vmem:[%s2524 + $0x160] sm:$0xff] %v2495
      %2570 = vst [vmem:[%s2524 + $0x168] sm:$0xff] %v2496
      %2571 = vst [vmem:[%s2524 + $0x170] sm:$0xff] %v2497
      %2572 = vst [vmem:[%s2524 + $0x178] sm:$0xff] %v2498
      %2573 = vst [vmem:[%s2524 + $0x180] sm:$0xff] %v2499
      %2574 = vst [vmem:[%s2524 + $0x188] sm:$0xff] %v2500
      %2575 = vst [vmem:[%s2524 + $0x190] sm:$0xff] %v2501
      %2576 = vst [vmem:[%s2524 + $0x198] sm:$0xff] %v2502
      %2577 = vst [vmem:[%s2524 + $0x1a0] sm:$0xff] %v2503
      %2578 = vst [vmem:[%s2524 + $0x1a8] sm:$0xff] %v2504
      %2579 = vst [vmem:[%s2524 + $0x1b0] sm:$0xff] %v2505
      %2580 = vst [vmem:[%s2524 + $0x1b8] sm:$0xff] %v2506
      %2581 = vst [vmem:[%s2524 + $0x1c0] sm:$0xff] %v2507
      %2582 = vst [vmem:[%s2524 + $0x1c8] sm:$0xff] %v2508
      %2583 = vst [vmem:[%s2524 + $0x1d0] sm:$0xff] %v2509
      %2584 = vst [vmem:[%s2524 + $0x1d8] sm:$0xff] %v2510
      %2585 = vst [vmem:[%s2524 + $0x1e0] sm:$0xff] %v2511
      %2586 = vst [vmem:[%s2524 + $0x1e8] sm:$0xff] %v2512
      %2587 = vst [vmem:[%s2524 + $0x1f0] sm:$0xff] %v2513
      %2588 = vst [vmem:[%s2524 + $0x1f8] sm:$0xff] %v2514
      %2589 = vst [vmem:[%s2524 + $0x200] sm:$0xff] %v2515
      %2590 = vst [vmem:[%s2524 + $0x208] sm:$0xff] %v2516
      %2591 = vst [vmem:[%s2524 + $0x210] sm:$0xff] %v2517
      %2592 = vst [vmem:[%s2524 + $0x218] sm:$0xff] %v2518
      %2593 = vst [vmem:[%s2524 + $0x220] sm:$0xff] %v2519
      %2594 = vst [vmem:[%s2524 + $0x228] sm:$0xff] %v2520
      %2595 = vst [vmem:[%s2524 + $0x230] sm:$0xff] %v2521
      %2596 = vst [vmem:[%s2524 + $0x238] sm:$0xff] %v2522
    $region66: #{net_forward.1} parent=1 // loop_footer
      %s91 = sadd.s32 1, %s87
    $region67: #{net_forward.1} parent=1 // loop_footer_branch
      %86 = sbr.rel target = $region63
    $region68: #{net_forward.1} parent=1 // loop_exit
      _
    loop: start=0, step=1, limit=6
    $region76: #{net_forward.1} parent=1 // loop_pre_header
      _
    $region77: #{net_forward.1} parent=1 // loop_header
      %s2598 = sphi 0, %s2602
      %p2599 = scmp.ge.s32.totalorder %s2598, 6
    $region78: #{net_forward.1} parent=1 // loop_header_branch
      %2601 = sbr.rel (%p2599) target = $region82
    $region79: #{net_forward.1} parent=1 // loop_body
      %s2603 = smul.u32 %s2598, 576
      %s2604 = scalar_lea.vmem [#allocation2], %s2603
      %v2605 = vld [vmem:[%s2604] ss:$2 sm:$0xff]
      %s2606 = scalar_lea.vmem %s2604, 16 [#allocation2]
      %v2607 = vld [vmem:[%s2606] ss:$2 sm:$0xf]
      %s2608 = scalar_lea.vmem %s2604, 48 [#allocation2]
      %v2609 = vld [vmem:[%s2608] ss:$2 sm:$0xff]
      %s2610 = scalar_lea.vmem %s2604, 64 [#allocation2]
      %v2611 = vld [vmem:[%s2610] ss:$2 sm:$0xf]
      %s2612 = scalar_lea.vmem %s2604, 96 [#allocation2]
      %v2613 = vld [vmem:[%s2612] ss:$2 sm:$0xff]
      %s2614 = scalar_lea.vmem %s2604, 112 [#allocation2]
      %v2615 = vld [vmem:[%s2614] ss:$2 sm:$0xf]
      %s2616 = scalar_lea.vmem %s2604, 144 [#allocation2]
      %v2617 = vld [vmem:[%s2616] ss:$2 sm:$0xff]
      %s2618 = scalar_lea.vmem %s2604, 160 [#allocation2]
      %v2619 = vld [vmem:[%s2618] ss:$2 sm:$0xf]
      %s2620 = scalar_lea.vmem %s2604, 192 [#allocation2]
      %v2621 = vld [vmem:[%s2620] ss:$2 sm:$0xff]
      %s2622 = scalar_lea.vmem %s2604, 208 [#allocation2]
      %v2623 = vld [vmem:[%s2622] ss:$2 sm:$0xf]
      %s2624 = scalar_lea.vmem %s2604, 240 [#allocation2]
      %v2625 = vld [vmem:[%s2624] ss:$2 sm:$0xff]
      %s2626 = scalar_lea.vmem %s2604, 256 [#allocation2]
      %v2627 = vld [vmem:[%s2626] ss:$2 sm:$0xf]
      %s2628 = scalar_lea.vmem %s2604, 288 [#allocation2]
      %v2629 = vld [vmem:[%s2628] ss:$2 sm:$0xff]
      %s2630 = scalar_lea.vmem %s2604, 304 [#allocation2]
      %v2631 = vld [vmem:[%s2630] ss:$2 sm:$0xf]
      %s2632 = scalar_lea.vmem %s2604, 336 [#allocation2]
      %v2633 = vld [vmem:[%s2632] ss:$2 sm:$0xff]
      %s2634 = scalar_lea.vmem %s2604, 352 [#allocation2]
      %v2635 = vld [vmem:[%s2634] ss:$2 sm:$0xf]
      %s2636 = scalar_lea.vmem %s2604, 384 [#allocation2]
      %v2637 = vld [vmem:[%s2636] ss:$2 sm:$0xff]
      %s2638 = scalar_lea.vmem %s2604, 400 [#allocation2]
      %v2639 = vld [vmem:[%s2638] ss:$2 sm:$0xf]
      %s2640 = scalar_lea.vmem %s2604, 432 [#allocation2]
      %v2641 = vld [vmem:[%s2640] ss:$2 sm:$0xff]
      %s2642 = scalar_lea.vmem %s2604, 448 [#allocation2]
      %v2643 = vld [vmem:[%s2642] ss:$2 sm:$0xf]
      %s2644 = scalar_lea.vmem %s2604, 480 [#allocation2]
      %v2645 = vld [vmem:[%s2644] ss:$2 sm:$0xff]
      %s2646 = scalar_lea.vmem %s2604, 496 [#allocation2]
      %v2647 = vld [vmem:[%s2646] ss:$2 sm:$0xf]
      %s2648 = scalar_lea.vmem %s2604, 528 [#allocation2]
      %v2649 = vld [vmem:[%s2648] ss:$2 sm:$0xff]
      %s2650 = scalar_lea.vmem %s2604, 544 [#allocation2]
      %v2651 = vld [vmem:[%s2650] ss:$2 sm:$0xf]
      %s2652 = scalar_lea.vmem %s2604, 1 [#allocation2]
      %v2653 = vld [vmem:[%s2652] ss:$2 sm:$0xff]
      %s2654 = scalar_lea.vmem %s2604, 17 [#allocation2]
      %v2655 = vld [vmem:[%s2654] ss:$2 sm:$0xf]
      %s2656 = scalar_lea.vmem %s2604, 49 [#allocation2]
      %v2657 = vld [vmem:[%s2656] ss:$2 sm:$0xff]
      %s2658 = scalar_lea.vmem %s2604, 65 [#allocation2]
      %v2659 = vld [vmem:[%s2658] ss:$2 sm:$0xf]
      %s2660 = scalar_lea.vmem %s2604, 97 [#allocation2]
      %v2661 = vld [vmem:[%s2660] ss:$2 sm:$0xff]
      %s2662 = scalar_lea.vmem %s2604, 113 [#allocation2]
      %v2663 = vld [vmem:[%s2662] ss:$2 sm:$0xf]
      %s2664 = scalar_lea.vmem %s2604, 145 [#allocation2]
      %v2665 = vld [vmem:[%s2664] ss:$2 sm:$0xff]
      %s2666 = scalar_lea.vmem %s2604, 161 [#allocation2]
      %v2667 = vld [vmem:[%s2666] ss:$2 sm:$0xf]
      %s2668 = scalar_lea.vmem %s2604, 193 [#allocation2]
      %v2669 = vld [vmem:[%s2668] ss:$2 sm:$0xff]
      %s2670 = scalar_lea.vmem %s2604, 209 [#allocation2]
      %v2671 = vld [vmem:[%s2670] ss:$2 sm:$0xf]
      %s2672 = scalar_lea.vmem %s2604, 241 [#allocation2]
      %v2673 = vld [vmem:[%s2672] ss:$2 sm:$0xff]
      %s2674 = scalar_lea.vmem %s2604, 257 [#allocation2]
      %v2675 = vld [vmem:[%s2674] ss:$2 sm:$0xf]
      %s2676 = scalar_lea.vmem %s2604, 289 [#allocation2]
      %v2677 = vld [vmem:[%s2676] ss:$2 sm:$0xff]
      %s2678 = scalar_lea.vmem %s2604, 305 [#allocation2]
      %v2679 = vld [vmem:[%s2678] ss:$2 sm:$0xf]
      %s2680 = scalar_lea.vmem %s2604, 337 [#allocation2]
      %v2681 = vld [vmem:[%s2680] ss:$2 sm:$0xff]
      %s2682 = scalar_lea.vmem %s2604, 353 [#allocation2]
      %v2683 = vld [vmem:[%s2682] ss:$2 sm:$0xf]
      %s2684 = scalar_lea.vmem %s2604, 385 [#allocation2]
      %v2685 = vld [vmem:[%s2684] ss:$2 sm:$0xff]
      %s2686 = scalar_lea.vmem %s2604, 401 [#allocation2]
      %v2687 = vld [vmem:[%s2686] ss:$2 sm:$0xf]
      %s2688 = scalar_lea.vmem %s2604, 433 [#allocation2]
      %v2689 = vld [vmem:[%s2688] ss:$2 sm:$0xff]
      %s2690 = scalar_lea.vmem %s2604, 449 [#allocation2]
      %v2691 = vld [vmem:[%s2690] ss:$2 sm:$0xf]
      %s2692 = scalar_lea.vmem %s2604, 481 [#allocation2]
      %v2693 = vld [vmem:[%s2692] ss:$2 sm:$0xff]
      %s2694 = scalar_lea.vmem %s2604, 497 [#allocation2]
      %v2695 = vld [vmem:[%s2694] ss:$2 sm:$0xf]
      %s2696 = scalar_lea.vmem %s2604, 529 [#allocation2]
      %v2697 = vld [vmem:[%s2696] ss:$2 sm:$0xff]
      %s2698 = scalar_lea.vmem %s2604, 545 [#allocation2]
      %v2699 = vld [vmem:[%s2698] ss:$2 sm:$0xf]
      %v2700 = vmax.f32 %v2605, %v2653
      %v2701 = vmax.f32 %v2607, %v2655
      %v2702 = vmax.f32 %v2609, %v2657
      %v2703 = vmax.f32 %v2611, %v2659
      %v2704 = vmax.f32 %v2613, %v2661
      %v2705 = vmax.f32 %v2615, %v2663
      %v2706 = vmax.f32 %v2617, %v2665
      %v2707 = vmax.f32 %v2619, %v2667
      %v2708 = vmax.f32 %v2621, %v2669
      %v2709 = vmax.f32 %v2623, %v2671
      %v2710 = vmax.f32 %v2625, %v2673
      %v2711 = vmax.f32 %v2627, %v2675
      %v2712 = vmax.f32 %v2629, %v2677
      %v2713 = vmax.f32 %v2631, %v2679
      %v2714 = vmax.f32 %v2633, %v2681
      %v2715 = vmax.f32 %v2635, %v2683
      %v2716 = vmax.f32 %v2637, %v2685
      %v2717 = vmax.f32 %v2639, %v2687
      %v2718 = vmax.f32 %v2641, %v2689
      %v2719 = vmax.f32 %v2643, %v2691
      %v2720 = vmax.f32 %v2645, %v2693
      %v2721 = vmax.f32 %v2647, %v2695
      %v2722 = vmax.f32 %v2649, %v2697
      %v2723 = vmax.f32 %v2651, %v2699
      %s2724 = sadd.s32 24, %s2603
      %s2725 = scalar_lea.vmem [#allocation2], %s2724
      %v2726 = vld [vmem:[%s2725] ss:$2 sm:$0xff]
      %s2727 = scalar_lea.vmem %s2725, 16 [#allocation2]
      %v2728 = vld [vmem:[%s2727] ss:$2 sm:$0xf]
      %s2729 = scalar_lea.vmem %s2725, 48 [#allocation2]
      %v2730 = vld [vmem:[%s2729] ss:$2 sm:$0xff]
      %s2731 = scalar_lea.vmem %s2725, 64 [#allocation2]
      %v2732 = vld [vmem:[%s2731] ss:$2 sm:$0xf]
      %s2733 = scalar_lea.vmem %s2725, 96 [#allocation2]
      %v2734 = vld [vmem:[%s2733] ss:$2 sm:$0xff]
      %s2735 = scalar_lea.vmem %s2725, 112 [#allocation2]
      %v2736 = vld [vmem:[%s2735] ss:$2 sm:$0xf]
      %s2737 = scalar_lea.vmem %s2725, 144 [#allocation2]
      %v2738 = vld [vmem:[%s2737] ss:$2 sm:$0xff]
      %s2739 = scalar_lea.vmem %s2725, 160 [#allocation2]
      %v2740 = vld [vmem:[%s2739] ss:$2 sm:$0xf]
      %s2741 = scalar_lea.vmem %s2725, 192 [#allocation2]
      %v2742 = vld [vmem:[%s2741] ss:$2 sm:$0xff]
      %s2743 = scalar_lea.vmem %s2725, 208 [#allocation2]
      %v2744 = vld [vmem:[%s2743] ss:$2 sm:$0xf]
      %s2745 = scalar_lea.vmem %s2725, 240 [#allocation2]
      %v2746 = vld [vmem:[%s2745] ss:$2 sm:$0xff]
      %s2747 = scalar_lea.vmem %s2725, 256 [#allocation2]
      %v2748 = vld [vmem:[%s2747] ss:$2 sm:$0xf]
      %s2749 = scalar_lea.vmem %s2725, 288 [#allocation2]
      %v2750 = vld [vmem:[%s2749] ss:$2 sm:$0xff]
      %s2751 = scalar_lea.vmem %s2725, 304 [#allocation2]
      %v2752 = vld [vmem:[%s2751] ss:$2 sm:$0xf]
      %s2753 = scalar_lea.vmem %s2725, 336 [#allocation2]
      %v2754 = vld [vmem:[%s2753] ss:$2 sm:$0xff]
      %s2755 = scalar_lea.vmem %s2725, 352 [#allocation2]
      %v2756 = vld [vmem:[%s2755] ss:$2 sm:$0xf]
      %s2757 = scalar_lea.vmem %s2725, 384 [#allocation2]
      %v2758 = vld [vmem:[%s2757] ss:$2 sm:$0xff]
      %s2759 = scalar_lea.vmem %s2725, 400 [#allocation2]
      %v2760 = vld [vmem:[%s2759] ss:$2 sm:$0xf]
      %s2761 = scalar_lea.vmem %s2725, 432 [#allocation2]
      %v2762 = vld [vmem:[%s2761] ss:$2 sm:$0xff]
      %s2763 = scalar_lea.vmem %s2725, 448 [#allocation2]
      %v2764 = vld [vmem:[%s2763] ss:$2 sm:$0xf]
      %s2765 = scalar_lea.vmem %s2725, 480 [#allocation2]
      %v2766 = vld [vmem:[%s2765] ss:$2 sm:$0xff]
      %s2767 = scalar_lea.vmem %s2725, 496 [#allocation2]
      %v2768 = vld [vmem:[%s2767] ss:$2 sm:$0xf]
      %s2769 = scalar_lea.vmem %s2725, 528 [#allocation2]
      %v2770 = vld [vmem:[%s2769] ss:$2 sm:$0xff]
      %s2771 = scalar_lea.vmem %s2725, 544 [#allocation2]
      %v2772 = vld [vmem:[%s2771] ss:$2 sm:$0xf]
      %s2773 = scalar_lea.vmem %s2725, 1 [#allocation2]
      %v2774 = vld [vmem:[%s2773] ss:$2 sm:$0xff]
      %s2775 = scalar_lea.vmem %s2725, 17 [#allocation2]
      %v2776 = vld [vmem:[%s2775] ss:$2 sm:$0xf]
      %s2777 = scalar_lea.vmem %s2725, 49 [#allocation2]
      %v2778 = vld [vmem:[%s2777] ss:$2 sm:$0xff]
      %s2779 = scalar_lea.vmem %s2725, 65 [#allocation2]
      %v2780 = vld [vmem:[%s2779] ss:$2 sm:$0xf]
      %s2781 = scalar_lea.vmem %s2725, 97 [#allocation2]
      %v2782 = vld [vmem:[%s2781] ss:$2 sm:$0xff]
      %s2783 = scalar_lea.vmem %s2725, 113 [#allocation2]
      %v2784 = vld [vmem:[%s2783] ss:$2 sm:$0xf]
      %s2785 = scalar_lea.vmem %s2725, 145 [#allocation2]
      %v2786 = vld [vmem:[%s2785] ss:$2 sm:$0xff]
      %s2787 = scalar_lea.vmem %s2725, 161 [#allocation2]
      %v2788 = vld [vmem:[%s2787] ss:$2 sm:$0xf]
      %s2789 = scalar_lea.vmem %s2725, 193 [#allocation2]
      %v2790 = vld [vmem:[%s2789] ss:$2 sm:$0xff]
      %s2791 = scalar_lea.vmem %s2725, 209 [#allocation2]
      %v2792 = vld [vmem:[%s2791] ss:$2 sm:$0xf]
      %s2793 = scalar_lea.vmem %s2725, 241 [#allocation2]
      %v2794 = vld [vmem:[%s2793] ss:$2 sm:$0xff]
      %s2795 = scalar_lea.vmem %s2725, 257 [#allocation2]
      %v2796 = vld [vmem:[%s2795] ss:$2 sm:$0xf]
      %s2797 = scalar_lea.vmem %s2725, 289 [#allocation2]
      %v2798 = vld [vmem:[%s2797] ss:$2 sm:$0xff]
      %s2799 = scalar_lea.vmem %s2725, 305 [#allocation2]
      %v2800 = vld [vmem:[%s2799] ss:$2 sm:$0xf]
      %s2801 = scalar_lea.vmem %s2725, 337 [#allocation2]
      %v2802 = vld [vmem:[%s2801] ss:$2 sm:$0xff]
      %s2803 = scalar_lea.vmem %s2725, 353 [#allocation2]
      %v2804 = vld [vmem:[%s2803] ss:$2 sm:$0xf]
      %s2805 = scalar_lea.vmem %s2725, 385 [#allocation2]
      %v2806 = vld [vmem:[%s2805] ss:$2 sm:$0xff]
      %s2807 = scalar_lea.vmem %s2725, 401 [#allocation2]
      %v2808 = vld [vmem:[%s2807] ss:$2 sm:$0xf]
      %s2809 = scalar_lea.vmem %s2725, 433 [#allocation2]
      %v2810 = vld [vmem:[%s2809] ss:$2 sm:$0xff]
      %s2811 = scalar_lea.vmem %s2725, 449 [#allocation2]
      %v2812 = vld [vmem:[%s2811] ss:$2 sm:$0xf]
      %s2813 = scalar_lea.vmem %s2725, 481 [#allocation2]
      %v2814 = vld [vmem:[%s2813] ss:$2 sm:$0xff]
      %s2815 = scalar_lea.vmem %s2725, 497 [#allocation2]
      %v2816 = vld [vmem:[%s2815] ss:$2 sm:$0xf]
      %s2817 = scalar_lea.vmem %s2725, 529 [#allocation2]
      %v2818 = vld [vmem:[%s2817] ss:$2 sm:$0xff]
      %s2819 = scalar_lea.vmem %s2725, 545 [#allocation2]
      %v2820 = vld [vmem:[%s2819] ss:$2 sm:$0xf]
      %v2821 = vmax.f32 %v2726, %v2774
      %v2822 = vmax.f32 %v2728, %v2776
      %v2823 = vmax.f32 %v2730, %v2778
      %v2824 = vmax.f32 %v2732, %v2780
      %v2825 = vmax.f32 %v2734, %v2782
      %v2826 = vmax.f32 %v2736, %v2784
      %v2827 = vmax.f32 %v2738, %v2786
      %v2828 = vmax.f32 %v2740, %v2788
      %v2829 = vmax.f32 %v2742, %v2790
      %v2830 = vmax.f32 %v2744, %v2792
      %v2831 = vmax.f32 %v2746, %v2794
      %v2832 = vmax.f32 %v2748, %v2796
      %v2833 = vmax.f32 %v2750, %v2798
      %v2834 = vmax.f32 %v2752, %v2800
      %v2835 = vmax.f32 %v2754, %v2802
      %v2836 = vmax.f32 %v2756, %v2804
      %v2837 = vmax.f32 %v2758, %v2806
      %v2838 = vmax.f32 %v2760, %v2808
      %v2839 = vmax.f32 %v2762, %v2810
      %v2840 = vmax.f32 %v2764, %v2812
      %v2841 = vmax.f32 %v2766, %v2814
      %v2842 = vmax.f32 %v2768, %v2816
      %v2843 = vmax.f32 %v2770, %v2818
      %v2844 = vmax.f32 %v2772, %v2820
      %v2845 = vmax.f32 %v2700, %v2821
      %v2846 = vmax.f32 %v2701, %v2822
      %v2847 = vmax.f32 %v2702, %v2823
      %v2848 = vmax.f32 %v2703, %v2824
      %v2849 = vmax.f32 %v2704, %v2825
      %v2850 = vmax.f32 %v2705, %v2826
      %v2851 = vmax.f32 %v2706, %v2827
      %v2852 = vmax.f32 %v2707, %v2828
      %v2853 = vmax.f32 %v2708, %v2829
      %v2854 = vmax.f32 %v2709, %v2830
      %v2855 = vmax.f32 %v2710, %v2831
      %v2856 = vmax.f32 %v2711, %v2832
      %v2857 = vmax.f32 %v2712, %v2833
      %v2858 = vmax.f32 %v2713, %v2834
      %v2859 = vmax.f32 %v2714, %v2835
      %v2860 = vmax.f32 %v2715, %v2836
      %v2861 = vmax.f32 %v2716, %v2837
      %v2862 = vmax.f32 %v2717, %v2838
      %v2863 = vmax.f32 %v2718, %v2839
      %v2864 = vmax.f32 %v2719, %v2840
      %v2865 = vmax.f32 %v2720, %v2841
      %v2866 = vmax.f32 %v2721, %v2842
      %v2867 = vmax.f32 %v2722, %v2843
      %v2868 = vmax.f32 %v2723, %v2844
      %v2869 = vmax.f32 %v2845, 0.0
      %v2870 = vmax.f32 %v2846, 0.0
      %v2871 = vmax.f32 %v2847, 0.0
      %v2872 = vmax.f32 %v2848, 0.0
      %v2873 = vmax.f32 %v2849, 0.0
      %v2874 = vmax.f32 %v2850, 0.0
      %v2875 = vmax.f32 %v2851, 0.0
      %v2876 = vmax.f32 %v2852, 0.0
      %v2877 = vmax.f32 %v2853, 0.0
      %v2878 = vmax.f32 %v2854, 0.0
      %v2879 = vmax.f32 %v2855, 0.0
      %v2880 = vmax.f32 %v2856, 0.0
      %v2881 = vmax.f32 %v2857, 0.0
      %v2882 = vmax.f32 %v2858, 0.0
      %v2883 = vmax.f32 %v2859, 0.0
      %v2884 = vmax.f32 %v2860, 0.0
      %v2885 = vmax.f32 %v2861, 0.0
      %v2886 = vmax.f32 %v2862, 0.0
      %v2887 = vmax.f32 %v2863, 0.0
      %v2888 = vmax.f32 %v2864, 0.0
      %v2889 = vmax.f32 %v2865, 0.0
      %v2890 = vmax.f32 %v2866, 0.0
      %v2891 = vmax.f32 %v2867, 0.0
      %v2892 = vmax.f32 %v2868, 0.0
      %s2893 = smul.u32 %s2598, 192
      %s2894 = scalar_lea.vmem [#allocation3], %s2893
      %2895 = vst [vmem:[%s2894] sm:$0xff] %v2869
      %2896 = vst [vmem:[%s2894 + $0x8] sm:$0xf] %v2870
      %2897 = vst [vmem:[%s2894 + $0x10] sm:$0xff] %v2871
      %2898 = vst [vmem:[%s2894 + $0x18] sm:$0xf] %v2872
      %2899 = vst [vmem:[%s2894 + $0x20] sm:$0xff] %v2873
      %2900 = vst [vmem:[%s2894 + $0x28] sm:$0xf] %v2874
      %2901 = vst [vmem:[%s2894 + $0x30] sm:$0xff] %v2875
      %2902 = vst [vmem:[%s2894 + $0x38] sm:$0xf] %v2876
      %2903 = vst [vmem:[%s2894 + $0x40] sm:$0xff] %v2877
      %2904 = vst [vmem:[%s2894 + $0x48] sm:$0xf] %v2878
      %2905 = vst [vmem:[%s2894 + $0x50] sm:$0xff] %v2879
      %2906 = vst [vmem:[%s2894 + $0x58] sm:$0xf] %v2880
      %2907 = vst [vmem:[%s2894 + $0x60] sm:$0xff] %v2881
      %2908 = vst [vmem:[%s2894 + $0x68] sm:$0xf] %v2882
      %2909 = vst [vmem:[%s2894 + $0x70] sm:$0xff] %v2883
      %2910 = vst [vmem:[%s2894 + $0x78] sm:$0xf] %v2884
      %2911 = vst [vmem:[%s2894 + $0x80] sm:$0xff] %v2885
      %2912 = vst [vmem:[%s2894 + $0x88] sm:$0xf] %v2886
      %2913 = vst [vmem:[%s2894 + $0x90] sm:$0xff] %v2887
      %2914 = vst [vmem:[%s2894 + $0x98] sm:$0xf] %v2888
      %2915 = vst [vmem:[%s2894 + $0xa0] sm:$0xff] %v2889
      %2916 = vst [vmem:[%s2894 + $0xa8] sm:$0xf] %v2890
      %2917 = vst [vmem:[%s2894 + $0xb0] sm:$0xff] %v2891
      %2918 = vst [vmem:[%s2894 + $0xb8] sm:$0xf] %v2892
    $region80: #{net_forward.1} parent=1 // loop_footer
      %s2602 = sadd.s32 1, %s2598
    $region81: #{net_forward.1} parent=1 // loop_footer_branch
      %2597 = sbr.rel target = $region77
    $region82: #{net_forward.1} parent=1 // loop_exit
      _
    loop: start=0, step=1, limit=16
    $region83: #{net_forward.1} parent=1 // loop_pre_header
      _
    $region84: #{net_forward.1} parent=1 // loop_header
      %s2920 = sphi 0, %s2924
      %p2921 = scmp.ge.s32.totalorder %s2920, 16
    $region85: #{net_forward.1} parent=1 // loop_header_branch
      %2923 = sbr.rel (%p2921) target = $region89
    $region86: #{net_forward.1} parent=1 // loop_body
      %v2925 = vld [vmem:[#allocation3] sm:$0xff]
      %v2926 = vld [vmem:[#allocation3 + $0x8] sm:$0xf]
      %v2927 = vld [vmem:[#allocation3 + $0x10] sm:$0xff]
      %v2928 = vld [vmem:[#allocation3 + $0x18] sm:$0xf]
      %v2929 = vld [vmem:[#allocation3 + $0x20] sm:$0xff]
      %v2930 = vld [vmem:[#allocation3 + $0x28] sm:$0xf]
      %v2931 = vld [vmem:[#allocation3 + $0x30] sm:$0xff]
      %v2932 = vld [vmem:[#allocation3 + $0x38] sm:$0xf]
      %v2933 = vld [vmem:[#allocation3 + $0x40] sm:$0xff]
      %v2934 = vld [vmem:[#allocation3 + $0x48] sm:$0xf]
      %v2935 = vld [vmem:[#allocation3 + $0x50] sm:$0xff]
      %v2936 = vld [vmem:[#allocation3 + $0x58] sm:$0xf]
      %v2937 = vld [vmem:[#allocation3 + $0x60] sm:$0xff]
      %v2938 = vld [vmem:[#allocation3 + $0x68] sm:$0xf]
      %v2939 = vld [vmem:[#allocation3 + $0x70] sm:$0xff]
      %v2940 = vld [vmem:[#allocation3 + $0x78] sm:$0xf]
      %v2941 = vld [vmem:[#allocation3 + $0x80] sm:$0xff]
      %v2942 = vld [vmem:[#allocation3 + $0x88] sm:$0xf]
      %v2943 = vld [vmem:[#allocation3 + $0x90] sm:$0xff]
      %v2944 = vld [vmem:[#allocation3 + $0x98] sm:$0xf]
      %s2945 = smul.u32 %s2920, 54
      %s2946 = sld [smem:[#allocation10 + %s2945]]
      %v2947 = vstv %s2946
      %v2948 = vmul.f32 %v2925, %v2947
      %v2949 = vmul.f32 %v2926, %v2947
      %v2950 = vmul.f32 %v2927, %v2947
      %v2951 = vmul.f32 %v2928, %v2947
      %v2952 = vmul.f32 %v2929, %v2947
      %v2953 = vmul.f32 %v2930, %v2947
      %v2954 = vmul.f32 %v2931, %v2947
      %v2955 = vmul.f32 %v2932, %v2947
      %v2956 = vmul.f32 %v2933, %v2947
      %v2957 = vmul.f32 %v2934, %v2947
      %v2958 = vmul.f32 %v2935, %v2947
      %v2959 = vmul.f32 %v2936, %v2947
      %v2960 = vmul.f32 %v2937, %v2947
      %v2961 = vmul.f32 %v2938, %v2947
      %v2962 = vmul.f32 %v2939, %v2947
      %v2963 = vmul.f32 %v2940, %v2947
      %v2964 = vmul.f32 %v2941, %v2947
      %v2965 = vmul.f32 %v2942, %v2947
      %v2966 = vmul.f32 %v2943, %v2947
      %v2967 = vmul.f32 %v2944, %v2947
      %v2968 = vadd.f32 %v2948, 0.0
      %v2969 = vadd.f32 %v2949, 0.0
      %v2970 = vadd.f32 %v2950, 0.0
      %v2971 = vadd.f32 %v2951, 0.0
      %v2972 = vadd.f32 %v2952, 0.0
      %v2973 = vadd.f32 %v2953, 0.0
      %v2974 = vadd.f32 %v2954, 0.0
      %v2975 = vadd.f32 %v2955, 0.0
      %v2976 = vadd.f32 %v2956, 0.0
      %v2977 = vadd.f32 %v2957, 0.0
      %v2978 = vadd.f32 %v2958, 0.0
      %v2979 = vadd.f32 %v2959, 0.0
      %v2980 = vadd.f32 %v2960, 0.0
      %v2981 = vadd.f32 %v2961, 0.0
      %v2982 = vadd.f32 %v2962, 0.0
      %v2983 = vadd.f32 %v2963, 0.0
      %v2984 = vadd.f32 %v2964, 0.0
      %v2985 = vadd.f32 %v2965, 0.0
      %v2986 = vadd.f32 %v2966, 0.0
      %v2987 = vadd.f32 %v2967, 0.0
      %s2988 = sadd.s32 %s2945, 1
      %s2989 = sld [smem:[#allocation10 + %s2988]]
      %v2990 = vstv %s2989
      %v2991 = vmul.f32 %v2925, %v2990
      %v2992 = vmul.f32 %v2926, %v2990
      %v2993 = vmul.f32 %v2927, %v2990
      %v2994 = vmul.f32 %v2928, %v2990
      %v2995 = vmul.f32 %v2929, %v2990
      %v2996 = vmul.f32 %v2930, %v2990
      %v2997 = vmul.f32 %v2931, %v2990
      %v2998 = vmul.f32 %v2932, %v2990
      %v2999 = vmul.f32 %v2933, %v2990
      %v3000 = vmul.f32 %v2934, %v2990
      %v3001 = vmul.f32 %v2935, %v2990
      %v3002 = vmul.f32 %v2936, %v2990
      %v3003 = vmul.f32 %v2937, %v2990
      %v3004 = vmul.f32 %v2938, %v2990
      %v3005 = vmul.f32 %v2939, %v2990
      %v3006 = vmul.f32 %v2940, %v2990
      %v3007 = vmul.f32 %v2941, %v2990
      %v3008 = vmul.f32 %v2942, %v2990
      %v3009 = vmul.f32 %v2943, %v2990
      %v3010 = vmul.f32 %v2944, %v2990
      %vm3031 = vcmask 1046528
      %v3032 = vrot.slane %v2991, 1
      %v3033 = vrot.slane %v2992, 1
      %v3034 = vsel %vm3031, %v3032, %v3033
      %v3035 = vrot.slane %v2993, 1
      %v3036 = vrot.slane %v2994, 1
      %v3037 = vsel %vm3031, %v3035, %v3036
      %v3038 = vrot.slane %v2995, 1
      %v3039 = vrot.slane %v2996, 1
      %v3040 = vsel %vm3031, %v3038, %v3039
      %v3041 = vrot.slane %v2997, 1
      %v3042 = vrot.slane %v2998, 1
      %v3043 = vsel %vm3031, %v3041, %v3042
      %v3044 = vrot.slane %v2999, 1
      %v3045 = vrot.slane %v3000, 1
      %v3046 = vsel %vm3031, %v3044, %v3045
      %v3047 = vrot.slane %v3001, 1
      %v3048 = vrot.slane %v3002, 1
      %v3049 = vsel %vm3031, %v3047, %v3048
      %v3050 = vrot.slane %v3003, 1
      %v3051 = vrot.slane %v3004, 1
      %v3052 = vsel %vm3031, %v3050, %v3051
      %v3053 = vrot.slane %v3005, 1
      %v3054 = vrot.slane %v3006, 1
      %v3055 = vsel %vm3031, %v3053, %v3054
      %v3056 = vrot.slane %v3007, 1
      %v3057 = vrot.slane %v3008, 1
      %v3058 = vsel %vm3031, %v3056, %v3057
      %v3059 = vrot.slane %v3009, 1
      %v3060 = vrot.slane %v3010, 1
      %v3061 = vsel %vm3031, %v3059, %v3060
      %v3082 = vadd.f32 %v2968, %v3034
      %v3083 = vadd.f32 %v2969, %v3033
      %v3084 = vadd.f32 %v2970, %v3037
      %v3085 = vadd.f32 %v2971, %v3036
      %v3086 = vadd.f32 %v2972, %v3040
      %v3087 = vadd.f32 %v2973, %v3039
      %v3088 = vadd.f32 %v2974, %v3043
      %v3089 = vadd.f32 %v2975, %v3042
      %v3090 = vadd.f32 %v2976, %v3046
      %v3091 = vadd.f32 %v2977, %v3045
      %v3092 = vadd.f32 %v2978, %v3049
      %v3093 = vadd.f32 %v2979, %v3048
      %v3094 = vadd.f32 %v2980, %v3052
      %v3095 = vadd.f32 %v2981, %v3051
      %v3096 = vadd.f32 %v2982, %v3055
      %v3097 = vadd.f32 %v2983, %v3054
      %v3098 = vadd.f32 %v2984, %v3058
      %v3099 = vadd.f32 %v2985, %v3057
      %v3100 = vadd.f32 %v2986, %v3061
      %v3101 = vadd.f32 %v2987, %v3060
      %s3102 = sadd.s32 %s2945, 2
      %s3103 = sld [smem:[#allocation10 + %s3102]]
      %v3104 = vstv %s3103
      %v3105 = vmul.f32 %v2925, %v3104
      %v3106 = vmul.f32 %v2926, %v3104
      %v3107 = vmul.f32 %v2927, %v3104
      %v3108 = vmul.f32 %v2928, %v3104
      %v3109 = vmul.f32 %v2929, %v3104
      %v3110 = vmul.f32 %v2930, %v3104
      %v3111 = vmul.f32 %v2931, %v3104
      %v3112 = vmul.f32 %v2932, %v3104
      %v3113 = vmul.f32 %v2933, %v3104
      %v3114 = vmul.f32 %v2934, %v3104
      %v3115 = vmul.f32 %v2935, %v3104
      %v3116 = vmul.f32 %v2936, %v3104
      %v3117 = vmul.f32 %v2937, %v3104
      %v3118 = vmul.f32 %v2938, %v3104
      %v3119 = vmul.f32 %v2939, %v3104
      %v3120 = vmul.f32 %v2940, %v3104
      %v3121 = vmul.f32 %v2941, %v3104
      %v3122 = vmul.f32 %v2942, %v3104
      %v3123 = vmul.f32 %v2943, %v3104
      %v3124 = vmul.f32 %v2944, %v3104
      %vm3145 = vcmask 1045504
      %v3146 = vrot.slane %v3105, 2
      %v3147 = vrot.slane %v3106, 2
      %v3148 = vsel %vm3145, %v3146, %v3147
      %v3149 = vrot.slane %v3107, 2
      %v3150 = vrot.slane %v3108, 2
      %v3151 = vsel %vm3145, %v3149, %v3150
      %v3152 = vrot.slane %v3109, 2
      %v3153 = vrot.slane %v3110, 2
      %v3154 = vsel %vm3145, %v3152, %v3153
      %v3155 = vrot.slane %v3111, 2
      %v3156 = vrot.slane %v3112, 2
      %v3157 = vsel %vm3145, %v3155, %v3156
      %v3158 = vrot.slane %v3113, 2
      %v3159 = vrot.slane %v3114, 2
      %v3160 = vsel %vm3145, %v3158, %v3159
      %v3161 = vrot.slane %v3115, 2
      %v3162 = vrot.slane %v3116, 2
      %v3163 = vsel %vm3145, %v3161, %v3162
      %v3164 = vrot.slane %v3117, 2
      %v3165 = vrot.slane %v3118, 2
      %v3166 = vsel %vm3145, %v3164, %v3165
      %v3167 = vrot.slane %v3119, 2
      %v3168 = vrot.slane %v3120, 2
      %v3169 = vsel %vm3145, %v3167, %v3168
      %v3170 = vrot.slane %v3121, 2
      %v3171 = vrot.slane %v3122, 2
      %v3172 = vsel %vm3145, %v3170, %v3171
      %v3173 = vrot.slane %v3123, 2
      %v3174 = vrot.slane %v3124, 2
      %v3175 = vsel %vm3145, %v3173, %v3174
      %v3196 = vadd.f32 %v3082, %v3148
      %v3197 = vadd.f32 %v3083, %v3147
      %v3198 = vadd.f32 %v3084, %v3151
      %v3199 = vadd.f32 %v3085, %v3150
      %v3200 = vadd.f32 %v3086, %v3154
      %v3201 = vadd.f32 %v3087, %v3153
      %v3202 = vadd.f32 %v3088, %v3157
      %v3203 = vadd.f32 %v3089, %v3156
      %v3204 = vadd.f32 %v3090, %v3160
      %v3205 = vadd.f32 %v3091, %v3159
      %v3206 = vadd.f32 %v3092, %v3163
      %v3207 = vadd.f32 %v3093, %v3162
      %v3208 = vadd.f32 %v3094, %v3166
      %v3209 = vadd.f32 %v3095, %v3165
      %v3210 = vadd.f32 %v3096, %v3169
      %v3211 = vadd.f32 %v3097, %v3168
      %v3212 = vadd.f32 %v3098, %v3172
      %v3213 = vadd.f32 %v3099, %v3171
      %v3214 = vadd.f32 %v3100, %v3175
      %v3215 = vadd.f32 %v3101, %v3174
      %s3216 = scalar_lea.vmem [#allocation3], 16
      %v3217 = vld [vmem:[%s3216] sm:$0xff]
      %v3218 = vld [vmem:[%s3216 + $0x8] sm:$0xf]
      %v3219 = vld [vmem:[%s3216 + $0x10] sm:$0xff]
      %v3220 = vld [vmem:[%s3216 + $0x18] sm:$0xf]
      %v3221 = vld [vmem:[%s3216 + $0x20] sm:$0xff]
      %v3222 = vld [vmem:[%s3216 + $0x28] sm:$0xf]
      %v3223 = vld [vmem:[%s3216 + $0x30] sm:$0xff]
      %v3224 = vld [vmem:[%s3216 + $0x38] sm:$0xf]
      %v3225 = vld [vmem:[%s3216 + $0x40] sm:$0xff]
      %v3226 = vld [vmem:[%s3216 + $0x48] sm:$0xf]
      %v3227 = vld [vmem:[%s3216 + $0x50] sm:$0xff]
      %v3228 = vld [vmem:[%s3216 + $0x58] sm:$0xf]
      %v3229 = vld [vmem:[%s3216 + $0x60] sm:$0xff]
      %v3230 = vld [vmem:[%s3216 + $0x68] sm:$0xf]
      %v3231 = vld [vmem:[%s3216 + $0x70] sm:$0xff]
      %v3232 = vld [vmem:[%s3216 + $0x78] sm:$0xf]
      %v3233 = vld [vmem:[%s3216 + $0x80] sm:$0xff]
      %v3234 = vld [vmem:[%s3216 + $0x88] sm:$0xf]
      %v3235 = vld [vmem:[%s3216 + $0x90] sm:$0xff]
      %v3236 = vld [vmem:[%s3216 + $0x98] sm:$0xf]
      %s3237 = sadd.s32 %s2945, 3
      %s3238 = sld [smem:[#allocation10 + %s3237]]
      %v3239 = vstv %s3238
      %v3240 = vmul.f32 %v3217, %v3239
      %v3241 = vmul.f32 %v3218, %v3239
      %v3242 = vmul.f32 %v3219, %v3239
      %v3243 = vmul.f32 %v3220, %v3239
      %v3244 = vmul.f32 %v3221, %v3239
      %v3245 = vmul.f32 %v3222, %v3239
      %v3246 = vmul.f32 %v3223, %v3239
      %v3247 = vmul.f32 %v3224, %v3239
      %v3248 = vmul.f32 %v3225, %v3239
      %v3249 = vmul.f32 %v3226, %v3239
      %v3250 = vmul.f32 %v3227, %v3239
      %v3251 = vmul.f32 %v3228, %v3239
      %v3252 = vmul.f32 %v3229, %v3239
      %v3253 = vmul.f32 %v3230, %v3239
      %v3254 = vmul.f32 %v3231, %v3239
      %v3255 = vmul.f32 %v3232, %v3239
      %v3256 = vmul.f32 %v3233, %v3239
      %v3257 = vmul.f32 %v3234, %v3239
      %v3258 = vmul.f32 %v3235, %v3239
      %v3259 = vmul.f32 %v3236, %v3239
      %v3260 = vadd.f32 %v3196, %v3240
      %v3261 = vadd.f32 %v3197, %v3241
      %v3262 = vadd.f32 %v3198, %v3242
      %v3263 = vadd.f32 %v3199, %v3243
      %v3264 = vadd.f32 %v3200, %v3244
      %v3265 = vadd.f32 %v3201, %v3245
      %v3266 = vadd.f32 %v3202, %v3246
      %v3267 = vadd.f32 %v3203, %v3247
      %v3268 = vadd.f32 %v3204, %v3248
      %v3269 = vadd.f32 %v3205, %v3249
      %v3270 = vadd.f32 %v3206, %v3250
      %v3271 = vadd.f32 %v3207, %v3251
      %v3272 = vadd.f32 %v3208, %v3252
      %v3273 = vadd.f32 %v3209, %v3253
      %v3274 = vadd.f32 %v3210, %v3254
      %v3275 = vadd.f32 %v3211, %v3255
      %v3276 = vadd.f32 %v3212, %v3256
      %v3277 = vadd.f32 %v3213, %v3257
      %v3278 = vadd.f32 %v3214, %v3258
      %v3279 = vadd.f32 %v3215, %v3259
      %s3280 = sadd.s32 %s2945, 4
      %s3281 = sld [smem:[#allocation10 + %s3280]]
      %v3282 = vstv %s3281
      %v3283 = vmul.f32 %v3217, %v3282
      %v3284 = vmul.f32 %v3218, %v3282
      %v3285 = vmul.f32 %v3219, %v3282
      %v3286 = vmul.f32 %v3220, %v3282
      %v3287 = vmul.f32 %v3221, %v3282
      %v3288 = vmul.f32 %v3222, %v3282
      %v3289 = vmul.f32 %v3223, %v3282
      %v3290 = vmul.f32 %v3224, %v3282
      %v3291 = vmul.f32 %v3225, %v3282
      %v3292 = vmul.f32 %v3226, %v3282
      %v3293 = vmul.f32 %v3227, %v3282
      %v3294 = vmul.f32 %v3228, %v3282
      %v3295 = vmul.f32 %v3229, %v3282
      %v3296 = vmul.f32 %v3230, %v3282
      %v3297 = vmul.f32 %v3231, %v3282
      %v3298 = vmul.f32 %v3232, %v3282
      %v3299 = vmul.f32 %v3233, %v3282
      %v3300 = vmul.f32 %v3234, %v3282
      %v3301 = vmul.f32 %v3235, %v3282
      %v3302 = vmul.f32 %v3236, %v3282
      %v3323 = vrot.slane %v3283, 1
      %v3324 = vrot.slane %v3284, 1
      %v3325 = vsel %vm3031, %v3323, %v3324
      %v3326 = vrot.slane %v3285, 1
      %v3327 = vrot.slane %v3286, 1
      %v3328 = vsel %vm3031, %v3326, %v3327
      %v3329 = vrot.slane %v3287, 1
      %v3330 = vrot.slane %v3288, 1
      %v3331 = vsel %vm3031, %v3329, %v3330
      %v3332 = vrot.slane %v3289, 1
      %v3333 = vrot.slane %v3290, 1
      %v3334 = vsel %vm3031, %v3332, %v3333
      %v3335 = vrot.slane %v3291, 1
      %v3336 = vrot.slane %v3292, 1
      %v3337 = vsel %vm3031, %v3335, %v3336
      %v3338 = vrot.slane %v3293, 1
      %v3339 = vrot.slane %v3294, 1
      %v3340 = vsel %vm3031, %v3338, %v3339
      %v3341 = vrot.slane %v3295, 1
      %v3342 = vrot.slane %v3296, 1
      %v3343 = vsel %vm3031, %v3341, %v3342
      %v3344 = vrot.slane %v3297, 1
      %v3345 = vrot.slane %v3298, 1
      %v3346 = vsel %vm3031, %v3344, %v3345
      %v3347 = vrot.slane %v3299, 1
      %v3348 = vrot.slane %v3300, 1
      %v3349 = vsel %vm3031, %v3347, %v3348
      %v3350 = vrot.slane %v3301, 1
      %v3351 = vrot.slane %v3302, 1
      %v3352 = vsel %vm3031, %v3350, %v3351
      %v3373 = vadd.f32 %v3260, %v3325
      %v3374 = vadd.f32 %v3261, %v3324
      %v3375 = vadd.f32 %v3262, %v3328
      %v3376 = vadd.f32 %v3263, %v3327
      %v3377 = vadd.f32 %v3264, %v3331
      %v3378 = vadd.f32 %v3265, %v3330
      %v3379 = vadd.f32 %v3266, %v3334
      %v3380 = vadd.f32 %v3267, %v3333
      %v3381 = vadd.f32 %v3268, %v3337
      %v3382 = vadd.f32 %v3269, %v3336
      %v3383 = vadd.f32 %v3270, %v3340
      %v3384 = vadd.f32 %v3271, %v3339
      %v3385 = vadd.f32 %v3272, %v3343
      %v3386 = vadd.f32 %v3273, %v3342
      %v3387 = vadd.f32 %v3274, %v3346
      %v3388 = vadd.f32 %v3275, %v3345
      %v3389 = vadd.f32 %v3276, %v3349
      %v3390 = vadd.f32 %v3277, %v3348
      %v3391 = vadd.f32 %v3278, %v3352
      %v3392 = vadd.f32 %v3279, %v3351
      %s3393 = sadd.s32 %s2945, 5
      %s3394 = sld [smem:[#allocation10 + %s3393]]
      %v3395 = vstv %s3394
      %v3396 = vmul.f32 %v3217, %v3395
      %v3397 = vmul.f32 %v3218, %v3395
      %v3398 = vmul.f32 %v3219, %v3395
      %v3399 = vmul.f32 %v3220, %v3395
      %v3400 = vmul.f32 %v3221, %v3395
      %v3401 = vmul.f32 %v3222, %v3395
      %v3402 = vmul.f32 %v3223, %v3395
      %v3403 = vmul.f32 %v3224, %v3395
      %v3404 = vmul.f32 %v3225, %v3395
      %v3405 = vmul.f32 %v3226, %v3395
      %v3406 = vmul.f32 %v3227, %v3395
      %v3407 = vmul.f32 %v3228, %v3395
      %v3408 = vmul.f32 %v3229, %v3395
      %v3409 = vmul.f32 %v3230, %v3395
      %v3410 = vmul.f32 %v3231, %v3395
      %v3411 = vmul.f32 %v3232, %v3395
      %v3412 = vmul.f32 %v3233, %v3395
      %v3413 = vmul.f32 %v3234, %v3395
      %v3414 = vmul.f32 %v3235, %v3395
      %v3415 = vmul.f32 %v3236, %v3395
      %v3436 = vrot.slane %v3396, 2
      %v3437 = vrot.slane %v3397, 2
      %v3438 = vsel %vm3145, %v3436, %v3437
      %v3439 = vrot.slane %v3398, 2
      %v3440 = vrot.slane %v3399, 2
      %v3441 = vsel %vm3145, %v3439, %v3440
      %v3442 = vrot.slane %v3400, 2
      %v3443 = vrot.slane %v3401, 2
      %v3444 = vsel %vm3145, %v3442, %v3443
      %v3445 = vrot.slane %v3402, 2
      %v3446 = vrot.slane %v3403, 2
      %v3447 = vsel %vm3145, %v3445, %v3446
      %v3448 = vrot.slane %v3404, 2
      %v3449 = vrot.slane %v3405, 2
      %v3450 = vsel %vm3145, %v3448, %v3449
      %v3451 = vrot.slane %v3406, 2
      %v3452 = vrot.slane %v3407, 2
      %v3453 = vsel %vm3145, %v3451, %v3452
      %v3454 = vrot.slane %v3408, 2
      %v3455 = vrot.slane %v3409, 2
      %v3456 = vsel %vm3145, %v3454, %v3455
      %v3457 = vrot.slane %v3410, 2
      %v3458 = vrot.slane %v3411, 2
      %v3459 = vsel %vm3145, %v3457, %v3458
      %v3460 = vrot.slane %v3412, 2
      %v3461 = vrot.slane %v3413, 2
      %v3462 = vsel %vm3145, %v3460, %v3461
      %v3463 = vrot.slane %v3414, 2
      %v3464 = vrot.slane %v3415, 2
      %v3465 = vsel %vm3145, %v3463, %v3464
      %v3486 = vadd.f32 %v3373, %v3438
      %v3487 = vadd.f32 %v3374, %v3437
      %v3488 = vadd.f32 %v3375, %v3441
      %v3489 = vadd.f32 %v3376, %v3440
      %v3490 = vadd.f32 %v3377, %v3444
      %v3491 = vadd.f32 %v3378, %v3443
      %v3492 = vadd.f32 %v3379, %v3447
      %v3493 = vadd.f32 %v3380, %v3446
      %v3494 = vadd.f32 %v3381, %v3450
      %v3495 = vadd.f32 %v3382, %v3449
      %v3496 = vadd.f32 %v3383, %v3453
      %v3497 = vadd.f32 %v3384, %v3452
      %v3498 = vadd.f32 %v3385, %v3456
      %v3499 = vadd.f32 %v3386, %v3455
      %v3500 = vadd.f32 %v3387, %v3459
      %v3501 = vadd.f32 %v3388, %v3458
      %v3502 = vadd.f32 %v3389, %v3462
      %v3503 = vadd.f32 %v3390, %v3461
      %v3504 = vadd.f32 %v3391, %v3465
      %v3505 = vadd.f32 %v3392, %v3464
      %s3506 = scalar_lea.vmem [#allocation3], 32
      %v3507 = vld [vmem:[%s3506] sm:$0xff]
      %v3508 = vld [vmem:[%s3506 + $0x8] sm:$0xf]
      %v3509 = vld [vmem:[%s3506 + $0x10] sm:$0xff]
      %v3510 = vld [vmem:[%s3506 + $0x18] sm:$0xf]
      %v3511 = vld [vmem:[%s3506 + $0x20] sm:$0xff]
      %v3512 = vld [vmem:[%s3506 + $0x28] sm:$0xf]
      %v3513 = vld [vmem:[%s3506 + $0x30] sm:$0xff]
      %v3514 = vld [vmem:[%s3506 + $0x38] sm:$0xf]
      %v3515 = vld [vmem:[%s3506 + $0x40] sm:$0xff]
      %v3516 = vld [vmem:[%s3506 + $0x48] sm:$0xf]
      %v3517 = vld [vmem:[%s3506 + $0x50] sm:$0xff]
      %v3518 = vld [vmem:[%s3506 + $0x58] sm:$0xf]
      %v3519 = vld [vmem:[%s3506 + $0x60] sm:$0xff]
      %v3520 = vld [vmem:[%s3506 + $0x68] sm:$0xf]
      %v3521 = vld [vmem:[%s3506 + $0x70] sm:$0xff]
      %v3522 = vld [vmem:[%s3506 + $0x78] sm:$0xf]
      %v3523 = vld [vmem:[%s3506 + $0x80] sm:$0xff]
      %v3524 = vld [vmem:[%s3506 + $0x88] sm:$0xf]
      %v3525 = vld [vmem:[%s3506 + $0x90] sm:$0xff]
      %v3526 = vld [vmem:[%s3506 + $0x98] sm:$0xf]
      %s3527 = sadd.s32 %s2945, 6
      %s3528 = sld [smem:[#allocation10 + %s3527]]
      %v3529 = vstv %s3528
      %v3530 = vmul.f32 %v3507, %v3529
      %v3531 = vmul.f32 %v3508, %v3529
      %v3532 = vmul.f32 %v3509, %v3529
      %v3533 = vmul.f32 %v3510, %v3529
      %v3534 = vmul.f32 %v3511, %v3529
      %v3535 = vmul.f32 %v3512, %v3529
      %v3536 = vmul.f32 %v3513, %v3529
      %v3537 = vmul.f32 %v3514, %v3529
      %v3538 = vmul.f32 %v3515, %v3529
      %v3539 = vmul.f32 %v3516, %v3529
      %v3540 = vmul.f32 %v3517, %v3529
      %v3541 = vmul.f32 %v3518, %v3529
      %v3542 = vmul.f32 %v3519, %v3529
      %v3543 = vmul.f32 %v3520, %v3529
      %v3544 = vmul.f32 %v3521, %v3529
      %v3545 = vmul.f32 %v3522, %v3529
      %v3546 = vmul.f32 %v3523, %v3529
      %v3547 = vmul.f32 %v3524, %v3529
      %v3548 = vmul.f32 %v3525, %v3529
      %v3549 = vmul.f32 %v3526, %v3529
      %v3550 = vadd.f32 %v3486, %v3530
      %v3551 = vadd.f32 %v3487, %v3531
      %v3552 = vadd.f32 %v3488, %v3532
      %v3553 = vadd.f32 %v3489, %v3533
      %v3554 = vadd.f32 %v3490, %v3534
      %v3555 = vadd.f32 %v3491, %v3535
      %v3556 = vadd.f32 %v3492, %v3536
      %v3557 = vadd.f32 %v3493, %v3537
      %v3558 = vadd.f32 %v3494, %v3538
      %v3559 = vadd.f32 %v3495, %v3539
      %v3560 = vadd.f32 %v3496, %v3540
      %v3561 = vadd.f32 %v3497, %v3541
      %v3562 = vadd.f32 %v3498, %v3542
      %v3563 = vadd.f32 %v3499, %v3543
      %v3564 = vadd.f32 %v3500, %v3544
      %v3565 = vadd.f32 %v3501, %v3545
      %v3566 = vadd.f32 %v3502, %v3546
      %v3567 = vadd.f32 %v3503, %v3547
      %v3568 = vadd.f32 %v3504, %v3548
      %v3569 = vadd.f32 %v3505, %v3549
      %s3570 = sadd.s32 %s2945, 7
      %s3571 = sld [smem:[#allocation10 + %s3570]]
      %v3572 = vstv %s3571
      %v3573 = vmul.f32 %v3507, %v3572
      %v3574 = vmul.f32 %v3508, %v3572
      %v3575 = vmul.f32 %v3509, %v3572
      %v3576 = vmul.f32 %v3510, %v3572
      %v3577 = vmul.f32 %v3511, %v3572
      %v3578 = vmul.f32 %v3512, %v3572
      %v3579 = vmul.f32 %v3513, %v3572
      %v3580 = vmul.f32 %v3514, %v3572
      %v3581 = vmul.f32 %v3515, %v3572
      %v3582 = vmul.f32 %v3516, %v3572
      %v3583 = vmul.f32 %v3517, %v3572
      %v3584 = vmul.f32 %v3518, %v3572
      %v3585 = vmul.f32 %v3519, %v3572
      %v3586 = vmul.f32 %v3520, %v3572
      %v3587 = vmul.f32 %v3521, %v3572
      %v3588 = vmul.f32 %v3522, %v3572
      %v3589 = vmul.f32 %v3523, %v3572
      %v3590 = vmul.f32 %v3524, %v3572
      %v3591 = vmul.f32 %v3525, %v3572
      %v3592 = vmul.f32 %v3526, %v3572
      %v3613 = vrot.slane %v3573, 1
      %v3614 = vrot.slane %v3574, 1
      %v3615 = vsel %vm3031, %v3613, %v3614
      %v3616 = vrot.slane %v3575, 1
      %v3617 = vrot.slane %v3576, 1
      %v3618 = vsel %vm3031, %v3616, %v3617
      %v3619 = vrot.slane %v3577, 1
      %v3620 = vrot.slane %v3578, 1
      %v3621 = vsel %vm3031, %v3619, %v3620
      %v3622 = vrot.slane %v3579, 1
      %v3623 = vrot.slane %v3580, 1
      %v3624 = vsel %vm3031, %v3622, %v3623
      %v3625 = vrot.slane %v3581, 1
      %v3626 = vrot.slane %v3582, 1
      %v3627 = vsel %vm3031, %v3625, %v3626
      %v3628 = vrot.slane %v3583, 1
      %v3629 = vrot.slane %v3584, 1
      %v3630 = vsel %vm3031, %v3628, %v3629
      %v3631 = vrot.slane %v3585, 1
      %v3632 = vrot.slane %v3586, 1
      %v3633 = vsel %vm3031, %v3631, %v3632
      %v3634 = vrot.slane %v3587, 1
      %v3635 = vrot.slane %v3588, 1
      %v3636 = vsel %vm3031, %v3634, %v3635
      %v3637 = vrot.slane %v3589, 1
      %v3638 = vrot.slane %v3590, 1
      %v3639 = vsel %vm3031, %v3637, %v3638
      %v3640 = vrot.slane %v3591, 1
      %v3641 = vrot.slane %v3592, 1
      %v3642 = vsel %vm3031, %v3640, %v3641
      %v3663 = vadd.f32 %v3550, %v3615
      %v3664 = vadd.f32 %v3551, %v3614
      %v3665 = vadd.f32 %v3552, %v3618
      %v3666 = vadd.f32 %v3553, %v3617
      %v3667 = vadd.f32 %v3554, %v3621
      %v3668 = vadd.f32 %v3555, %v3620
      %v3669 = vadd.f32 %v3556, %v3624
      %v3670 = vadd.f32 %v3557, %v3623
      %v3671 = vadd.f32 %v3558, %v3627
      %v3672 = vadd.f32 %v3559, %v3626
      %v3673 = vadd.f32 %v3560, %v3630
      %v3674 = vadd.f32 %v3561, %v3629
      %v3675 = vadd.f32 %v3562, %v3633
      %v3676 = vadd.f32 %v3563, %v3632
      %v3677 = vadd.f32 %v3564, %v3636
      %v3678 = vadd.f32 %v3565, %v3635
      %v3679 = vadd.f32 %v3566, %v3639
      %v3680 = vadd.f32 %v3567, %v3638
      %v3681 = vadd.f32 %v3568, %v3642
      %v3682 = vadd.f32 %v3569, %v3641
      %s3683 = sadd.s32 %s2945, 8
      %s3684 = sld [smem:[#allocation10 + %s3683]]
      %v3685 = vstv %s3684
      %v3686 = vmul.f32 %v3507, %v3685
      %v3687 = vmul.f32 %v3508, %v3685
      %v3688 = vmul.f32 %v3509, %v3685
      %v3689 = vmul.f32 %v3510, %v3685
      %v3690 = vmul.f32 %v3511, %v3685
      %v3691 = vmul.f32 %v3512, %v3685
      %v3692 = vmul.f32 %v3513, %v3685
      %v3693 = vmul.f32 %v3514, %v3685
      %v3694 = vmul.f32 %v3515, %v3685
      %v3695 = vmul.f32 %v3516, %v3685
      %v3696 = vmul.f32 %v3517, %v3685
      %v3697 = vmul.f32 %v3518, %v3685
      %v3698 = vmul.f32 %v3519, %v3685
      %v3699 = vmul.f32 %v3520, %v3685
      %v3700 = vmul.f32 %v3521, %v3685
      %v3701 = vmul.f32 %v3522, %v3685
      %v3702 = vmul.f32 %v3523, %v3685
      %v3703 = vmul.f32 %v3524, %v3685
      %v3704 = vmul.f32 %v3525, %v3685
      %v3705 = vmul.f32 %v3526, %v3685
      %v3726 = vrot.slane %v3686, 2
      %v3727 = vrot.slane %v3687, 2
      %v3728 = vsel %vm3145, %v3726, %v3727
      %v3729 = vrot.slane %v3688, 2
      %v3730 = vrot.slane %v3689, 2
      %v3731 = vsel %vm3145, %v3729, %v3730
      %v3732 = vrot.slane %v3690, 2
      %v3733 = vrot.slane %v3691, 2
      %v3734 = vsel %vm3145, %v3732, %v3733
      %v3735 = vrot.slane %v3692, 2
      %v3736 = vrot.slane %v3693, 2
      %v3737 = vsel %vm3145, %v3735, %v3736
      %v3738 = vrot.slane %v3694, 2
      %v3739 = vrot.slane %v3695, 2
      %v3740 = vsel %vm3145, %v3738, %v3739
      %v3741 = vrot.slane %v3696, 2
      %v3742 = vrot.slane %v3697, 2
      %v3743 = vsel %vm3145, %v3741, %v3742
      %v3744 = vrot.slane %v3698, 2
      %v3745 = vrot.slane %v3699, 2
      %v3746 = vsel %vm3145, %v3744, %v3745
      %v3747 = vrot.slane %v3700, 2
      %v3748 = vrot.slane %v3701, 2
      %v3749 = vsel %vm3145, %v3747, %v3748
      %v3750 = vrot.slane %v3702, 2
      %v3751 = vrot.slane %v3703, 2
      %v3752 = vsel %vm3145, %v3750, %v3751
      %v3753 = vrot.slane %v3704, 2
      %v3754 = vrot.slane %v3705, 2
      %v3755 = vsel %vm3145, %v3753, %v3754
      %v3776 = vadd.f32 %v3663, %v3728
      %v3777 = vadd.f32 %v3664, %v3727
      %v3778 = vadd.f32 %v3665, %v3731
      %v3779 = vadd.f32 %v3666, %v3730
      %v3780 = vadd.f32 %v3667, %v3734
      %v3781 = vadd.f32 %v3668, %v3733
      %v3782 = vadd.f32 %v3669, %v3737
      %v3783 = vadd.f32 %v3670, %v3736
      %v3784 = vadd.f32 %v3671, %v3740
      %v3785 = vadd.f32 %v3672, %v3739
      %v3786 = vadd.f32 %v3673, %v3743
      %v3787 = vadd.f32 %v3674, %v3742
      %v3788 = vadd.f32 %v3675, %v3746
      %v3789 = vadd.f32 %v3676, %v3745
      %v3790 = vadd.f32 %v3677, %v3749
      %v3791 = vadd.f32 %v3678, %v3748
      %v3792 = vadd.f32 %v3679, %v3752
      %v3793 = vadd.f32 %v3680, %v3751
      %v3794 = vadd.f32 %v3681, %v3755
      %v3795 = vadd.f32 %v3682, %v3754
      %s3796 = scalar_lea.vmem [#allocation3], 192
      %v3797 = vld [vmem:[%s3796] sm:$0xff]
      %v3798 = vld [vmem:[%s3796 + $0x8] sm:$0xf]
      %v3799 = vld [vmem:[%s3796 + $0x10] sm:$0xff]
      %v3800 = vld [vmem:[%s3796 + $0x18] sm:$0xf]
      %v3801 = vld [vmem:[%s3796 + $0x20] sm:$0xff]
      %v3802 = vld [vmem:[%s3796 + $0x28] sm:$0xf]
      %v3803 = vld [vmem:[%s3796 + $0x30] sm:$0xff]
      %v3804 = vld [vmem:[%s3796 + $0x38] sm:$0xf]
      %v3805 = vld [vmem:[%s3796 + $0x40] sm:$0xff]
      %v3806 = vld [vmem:[%s3796 + $0x48] sm:$0xf]
      %v3807 = vld [vmem:[%s3796 + $0x50] sm:$0xff]
      %v3808 = vld [vmem:[%s3796 + $0x58] sm:$0xf]
      %v3809 = vld [vmem:[%s3796 + $0x60] sm:$0xff]
      %v3810 = vld [vmem:[%s3796 + $0x68] sm:$0xf]
      %v3811 = vld [vmem:[%s3796 + $0x70] sm:$0xff]
      %v3812 = vld [vmem:[%s3796 + $0x78] sm:$0xf]
      %v3813 = vld [vmem:[%s3796 + $0x80] sm:$0xff]
      %v3814 = vld [vmem:[%s3796 + $0x88] sm:$0xf]
      %v3815 = vld [vmem:[%s3796 + $0x90] sm:$0xff]
      %v3816 = vld [vmem:[%s3796 + $0x98] sm:$0xf]
      %s3817 = sadd.s32 %s2945, 9
      %s3818 = sld [smem:[#allocation10 + %s3817]]
      %v3819 = vstv %s3818
      %v3820 = vmul.f32 %v3797, %v3819
      %v3821 = vmul.f32 %v3798, %v3819
      %v3822 = vmul.f32 %v3799, %v3819
      %v3823 = vmul.f32 %v3800, %v3819
      %v3824 = vmul.f32 %v3801, %v3819
      %v3825 = vmul.f32 %v3802, %v3819
      %v3826 = vmul.f32 %v3803, %v3819
      %v3827 = vmul.f32 %v3804, %v3819
      %v3828 = vmul.f32 %v3805, %v3819
      %v3829 = vmul.f32 %v3806, %v3819
      %v3830 = vmul.f32 %v3807, %v3819
      %v3831 = vmul.f32 %v3808, %v3819
      %v3832 = vmul.f32 %v3809, %v3819
      %v3833 = vmul.f32 %v3810, %v3819
      %v3834 = vmul.f32 %v3811, %v3819
      %v3835 = vmul.f32 %v3812, %v3819
      %v3836 = vmul.f32 %v3813, %v3819
      %v3837 = vmul.f32 %v3814, %v3819
      %v3838 = vmul.f32 %v3815, %v3819
      %v3839 = vmul.f32 %v3816, %v3819
      %v3840 = vadd.f32 %v3776, %v3820
      %v3841 = vadd.f32 %v3777, %v3821
      %v3842 = vadd.f32 %v3778, %v3822
      %v3843 = vadd.f32 %v3779, %v3823
      %v3844 = vadd.f32 %v3780, %v3824
      %v3845 = vadd.f32 %v3781, %v3825
      %v3846 = vadd.f32 %v3782, %v3826
      %v3847 = vadd.f32 %v3783, %v3827
      %v3848 = vadd.f32 %v3784, %v3828
      %v3849 = vadd.f32 %v3785, %v3829
      %v3850 = vadd.f32 %v3786, %v3830
      %v3851 = vadd.f32 %v3787, %v3831
      %v3852 = vadd.f32 %v3788, %v3832
      %v3853 = vadd.f32 %v3789, %v3833
      %v3854 = vadd.f32 %v3790, %v3834
      %v3855 = vadd.f32 %v3791, %v3835
      %v3856 = vadd.f32 %v3792, %v3836
      %v3857 = vadd.f32 %v3793, %v3837
      %v3858 = vadd.f32 %v3794, %v3838
      %v3859 = vadd.f32 %v3795, %v3839
      %s3860 = sadd.s32 %s2945, 10
      %s3861 = sld [smem:[#allocation10 + %s3860]]
      %v3862 = vstv %s3861
      %v3863 = vmul.f32 %v3797, %v3862
      %v3864 = vmul.f32 %v3798, %v3862
      %v3865 = vmul.f32 %v3799, %v3862
      %v3866 = vmul.f32 %v3800, %v3862
      %v3867 = vmul.f32 %v3801, %v3862
      %v3868 = vmul.f32 %v3802, %v3862
      %v3869 = vmul.f32 %v3803, %v3862
      %v3870 = vmul.f32 %v3804, %v3862
      %v3871 = vmul.f32 %v3805, %v3862
      %v3872 = vmul.f32 %v3806, %v3862
      %v3873 = vmul.f32 %v3807, %v3862
      %v3874 = vmul.f32 %v3808, %v3862
      %v3875 = vmul.f32 %v3809, %v3862
      %v3876 = vmul.f32 %v3810, %v3862
      %v3877 = vmul.f32 %v3811, %v3862
      %v3878 = vmul.f32 %v3812, %v3862
      %v3879 = vmul.f32 %v3813, %v3862
      %v3880 = vmul.f32 %v3814, %v3862
      %v3881 = vmul.f32 %v3815, %v3862
      %v3882 = vmul.f32 %v3816, %v3862
      %v3903 = vrot.slane %v3863, 1
      %v3904 = vrot.slane %v3864, 1
      %v3905 = vsel %vm3031, %v3903, %v3904
      %v3906 = vrot.slane %v3865, 1
      %v3907 = vrot.slane %v3866, 1
      %v3908 = vsel %vm3031, %v3906, %v3907
      %v3909 = vrot.slane %v3867, 1
      %v3910 = vrot.slane %v3868, 1
      %v3911 = vsel %vm3031, %v3909, %v3910
      %v3912 = vrot.slane %v3869, 1
      %v3913 = vrot.slane %v3870, 1
      %v3914 = vsel %vm3031, %v3912, %v3913
      %v3915 = vrot.slane %v3871, 1
      %v3916 = vrot.slane %v3872, 1
      %v3917 = vsel %vm3031, %v3915, %v3916
      %v3918 = vrot.slane %v3873, 1
      %v3919 = vrot.slane %v3874, 1
      %v3920 = vsel %vm3031, %v3918, %v3919
      %v3921 = vrot.slane %v3875, 1
      %v3922 = vrot.slane %v3876, 1
      %v3923 = vsel %vm3031, %v3921, %v3922
      %v3924 = vrot.slane %v3877, 1
      %v3925 = vrot.slane %v3878, 1
      %v3926 = vsel %vm3031, %v3924, %v3925
      %v3927 = vrot.slane %v3879, 1
      %v3928 = vrot.slane %v3880, 1
      %v3929 = vsel %vm3031, %v3927, %v3928
      %v3930 = vrot.slane %v3881, 1
      %v3931 = vrot.slane %v3882, 1
      %v3932 = vsel %vm3031, %v3930, %v3931
      %v3953 = vadd.f32 %v3840, %v3905
      %v3954 = vadd.f32 %v3841, %v3904
      %v3955 = vadd.f32 %v3842, %v3908
      %v3956 = vadd.f32 %v3843, %v3907
      %v3957 = vadd.f32 %v3844, %v3911
      %v3958 = vadd.f32 %v3845, %v3910
      %v3959 = vadd.f32 %v3846, %v3914
      %v3960 = vadd.f32 %v3847, %v3913
      %v3961 = vadd.f32 %v3848, %v3917
      %v3962 = vadd.f32 %v3849, %v3916
      %v3963 = vadd.f32 %v3850, %v3920
      %v3964 = vadd.f32 %v3851, %v3919
      %v3965 = vadd.f32 %v3852, %v3923
      %v3966 = vadd.f32 %v3853, %v3922
      %v3967 = vadd.f32 %v3854, %v3926
      %v3968 = vadd.f32 %v3855, %v3925
      %v3969 = vadd.f32 %v3856, %v3929
      %v3970 = vadd.f32 %v3857, %v3928
      %v3971 = vadd.f32 %v3858, %v3932
      %v3972 = vadd.f32 %v3859, %v3931
      %s3973 = sadd.s32 %s2945, 11
      %s3974 = sld [smem:[#allocation10 + %s3973]]
      %v3975 = vstv %s3974
      %v3976 = vmul.f32 %v3797, %v3975
      %v3977 = vmul.f32 %v3798, %v3975
      %v3978 = vmul.f32 %v3799, %v3975
      %v3979 = vmul.f32 %v3800, %v3975
      %v3980 = vmul.f32 %v3801, %v3975
      %v3981 = vmul.f32 %v3802, %v3975
      %v3982 = vmul.f32 %v3803, %v3975
      %v3983 = vmul.f32 %v3804, %v3975
      %v3984 = vmul.f32 %v3805, %v3975
      %v3985 = vmul.f32 %v3806, %v3975
      %v3986 = vmul.f32 %v3807, %v3975
      %v3987 = vmul.f32 %v3808, %v3975
      %v3988 = vmul.f32 %v3809, %v3975
      %v3989 = vmul.f32 %v3810, %v3975
      %v3990 = vmul.f32 %v3811, %v3975
      %v3991 = vmul.f32 %v3812, %v3975
      %v3992 = vmul.f32 %v3813, %v3975
      %v3993 = vmul.f32 %v3814, %v3975
      %v3994 = vmul.f32 %v3815, %v3975
      %v3995 = vmul.f32 %v3816, %v3975
      %v4016 = vrot.slane %v3976, 2
      %v4017 = vrot.slane %v3977, 2
      %v4018 = vsel %vm3145, %v4016, %v4017
      %v4019 = vrot.slane %v3978, 2
      %v4020 = vrot.slane %v3979, 2
      %v4021 = vsel %vm3145, %v4019, %v4020
      %v4022 = vrot.slane %v3980, 2
      %v4023 = vrot.slane %v3981, 2
      %v4024 = vsel %vm3145, %v4022, %v4023
      %v4025 = vrot.slane %v3982, 2
      %v4026 = vrot.slane %v3983, 2
      %v4027 = vsel %vm3145, %v4025, %v4026
      %v4028 = vrot.slane %v3984, 2
      %v4029 = vrot.slane %v3985, 2
      %v4030 = vsel %vm3145, %v4028, %v4029
      %v4031 = vrot.slane %v3986, 2
      %v4032 = vrot.slane %v3987, 2
      %v4033 = vsel %vm3145, %v4031, %v4032
      %v4034 = vrot.slane %v3988, 2
      %v4035 = vrot.slane %v3989, 2
      %v4036 = vsel %vm3145, %v4034, %v4035
      %v4037 = vrot.slane %v3990, 2
      %v4038 = vrot.slane %v3991, 2
      %v4039 = vsel %vm3145, %v4037, %v4038
      %v4040 = vrot.slane %v3992, 2
      %v4041 = vrot.slane %v3993, 2
      %v4042 = vsel %vm3145, %v4040, %v4041
      %v4043 = vrot.slane %v3994, 2
      %v4044 = vrot.slane %v3995, 2
      %v4045 = vsel %vm3145, %v4043, %v4044
      %v4066 = vadd.f32 %v3953, %v4018
      %v4067 = vadd.f32 %v3954, %v4017
      %v4068 = vadd.f32 %v3955, %v4021
      %v4069 = vadd.f32 %v3956, %v4020
      %v4070 = vadd.f32 %v3957, %v4024
      %v4071 = vadd.f32 %v3958, %v4023
      %v4072 = vadd.f32 %v3959, %v4027
      %v4073 = vadd.f32 %v3960, %v4026
      %v4074 = vadd.f32 %v3961, %v4030
      %v4075 = vadd.f32 %v3962, %v4029
      %v4076 = vadd.f32 %v3963, %v4033
      %v4077 = vadd.f32 %v3964, %v4032
      %v4078 = vadd.f32 %v3965, %v4036
      %v4079 = vadd.f32 %v3966, %v4035
      %v4080 = vadd.f32 %v3967, %v4039
      %v4081 = vadd.f32 %v3968, %v4038
      %v4082 = vadd.f32 %v3969, %v4042
      %v4083 = vadd.f32 %v3970, %v4041
      %v4084 = vadd.f32 %v3971, %v4045
      %v4085 = vadd.f32 %v3972, %v4044
      %s4086 = scalar_lea.vmem [#allocation3], 208
      %v4087 = vld [vmem:[%s4086] sm:$0xff]
      %v4088 = vld [vmem:[%s4086 + $0x8] sm:$0xf]
      %v4089 = vld [vmem:[%s4086 + $0x10] sm:$0xff]
      %v4090 = vld [vmem:[%s4086 + $0x18] sm:$0xf]
      %v4091 = vld [vmem:[%s4086 + $0x20] sm:$0xff]
      %v4092 = vld [vmem:[%s4086 + $0x28] sm:$0xf]
      %v4093 = vld [vmem:[%s4086 + $0x30] sm:$0xff]
      %v4094 = vld [vmem:[%s4086 + $0x38] sm:$0xf]
      %v4095 = vld [vmem:[%s4086 + $0x40] sm:$0xff]
      %v4096 = vld [vmem:[%s4086 + $0x48] sm:$0xf]
      %v4097 = vld [vmem:[%s4086 + $0x50] sm:$0xff]
      %v4098 = vld [vmem:[%s4086 + $0x58] sm:$0xf]
      %v4099 = vld [vmem:[%s4086 + $0x60] sm:$0xff]
      %v4100 = vld [vmem:[%s4086 + $0x68] sm:$0xf]
      %v4101 = vld [vmem:[%s4086 + $0x70] sm:$0xff]
      %v4102 = vld [vmem:[%s4086 + $0x78] sm:$0xf]
      %v4103 = vld [vmem:[%s4086 + $0x80] sm:$0xff]
      %v4104 = vld [vmem:[%s4086 + $0x88] sm:$0xf]
      %v4105 = vld [vmem:[%s4086 + $0x90] sm:$0xff]
      %v4106 = vld [vmem:[%s4086 + $0x98] sm:$0xf]
      %s4107 = sadd.s32 %s2945, 12
      %s4108 = sld [smem:[#allocation10 + %s4107]]
      %v4109 = vstv %s4108
      %v4110 = vmul.f32 %v4087, %v4109
      %v4111 = vmul.f32 %v4088, %v4109
      %v4112 = vmul.f32 %v4089, %v4109
      %v4113 = vmul.f32 %v4090, %v4109
      %v4114 = vmul.f32 %v4091, %v4109
      %v4115 = vmul.f32 %v4092, %v4109
      %v4116 = vmul.f32 %v4093, %v4109
      %v4117 = vmul.f32 %v4094, %v4109
      %v4118 = vmul.f32 %v4095, %v4109
      %v4119 = vmul.f32 %v4096, %v4109
      %v4120 = vmul.f32 %v4097, %v4109
      %v4121 = vmul.f32 %v4098, %v4109
      %v4122 = vmul.f32 %v4099, %v4109
      %v4123 = vmul.f32 %v4100, %v4109
      %v4124 = vmul.f32 %v4101, %v4109
      %v4125 = vmul.f32 %v4102, %v4109
      %v4126 = vmul.f32 %v4103, %v4109
      %v4127 = vmul.f32 %v4104, %v4109
      %v4128 = vmul.f32 %v4105, %v4109
      %v4129 = vmul.f32 %v4106, %v4109
      %v4130 = vadd.f32 %v4066, %v4110
      %v4131 = vadd.f32 %v4067, %v4111
      %v4132 = vadd.f32 %v4068, %v4112
      %v4133 = vadd.f32 %v4069, %v4113
      %v4134 = vadd.f32 %v4070, %v4114
      %v4135 = vadd.f32 %v4071, %v4115
      %v4136 = vadd.f32 %v4072, %v4116
      %v4137 = vadd.f32 %v4073, %v4117
      %v4138 = vadd.f32 %v4074, %v4118
      %v4139 = vadd.f32 %v4075, %v4119
      %v4140 = vadd.f32 %v4076, %v4120
      %v4141 = vadd.f32 %v4077, %v4121
      %v4142 = vadd.f32 %v4078, %v4122
      %v4143 = vadd.f32 %v4079, %v4123
      %v4144 = vadd.f32 %v4080, %v4124
      %v4145 = vadd.f32 %v4081, %v4125
      %v4146 = vadd.f32 %v4082, %v4126
      %v4147 = vadd.f32 %v4083, %v4127
      %v4148 = vadd.f32 %v4084, %v4128
      %v4149 = vadd.f32 %v4085, %v4129
      %s4150 = sadd.s32 %s2945, 13
      %s4151 = sld [smem:[#allocation10 + %s4150]]
      %v4152 = vstv %s4151
      %v4153 = vmul.f32 %v4087, %v4152
      %v4154 = vmul.f32 %v4088, %v4152
      %v4155 = vmul.f32 %v4089, %v4152
      %v4156 = vmul.f32 %v4090, %v4152
      %v4157 = vmul.f32 %v4091, %v4152
      %v4158 = vmul.f32 %v4092, %v4152
      %v4159 = vmul.f32 %v4093, %v4152
      %v4160 = vmul.f32 %v4094, %v4152
      %v4161 = vmul.f32 %v4095, %v4152
      %v4162 = vmul.f32 %v4096, %v4152
      %v4163 = vmul.f32 %v4097, %v4152
      %v4164 = vmul.f32 %v4098, %v4152
      %v4165 = vmul.f32 %v4099, %v4152
      %v4166 = vmul.f32 %v4100, %v4152
      %v4167 = vmul.f32 %v4101, %v4152
      %v4168 = vmul.f32 %v4102, %v4152
      %v4169 = vmul.f32 %v4103, %v4152
      %v4170 = vmul.f32 %v4104, %v4152
      %v4171 = vmul.f32 %v4105, %v4152
      %v4172 = vmul.f32 %v4106, %v4152
      %v4193 = vrot.slane %v4153, 1
      %v4194 = vrot.slane %v4154, 1
      %v4195 = vsel %vm3031, %v4193, %v4194
      %v4196 = vrot.slane %v4155, 1
      %v4197 = vrot.slane %v4156, 1
      %v4198 = vsel %vm3031, %v4196, %v4197
      %v4199 = vrot.slane %v4157, 1
      %v4200 = vrot.slane %v4158, 1
      %v4201 = vsel %vm3031, %v4199, %v4200
      %v4202 = vrot.slane %v4159, 1
      %v4203 = vrot.slane %v4160, 1
      %v4204 = vsel %vm3031, %v4202, %v4203
      %v4205 = vrot.slane %v4161, 1
      %v4206 = vrot.slane %v4162, 1
      %v4207 = vsel %vm3031, %v4205, %v4206
      %v4208 = vrot.slane %v4163, 1
      %v4209 = vrot.slane %v4164, 1
      %v4210 = vsel %vm3031, %v4208, %v4209
      %v4211 = vrot.slane %v4165, 1
      %v4212 = vrot.slane %v4166, 1
      %v4213 = vsel %vm3031, %v4211, %v4212
      %v4214 = vrot.slane %v4167, 1
      %v4215 = vrot.slane %v4168, 1
      %v4216 = vsel %vm3031, %v4214, %v4215
      %v4217 = vrot.slane %v4169, 1
      %v4218 = vrot.slane %v4170, 1
      %v4219 = vsel %vm3031, %v4217, %v4218
      %v4220 = vrot.slane %v4171, 1
      %v4221 = vrot.slane %v4172, 1
      %v4222 = vsel %vm3031, %v4220, %v4221
      %v4243 = vadd.f32 %v4130, %v4195
      %v4244 = vadd.f32 %v4131, %v4194
      %v4245 = vadd.f32 %v4132, %v4198
      %v4246 = vadd.f32 %v4133, %v4197
      %v4247 = vadd.f32 %v4134, %v4201
      %v4248 = vadd.f32 %v4135, %v4200
      %v4249 = vadd.f32 %v4136, %v4204
      %v4250 = vadd.f32 %v4137, %v4203
      %v4251 = vadd.f32 %v4138, %v4207
      %v4252 = vadd.f32 %v4139, %v4206
      %v4253 = vadd.f32 %v4140, %v4210
      %v4254 = vadd.f32 %v4141, %v4209
      %v4255 = vadd.f32 %v4142, %v4213
      %v4256 = vadd.f32 %v4143, %v4212
      %v4257 = vadd.f32 %v4144, %v4216
      %v4258 = vadd.f32 %v4145, %v4215
      %v4259 = vadd.f32 %v4146, %v4219
      %v4260 = vadd.f32 %v4147, %v4218
      %v4261 = vadd.f32 %v4148, %v4222
      %v4262 = vadd.f32 %v4149, %v4221
      %s4263 = sadd.s32 %s2945, 14
      %s4264 = sld [smem:[#allocation10 + %s4263]]
      %v4265 = vstv %s4264
      %v4266 = vmul.f32 %v4087, %v4265
      %v4267 = vmul.f32 %v4088, %v4265
      %v4268 = vmul.f32 %v4089, %v4265
      %v4269 = vmul.f32 %v4090, %v4265
      %v4270 = vmul.f32 %v4091, %v4265
      %v4271 = vmul.f32 %v4092, %v4265
      %v4272 = vmul.f32 %v4093, %v4265
      %v4273 = vmul.f32 %v4094, %v4265
      %v4274 = vmul.f32 %v4095, %v4265
      %v4275 = vmul.f32 %v4096, %v4265
      %v4276 = vmul.f32 %v4097, %v4265
      %v4277 = vmul.f32 %v4098, %v4265
      %v4278 = vmul.f32 %v4099, %v4265
      %v4279 = vmul.f32 %v4100, %v4265
      %v4280 = vmul.f32 %v4101, %v4265
      %v4281 = vmul.f32 %v4102, %v4265
      %v4282 = vmul.f32 %v4103, %v4265
      %v4283 = vmul.f32 %v4104, %v4265
      %v4284 = vmul.f32 %v4105, %v4265
      %v4285 = vmul.f32 %v4106, %v4265
      %v4306 = vrot.slane %v4266, 2
      %v4307 = vrot.slane %v4267, 2
      %v4308 = vsel %vm3145, %v4306, %v4307
      %v4309 = vrot.slane %v4268, 2
      %v4310 = vrot.slane %v4269, 2
      %v4311 = vsel %vm3145, %v4309, %v4310
      %v4312 = vrot.slane %v4270, 2
      %v4313 = vrot.slane %v4271, 2
      %v4314 = vsel %vm3145, %v4312, %v4313
      %v4315 = vrot.slane %v4272, 2
      %v4316 = vrot.slane %v4273, 2
      %v4317 = vsel %vm3145, %v4315, %v4316
      %v4318 = vrot.slane %v4274, 2
      %v4319 = vrot.slane %v4275, 2
      %v4320 = vsel %vm3145, %v4318, %v4319
      %v4321 = vrot.slane %v4276, 2
      %v4322 = vrot.slane %v4277, 2
      %v4323 = vsel %vm3145, %v4321, %v4322
      %v4324 = vrot.slane %v4278, 2
      %v4325 = vrot.slane %v4279, 2
      %v4326 = vsel %vm3145, %v4324, %v4325
      %v4327 = vrot.slane %v4280, 2
      %v4328 = vrot.slane %v4281, 2
      %v4329 = vsel %vm3145, %v4327, %v4328
      %v4330 = vrot.slane %v4282, 2
      %v4331 = vrot.slane %v4283, 2
      %v4332 = vsel %vm3145, %v4330, %v4331
      %v4333 = vrot.slane %v4284, 2
      %v4334 = vrot.slane %v4285, 2
      %v4335 = vsel %vm3145, %v4333, %v4334
      %v4356 = vadd.f32 %v4243, %v4308
      %v4357 = vadd.f32 %v4244, %v4307
      %v4358 = vadd.f32 %v4245, %v4311
      %v4359 = vadd.f32 %v4246, %v4310
      %v4360 = vadd.f32 %v4247, %v4314
      %v4361 = vadd.f32 %v4248, %v4313
      %v4362 = vadd.f32 %v4249, %v4317
      %v4363 = vadd.f32 %v4250, %v4316
      %v4364 = vadd.f32 %v4251, %v4320
      %v4365 = vadd.f32 %v4252, %v4319
      %v4366 = vadd.f32 %v4253, %v4323
      %v4367 = vadd.f32 %v4254, %v4322
      %v4368 = vadd.f32 %v4255, %v4326
      %v4369 = vadd.f32 %v4256, %v4325
      %v4370 = vadd.f32 %v4257, %v4329
      %v4371 = vadd.f32 %v4258, %v4328
      %v4372 = vadd.f32 %v4259, %v4332
      %v4373 = vadd.f32 %v4260, %v4331
      %v4374 = vadd.f32 %v4261, %v4335
      %v4375 = vadd.f32 %v4262, %v4334
      %s4376 = scalar_lea.vmem [#allocation3], 224
      %v4377 = vld [vmem:[%s4376] sm:$0xff]
      %v4378 = vld [vmem:[%s4376 + $0x8] sm:$0xf]
      %v4379 = vld [vmem:[%s4376 + $0x10] sm:$0xff]
      %v4380 = vld [vmem:[%s4376 + $0x18] sm:$0xf]
      %v4381 = vld [vmem:[%s4376 + $0x20] sm:$0xff]
      %v4382 = vld [vmem:[%s4376 + $0x28] sm:$0xf]
      %v4383 = vld [vmem:[%s4376 + $0x30] sm:$0xff]
      %v4384 = vld [vmem:[%s4376 + $0x38] sm:$0xf]
      %v4385 = vld [vmem:[%s4376 + $0x40] sm:$0xff]
      %v4386 = vld [vmem:[%s4376 + $0x48] sm:$0xf]
      %v4387 = vld [vmem:[%s4376 + $0x50] sm:$0xff]
      %v4388 = vld [vmem:[%s4376 + $0x58] sm:$0xf]
      %v4389 = vld [vmem:[%s4376 + $0x60] sm:$0xff]
      %v4390 = vld [vmem:[%s4376 + $0x68] sm:$0xf]
      %v4391 = vld [vmem:[%s4376 + $0x70] sm:$0xff]
      %v4392 = vld [vmem:[%s4376 + $0x78] sm:$0xf]
      %v4393 = vld [vmem:[%s4376 + $0x80] sm:$0xff]
      %v4394 = vld [vmem:[%s4376 + $0x88] sm:$0xf]
      %v4395 = vld [vmem:[%s4376 + $0x90] sm:$0xff]
      %v4396 = vld [vmem:[%s4376 + $0x98] sm:$0xf]
      %s4397 = sadd.s32 %s2945, 15
      %s4398 = sld [smem:[#allocation10 + %s4397]]
      %v4399 = vstv %s4398
      %v4400 = vmul.f32 %v4377, %v4399
      %v4401 = vmul.f32 %v4378, %v4399
      %v4402 = vmul.f32 %v4379, %v4399
      %v4403 = vmul.f32 %v4380, %v4399
      %v4404 = vmul.f32 %v4381, %v4399
      %v4405 = vmul.f32 %v4382, %v4399
      %v4406 = vmul.f32 %v4383, %v4399
      %v4407 = vmul.f32 %v4384, %v4399
      %v4408 = vmul.f32 %v4385, %v4399
      %v4409 = vmul.f32 %v4386, %v4399
      %v4410 = vmul.f32 %v4387, %v4399
      %v4411 = vmul.f32 %v4388, %v4399
      %v4412 = vmul.f32 %v4389, %v4399
      %v4413 = vmul.f32 %v4390, %v4399
      %v4414 = vmul.f32 %v4391, %v4399
      %v4415 = vmul.f32 %v4392, %v4399
      %v4416 = vmul.f32 %v4393, %v4399
      %v4417 = vmul.f32 %v4394, %v4399
      %v4418 = vmul.f32 %v4395, %v4399
      %v4419 = vmul.f32 %v4396, %v4399
      %v4420 = vadd.f32 %v4356, %v4400
      %v4421 = vadd.f32 %v4357, %v4401
      %v4422 = vadd.f32 %v4358, %v4402
      %v4423 = vadd.f32 %v4359, %v4403
      %v4424 = vadd.f32 %v4360, %v4404
      %v4425 = vadd.f32 %v4361, %v4405
      %v4426 = vadd.f32 %v4362, %v4406
      %v4427 = vadd.f32 %v4363, %v4407
      %v4428 = vadd.f32 %v4364, %v4408
      %v4429 = vadd.f32 %v4365, %v4409
      %v4430 = vadd.f32 %v4366, %v4410
      %v4431 = vadd.f32 %v4367, %v4411
      %v4432 = vadd.f32 %v4368, %v4412
      %v4433 = vadd.f32 %v4369, %v4413
      %v4434 = vadd.f32 %v4370, %v4414
      %v4435 = vadd.f32 %v4371, %v4415
      %v4436 = vadd.f32 %v4372, %v4416
      %v4437 = vadd.f32 %v4373, %v4417
      %v4438 = vadd.f32 %v4374, %v4418
      %v4439 = vadd.f32 %v4375, %v4419
      %s4440 = sadd.s32 %s2945, 16
      %s4441 = sld [smem:[#allocation10 + %s4440]]
      %v4442 = vstv %s4441
      %v4443 = vmul.f32 %v4377, %v4442
      %v4444 = vmul.f32 %v4378, %v4442
      %v4445 = vmul.f32 %v4379, %v4442
      %v4446 = vmul.f32 %v4380, %v4442
      %v4447 = vmul.f32 %v4381, %v4442
      %v4448 = vmul.f32 %v4382, %v4442
      %v4449 = vmul.f32 %v4383, %v4442
      %v4450 = vmul.f32 %v4384, %v4442
      %v4451 = vmul.f32 %v4385, %v4442
      %v4452 = vmul.f32 %v4386, %v4442
      %v4453 = vmul.f32 %v4387, %v4442
      %v4454 = vmul.f32 %v4388, %v4442
      %v4455 = vmul.f32 %v4389, %v4442
      %v4456 = vmul.f32 %v4390, %v4442
      %v4457 = vmul.f32 %v4391, %v4442
      %v4458 = vmul.f32 %v4392, %v4442
      %v4459 = vmul.f32 %v4393, %v4442
      %v4460 = vmul.f32 %v4394, %v4442
      %v4461 = vmul.f32 %v4395, %v4442
      %v4462 = vmul.f32 %v4396, %v4442
      %v4483 = vrot.slane %v4443, 1
      %v4484 = vrot.slane %v4444, 1
      %v4485 = vsel %vm3031, %v4483, %v4484
      %v4486 = vrot.slane %v4445, 1
      %v4487 = vrot.slane %v4446, 1
      %v4488 = vsel %vm3031, %v4486, %v4487
      %v4489 = vrot.slane %v4447, 1
      %v4490 = vrot.slane %v4448, 1
      %v4491 = vsel %vm3031, %v4489, %v4490
      %v4492 = vrot.slane %v4449, 1
      %v4493 = vrot.slane %v4450, 1
      %v4494 = vsel %vm3031, %v4492, %v4493
      %v4495 = vrot.slane %v4451, 1
      %v4496 = vrot.slane %v4452, 1
      %v4497 = vsel %vm3031, %v4495, %v4496
      %v4498 = vrot.slane %v4453, 1
      %v4499 = vrot.slane %v4454, 1
      %v4500 = vsel %vm3031, %v4498, %v4499
      %v4501 = vrot.slane %v4455, 1
      %v4502 = vrot.slane %v4456, 1
      %v4503 = vsel %vm3031, %v4501, %v4502
      %v4504 = vrot.slane %v4457, 1
      %v4505 = vrot.slane %v4458, 1
      %v4506 = vsel %vm3031, %v4504, %v4505
      %v4507 = vrot.slane %v4459, 1
      %v4508 = vrot.slane %v4460, 1
      %v4509 = vsel %vm3031, %v4507, %v4508
      %v4510 = vrot.slane %v4461, 1
      %v4511 = vrot.slane %v4462, 1
      %v4512 = vsel %vm3031, %v4510, %v4511
      %v4533 = vadd.f32 %v4420, %v4485
      %v4534 = vadd.f32 %v4421, %v4484
      %v4535 = vadd.f32 %v4422, %v4488
      %v4536 = vadd.f32 %v4423, %v4487
      %v4537 = vadd.f32 %v4424, %v4491
      %v4538 = vadd.f32 %v4425, %v4490
      %v4539 = vadd.f32 %v4426, %v4494
      %v4540 = vadd.f32 %v4427, %v4493
      %v4541 = vadd.f32 %v4428, %v4497
      %v4542 = vadd.f32 %v4429, %v4496
      %v4543 = vadd.f32 %v4430, %v4500
      %v4544 = vadd.f32 %v4431, %v4499
      %v4545 = vadd.f32 %v4432, %v4503
      %v4546 = vadd.f32 %v4433, %v4502
      %v4547 = vadd.f32 %v4434, %v4506
      %v4548 = vadd.f32 %v4435, %v4505
      %v4549 = vadd.f32 %v4436, %v4509
      %v4550 = vadd.f32 %v4437, %v4508
      %v4551 = vadd.f32 %v4438, %v4512
      %v4552 = vadd.f32 %v4439, %v4511
      %s4553 = sadd.s32 %s2945, 17
      %s4554 = sld [smem:[#allocation10 + %s4553]]
      %v4555 = vstv %s4554
      %v4556 = vmul.f32 %v4377, %v4555
      %v4557 = vmul.f32 %v4378, %v4555
      %v4558 = vmul.f32 %v4379, %v4555
      %v4559 = vmul.f32 %v4380, %v4555
      %v4560 = vmul.f32 %v4381, %v4555
      %v4561 = vmul.f32 %v4382, %v4555
      %v4562 = vmul.f32 %v4383, %v4555
      %v4563 = vmul.f32 %v4384, %v4555
      %v4564 = vmul.f32 %v4385, %v4555
      %v4565 = vmul.f32 %v4386, %v4555
      %v4566 = vmul.f32 %v4387, %v4555
      %v4567 = vmul.f32 %v4388, %v4555
      %v4568 = vmul.f32 %v4389, %v4555
      %v4569 = vmul.f32 %v4390, %v4555
      %v4570 = vmul.f32 %v4391, %v4555
      %v4571 = vmul.f32 %v4392, %v4555
      %v4572 = vmul.f32 %v4393, %v4555
      %v4573 = vmul.f32 %v4394, %v4555
      %v4574 = vmul.f32 %v4395, %v4555
      %v4575 = vmul.f32 %v4396, %v4555
      %v4596 = vrot.slane %v4556, 2
      %v4597 = vrot.slane %v4557, 2
      %v4598 = vsel %vm3145, %v4596, %v4597
      %v4599 = vrot.slane %v4558, 2
      %v4600 = vrot.slane %v4559, 2
      %v4601 = vsel %vm3145, %v4599, %v4600
      %v4602 = vrot.slane %v4560, 2
      %v4603 = vrot.slane %v4561, 2
      %v4604 = vsel %vm3145, %v4602, %v4603
      %v4605 = vrot.slane %v4562, 2
      %v4606 = vrot.slane %v4563, 2
      %v4607 = vsel %vm3145, %v4605, %v4606
      %v4608 = vrot.slane %v4564, 2
      %v4609 = vrot.slane %v4565, 2
      %v4610 = vsel %vm3145, %v4608, %v4609
      %v4611 = vrot.slane %v4566, 2
      %v4612 = vrot.slane %v4567, 2
      %v4613 = vsel %vm3145, %v4611, %v4612
      %v4614 = vrot.slane %v4568, 2
      %v4615 = vrot.slane %v4569, 2
      %v4616 = vsel %vm3145, %v4614, %v4615
      %v4617 = vrot.slane %v4570, 2
      %v4618 = vrot.slane %v4571, 2
      %v4619 = vsel %vm3145, %v4617, %v4618
      %v4620 = vrot.slane %v4572, 2
      %v4621 = vrot.slane %v4573, 2
      %v4622 = vsel %vm3145, %v4620, %v4621
      %v4623 = vrot.slane %v4574, 2
      %v4624 = vrot.slane %v4575, 2
      %v4625 = vsel %vm3145, %v4623, %v4624
      %v4646 = vadd.f32 %v4533, %v4598
      %v4647 = vadd.f32 %v4534, %v4597
      %v4648 = vadd.f32 %v4535, %v4601
      %v4649 = vadd.f32 %v4536, %v4600
      %v4650 = vadd.f32 %v4537, %v4604
      %v4651 = vadd.f32 %v4538, %v4603
      %v4652 = vadd.f32 %v4539, %v4607
      %v4653 = vadd.f32 %v4540, %v4606
      %v4654 = vadd.f32 %v4541, %v4610
      %v4655 = vadd.f32 %v4542, %v4609
      %v4656 = vadd.f32 %v4543, %v4613
      %v4657 = vadd.f32 %v4544, %v4612
      %v4658 = vadd.f32 %v4545, %v4616
      %v4659 = vadd.f32 %v4546, %v4615
      %v4660 = vadd.f32 %v4547, %v4619
      %v4661 = vadd.f32 %v4548, %v4618
      %v4662 = vadd.f32 %v4549, %v4622
      %v4663 = vadd.f32 %v4550, %v4621
      %v4664 = vadd.f32 %v4551, %v4625
      %v4665 = vadd.f32 %v4552, %v4624
      %s4666 = scalar_lea.vmem [#allocation3], 384
      %v4667 = vld [vmem:[%s4666] sm:$0xff]
      %v4668 = vld [vmem:[%s4666 + $0x8] sm:$0xf]
      %v4669 = vld [vmem:[%s4666 + $0x10] sm:$0xff]
      %v4670 = vld [vmem:[%s4666 + $0x18] sm:$0xf]
      %v4671 = vld [vmem:[%s4666 + $0x20] sm:$0xff]
      %v4672 = vld [vmem:[%s4666 + $0x28] sm:$0xf]
      %v4673 = vld [vmem:[%s4666 + $0x30] sm:$0xff]
      %v4674 = vld [vmem:[%s4666 + $0x38] sm:$0xf]
      %v4675 = vld [vmem:[%s4666 + $0x40] sm:$0xff]
      %v4676 = vld [vmem:[%s4666 + $0x48] sm:$0xf]
      %v4677 = vld [vmem:[%s4666 + $0x50] sm:$0xff]
      %v4678 = vld [vmem:[%s4666 + $0x58] sm:$0xf]
      %v4679 = vld [vmem:[%s4666 + $0x60] sm:$0xff]
      %v4680 = vld [vmem:[%s4666 + $0x68] sm:$0xf]
      %v4681 = vld [vmem:[%s4666 + $0x70] sm:$0xff]
      %v4682 = vld [vmem:[%s4666 + $0x78] sm:$0xf]
      %v4683 = vld [vmem:[%s4666 + $0x80] sm:$0xff]
      %v4684 = vld [vmem:[%s4666 + $0x88] sm:$0xf]
      %v4685 = vld [vmem:[%s4666 + $0x90] sm:$0xff]
      %v4686 = vld [vmem:[%s4666 + $0x98] sm:$0xf]
      %s4687 = sadd.s32 %s2945, 18
      %s4688 = sld [smem:[#allocation10 + %s4687]]
      %v4689 = vstv %s4688
      %v4690 = vmul.f32 %v4667, %v4689
      %v4691 = vmul.f32 %v4668, %v4689
      %v4692 = vmul.f32 %v4669, %v4689
      %v4693 = vmul.f32 %v4670, %v4689
      %v4694 = vmul.f32 %v4671, %v4689
      %v4695 = vmul.f32 %v4672, %v4689
      %v4696 = vmul.f32 %v4673, %v4689
      %v4697 = vmul.f32 %v4674, %v4689
      %v4698 = vmul.f32 %v4675, %v4689
      %v4699 = vmul.f32 %v4676, %v4689
      %v4700 = vmul.f32 %v4677, %v4689
      %v4701 = vmul.f32 %v4678, %v4689
      %v4702 = vmul.f32 %v4679, %v4689
      %v4703 = vmul.f32 %v4680, %v4689
      %v4704 = vmul.f32 %v4681, %v4689
      %v4705 = vmul.f32 %v4682, %v4689
      %v4706 = vmul.f32 %v4683, %v4689
      %v4707 = vmul.f32 %v4684, %v4689
      %v4708 = vmul.f32 %v4685, %v4689
      %v4709 = vmul.f32 %v4686, %v4689
      %v4710 = vadd.f32 %v4646, %v4690
      %v4711 = vadd.f32 %v4647, %v4691
      %v4712 = vadd.f32 %v4648, %v4692
      %v4713 = vadd.f32 %v4649, %v4693
      %v4714 = vadd.f32 %v4650, %v4694
      %v4715 = vadd.f32 %v4651, %v4695
      %v4716 = vadd.f32 %v4652, %v4696
      %v4717 = vadd.f32 %v4653, %v4697
      %v4718 = vadd.f32 %v4654, %v4698
      %v4719 = vadd.f32 %v4655, %v4699
      %v4720 = vadd.f32 %v4656, %v4700
      %v4721 = vadd.f32 %v4657, %v4701
      %v4722 = vadd.f32 %v4658, %v4702
      %v4723 = vadd.f32 %v4659, %v4703
      %v4724 = vadd.f32 %v4660, %v4704
      %v4725 = vadd.f32 %v4661, %v4705
      %v4726 = vadd.f32 %v4662, %v4706
      %v4727 = vadd.f32 %v4663, %v4707
      %v4728 = vadd.f32 %v4664, %v4708
      %v4729 = vadd.f32 %v4665, %v4709
      %s4730 = sadd.s32 %s2945, 19
      %s4731 = sld [smem:[#allocation10 + %s4730]]
      %v4732 = vstv %s4731
      %v4733 = vmul.f32 %v4667, %v4732
      %v4734 = vmul.f32 %v4668, %v4732
      %v4735 = vmul.f32 %v4669, %v4732
      %v4736 = vmul.f32 %v4670, %v4732
      %v4737 = vmul.f32 %v4671, %v4732
      %v4738 = vmul.f32 %v4672, %v4732
      %v4739 = vmul.f32 %v4673, %v4732
      %v4740 = vmul.f32 %v4674, %v4732
      %v4741 = vmul.f32 %v4675, %v4732
      %v4742 = vmul.f32 %v4676, %v4732
      %v4743 = vmul.f32 %v4677, %v4732
      %v4744 = vmul.f32 %v4678, %v4732
      %v4745 = vmul.f32 %v4679, %v4732
      %v4746 = vmul.f32 %v4680, %v4732
      %v4747 = vmul.f32 %v4681, %v4732
      %v4748 = vmul.f32 %v4682, %v4732
      %v4749 = vmul.f32 %v4683, %v4732
      %v4750 = vmul.f32 %v4684, %v4732
      %v4751 = vmul.f32 %v4685, %v4732
      %v4752 = vmul.f32 %v4686, %v4732
      %v4773 = vrot.slane %v4733, 1
      %v4774 = vrot.slane %v4734, 1
      %v4775 = vsel %vm3031, %v4773, %v4774
      %v4776 = vrot.slane %v4735, 1
      %v4777 = vrot.slane %v4736, 1
      %v4778 = vsel %vm3031, %v4776, %v4777
      %v4779 = vrot.slane %v4737, 1
      %v4780 = vrot.slane %v4738, 1
      %v4781 = vsel %vm3031, %v4779, %v4780
      %v4782 = vrot.slane %v4739, 1
      %v4783 = vrot.slane %v4740, 1
      %v4784 = vsel %vm3031, %v4782, %v4783
      %v4785 = vrot.slane %v4741, 1
      %v4786 = vrot.slane %v4742, 1
      %v4787 = vsel %vm3031, %v4785, %v4786
      %v4788 = vrot.slane %v4743, 1
      %v4789 = vrot.slane %v4744, 1
      %v4790 = vsel %vm3031, %v4788, %v4789
      %v4791 = vrot.slane %v4745, 1
      %v4792 = vrot.slane %v4746, 1
      %v4793 = vsel %vm3031, %v4791, %v4792
      %v4794 = vrot.slane %v4747, 1
      %v4795 = vrot.slane %v4748, 1
      %v4796 = vsel %vm3031, %v4794, %v4795
      %v4797 = vrot.slane %v4749, 1
      %v4798 = vrot.slane %v4750, 1
      %v4799 = vsel %vm3031, %v4797, %v4798
      %v4800 = vrot.slane %v4751, 1
      %v4801 = vrot.slane %v4752, 1
      %v4802 = vsel %vm3031, %v4800, %v4801
      %v4823 = vadd.f32 %v4710, %v4775
      %v4824 = vadd.f32 %v4711, %v4774
      %v4825 = vadd.f32 %v4712, %v4778
      %v4826 = vadd.f32 %v4713, %v4777
      %v4827 = vadd.f32 %v4714, %v4781
      %v4828 = vadd.f32 %v4715, %v4780
      %v4829 = vadd.f32 %v4716, %v4784
      %v4830 = vadd.f32 %v4717, %v4783
      %v4831 = vadd.f32 %v4718, %v4787
      %v4832 = vadd.f32 %v4719, %v4786
      %v4833 = vadd.f32 %v4720, %v4790
      %v4834 = vadd.f32 %v4721, %v4789
      %v4835 = vadd.f32 %v4722, %v4793
      %v4836 = vadd.f32 %v4723, %v4792
      %v4837 = vadd.f32 %v4724, %v4796
      %v4838 = vadd.f32 %v4725, %v4795
      %v4839 = vadd.f32 %v4726, %v4799
      %v4840 = vadd.f32 %v4727, %v4798
      %v4841 = vadd.f32 %v4728, %v4802
      %v4842 = vadd.f32 %v4729, %v4801
      %s4843 = sadd.s32 %s2945, 20
      %s4844 = sld [smem:[#allocation10 + %s4843]]
      %v4845 = vstv %s4844
      %v4846 = vmul.f32 %v4667, %v4845
      %v4847 = vmul.f32 %v4668, %v4845
      %v4848 = vmul.f32 %v4669, %v4845
      %v4849 = vmul.f32 %v4670, %v4845
      %v4850 = vmul.f32 %v4671, %v4845
      %v4851 = vmul.f32 %v4672, %v4845
      %v4852 = vmul.f32 %v4673, %v4845
      %v4853 = vmul.f32 %v4674, %v4845
      %v4854 = vmul.f32 %v4675, %v4845
      %v4855 = vmul.f32 %v4676, %v4845
      %v4856 = vmul.f32 %v4677, %v4845
      %v4857 = vmul.f32 %v4678, %v4845
      %v4858 = vmul.f32 %v4679, %v4845
      %v4859 = vmul.f32 %v4680, %v4845
      %v4860 = vmul.f32 %v4681, %v4845
      %v4861 = vmul.f32 %v4682, %v4845
      %v4862 = vmul.f32 %v4683, %v4845
      %v4863 = vmul.f32 %v4684, %v4845
      %v4864 = vmul.f32 %v4685, %v4845
      %v4865 = vmul.f32 %v4686, %v4845
      %v4886 = vrot.slane %v4846, 2
      %v4887 = vrot.slane %v4847, 2
      %v4888 = vsel %vm3145, %v4886, %v4887
      %v4889 = vrot.slane %v4848, 2
      %v4890 = vrot.slane %v4849, 2
      %v4891 = vsel %vm3145, %v4889, %v4890
      %v4892 = vrot.slane %v4850, 2
      %v4893 = vrot.slane %v4851, 2
      %v4894 = vsel %vm3145, %v4892, %v4893
      %v4895 = vrot.slane %v4852, 2
      %v4896 = vrot.slane %v4853, 2
      %v4897 = vsel %vm3145, %v4895, %v4896
      %v4898 = vrot.slane %v4854, 2
      %v4899 = vrot.slane %v4855, 2
      %v4900 = vsel %vm3145, %v4898, %v4899
      %v4901 = vrot.slane %v4856, 2
      %v4902 = vrot.slane %v4857, 2
      %v4903 = vsel %vm3145, %v4901, %v4902
      %v4904 = vrot.slane %v4858, 2
      %v4905 = vrot.slane %v4859, 2
      %v4906 = vsel %vm3145, %v4904, %v4905
      %v4907 = vrot.slane %v4860, 2
      %v4908 = vrot.slane %v4861, 2
      %v4909 = vsel %vm3145, %v4907, %v4908
      %v4910 = vrot.slane %v4862, 2
      %v4911 = vrot.slane %v4863, 2
      %v4912 = vsel %vm3145, %v4910, %v4911
      %v4913 = vrot.slane %v4864, 2
      %v4914 = vrot.slane %v4865, 2
      %v4915 = vsel %vm3145, %v4913, %v4914
      %v4936 = vadd.f32 %v4823, %v4888
      %v4937 = vadd.f32 %v4824, %v4887
      %v4938 = vadd.f32 %v4825, %v4891
      %v4939 = vadd.f32 %v4826, %v4890
      %v4940 = vadd.f32 %v4827, %v4894
      %v4941 = vadd.f32 %v4828, %v4893
      %v4942 = vadd.f32 %v4829, %v4897
      %v4943 = vadd.f32 %v4830, %v4896
      %v4944 = vadd.f32 %v4831, %v4900
      %v4945 = vadd.f32 %v4832, %v4899
      %v4946 = vadd.f32 %v4833, %v4903
      %v4947 = vadd.f32 %v4834, %v4902
      %v4948 = vadd.f32 %v4835, %v4906
      %v4949 = vadd.f32 %v4836, %v4905
      %v4950 = vadd.f32 %v4837, %v4909
      %v4951 = vadd.f32 %v4838, %v4908
      %v4952 = vadd.f32 %v4839, %v4912
      %v4953 = vadd.f32 %v4840, %v4911
      %v4954 = vadd.f32 %v4841, %v4915
      %v4955 = vadd.f32 %v4842, %v4914
      %s4956 = scalar_lea.vmem [#allocation3], 400
      %v4957 = vld [vmem:[%s4956] sm:$0xff]
      %v4958 = vld [vmem:[%s4956 + $0x8] sm:$0xf]
      %v4959 = vld [vmem:[%s4956 + $0x10] sm:$0xff]
      %v4960 = vld [vmem:[%s4956 + $0x18] sm:$0xf]
      %v4961 = vld [vmem:[%s4956 + $0x20] sm:$0xff]
      %v4962 = vld [vmem:[%s4956 + $0x28] sm:$0xf]
      %v4963 = vld [vmem:[%s4956 + $0x30] sm:$0xff]
      %v4964 = vld [vmem:[%s4956 + $0x38] sm:$0xf]
      %v4965 = vld [vmem:[%s4956 + $0x40] sm:$0xff]
      %v4966 = vld [vmem:[%s4956 + $0x48] sm:$0xf]
      %v4967 = vld [vmem:[%s4956 + $0x50] sm:$0xff]
      %v4968 = vld [vmem:[%s4956 + $0x58] sm:$0xf]
      %v4969 = vld [vmem:[%s4956 + $0x60] sm:$0xff]
      %v4970 = vld [vmem:[%s4956 + $0x68] sm:$0xf]
      %v4971 = vld [vmem:[%s4956 + $0x70] sm:$0xff]
      %v4972 = vld [vmem:[%s4956 + $0x78] sm:$0xf]
      %v4973 = vld [vmem:[%s4956 + $0x80] sm:$0xff]
      %v4974 = vld [vmem:[%s4956 + $0x88] sm:$0xf]
      %v4975 = vld [vmem:[%s4956 + $0x90] sm:$0xff]
      %v4976 = vld [vmem:[%s4956 + $0x98] sm:$0xf]
      %s4977 = sadd.s32 %s2945, 21
      %s4978 = sld [smem:[#allocation10 + %s4977]]
      %v4979 = vstv %s4978
      %v4980 = vmul.f32 %v4957, %v4979
      %v4981 = vmul.f32 %v4958, %v4979
      %v4982 = vmul.f32 %v4959, %v4979
      %v4983 = vmul.f32 %v4960, %v4979
      %v4984 = vmul.f32 %v4961, %v4979
      %v4985 = vmul.f32 %v4962, %v4979
      %v4986 = vmul.f32 %v4963, %v4979
      %v4987 = vmul.f32 %v4964, %v4979
      %v4988 = vmul.f32 %v4965, %v4979
      %v4989 = vmul.f32 %v4966, %v4979
      %v4990 = vmul.f32 %v4967, %v4979
      %v4991 = vmul.f32 %v4968, %v4979
      %v4992 = vmul.f32 %v4969, %v4979
      %v4993 = vmul.f32 %v4970, %v4979
      %v4994 = vmul.f32 %v4971, %v4979
      %v4995 = vmul.f32 %v4972, %v4979
      %v4996 = vmul.f32 %v4973, %v4979
      %v4997 = vmul.f32 %v4974, %v4979
      %v4998 = vmul.f32 %v4975, %v4979
      %v4999 = vmul.f32 %v4976, %v4979
      %v5000 = vadd.f32 %v4936, %v4980
      %v5001 = vadd.f32 %v4937, %v4981
      %v5002 = vadd.f32 %v4938, %v4982
      %v5003 = vadd.f32 %v4939, %v4983
      %v5004 = vadd.f32 %v4940, %v4984
      %v5005 = vadd.f32 %v4941, %v4985
      %v5006 = vadd.f32 %v4942, %v4986
      %v5007 = vadd.f32 %v4943, %v4987
      %v5008 = vadd.f32 %v4944, %v4988
      %v5009 = vadd.f32 %v4945, %v4989
      %v5010 = vadd.f32 %v4946, %v4990
      %v5011 = vadd.f32 %v4947, %v4991
      %v5012 = vadd.f32 %v4948, %v4992
      %v5013 = vadd.f32 %v4949, %v4993
      %v5014 = vadd.f32 %v4950, %v4994
      %v5015 = vadd.f32 %v4951, %v4995
      %v5016 = vadd.f32 %v4952, %v4996
      %v5017 = vadd.f32 %v4953, %v4997
      %v5018 = vadd.f32 %v4954, %v4998
      %v5019 = vadd.f32 %v4955, %v4999
      %s5020 = sadd.s32 %s2945, 22
      %s5021 = sld [smem:[#allocation10 + %s5020]]
      %v5022 = vstv %s5021
      %v5023 = vmul.f32 %v4957, %v5022
      %v5024 = vmul.f32 %v4958, %v5022
      %v5025 = vmul.f32 %v4959, %v5022
      %v5026 = vmul.f32 %v4960, %v5022
      %v5027 = vmul.f32 %v4961, %v5022
      %v5028 = vmul.f32 %v4962, %v5022
      %v5029 = vmul.f32 %v4963, %v5022
      %v5030 = vmul.f32 %v4964, %v5022
      %v5031 = vmul.f32 %v4965, %v5022
      %v5032 = vmul.f32 %v4966, %v5022
      %v5033 = vmul.f32 %v4967, %v5022
      %v5034 = vmul.f32 %v4968, %v5022
      %v5035 = vmul.f32 %v4969, %v5022
      %v5036 = vmul.f32 %v4970, %v5022
      %v5037 = vmul.f32 %v4971, %v5022
      %v5038 = vmul.f32 %v4972, %v5022
      %v5039 = vmul.f32 %v4973, %v5022
      %v5040 = vmul.f32 %v4974, %v5022
      %v5041 = vmul.f32 %v4975, %v5022
      %v5042 = vmul.f32 %v4976, %v5022
      %v5063 = vrot.slane %v5023, 1
      %v5064 = vrot.slane %v5024, 1
      %v5065 = vsel %vm3031, %v5063, %v5064
      %v5066 = vrot.slane %v5025, 1
      %v5067 = vrot.slane %v5026, 1
      %v5068 = vsel %vm3031, %v5066, %v5067
      %v5069 = vrot.slane %v5027, 1
      %v5070 = vrot.slane %v5028, 1
      %v5071 = vsel %vm3031, %v5069, %v5070
      %v5072 = vrot.slane %v5029, 1
      %v5073 = vrot.slane %v5030, 1
      %v5074 = vsel %vm3031, %v5072, %v5073
      %v5075 = vrot.slane %v5031, 1
      %v5076 = vrot.slane %v5032, 1
      %v5077 = vsel %vm3031, %v5075, %v5076
      %v5078 = vrot.slane %v5033, 1
      %v5079 = vrot.slane %v5034, 1
      %v5080 = vsel %vm3031, %v5078, %v5079
      %v5081 = vrot.slane %v5035, 1
      %v5082 = vrot.slane %v5036, 1
      %v5083 = vsel %vm3031, %v5081, %v5082
      %v5084 = vrot.slane %v5037, 1
      %v5085 = vrot.slane %v5038, 1
      %v5086 = vsel %vm3031, %v5084, %v5085
      %v5087 = vrot.slane %v5039, 1
      %v5088 = vrot.slane %v5040, 1
      %v5089 = vsel %vm3031, %v5087, %v5088
      %v5090 = vrot.slane %v5041, 1
      %v5091 = vrot.slane %v5042, 1
      %v5092 = vsel %vm3031, %v5090, %v5091
      %v5113 = vadd.f32 %v5000, %v5065
      %v5114 = vadd.f32 %v5001, %v5064
      %v5115 = vadd.f32 %v5002, %v5068
      %v5116 = vadd.f32 %v5003, %v5067
      %v5117 = vadd.f32 %v5004, %v5071
      %v5118 = vadd.f32 %v5005, %v5070
      %v5119 = vadd.f32 %v5006, %v5074
      %v5120 = vadd.f32 %v5007, %v5073
      %v5121 = vadd.f32 %v5008, %v5077
      %v5122 = vadd.f32 %v5009, %v5076
      %v5123 = vadd.f32 %v5010, %v5080
      %v5124 = vadd.f32 %v5011, %v5079
      %v5125 = vadd.f32 %v5012, %v5083
      %v5126 = vadd.f32 %v5013, %v5082
      %v5127 = vadd.f32 %v5014, %v5086
      %v5128 = vadd.f32 %v5015, %v5085
      %v5129 = vadd.f32 %v5016, %v5089
      %v5130 = vadd.f32 %v5017, %v5088
      %v5131 = vadd.f32 %v5018, %v5092
      %v5132 = vadd.f32 %v5019, %v5091
      %s5133 = sadd.s32 %s2945, 23
      %s5134 = sld [smem:[#allocation10 + %s5133]]
      %v5135 = vstv %s5134
      %v5136 = vmul.f32 %v4957, %v5135
      %v5137 = vmul.f32 %v4958, %v5135
      %v5138 = vmul.f32 %v4959, %v5135
      %v5139 = vmul.f32 %v4960, %v5135
      %v5140 = vmul.f32 %v4961, %v5135
      %v5141 = vmul.f32 %v4962, %v5135
      %v5142 = vmul.f32 %v4963, %v5135
      %v5143 = vmul.f32 %v4964, %v5135
      %v5144 = vmul.f32 %v4965, %v5135
      %v5145 = vmul.f32 %v4966, %v5135
      %v5146 = vmul.f32 %v4967, %v5135
      %v5147 = vmul.f32 %v4968, %v5135
      %v5148 = vmul.f32 %v4969, %v5135
      %v5149 = vmul.f32 %v4970, %v5135
      %v5150 = vmul.f32 %v4971, %v5135
      %v5151 = vmul.f32 %v4972, %v5135
      %v5152 = vmul.f32 %v4973, %v5135
      %v5153 = vmul.f32 %v4974, %v5135
      %v5154 = vmul.f32 %v4975, %v5135
      %v5155 = vmul.f32 %v4976, %v5135
      %v5176 = vrot.slane %v5136, 2
      %v5177 = vrot.slane %v5137, 2
      %v5178 = vsel %vm3145, %v5176, %v5177
      %v5179 = vrot.slane %v5138, 2
      %v5180 = vrot.slane %v5139, 2
      %v5181 = vsel %vm3145, %v5179, %v5180
      %v5182 = vrot.slane %v5140, 2
      %v5183 = vrot.slane %v5141, 2
      %v5184 = vsel %vm3145, %v5182, %v5183
      %v5185 = vrot.slane %v5142, 2
      %v5186 = vrot.slane %v5143, 2
      %v5187 = vsel %vm3145, %v5185, %v5186
      %v5188 = vrot.slane %v5144, 2
      %v5189 = vrot.slane %v5145, 2
      %v5190 = vsel %vm3145, %v5188, %v5189
      %v5191 = vrot.slane %v5146, 2
      %v5192 = vrot.slane %v5147, 2
      %v5193 = vsel %vm3145, %v5191, %v5192
      %v5194 = vrot.slane %v5148, 2
      %v5195 = vrot.slane %v5149, 2
      %v5196 = vsel %vm3145, %v5194, %v5195
      %v5197 = vrot.slane %v5150, 2
      %v5198 = vrot.slane %v5151, 2
      %v5199 = vsel %vm3145, %v5197, %v5198
      %v5200 = vrot.slane %v5152, 2
      %v5201 = vrot.slane %v5153, 2
      %v5202 = vsel %vm3145, %v5200, %v5201
      %v5203 = vrot.slane %v5154, 2
      %v5204 = vrot.slane %v5155, 2
      %v5205 = vsel %vm3145, %v5203, %v5204
      %v5226 = vadd.f32 %v5113, %v5178
      %v5227 = vadd.f32 %v5114, %v5177
      %v5228 = vadd.f32 %v5115, %v5181
      %v5229 = vadd.f32 %v5116, %v5180
      %v5230 = vadd.f32 %v5117, %v5184
      %v5231 = vadd.f32 %v5118, %v5183
      %v5232 = vadd.f32 %v5119, %v5187
      %v5233 = vadd.f32 %v5120, %v5186
      %v5234 = vadd.f32 %v5121, %v5190
      %v5235 = vadd.f32 %v5122, %v5189
      %v5236 = vadd.f32 %v5123, %v5193
      %v5237 = vadd.f32 %v5124, %v5192
      %v5238 = vadd.f32 %v5125, %v5196
      %v5239 = vadd.f32 %v5126, %v5195
      %v5240 = vadd.f32 %v5127, %v5199
      %v5241 = vadd.f32 %v5128, %v5198
      %v5242 = vadd.f32 %v5129, %v5202
      %v5243 = vadd.f32 %v5130, %v5201
      %v5244 = vadd.f32 %v5131, %v5205
      %v5245 = vadd.f32 %v5132, %v5204
      %s5246 = scalar_lea.vmem [#allocation3], 416
      %v5247 = vld [vmem:[%s5246] sm:$0xff]
      %v5248 = vld [vmem:[%s5246 + $0x8] sm:$0xf]
      %v5249 = vld [vmem:[%s5246 + $0x10] sm:$0xff]
      %v5250 = vld [vmem:[%s5246 + $0x18] sm:$0xf]
      %v5251 = vld [vmem:[%s5246 + $0x20] sm:$0xff]
      %v5252 = vld [vmem:[%s5246 + $0x28] sm:$0xf]
      %v5253 = vld [vmem:[%s5246 + $0x30] sm:$0xff]
      %v5254 = vld [vmem:[%s5246 + $0x38] sm:$0xf]
      %v5255 = vld [vmem:[%s5246 + $0x40] sm:$0xff]
      %v5256 = vld [vmem:[%s5246 + $0x48] sm:$0xf]
      %v5257 = vld [vmem:[%s5246 + $0x50] sm:$0xff]
      %v5258 = vld [vmem:[%s5246 + $0x58] sm:$0xf]
      %v5259 = vld [vmem:[%s5246 + $0x60] sm:$0xff]
      %v5260 = vld [vmem:[%s5246 + $0x68] sm:$0xf]
      %v5261 = vld [vmem:[%s5246 + $0x70] sm:$0xff]
      %v5262 = vld [vmem:[%s5246 + $0x78] sm:$0xf]
      %v5263 = vld [vmem:[%s5246 + $0x80] sm:$0xff]
      %v5264 = vld [vmem:[%s5246 + $0x88] sm:$0xf]
      %v5265 = vld [vmem:[%s5246 + $0x90] sm:$0xff]
      %v5266 = vld [vmem:[%s5246 + $0x98] sm:$0xf]
      %s5267 = sadd.s32 %s2945, 24
      %s5268 = sld [smem:[#allocation10 + %s5267]]
      %v5269 = vstv %s5268
      %v5270 = vmul.f32 %v5247, %v5269
      %v5271 = vmul.f32 %v5248, %v5269
      %v5272 = vmul.f32 %v5249, %v5269
      %v5273 = vmul.f32 %v5250, %v5269
      %v5274 = vmul.f32 %v5251, %v5269
      %v5275 = vmul.f32 %v5252, %v5269
      %v5276 = vmul.f32 %v5253, %v5269
      %v5277 = vmul.f32 %v5254, %v5269
      %v5278 = vmul.f32 %v5255, %v5269
      %v5279 = vmul.f32 %v5256, %v5269
      %v5280 = vmul.f32 %v5257, %v5269
      %v5281 = vmul.f32 %v5258, %v5269
      %v5282 = vmul.f32 %v5259, %v5269
      %v5283 = vmul.f32 %v5260, %v5269
      %v5284 = vmul.f32 %v5261, %v5269
      %v5285 = vmul.f32 %v5262, %v5269
      %v5286 = vmul.f32 %v5263, %v5269
      %v5287 = vmul.f32 %v5264, %v5269
      %v5288 = vmul.f32 %v5265, %v5269
      %v5289 = vmul.f32 %v5266, %v5269
      %v5290 = vadd.f32 %v5226, %v5270
      %v5291 = vadd.f32 %v5227, %v5271
      %v5292 = vadd.f32 %v5228, %v5272
      %v5293 = vadd.f32 %v5229, %v5273
      %v5294 = vadd.f32 %v5230, %v5274
      %v5295 = vadd.f32 %v5231, %v5275
      %v5296 = vadd.f32 %v5232, %v5276
      %v5297 = vadd.f32 %v5233, %v5277
      %v5298 = vadd.f32 %v5234, %v5278
      %v5299 = vadd.f32 %v5235, %v5279
      %v5300 = vadd.f32 %v5236, %v5280
      %v5301 = vadd.f32 %v5237, %v5281
      %v5302 = vadd.f32 %v5238, %v5282
      %v5303 = vadd.f32 %v5239, %v5283
      %v5304 = vadd.f32 %v5240, %v5284
      %v5305 = vadd.f32 %v5241, %v5285
      %v5306 = vadd.f32 %v5242, %v5286
      %v5307 = vadd.f32 %v5243, %v5287
      %v5308 = vadd.f32 %v5244, %v5288
      %v5309 = vadd.f32 %v5245, %v5289
      %s5310 = sadd.s32 %s2945, 25
      %s5311 = sld [smem:[#allocation10 + %s5310]]
      %v5312 = vstv %s5311
      %v5313 = vmul.f32 %v5247, %v5312
      %v5314 = vmul.f32 %v5248, %v5312
      %v5315 = vmul.f32 %v5249, %v5312
      %v5316 = vmul.f32 %v5250, %v5312
      %v5317 = vmul.f32 %v5251, %v5312
      %v5318 = vmul.f32 %v5252, %v5312
      %v5319 = vmul.f32 %v5253, %v5312
      %v5320 = vmul.f32 %v5254, %v5312
      %v5321 = vmul.f32 %v5255, %v5312
      %v5322 = vmul.f32 %v5256, %v5312
      %v5323 = vmul.f32 %v5257, %v5312
      %v5324 = vmul.f32 %v5258, %v5312
      %v5325 = vmul.f32 %v5259, %v5312
      %v5326 = vmul.f32 %v5260, %v5312
      %v5327 = vmul.f32 %v5261, %v5312
      %v5328 = vmul.f32 %v5262, %v5312
      %v5329 = vmul.f32 %v5263, %v5312
      %v5330 = vmul.f32 %v5264, %v5312
      %v5331 = vmul.f32 %v5265, %v5312
      %v5332 = vmul.f32 %v5266, %v5312
      %v5353 = vrot.slane %v5313, 1
      %v5354 = vrot.slane %v5314, 1
      %v5355 = vsel %vm3031, %v5353, %v5354
      %v5356 = vrot.slane %v5315, 1
      %v5357 = vrot.slane %v5316, 1
      %v5358 = vsel %vm3031, %v5356, %v5357
      %v5359 = vrot.slane %v5317, 1
      %v5360 = vrot.slane %v5318, 1
      %v5361 = vsel %vm3031, %v5359, %v5360
      %v5362 = vrot.slane %v5319, 1
      %v5363 = vrot.slane %v5320, 1
      %v5364 = vsel %vm3031, %v5362, %v5363
      %v5365 = vrot.slane %v5321, 1
      %v5366 = vrot.slane %v5322, 1
      %v5367 = vsel %vm3031, %v5365, %v5366
      %v5368 = vrot.slane %v5323, 1
      %v5369 = vrot.slane %v5324, 1
      %v5370 = vsel %vm3031, %v5368, %v5369
      %v5371 = vrot.slane %v5325, 1
      %v5372 = vrot.slane %v5326, 1
      %v5373 = vsel %vm3031, %v5371, %v5372
      %v5374 = vrot.slane %v5327, 1
      %v5375 = vrot.slane %v5328, 1
      %v5376 = vsel %vm3031, %v5374, %v5375
      %v5377 = vrot.slane %v5329, 1
      %v5378 = vrot.slane %v5330, 1
      %v5379 = vsel %vm3031, %v5377, %v5378
      %v5380 = vrot.slane %v5331, 1
      %v5381 = vrot.slane %v5332, 1
      %v5382 = vsel %vm3031, %v5380, %v5381
      %v5403 = vadd.f32 %v5290, %v5355
      %v5404 = vadd.f32 %v5291, %v5354
      %v5405 = vadd.f32 %v5292, %v5358
      %v5406 = vadd.f32 %v5293, %v5357
      %v5407 = vadd.f32 %v5294, %v5361
      %v5408 = vadd.f32 %v5295, %v5360
      %v5409 = vadd.f32 %v5296, %v5364
      %v5410 = vadd.f32 %v5297, %v5363
      %v5411 = vadd.f32 %v5298, %v5367
      %v5412 = vadd.f32 %v5299, %v5366
      %v5413 = vadd.f32 %v5300, %v5370
      %v5414 = vadd.f32 %v5301, %v5369
      %v5415 = vadd.f32 %v5302, %v5373
      %v5416 = vadd.f32 %v5303, %v5372
      %v5417 = vadd.f32 %v5304, %v5376
      %v5418 = vadd.f32 %v5305, %v5375
      %v5419 = vadd.f32 %v5306, %v5379
      %v5420 = vadd.f32 %v5307, %v5378
      %v5421 = vadd.f32 %v5308, %v5382
      %v5422 = vadd.f32 %v5309, %v5381
      %s5423 = sadd.s32 %s2945, 26
      %s5424 = sld [smem:[#allocation10 + %s5423]]
      %v5425 = vstv %s5424
      %v5426 = vmul.f32 %v5247, %v5425
      %v5427 = vmul.f32 %v5248, %v5425
      %v5428 = vmul.f32 %v5249, %v5425
      %v5429 = vmul.f32 %v5250, %v5425
      %v5430 = vmul.f32 %v5251, %v5425
      %v5431 = vmul.f32 %v5252, %v5425
      %v5432 = vmul.f32 %v5253, %v5425
      %v5433 = vmul.f32 %v5254, %v5425
      %v5434 = vmul.f32 %v5255, %v5425
      %v5435 = vmul.f32 %v5256, %v5425
      %v5436 = vmul.f32 %v5257, %v5425
      %v5437 = vmul.f32 %v5258, %v5425
      %v5438 = vmul.f32 %v5259, %v5425
      %v5439 = vmul.f32 %v5260, %v5425
      %v5440 = vmul.f32 %v5261, %v5425
      %v5441 = vmul.f32 %v5262, %v5425
      %v5442 = vmul.f32 %v5263, %v5425
      %v5443 = vmul.f32 %v5264, %v5425
      %v5444 = vmul.f32 %v5265, %v5425
      %v5445 = vmul.f32 %v5266, %v5425
      %v5466 = vrot.slane %v5426, 2
      %v5467 = vrot.slane %v5427, 2
      %v5468 = vsel %vm3145, %v5466, %v5467
      %v5469 = vrot.slane %v5428, 2
      %v5470 = vrot.slane %v5429, 2
      %v5471 = vsel %vm3145, %v5469, %v5470
      %v5472 = vrot.slane %v5430, 2
      %v5473 = vrot.slane %v5431, 2
      %v5474 = vsel %vm3145, %v5472, %v5473
      %v5475 = vrot.slane %v5432, 2
      %v5476 = vrot.slane %v5433, 2
      %v5477 = vsel %vm3145, %v5475, %v5476
      %v5478 = vrot.slane %v5434, 2
      %v5479 = vrot.slane %v5435, 2
      %v5480 = vsel %vm3145, %v5478, %v5479
      %v5481 = vrot.slane %v5436, 2
      %v5482 = vrot.slane %v5437, 2
      %v5483 = vsel %vm3145, %v5481, %v5482
      %v5484 = vrot.slane %v5438, 2
      %v5485 = vrot.slane %v5439, 2
      %v5486 = vsel %vm3145, %v5484, %v5485
      %v5487 = vrot.slane %v5440, 2
      %v5488 = vrot.slane %v5441, 2
      %v5489 = vsel %vm3145, %v5487, %v5488
      %v5490 = vrot.slane %v5442, 2
      %v5491 = vrot.slane %v5443, 2
      %v5492 = vsel %vm3145, %v5490, %v5491
      %v5493 = vrot.slane %v5444, 2
      %v5494 = vrot.slane %v5445, 2
      %v5495 = vsel %vm3145, %v5493, %v5494
      %v5516 = vadd.f32 %v5403, %v5468
      %v5517 = vadd.f32 %v5404, %v5467
      %v5518 = vadd.f32 %v5405, %v5471
      %v5519 = vadd.f32 %v5406, %v5470
      %v5520 = vadd.f32 %v5407, %v5474
      %v5521 = vadd.f32 %v5408, %v5473
      %v5522 = vadd.f32 %v5409, %v5477
      %v5523 = vadd.f32 %v5410, %v5476
      %v5524 = vadd.f32 %v5411, %v5480
      %v5525 = vadd.f32 %v5412, %v5479
      %v5526 = vadd.f32 %v5413, %v5483
      %v5527 = vadd.f32 %v5414, %v5482
      %v5528 = vadd.f32 %v5415, %v5486
      %v5529 = vadd.f32 %v5416, %v5485
      %v5530 = vadd.f32 %v5417, %v5489
      %v5531 = vadd.f32 %v5418, %v5488
      %v5532 = vadd.f32 %v5419, %v5492
      %v5533 = vadd.f32 %v5420, %v5491
      %v5534 = vadd.f32 %v5421, %v5495
      %v5535 = vadd.f32 %v5422, %v5494
      %s5536 = scalar_lea.vmem [#allocation3], 576
      %v5537 = vld [vmem:[%s5536] sm:$0xff]
      %v5538 = vld [vmem:[%s5536 + $0x8] sm:$0xf]
      %v5539 = vld [vmem:[%s5536 + $0x10] sm:$0xff]
      %v5540 = vld [vmem:[%s5536 + $0x18] sm:$0xf]
      %v5541 = vld [vmem:[%s5536 + $0x20] sm:$0xff]
      %v5542 = vld [vmem:[%s5536 + $0x28] sm:$0xf]
      %v5543 = vld [vmem:[%s5536 + $0x30] sm:$0xff]
      %v5544 = vld [vmem:[%s5536 + $0x38] sm:$0xf]
      %v5545 = vld [vmem:[%s5536 + $0x40] sm:$0xff]
      %v5546 = vld [vmem:[%s5536 + $0x48] sm:$0xf]
      %v5547 = vld [vmem:[%s5536 + $0x50] sm:$0xff]
      %v5548 = vld [vmem:[%s5536 + $0x58] sm:$0xf]
      %v5549 = vld [vmem:[%s5536 + $0x60] sm:$0xff]
      %v5550 = vld [vmem:[%s5536 + $0x68] sm:$0xf]
      %v5551 = vld [vmem:[%s5536 + $0x70] sm:$0xff]
      %v5552 = vld [vmem:[%s5536 + $0x78] sm:$0xf]
      %v5553 = vld [vmem:[%s5536 + $0x80] sm:$0xff]
      %v5554 = vld [vmem:[%s5536 + $0x88] sm:$0xf]
      %v5555 = vld [vmem:[%s5536 + $0x90] sm:$0xff]
      %v5556 = vld [vmem:[%s5536 + $0x98] sm:$0xf]
      %s5557 = sadd.s32 %s2945, 27
      %s5558 = sld [smem:[#allocation10 + %s5557]]
      %v5559 = vstv %s5558
      %v5560 = vmul.f32 %v5537, %v5559
      %v5561 = vmul.f32 %v5538, %v5559
      %v5562 = vmul.f32 %v5539, %v5559
      %v5563 = vmul.f32 %v5540, %v5559
      %v5564 = vmul.f32 %v5541, %v5559
      %v5565 = vmul.f32 %v5542, %v5559
      %v5566 = vmul.f32 %v5543, %v5559
      %v5567 = vmul.f32 %v5544, %v5559
      %v5568 = vmul.f32 %v5545, %v5559
      %v5569 = vmul.f32 %v5546, %v5559
      %v5570 = vmul.f32 %v5547, %v5559
      %v5571 = vmul.f32 %v5548, %v5559
      %v5572 = vmul.f32 %v5549, %v5559
      %v5573 = vmul.f32 %v5550, %v5559
      %v5574 = vmul.f32 %v5551, %v5559
      %v5575 = vmul.f32 %v5552, %v5559
      %v5576 = vmul.f32 %v5553, %v5559
      %v5577 = vmul.f32 %v5554, %v5559
      %v5578 = vmul.f32 %v5555, %v5559
      %v5579 = vmul.f32 %v5556, %v5559
      %v5580 = vadd.f32 %v5516, %v5560
      %v5581 = vadd.f32 %v5517, %v5561
      %v5582 = vadd.f32 %v5518, %v5562
      %v5583 = vadd.f32 %v5519, %v5563
      %v5584 = vadd.f32 %v5520, %v5564
      %v5585 = vadd.f32 %v5521, %v5565
      %v5586 = vadd.f32 %v5522, %v5566
      %v5587 = vadd.f32 %v5523, %v5567
      %v5588 = vadd.f32 %v5524, %v5568
      %v5589 = vadd.f32 %v5525, %v5569
      %v5590 = vadd.f32 %v5526, %v5570
      %v5591 = vadd.f32 %v5527, %v5571
      %v5592 = vadd.f32 %v5528, %v5572
      %v5593 = vadd.f32 %v5529, %v5573
      %v5594 = vadd.f32 %v5530, %v5574
      %v5595 = vadd.f32 %v5531, %v5575
      %v5596 = vadd.f32 %v5532, %v5576
      %v5597 = vadd.f32 %v5533, %v5577
      %v5598 = vadd.f32 %v5534, %v5578
      %v5599 = vadd.f32 %v5535, %v5579
      %s5600 = sadd.s32 %s2945, 28
      %s5601 = sld [smem:[#allocation10 + %s5600]]
      %v5602 = vstv %s5601
      %v5603 = vmul.f32 %v5537, %v5602
      %v5604 = vmul.f32 %v5538, %v5602
      %v5605 = vmul.f32 %v5539, %v5602
      %v5606 = vmul.f32 %v5540, %v5602
      %v5607 = vmul.f32 %v5541, %v5602
      %v5608 = vmul.f32 %v5542, %v5602
      %v5609 = vmul.f32 %v5543, %v5602
      %v5610 = vmul.f32 %v5544, %v5602
      %v5611 = vmul.f32 %v5545, %v5602
      %v5612 = vmul.f32 %v5546, %v5602
      %v5613 = vmul.f32 %v5547, %v5602
      %v5614 = vmul.f32 %v5548, %v5602
      %v5615 = vmul.f32 %v5549, %v5602
      %v5616 = vmul.f32 %v5550, %v5602
      %v5617 = vmul.f32 %v5551, %v5602
      %v5618 = vmul.f32 %v5552, %v5602
      %v5619 = vmul.f32 %v5553, %v5602
      %v5620 = vmul.f32 %v5554, %v5602
      %v5621 = vmul.f32 %v5555, %v5602
      %v5622 = vmul.f32 %v5556, %v5602
      %v5643 = vrot.slane %v5603, 1
      %v5644 = vrot.slane %v5604, 1
      %v5645 = vsel %vm3031, %v5643, %v5644
      %v5646 = vrot.slane %v5605, 1
      %v5647 = vrot.slane %v5606, 1
      %v5648 = vsel %vm3031, %v5646, %v5647
      %v5649 = vrot.slane %v5607, 1
      %v5650 = vrot.slane %v5608, 1
      %v5651 = vsel %vm3031, %v5649, %v5650
      %v5652 = vrot.slane %v5609, 1
      %v5653 = vrot.slane %v5610, 1
      %v5654 = vsel %vm3031, %v5652, %v5653
      %v5655 = vrot.slane %v5611, 1
      %v5656 = vrot.slane %v5612, 1
      %v5657 = vsel %vm3031, %v5655, %v5656
      %v5658 = vrot.slane %v5613, 1
      %v5659 = vrot.slane %v5614, 1
      %v5660 = vsel %vm3031, %v5658, %v5659
      %v5661 = vrot.slane %v5615, 1
      %v5662 = vrot.slane %v5616, 1
      %v5663 = vsel %vm3031, %v5661, %v5662
      %v5664 = vrot.slane %v5617, 1
      %v5665 = vrot.slane %v5618, 1
      %v5666 = vsel %vm3031, %v5664, %v5665
      %v5667 = vrot.slane %v5619, 1
      %v5668 = vrot.slane %v5620, 1
      %v5669 = vsel %vm3031, %v5667, %v5668
      %v5670 = vrot.slane %v5621, 1
      %v5671 = vrot.slane %v5622, 1
      %v5672 = vsel %vm3031, %v5670, %v5671
      %v5693 = vadd.f32 %v5580, %v5645
      %v5694 = vadd.f32 %v5581, %v5644
      %v5695 = vadd.f32 %v5582, %v5648
      %v5696 = vadd.f32 %v5583, %v5647
      %v5697 = vadd.f32 %v5584, %v5651
      %v5698 = vadd.f32 %v5585, %v5650
      %v5699 = vadd.f32 %v5586, %v5654
      %v5700 = vadd.f32 %v5587, %v5653
      %v5701 = vadd.f32 %v5588, %v5657
      %v5702 = vadd.f32 %v5589, %v5656
      %v5703 = vadd.f32 %v5590, %v5660
      %v5704 = vadd.f32 %v5591, %v5659
      %v5705 = vadd.f32 %v5592, %v5663
      %v5706 = vadd.f32 %v5593, %v5662
      %v5707 = vadd.f32 %v5594, %v5666
      %v5708 = vadd.f32 %v5595, %v5665
      %v5709 = vadd.f32 %v5596, %v5669
      %v5710 = vadd.f32 %v5597, %v5668
      %v5711 = vadd.f32 %v5598, %v5672
      %v5712 = vadd.f32 %v5599, %v5671
      %s5713 = sadd.s32 %s2945, 29
      %s5714 = sld [smem:[#allocation10 + %s5713]]
      %v5715 = vstv %s5714
      %v5716 = vmul.f32 %v5537, %v5715
      %v5717 = vmul.f32 %v5538, %v5715
      %v5718 = vmul.f32 %v5539, %v5715
      %v5719 = vmul.f32 %v5540, %v5715
      %v5720 = vmul.f32 %v5541, %v5715
      %v5721 = vmul.f32 %v5542, %v5715
      %v5722 = vmul.f32 %v5543, %v5715
      %v5723 = vmul.f32 %v5544, %v5715
      %v5724 = vmul.f32 %v5545, %v5715
      %v5725 = vmul.f32 %v5546, %v5715
      %v5726 = vmul.f32 %v5547, %v5715
      %v5727 = vmul.f32 %v5548, %v5715
      %v5728 = vmul.f32 %v5549, %v5715
      %v5729 = vmul.f32 %v5550, %v5715
      %v5730 = vmul.f32 %v5551, %v5715
      %v5731 = vmul.f32 %v5552, %v5715
      %v5732 = vmul.f32 %v5553, %v5715
      %v5733 = vmul.f32 %v5554, %v5715
      %v5734 = vmul.f32 %v5555, %v5715
      %v5735 = vmul.f32 %v5556, %v5715
      %v5756 = vrot.slane %v5716, 2
      %v5757 = vrot.slane %v5717, 2
      %v5758 = vsel %vm3145, %v5756, %v5757
      %v5759 = vrot.slane %v5718, 2
      %v5760 = vrot.slane %v5719, 2
      %v5761 = vsel %vm3145, %v5759, %v5760
      %v5762 = vrot.slane %v5720, 2
      %v5763 = vrot.slane %v5721, 2
      %v5764 = vsel %vm3145, %v5762, %v5763
      %v5765 = vrot.slane %v5722, 2
      %v5766 = vrot.slane %v5723, 2
      %v5767 = vsel %vm3145, %v5765, %v5766
      %v5768 = vrot.slane %v5724, 2
      %v5769 = vrot.slane %v5725, 2
      %v5770 = vsel %vm3145, %v5768, %v5769
      %v5771 = vrot.slane %v5726, 2
      %v5772 = vrot.slane %v5727, 2
      %v5773 = vsel %vm3145, %v5771, %v5772
      %v5774 = vrot.slane %v5728, 2
      %v5775 = vrot.slane %v5729, 2
      %v5776 = vsel %vm3145, %v5774, %v5775
      %v5777 = vrot.slane %v5730, 2
      %v5778 = vrot.slane %v5731, 2
      %v5779 = vsel %vm3145, %v5777, %v5778
      %v5780 = vrot.slane %v5732, 2
      %v5781 = vrot.slane %v5733, 2
      %v5782 = vsel %vm3145, %v5780, %v5781
      %v5783 = vrot.slane %v5734, 2
      %v5784 = vrot.slane %v5735, 2
      %v5785 = vsel %vm3145, %v5783, %v5784
      %v5806 = vadd.f32 %v5693, %v5758
      %v5807 = vadd.f32 %v5694, %v5757
      %v5808 = vadd.f32 %v5695, %v5761
      %v5809 = vadd.f32 %v5696, %v5760
      %v5810 = vadd.f32 %v5697, %v5764
      %v5811 = vadd.f32 %v5698, %v5763
      %v5812 = vadd.f32 %v5699, %v5767
      %v5813 = vadd.f32 %v5700, %v5766
      %v5814 = vadd.f32 %v5701, %v5770
      %v5815 = vadd.f32 %v5702, %v5769
      %v5816 = vadd.f32 %v5703, %v5773
      %v5817 = vadd.f32 %v5704, %v5772
      %v5818 = vadd.f32 %v5705, %v5776
      %v5819 = vadd.f32 %v5706, %v5775
      %v5820 = vadd.f32 %v5707, %v5779
      %v5821 = vadd.f32 %v5708, %v5778
      %v5822 = vadd.f32 %v5709, %v5782
      %v5823 = vadd.f32 %v5710, %v5781
      %v5824 = vadd.f32 %v5711, %v5785
      %v5825 = vadd.f32 %v5712, %v5784
      %s5826 = scalar_lea.vmem [#allocation3], 592
      %v5827 = vld [vmem:[%s5826] sm:$0xff]
      %v5828 = vld [vmem:[%s5826 + $0x8] sm:$0xf]
      %v5829 = vld [vmem:[%s5826 + $0x10] sm:$0xff]
      %v5830 = vld [vmem:[%s5826 + $0x18] sm:$0xf]
      %v5831 = vld [vmem:[%s5826 + $0x20] sm:$0xff]
      %v5832 = vld [vmem:[%s5826 + $0x28] sm:$0xf]
      %v5833 = vld [vmem:[%s5826 + $0x30] sm:$0xff]
      %v5834 = vld [vmem:[%s5826 + $0x38] sm:$0xf]
      %v5835 = vld [vmem:[%s5826 + $0x40] sm:$0xff]
      %v5836 = vld [vmem:[%s5826 + $0x48] sm:$0xf]
      %v5837 = vld [vmem:[%s5826 + $0x50] sm:$0xff]
      %v5838 = vld [vmem:[%s5826 + $0x58] sm:$0xf]
      %v5839 = vld [vmem:[%s5826 + $0x60] sm:$0xff]
      %v5840 = vld [vmem:[%s5826 + $0x68] sm:$0xf]
      %v5841 = vld [vmem:[%s5826 + $0x70] sm:$0xff]
      %v5842 = vld [vmem:[%s5826 + $0x78] sm:$0xf]
      %v5843 = vld [vmem:[%s5826 + $0x80] sm:$0xff]
      %v5844 = vld [vmem:[%s5826 + $0x88] sm:$0xf]
      %v5845 = vld [vmem:[%s5826 + $0x90] sm:$0xff]
      %v5846 = vld [vmem:[%s5826 + $0x98] sm:$0xf]
      %s5847 = sadd.s32 %s2945, 30
      %s5848 = sld [smem:[#allocation10 + %s5847]]
      %v5849 = vstv %s5848
      %v5850 = vmul.f32 %v5827, %v5849
      %v5851 = vmul.f32 %v5828, %v5849
      %v5852 = vmul.f32 %v5829, %v5849
      %v5853 = vmul.f32 %v5830, %v5849
      %v5854 = vmul.f32 %v5831, %v5849
      %v5855 = vmul.f32 %v5832, %v5849
      %v5856 = vmul.f32 %v5833, %v5849
      %v5857 = vmul.f32 %v5834, %v5849
      %v5858 = vmul.f32 %v5835, %v5849
      %v5859 = vmul.f32 %v5836, %v5849
      %v5860 = vmul.f32 %v5837, %v5849
      %v5861 = vmul.f32 %v5838, %v5849
      %v5862 = vmul.f32 %v5839, %v5849
      %v5863 = vmul.f32 %v5840, %v5849
      %v5864 = vmul.f32 %v5841, %v5849
      %v5865 = vmul.f32 %v5842, %v5849
      %v5866 = vmul.f32 %v5843, %v5849
      %v5867 = vmul.f32 %v5844, %v5849
      %v5868 = vmul.f32 %v5845, %v5849
      %v5869 = vmul.f32 %v5846, %v5849
      %v5870 = vadd.f32 %v5806, %v5850
      %v5871 = vadd.f32 %v5807, %v5851
      %v5872 = vadd.f32 %v5808, %v5852
      %v5873 = vadd.f32 %v5809, %v5853
      %v5874 = vadd.f32 %v5810, %v5854
      %v5875 = vadd.f32 %v5811, %v5855
      %v5876 = vadd.f32 %v5812, %v5856
      %v5877 = vadd.f32 %v5813, %v5857
      %v5878 = vadd.f32 %v5814, %v5858
      %v5879 = vadd.f32 %v5815, %v5859
      %v5880 = vadd.f32 %v5816, %v5860
      %v5881 = vadd.f32 %v5817, %v5861
      %v5882 = vadd.f32 %v5818, %v5862
      %v5883 = vadd.f32 %v5819, %v5863
      %v5884 = vadd.f32 %v5820, %v5864
      %v5885 = vadd.f32 %v5821, %v5865
      %v5886 = vadd.f32 %v5822, %v5866
      %v5887 = vadd.f32 %v5823, %v5867
      %v5888 = vadd.f32 %v5824, %v5868
      %v5889 = vadd.f32 %v5825, %v5869
      %s5890 = sadd.s32 %s2945, 31
      %s5891 = sld [smem:[#allocation10 + %s5890]]
      %v5892 = vstv %s5891
      %v5893 = vmul.f32 %v5827, %v5892
      %v5894 = vmul.f32 %v5828, %v5892
      %v5895 = vmul.f32 %v5829, %v5892
      %v5896 = vmul.f32 %v5830, %v5892
      %v5897 = vmul.f32 %v5831, %v5892
      %v5898 = vmul.f32 %v5832, %v5892
      %v5899 = vmul.f32 %v5833, %v5892
      %v5900 = vmul.f32 %v5834, %v5892
      %v5901 = vmul.f32 %v5835, %v5892
      %v5902 = vmul.f32 %v5836, %v5892
      %v5903 = vmul.f32 %v5837, %v5892
      %v5904 = vmul.f32 %v5838, %v5892
      %v5905 = vmul.f32 %v5839, %v5892
      %v5906 = vmul.f32 %v5840, %v5892
      %v5907 = vmul.f32 %v5841, %v5892
      %v5908 = vmul.f32 %v5842, %v5892
      %v5909 = vmul.f32 %v5843, %v5892
      %v5910 = vmul.f32 %v5844, %v5892
      %v5911 = vmul.f32 %v5845, %v5892
      %v5912 = vmul.f32 %v5846, %v5892
      %v5933 = vrot.slane %v5893, 1
      %v5934 = vrot.slane %v5894, 1
      %v5935 = vsel %vm3031, %v5933, %v5934
      %v5936 = vrot.slane %v5895, 1
      %v5937 = vrot.slane %v5896, 1
      %v5938 = vsel %vm3031, %v5936, %v5937
      %v5939 = vrot.slane %v5897, 1
      %v5940 = vrot.slane %v5898, 1
      %v5941 = vsel %vm3031, %v5939, %v5940
      %v5942 = vrot.slane %v5899, 1
      %v5943 = vrot.slane %v5900, 1
      %v5944 = vsel %vm3031, %v5942, %v5943
      %v5945 = vrot.slane %v5901, 1
      %v5946 = vrot.slane %v5902, 1
      %v5947 = vsel %vm3031, %v5945, %v5946
      %v5948 = vrot.slane %v5903, 1
      %v5949 = vrot.slane %v5904, 1
      %v5950 = vsel %vm3031, %v5948, %v5949
      %v5951 = vrot.slane %v5905, 1
      %v5952 = vrot.slane %v5906, 1
      %v5953 = vsel %vm3031, %v5951, %v5952
      %v5954 = vrot.slane %v5907, 1
      %v5955 = vrot.slane %v5908, 1
      %v5956 = vsel %vm3031, %v5954, %v5955
      %v5957 = vrot.slane %v5909, 1
      %v5958 = vrot.slane %v5910, 1
      %v5959 = vsel %vm3031, %v5957, %v5958
      %v5960 = vrot.slane %v5911, 1
      %v5961 = vrot.slane %v5912, 1
      %v5962 = vsel %vm3031, %v5960, %v5961
      %v5983 = vadd.f32 %v5870, %v5935
      %v5984 = vadd.f32 %v5871, %v5934
      %v5985 = vadd.f32 %v5872, %v5938
      %v5986 = vadd.f32 %v5873, %v5937
      %v5987 = vadd.f32 %v5874, %v5941
      %v5988 = vadd.f32 %v5875, %v5940
      %v5989 = vadd.f32 %v5876, %v5944
      %v5990 = vadd.f32 %v5877, %v5943
      %v5991 = vadd.f32 %v5878, %v5947
      %v5992 = vadd.f32 %v5879, %v5946
      %v5993 = vadd.f32 %v5880, %v5950
      %v5994 = vadd.f32 %v5881, %v5949
      %v5995 = vadd.f32 %v5882, %v5953
      %v5996 = vadd.f32 %v5883, %v5952
      %v5997 = vadd.f32 %v5884, %v5956
      %v5998 = vadd.f32 %v5885, %v5955
      %v5999 = vadd.f32 %v5886, %v5959
      %v6000 = vadd.f32 %v5887, %v5958
      %v6001 = vadd.f32 %v5888, %v5962
      %v6002 = vadd.f32 %v5889, %v5961
      %s6003 = sadd.s32 %s2945, 32
      %s6004 = sld [smem:[#allocation10 + %s6003]]
      %v6005 = vstv %s6004
      %v6006 = vmul.f32 %v5827, %v6005
      %v6007 = vmul.f32 %v5828, %v6005
      %v6008 = vmul.f32 %v5829, %v6005
      %v6009 = vmul.f32 %v5830, %v6005
      %v6010 = vmul.f32 %v5831, %v6005
      %v6011 = vmul.f32 %v5832, %v6005
      %v6012 = vmul.f32 %v5833, %v6005
      %v6013 = vmul.f32 %v5834, %v6005
      %v6014 = vmul.f32 %v5835, %v6005
      %v6015 = vmul.f32 %v5836, %v6005
      %v6016 = vmul.f32 %v5837, %v6005
      %v6017 = vmul.f32 %v5838, %v6005
      %v6018 = vmul.f32 %v5839, %v6005
      %v6019 = vmul.f32 %v5840, %v6005
      %v6020 = vmul.f32 %v5841, %v6005
      %v6021 = vmul.f32 %v5842, %v6005
      %v6022 = vmul.f32 %v5843, %v6005
      %v6023 = vmul.f32 %v5844, %v6005
      %v6024 = vmul.f32 %v5845, %v6005
      %v6025 = vmul.f32 %v5846, %v6005
      %v6046 = vrot.slane %v6006, 2
      %v6047 = vrot.slane %v6007, 2
      %v6048 = vsel %vm3145, %v6046, %v6047
      %v6049 = vrot.slane %v6008, 2
      %v6050 = vrot.slane %v6009, 2
      %v6051 = vsel %vm3145, %v6049, %v6050
      %v6052 = vrot.slane %v6010, 2
      %v6053 = vrot.slane %v6011, 2
      %v6054 = vsel %vm3145, %v6052, %v6053
      %v6055 = vrot.slane %v6012, 2
      %v6056 = vrot.slane %v6013, 2
      %v6057 = vsel %vm3145, %v6055, %v6056
      %v6058 = vrot.slane %v6014, 2
      %v6059 = vrot.slane %v6015, 2
      %v6060 = vsel %vm3145, %v6058, %v6059
      %v6061 = vrot.slane %v6016, 2
      %v6062 = vrot.slane %v6017, 2
      %v6063 = vsel %vm3145, %v6061, %v6062
      %v6064 = vrot.slane %v6018, 2
      %v6065 = vrot.slane %v6019, 2
      %v6066 = vsel %vm3145, %v6064, %v6065
      %v6067 = vrot.slane %v6020, 2
      %v6068 = vrot.slane %v6021, 2
      %v6069 = vsel %vm3145, %v6067, %v6068
      %v6070 = vrot.slane %v6022, 2
      %v6071 = vrot.slane %v6023, 2
      %v6072 = vsel %vm3145, %v6070, %v6071
      %v6073 = vrot.slane %v6024, 2
      %v6074 = vrot.slane %v6025, 2
      %v6075 = vsel %vm3145, %v6073, %v6074
      %v6096 = vadd.f32 %v5983, %v6048
      %v6097 = vadd.f32 %v5984, %v6047
      %v6098 = vadd.f32 %v5985, %v6051
      %v6099 = vadd.f32 %v5986, %v6050
      %v6100 = vadd.f32 %v5987, %v6054
      %v6101 = vadd.f32 %v5988, %v6053
      %v6102 = vadd.f32 %v5989, %v6057
      %v6103 = vadd.f32 %v5990, %v6056
      %v6104 = vadd.f32 %v5991, %v6060
      %v6105 = vadd.f32 %v5992, %v6059
      %v6106 = vadd.f32 %v5993, %v6063
      %v6107 = vadd.f32 %v5994, %v6062
      %v6108 = vadd.f32 %v5995, %v6066
      %v6109 = vadd.f32 %v5996, %v6065
      %v6110 = vadd.f32 %v5997, %v6069
      %v6111 = vadd.f32 %v5998, %v6068
      %v6112 = vadd.f32 %v5999, %v6072
      %v6113 = vadd.f32 %v6000, %v6071
      %v6114 = vadd.f32 %v6001, %v6075
      %v6115 = vadd.f32 %v6002, %v6074
      %s6116 = scalar_lea.vmem [#allocation3], 608
      %v6117 = vld [vmem:[%s6116] sm:$0xff]
      %v6118 = vld [vmem:[%s6116 + $0x8] sm:$0xf]
      %v6119 = vld [vmem:[%s6116 + $0x10] sm:$0xff]
      %v6120 = vld [vmem:[%s6116 + $0x18] sm:$0xf]
      %v6121 = vld [vmem:[%s6116 + $0x20] sm:$0xff]
      %v6122 = vld [vmem:[%s6116 + $0x28] sm:$0xf]
      %v6123 = vld [vmem:[%s6116 + $0x30] sm:$0xff]
      %v6124 = vld [vmem:[%s6116 + $0x38] sm:$0xf]
      %v6125 = vld [vmem:[%s6116 + $0x40] sm:$0xff]
      %v6126 = vld [vmem:[%s6116 + $0x48] sm:$0xf]
      %v6127 = vld [vmem:[%s6116 + $0x50] sm:$0xff]
      %v6128 = vld [vmem:[%s6116 + $0x58] sm:$0xf]
      %v6129 = vld [vmem:[%s6116 + $0x60] sm:$0xff]
      %v6130 = vld [vmem:[%s6116 + $0x68] sm:$0xf]
      %v6131 = vld [vmem:[%s6116 + $0x70] sm:$0xff]
      %v6132 = vld [vmem:[%s6116 + $0x78] sm:$0xf]
      %v6133 = vld [vmem:[%s6116 + $0x80] sm:$0xff]
      %v6134 = vld [vmem:[%s6116 + $0x88] sm:$0xf]
      %v6135 = vld [vmem:[%s6116 + $0x90] sm:$0xff]
      %v6136 = vld [vmem:[%s6116 + $0x98] sm:$0xf]
      %s6137 = sadd.s32 %s2945, 33
      %s6138 = sld [smem:[#allocation10 + %s6137]]
      %v6139 = vstv %s6138
      %v6140 = vmul.f32 %v6117, %v6139
      %v6141 = vmul.f32 %v6118, %v6139
      %v6142 = vmul.f32 %v6119, %v6139
      %v6143 = vmul.f32 %v6120, %v6139
      %v6144 = vmul.f32 %v6121, %v6139
      %v6145 = vmul.f32 %v6122, %v6139
      %v6146 = vmul.f32 %v6123, %v6139
      %v6147 = vmul.f32 %v6124, %v6139
      %v6148 = vmul.f32 %v6125, %v6139
      %v6149 = vmul.f32 %v6126, %v6139
      %v6150 = vmul.f32 %v6127, %v6139
      %v6151 = vmul.f32 %v6128, %v6139
      %v6152 = vmul.f32 %v6129, %v6139
      %v6153 = vmul.f32 %v6130, %v6139
      %v6154 = vmul.f32 %v6131, %v6139
      %v6155 = vmul.f32 %v6132, %v6139
      %v6156 = vmul.f32 %v6133, %v6139
      %v6157 = vmul.f32 %v6134, %v6139
      %v6158 = vmul.f32 %v6135, %v6139
      %v6159 = vmul.f32 %v6136, %v6139
      %v6160 = vadd.f32 %v6096, %v6140
      %v6161 = vadd.f32 %v6097, %v6141
      %v6162 = vadd.f32 %v6098, %v6142
      %v6163 = vadd.f32 %v6099, %v6143
      %v6164 = vadd.f32 %v6100, %v6144
      %v6165 = vadd.f32 %v6101, %v6145
      %v6166 = vadd.f32 %v6102, %v6146
      %v6167 = vadd.f32 %v6103, %v6147
      %v6168 = vadd.f32 %v6104, %v6148
      %v6169 = vadd.f32 %v6105, %v6149
      %v6170 = vadd.f32 %v6106, %v6150
      %v6171 = vadd.f32 %v6107, %v6151
      %v6172 = vadd.f32 %v6108, %v6152
      %v6173 = vadd.f32 %v6109, %v6153
      %v6174 = vadd.f32 %v6110, %v6154
      %v6175 = vadd.f32 %v6111, %v6155
      %v6176 = vadd.f32 %v6112, %v6156
      %v6177 = vadd.f32 %v6113, %v6157
      %v6178 = vadd.f32 %v6114, %v6158
      %v6179 = vadd.f32 %v6115, %v6159
      %s6180 = sadd.s32 %s2945, 34
      %s6181 = sld [smem:[#allocation10 + %s6180]]
      %v6182 = vstv %s6181
      %v6183 = vmul.f32 %v6117, %v6182
      %v6184 = vmul.f32 %v6118, %v6182
      %v6185 = vmul.f32 %v6119, %v6182
      %v6186 = vmul.f32 %v6120, %v6182
      %v6187 = vmul.f32 %v6121, %v6182
      %v6188 = vmul.f32 %v6122, %v6182
      %v6189 = vmul.f32 %v6123, %v6182
      %v6190 = vmul.f32 %v6124, %v6182
      %v6191 = vmul.f32 %v6125, %v6182
      %v6192 = vmul.f32 %v6126, %v6182
      %v6193 = vmul.f32 %v6127, %v6182
      %v6194 = vmul.f32 %v6128, %v6182
      %v6195 = vmul.f32 %v6129, %v6182
      %v6196 = vmul.f32 %v6130, %v6182
      %v6197 = vmul.f32 %v6131, %v6182
      %v6198 = vmul.f32 %v6132, %v6182
      %v6199 = vmul.f32 %v6133, %v6182
      %v6200 = vmul.f32 %v6134, %v6182
      %v6201 = vmul.f32 %v6135, %v6182
      %v6202 = vmul.f32 %v6136, %v6182
      %v6223 = vrot.slane %v6183, 1
      %v6224 = vrot.slane %v6184, 1
      %v6225 = vsel %vm3031, %v6223, %v6224
      %v6226 = vrot.slane %v6185, 1
      %v6227 = vrot.slane %v6186, 1
      %v6228 = vsel %vm3031, %v6226, %v6227
      %v6229 = vrot.slane %v6187, 1
      %v6230 = vrot.slane %v6188, 1
      %v6231 = vsel %vm3031, %v6229, %v6230
      %v6232 = vrot.slane %v6189, 1
      %v6233 = vrot.slane %v6190, 1
      %v6234 = vsel %vm3031, %v6232, %v6233
      %v6235 = vrot.slane %v6191, 1
      %v6236 = vrot.slane %v6192, 1
      %v6237 = vsel %vm3031, %v6235, %v6236
      %v6238 = vrot.slane %v6193, 1
      %v6239 = vrot.slane %v6194, 1
      %v6240 = vsel %vm3031, %v6238, %v6239
      %v6241 = vrot.slane %v6195, 1
      %v6242 = vrot.slane %v6196, 1
      %v6243 = vsel %vm3031, %v6241, %v6242
      %v6244 = vrot.slane %v6197, 1
      %v6245 = vrot.slane %v6198, 1
      %v6246 = vsel %vm3031, %v6244, %v6245
      %v6247 = vrot.slane %v6199, 1
      %v6248 = vrot.slane %v6200, 1
      %v6249 = vsel %vm3031, %v6247, %v6248
      %v6250 = vrot.slane %v6201, 1
      %v6251 = vrot.slane %v6202, 1
      %v6252 = vsel %vm3031, %v6250, %v6251
      %v6273 = vadd.f32 %v6160, %v6225
      %v6274 = vadd.f32 %v6161, %v6224
      %v6275 = vadd.f32 %v6162, %v6228
      %v6276 = vadd.f32 %v6163, %v6227
      %v6277 = vadd.f32 %v6164, %v6231
      %v6278 = vadd.f32 %v6165, %v6230
      %v6279 = vadd.f32 %v6166, %v6234
      %v6280 = vadd.f32 %v6167, %v6233
      %v6281 = vadd.f32 %v6168, %v6237
      %v6282 = vadd.f32 %v6169, %v6236
      %v6283 = vadd.f32 %v6170, %v6240
      %v6284 = vadd.f32 %v6171, %v6239
      %v6285 = vadd.f32 %v6172, %v6243
      %v6286 = vadd.f32 %v6173, %v6242
      %v6287 = vadd.f32 %v6174, %v6246
      %v6288 = vadd.f32 %v6175, %v6245
      %v6289 = vadd.f32 %v6176, %v6249
      %v6290 = vadd.f32 %v6177, %v6248
      %v6291 = vadd.f32 %v6178, %v6252
      %v6292 = vadd.f32 %v6179, %v6251
      %s6293 = sadd.s32 %s2945, 35
      %s6294 = sld [smem:[#allocation10 + %s6293]]
      %v6295 = vstv %s6294
      %v6296 = vmul.f32 %v6117, %v6295
      %v6297 = vmul.f32 %v6118, %v6295
      %v6298 = vmul.f32 %v6119, %v6295
      %v6299 = vmul.f32 %v6120, %v6295
      %v6300 = vmul.f32 %v6121, %v6295
      %v6301 = vmul.f32 %v6122, %v6295
      %v6302 = vmul.f32 %v6123, %v6295
      %v6303 = vmul.f32 %v6124, %v6295
      %v6304 = vmul.f32 %v6125, %v6295
      %v6305 = vmul.f32 %v6126, %v6295
      %v6306 = vmul.f32 %v6127, %v6295
      %v6307 = vmul.f32 %v6128, %v6295
      %v6308 = vmul.f32 %v6129, %v6295
      %v6309 = vmul.f32 %v6130, %v6295
      %v6310 = vmul.f32 %v6131, %v6295
      %v6311 = vmul.f32 %v6132, %v6295
      %v6312 = vmul.f32 %v6133, %v6295
      %v6313 = vmul.f32 %v6134, %v6295
      %v6314 = vmul.f32 %v6135, %v6295
      %v6315 = vmul.f32 %v6136, %v6295
      %v6336 = vrot.slane %v6296, 2
      %v6337 = vrot.slane %v6297, 2
      %v6338 = vsel %vm3145, %v6336, %v6337
      %v6339 = vrot.slane %v6298, 2
      %v6340 = vrot.slane %v6299, 2
      %v6341 = vsel %vm3145, %v6339, %v6340
      %v6342 = vrot.slane %v6300, 2
      %v6343 = vrot.slane %v6301, 2
      %v6344 = vsel %vm3145, %v6342, %v6343
      %v6345 = vrot.slane %v6302, 2
      %v6346 = vrot.slane %v6303, 2
      %v6347 = vsel %vm3145, %v6345, %v6346
      %v6348 = vrot.slane %v6304, 2
      %v6349 = vrot.slane %v6305, 2
      %v6350 = vsel %vm3145, %v6348, %v6349
      %v6351 = vrot.slane %v6306, 2
      %v6352 = vrot.slane %v6307, 2
      %v6353 = vsel %vm3145, %v6351, %v6352
      %v6354 = vrot.slane %v6308, 2
      %v6355 = vrot.slane %v6309, 2
      %v6356 = vsel %vm3145, %v6354, %v6355
      %v6357 = vrot.slane %v6310, 2
      %v6358 = vrot.slane %v6311, 2
      %v6359 = vsel %vm3145, %v6357, %v6358
      %v6360 = vrot.slane %v6312, 2
      %v6361 = vrot.slane %v6313, 2
      %v6362 = vsel %vm3145, %v6360, %v6361
      %v6363 = vrot.slane %v6314, 2
      %v6364 = vrot.slane %v6315, 2
      %v6365 = vsel %vm3145, %v6363, %v6364
      %v6386 = vadd.f32 %v6273, %v6338
      %v6387 = vadd.f32 %v6274, %v6337
      %v6388 = vadd.f32 %v6275, %v6341
      %v6389 = vadd.f32 %v6276, %v6340
      %v6390 = vadd.f32 %v6277, %v6344
      %v6391 = vadd.f32 %v6278, %v6343
      %v6392 = vadd.f32 %v6279, %v6347
      %v6393 = vadd.f32 %v6280, %v6346
      %v6394 = vadd.f32 %v6281, %v6350
      %v6395 = vadd.f32 %v6282, %v6349
      %v6396 = vadd.f32 %v6283, %v6353
      %v6397 = vadd.f32 %v6284, %v6352
      %v6398 = vadd.f32 %v6285, %v6356
      %v6399 = vadd.f32 %v6286, %v6355
      %v6400 = vadd.f32 %v6287, %v6359
      %v6401 = vadd.f32 %v6288, %v6358
      %v6402 = vadd.f32 %v6289, %v6362
      %v6403 = vadd.f32 %v6290, %v6361
      %v6404 = vadd.f32 %v6291, %v6365
      %v6405 = vadd.f32 %v6292, %v6364
      %s6406 = scalar_lea.vmem [#allocation3], 768
      %v6407 = vld [vmem:[%s6406] sm:$0xff]
      %v6408 = vld [vmem:[%s6406 + $0x8] sm:$0xf]
      %v6409 = vld [vmem:[%s6406 + $0x10] sm:$0xff]
      %v6410 = vld [vmem:[%s6406 + $0x18] sm:$0xf]
      %v6411 = vld [vmem:[%s6406 + $0x20] sm:$0xff]
      %v6412 = vld [vmem:[%s6406 + $0x28] sm:$0xf]
      %v6413 = vld [vmem:[%s6406 + $0x30] sm:$0xff]
      %v6414 = vld [vmem:[%s6406 + $0x38] sm:$0xf]
      %v6415 = vld [vmem:[%s6406 + $0x40] sm:$0xff]
      %v6416 = vld [vmem:[%s6406 + $0x48] sm:$0xf]
      %v6417 = vld [vmem:[%s6406 + $0x50] sm:$0xff]
      %v6418 = vld [vmem:[%s6406 + $0x58] sm:$0xf]
      %v6419 = vld [vmem:[%s6406 + $0x60] sm:$0xff]
      %v6420 = vld [vmem:[%s6406 + $0x68] sm:$0xf]
      %v6421 = vld [vmem:[%s6406 + $0x70] sm:$0xff]
      %v6422 = vld [vmem:[%s6406 + $0x78] sm:$0xf]
      %v6423 = vld [vmem:[%s6406 + $0x80] sm:$0xff]
      %v6424 = vld [vmem:[%s6406 + $0x88] sm:$0xf]
      %v6425 = vld [vmem:[%s6406 + $0x90] sm:$0xff]
      %v6426 = vld [vmem:[%s6406 + $0x98] sm:$0xf]
      %s6427 = sadd.s32 %s2945, 36
      %s6428 = sld [smem:[#allocation10 + %s6427]]
      %v6429 = vstv %s6428
      %v6430 = vmul.f32 %v6407, %v6429
      %v6431 = vmul.f32 %v6408, %v6429
      %v6432 = vmul.f32 %v6409, %v6429
      %v6433 = vmul.f32 %v6410, %v6429
      %v6434 = vmul.f32 %v6411, %v6429
      %v6435 = vmul.f32 %v6412, %v6429
      %v6436 = vmul.f32 %v6413, %v6429
      %v6437 = vmul.f32 %v6414, %v6429
      %v6438 = vmul.f32 %v6415, %v6429
      %v6439 = vmul.f32 %v6416, %v6429
      %v6440 = vmul.f32 %v6417, %v6429
      %v6441 = vmul.f32 %v6418, %v6429
      %v6442 = vmul.f32 %v6419, %v6429
      %v6443 = vmul.f32 %v6420, %v6429
      %v6444 = vmul.f32 %v6421, %v6429
      %v6445 = vmul.f32 %v6422, %v6429
      %v6446 = vmul.f32 %v6423, %v6429
      %v6447 = vmul.f32 %v6424, %v6429
      %v6448 = vmul.f32 %v6425, %v6429
      %v6449 = vmul.f32 %v6426, %v6429
      %v6450 = vadd.f32 %v6386, %v6430
      %v6451 = vadd.f32 %v6387, %v6431
      %v6452 = vadd.f32 %v6388, %v6432
      %v6453 = vadd.f32 %v6389, %v6433
      %v6454 = vadd.f32 %v6390, %v6434
      %v6455 = vadd.f32 %v6391, %v6435
      %v6456 = vadd.f32 %v6392, %v6436
      %v6457 = vadd.f32 %v6393, %v6437
      %v6458 = vadd.f32 %v6394, %v6438
      %v6459 = vadd.f32 %v6395, %v6439
      %v6460 = vadd.f32 %v6396, %v6440
      %v6461 = vadd.f32 %v6397, %v6441
      %v6462 = vadd.f32 %v6398, %v6442
      %v6463 = vadd.f32 %v6399, %v6443
      %v6464 = vadd.f32 %v6400, %v6444
      %v6465 = vadd.f32 %v6401, %v6445
      %v6466 = vadd.f32 %v6402, %v6446
      %v6467 = vadd.f32 %v6403, %v6447
      %v6468 = vadd.f32 %v6404, %v6448
      %v6469 = vadd.f32 %v6405, %v6449
      %s6470 = sadd.s32 %s2945, 37
      %s6471 = sld [smem:[#allocation10 + %s6470]]
      %v6472 = vstv %s6471
      %v6473 = vmul.f32 %v6407, %v6472
      %v6474 = vmul.f32 %v6408, %v6472
      %v6475 = vmul.f32 %v6409, %v6472
      %v6476 = vmul.f32 %v6410, %v6472
      %v6477 = vmul.f32 %v6411, %v6472
      %v6478 = vmul.f32 %v6412, %v6472
      %v6479 = vmul.f32 %v6413, %v6472
      %v6480 = vmul.f32 %v6414, %v6472
      %v6481 = vmul.f32 %v6415, %v6472
      %v6482 = vmul.f32 %v6416, %v6472
      %v6483 = vmul.f32 %v6417, %v6472
      %v6484 = vmul.f32 %v6418, %v6472
      %v6485 = vmul.f32 %v6419, %v6472
      %v6486 = vmul.f32 %v6420, %v6472
      %v6487 = vmul.f32 %v6421, %v6472
      %v6488 = vmul.f32 %v6422, %v6472
      %v6489 = vmul.f32 %v6423, %v6472
      %v6490 = vmul.f32 %v6424, %v6472
      %v6491 = vmul.f32 %v6425, %v6472
      %v6492 = vmul.f32 %v6426, %v6472
      %v6513 = vrot.slane %v6473, 1
      %v6514 = vrot.slane %v6474, 1
      %v6515 = vsel %vm3031, %v6513, %v6514
      %v6516 = vrot.slane %v6475, 1
      %v6517 = vrot.slane %v6476, 1
      %v6518 = vsel %vm3031, %v6516, %v6517
      %v6519 = vrot.slane %v6477, 1
      %v6520 = vrot.slane %v6478, 1
      %v6521 = vsel %vm3031, %v6519, %v6520
      %v6522 = vrot.slane %v6479, 1
      %v6523 = vrot.slane %v6480, 1
      %v6524 = vsel %vm3031, %v6522, %v6523
      %v6525 = vrot.slane %v6481, 1
      %v6526 = vrot.slane %v6482, 1
      %v6527 = vsel %vm3031, %v6525, %v6526
      %v6528 = vrot.slane %v6483, 1
      %v6529 = vrot.slane %v6484, 1
      %v6530 = vsel %vm3031, %v6528, %v6529
      %v6531 = vrot.slane %v6485, 1
      %v6532 = vrot.slane %v6486, 1
      %v6533 = vsel %vm3031, %v6531, %v6532
      %v6534 = vrot.slane %v6487, 1
      %v6535 = vrot.slane %v6488, 1
      %v6536 = vsel %vm3031, %v6534, %v6535
      %v6537 = vrot.slane %v6489, 1
      %v6538 = vrot.slane %v6490, 1
      %v6539 = vsel %vm3031, %v6537, %v6538
      %v6540 = vrot.slane %v6491, 1
      %v6541 = vrot.slane %v6492, 1
      %v6542 = vsel %vm3031, %v6540, %v6541
      %v6563 = vadd.f32 %v6450, %v6515
      %v6564 = vadd.f32 %v6451, %v6514
      %v6565 = vadd.f32 %v6452, %v6518
      %v6566 = vadd.f32 %v6453, %v6517
      %v6567 = vadd.f32 %v6454, %v6521
      %v6568 = vadd.f32 %v6455, %v6520
      %v6569 = vadd.f32 %v6456, %v6524
      %v6570 = vadd.f32 %v6457, %v6523
      %v6571 = vadd.f32 %v6458, %v6527
      %v6572 = vadd.f32 %v6459, %v6526
      %v6573 = vadd.f32 %v6460, %v6530
      %v6574 = vadd.f32 %v6461, %v6529
      %v6575 = vadd.f32 %v6462, %v6533
      %v6576 = vadd.f32 %v6463, %v6532
      %v6577 = vadd.f32 %v6464, %v6536
      %v6578 = vadd.f32 %v6465, %v6535
      %v6579 = vadd.f32 %v6466, %v6539
      %v6580 = vadd.f32 %v6467, %v6538
      %v6581 = vadd.f32 %v6468, %v6542
      %v6582 = vadd.f32 %v6469, %v6541
      %s6583 = sadd.s32 %s2945, 38
      %s6584 = sld [smem:[#allocation10 + %s6583]]
      %v6585 = vstv %s6584
      %v6586 = vmul.f32 %v6407, %v6585
      %v6587 = vmul.f32 %v6408, %v6585
      %v6588 = vmul.f32 %v6409, %v6585
      %v6589 = vmul.f32 %v6410, %v6585
      %v6590 = vmul.f32 %v6411, %v6585
      %v6591 = vmul.f32 %v6412, %v6585
      %v6592 = vmul.f32 %v6413, %v6585
      %v6593 = vmul.f32 %v6414, %v6585
      %v6594 = vmul.f32 %v6415, %v6585
      %v6595 = vmul.f32 %v6416, %v6585
      %v6596 = vmul.f32 %v6417, %v6585
      %v6597 = vmul.f32 %v6418, %v6585
      %v6598 = vmul.f32 %v6419, %v6585
      %v6599 = vmul.f32 %v6420, %v6585
      %v6600 = vmul.f32 %v6421, %v6585
      %v6601 = vmul.f32 %v6422, %v6585
      %v6602 = vmul.f32 %v6423, %v6585
      %v6603 = vmul.f32 %v6424, %v6585
      %v6604 = vmul.f32 %v6425, %v6585
      %v6605 = vmul.f32 %v6426, %v6585
      %v6626 = vrot.slane %v6586, 2
      %v6627 = vrot.slane %v6587, 2
      %v6628 = vsel %vm3145, %v6626, %v6627
      %v6629 = vrot.slane %v6588, 2
      %v6630 = vrot.slane %v6589, 2
      %v6631 = vsel %vm3145, %v6629, %v6630
      %v6632 = vrot.slane %v6590, 2
      %v6633 = vrot.slane %v6591, 2
      %v6634 = vsel %vm3145, %v6632, %v6633
      %v6635 = vrot.slane %v6592, 2
      %v6636 = vrot.slane %v6593, 2
      %v6637 = vsel %vm3145, %v6635, %v6636
      %v6638 = vrot.slane %v6594, 2
      %v6639 = vrot.slane %v6595, 2
      %v6640 = vsel %vm3145, %v6638, %v6639
      %v6641 = vrot.slane %v6596, 2
      %v6642 = vrot.slane %v6597, 2
      %v6643 = vsel %vm3145, %v6641, %v6642
      %v6644 = vrot.slane %v6598, 2
      %v6645 = vrot.slane %v6599, 2
      %v6646 = vsel %vm3145, %v6644, %v6645
      %v6647 = vrot.slane %v6600, 2
      %v6648 = vrot.slane %v6601, 2
      %v6649 = vsel %vm3145, %v6647, %v6648
      %v6650 = vrot.slane %v6602, 2
      %v6651 = vrot.slane %v6603, 2
      %v6652 = vsel %vm3145, %v6650, %v6651
      %v6653 = vrot.slane %v6604, 2
      %v6654 = vrot.slane %v6605, 2
      %v6655 = vsel %vm3145, %v6653, %v6654
      %v6676 = vadd.f32 %v6563, %v6628
      %v6677 = vadd.f32 %v6564, %v6627
      %v6678 = vadd.f32 %v6565, %v6631
      %v6679 = vadd.f32 %v6566, %v6630
      %v6680 = vadd.f32 %v6567, %v6634
      %v6681 = vadd.f32 %v6568, %v6633
      %v6682 = vadd.f32 %v6569, %v6637
      %v6683 = vadd.f32 %v6570, %v6636
      %v6684 = vadd.f32 %v6571, %v6640
      %v6685 = vadd.f32 %v6572, %v6639
      %v6686 = vadd.f32 %v6573, %v6643
      %v6687 = vadd.f32 %v6574, %v6642
      %v6688 = vadd.f32 %v6575, %v6646
      %v6689 = vadd.f32 %v6576, %v6645
      %v6690 = vadd.f32 %v6577, %v6649
      %v6691 = vadd.f32 %v6578, %v6648
      %v6692 = vadd.f32 %v6579, %v6652
      %v6693 = vadd.f32 %v6580, %v6651
      %v6694 = vadd.f32 %v6581, %v6655
      %v6695 = vadd.f32 %v6582, %v6654
      %s6696 = scalar_lea.vmem [#allocation3], 784
      %v6697 = vld [vmem:[%s6696] sm:$0xff]
      %v6698 = vld [vmem:[%s6696 + $0x8] sm:$0xf]
      %v6699 = vld [vmem:[%s6696 + $0x10] sm:$0xff]
      %v6700 = vld [vmem:[%s6696 + $0x18] sm:$0xf]
      %v6701 = vld [vmem:[%s6696 + $0x20] sm:$0xff]
      %v6702 = vld [vmem:[%s6696 + $0x28] sm:$0xf]
      %v6703 = vld [vmem:[%s6696 + $0x30] sm:$0xff]
      %v6704 = vld [vmem:[%s6696 + $0x38] sm:$0xf]
      %v6705 = vld [vmem:[%s6696 + $0x40] sm:$0xff]
      %v6706 = vld [vmem:[%s6696 + $0x48] sm:$0xf]
      %v6707 = vld [vmem:[%s6696 + $0x50] sm:$0xff]
      %v6708 = vld [vmem:[%s6696 + $0x58] sm:$0xf]
      %v6709 = vld [vmem:[%s6696 + $0x60] sm:$0xff]
      %v6710 = vld [vmem:[%s6696 + $0x68] sm:$0xf]
      %v6711 = vld [vmem:[%s6696 + $0x70] sm:$0xff]
      %v6712 = vld [vmem:[%s6696 + $0x78] sm:$0xf]
      %v6713 = vld [vmem:[%s6696 + $0x80] sm:$0xff]
      %v6714 = vld [vmem:[%s6696 + $0x88] sm:$0xf]
      %v6715 = vld [vmem:[%s6696 + $0x90] sm:$0xff]
      %v6716 = vld [vmem:[%s6696 + $0x98] sm:$0xf]
      %s6717 = sadd.s32 %s2945, 39
      %s6718 = sld [smem:[#allocation10 + %s6717]]
      %v6719 = vstv %s6718
      %v6720 = vmul.f32 %v6697, %v6719
      %v6721 = vmul.f32 %v6698, %v6719
      %v6722 = vmul.f32 %v6699, %v6719
      %v6723 = vmul.f32 %v6700, %v6719
      %v6724 = vmul.f32 %v6701, %v6719
      %v6725 = vmul.f32 %v6702, %v6719
      %v6726 = vmul.f32 %v6703, %v6719
      %v6727 = vmul.f32 %v6704, %v6719
      %v6728 = vmul.f32 %v6705, %v6719
      %v6729 = vmul.f32 %v6706, %v6719
      %v6730 = vmul.f32 %v6707, %v6719
      %v6731 = vmul.f32 %v6708, %v6719
      %v6732 = vmul.f32 %v6709, %v6719
      %v6733 = vmul.f32 %v6710, %v6719
      %v6734 = vmul.f32 %v6711, %v6719
      %v6735 = vmul.f32 %v6712, %v6719
      %v6736 = vmul.f32 %v6713, %v6719
      %v6737 = vmul.f32 %v6714, %v6719
      %v6738 = vmul.f32 %v6715, %v6719
      %v6739 = vmul.f32 %v6716, %v6719
      %v6740 = vadd.f32 %v6676, %v6720
      %v6741 = vadd.f32 %v6677, %v6721
      %v6742 = vadd.f32 %v6678, %v6722
      %v6743 = vadd.f32 %v6679, %v6723
      %v6744 = vadd.f32 %v6680, %v6724
      %v6745 = vadd.f32 %v6681, %v6725
      %v6746 = vadd.f32 %v6682, %v6726
      %v6747 = vadd.f32 %v6683, %v6727
      %v6748 = vadd.f32 %v6684, %v6728
      %v6749 = vadd.f32 %v6685, %v6729
      %v6750 = vadd.f32 %v6686, %v6730
      %v6751 = vadd.f32 %v6687, %v6731
      %v6752 = vadd.f32 %v6688, %v6732
      %v6753 = vadd.f32 %v6689, %v6733
      %v6754 = vadd.f32 %v6690, %v6734
      %v6755 = vadd.f32 %v6691, %v6735
      %v6756 = vadd.f32 %v6692, %v6736
      %v6757 = vadd.f32 %v6693, %v6737
      %v6758 = vadd.f32 %v6694, %v6738
      %v6759 = vadd.f32 %v6695, %v6739
      %s6760 = sadd.s32 %s2945, 40
      %s6761 = sld [smem:[#allocation10 + %s6760]]
      %v6762 = vstv %s6761
      %v6763 = vmul.f32 %v6697, %v6762
      %v6764 = vmul.f32 %v6698, %v6762
      %v6765 = vmul.f32 %v6699, %v6762
      %v6766 = vmul.f32 %v6700, %v6762
      %v6767 = vmul.f32 %v6701, %v6762
      %v6768 = vmul.f32 %v6702, %v6762
      %v6769 = vmul.f32 %v6703, %v6762
      %v6770 = vmul.f32 %v6704, %v6762
      %v6771 = vmul.f32 %v6705, %v6762
      %v6772 = vmul.f32 %v6706, %v6762
      %v6773 = vmul.f32 %v6707, %v6762
      %v6774 = vmul.f32 %v6708, %v6762
      %v6775 = vmul.f32 %v6709, %v6762
      %v6776 = vmul.f32 %v6710, %v6762
      %v6777 = vmul.f32 %v6711, %v6762
      %v6778 = vmul.f32 %v6712, %v6762
      %v6779 = vmul.f32 %v6713, %v6762
      %v6780 = vmul.f32 %v6714, %v6762
      %v6781 = vmul.f32 %v6715, %v6762
      %v6782 = vmul.f32 %v6716, %v6762
      %v6803 = vrot.slane %v6763, 1
      %v6804 = vrot.slane %v6764, 1
      %v6805 = vsel %vm3031, %v6803, %v6804
      %v6806 = vrot.slane %v6765, 1
      %v6807 = vrot.slane %v6766, 1
      %v6808 = vsel %vm3031, %v6806, %v6807
      %v6809 = vrot.slane %v6767, 1
      %v6810 = vrot.slane %v6768, 1
      %v6811 = vsel %vm3031, %v6809, %v6810
      %v6812 = vrot.slane %v6769, 1
      %v6813 = vrot.slane %v6770, 1
      %v6814 = vsel %vm3031, %v6812, %v6813
      %v6815 = vrot.slane %v6771, 1
      %v6816 = vrot.slane %v6772, 1
      %v6817 = vsel %vm3031, %v6815, %v6816
      %v6818 = vrot.slane %v6773, 1
      %v6819 = vrot.slane %v6774, 1
      %v6820 = vsel %vm3031, %v6818, %v6819
      %v6821 = vrot.slane %v6775, 1
      %v6822 = vrot.slane %v6776, 1
      %v6823 = vsel %vm3031, %v6821, %v6822
      %v6824 = vrot.slane %v6777, 1
      %v6825 = vrot.slane %v6778, 1
      %v6826 = vsel %vm3031, %v6824, %v6825
      %v6827 = vrot.slane %v6779, 1
      %v6828 = vrot.slane %v6780, 1
      %v6829 = vsel %vm3031, %v6827, %v6828
      %v6830 = vrot.slane %v6781, 1
      %v6831 = vrot.slane %v6782, 1
      %v6832 = vsel %vm3031, %v6830, %v6831
      %v6853 = vadd.f32 %v6740, %v6805
      %v6854 = vadd.f32 %v6741, %v6804
      %v6855 = vadd.f32 %v6742, %v6808
      %v6856 = vadd.f32 %v6743, %v6807
      %v6857 = vadd.f32 %v6744, %v6811
      %v6858 = vadd.f32 %v6745, %v6810
      %v6859 = vadd.f32 %v6746, %v6814
      %v6860 = vadd.f32 %v6747, %v6813
      %v6861 = vadd.f32 %v6748, %v6817
      %v6862 = vadd.f32 %v6749, %v6816
      %v6863 = vadd.f32 %v6750, %v6820
      %v6864 = vadd.f32 %v6751, %v6819
      %v6865 = vadd.f32 %v6752, %v6823
      %v6866 = vadd.f32 %v6753, %v6822
      %v6867 = vadd.f32 %v6754, %v6826
      %v6868 = vadd.f32 %v6755, %v6825
      %v6869 = vadd.f32 %v6756, %v6829
      %v6870 = vadd.f32 %v6757, %v6828
      %v6871 = vadd.f32 %v6758, %v6832
      %v6872 = vadd.f32 %v6759, %v6831
      %s6873 = sadd.s32 %s2945, 41
      %s6874 = sld [smem:[#allocation10 + %s6873]]
      %v6875 = vstv %s6874
      %v6876 = vmul.f32 %v6697, %v6875
      %v6877 = vmul.f32 %v6698, %v6875
      %v6878 = vmul.f32 %v6699, %v6875
      %v6879 = vmul.f32 %v6700, %v6875
      %v6880 = vmul.f32 %v6701, %v6875
      %v6881 = vmul.f32 %v6702, %v6875
      %v6882 = vmul.f32 %v6703, %v6875
      %v6883 = vmul.f32 %v6704, %v6875
      %v6884 = vmul.f32 %v6705, %v6875
      %v6885 = vmul.f32 %v6706, %v6875
      %v6886 = vmul.f32 %v6707, %v6875
      %v6887 = vmul.f32 %v6708, %v6875
      %v6888 = vmul.f32 %v6709, %v6875
      %v6889 = vmul.f32 %v6710, %v6875
      %v6890 = vmul.f32 %v6711, %v6875
      %v6891 = vmul.f32 %v6712, %v6875
      %v6892 = vmul.f32 %v6713, %v6875
      %v6893 = vmul.f32 %v6714, %v6875
      %v6894 = vmul.f32 %v6715, %v6875
      %v6895 = vmul.f32 %v6716, %v6875
      %v6916 = vrot.slane %v6876, 2
      %v6917 = vrot.slane %v6877, 2
      %v6918 = vsel %vm3145, %v6916, %v6917
      %v6919 = vrot.slane %v6878, 2
      %v6920 = vrot.slane %v6879, 2
      %v6921 = vsel %vm3145, %v6919, %v6920
      %v6922 = vrot.slane %v6880, 2
      %v6923 = vrot.slane %v6881, 2
      %v6924 = vsel %vm3145, %v6922, %v6923
      %v6925 = vrot.slane %v6882, 2
      %v6926 = vrot.slane %v6883, 2
      %v6927 = vsel %vm3145, %v6925, %v6926
      %v6928 = vrot.slane %v6884, 2
      %v6929 = vrot.slane %v6885, 2
      %v6930 = vsel %vm3145, %v6928, %v6929
      %v6931 = vrot.slane %v6886, 2
      %v6932 = vrot.slane %v6887, 2
      %v6933 = vsel %vm3145, %v6931, %v6932
      %v6934 = vrot.slane %v6888, 2
      %v6935 = vrot.slane %v6889, 2
      %v6936 = vsel %vm3145, %v6934, %v6935
      %v6937 = vrot.slane %v6890, 2
      %v6938 = vrot.slane %v6891, 2
      %v6939 = vsel %vm3145, %v6937, %v6938
      %v6940 = vrot.slane %v6892, 2
      %v6941 = vrot.slane %v6893, 2
      %v6942 = vsel %vm3145, %v6940, %v6941
      %v6943 = vrot.slane %v6894, 2
      %v6944 = vrot.slane %v6895, 2
      %v6945 = vsel %vm3145, %v6943, %v6944
      %v6966 = vadd.f32 %v6853, %v6918
      %v6967 = vadd.f32 %v6854, %v6917
      %v6968 = vadd.f32 %v6855, %v6921
      %v6969 = vadd.f32 %v6856, %v6920
      %v6970 = vadd.f32 %v6857, %v6924
      %v6971 = vadd.f32 %v6858, %v6923
      %v6972 = vadd.f32 %v6859, %v6927
      %v6973 = vadd.f32 %v6860, %v6926
      %v6974 = vadd.f32 %v6861, %v6930
      %v6975 = vadd.f32 %v6862, %v6929
      %v6976 = vadd.f32 %v6863, %v6933
      %v6977 = vadd.f32 %v6864, %v6932
      %v6978 = vadd.f32 %v6865, %v6936
      %v6979 = vadd.f32 %v6866, %v6935
      %v6980 = vadd.f32 %v6867, %v6939
      %v6981 = vadd.f32 %v6868, %v6938
      %v6982 = vadd.f32 %v6869, %v6942
      %v6983 = vadd.f32 %v6870, %v6941
      %v6984 = vadd.f32 %v6871, %v6945
      %v6985 = vadd.f32 %v6872, %v6944
      %s6986 = scalar_lea.vmem [#allocation3], 800
      %v6987 = vld [vmem:[%s6986] sm:$0xff]
      %v6988 = vld [vmem:[%s6986 + $0x8] sm:$0xf]
      %v6989 = vld [vmem:[%s6986 + $0x10] sm:$0xff]
      %v6990 = vld [vmem:[%s6986 + $0x18] sm:$0xf]
      %v6991 = vld [vmem:[%s6986 + $0x20] sm:$0xff]
      %v6992 = vld [vmem:[%s6986 + $0x28] sm:$0xf]
      %v6993 = vld [vmem:[%s6986 + $0x30] sm:$0xff]
      %v6994 = vld [vmem:[%s6986 + $0x38] sm:$0xf]
      %v6995 = vld [vmem:[%s6986 + $0x40] sm:$0xff]
      %v6996 = vld [vmem:[%s6986 + $0x48] sm:$0xf]
      %v6997 = vld [vmem:[%s6986 + $0x50] sm:$0xff]
      %v6998 = vld [vmem:[%s6986 + $0x58] sm:$0xf]
      %v6999 = vld [vmem:[%s6986 + $0x60] sm:$0xff]
      %v7000 = vld [vmem:[%s6986 + $0x68] sm:$0xf]
      %v7001 = vld [vmem:[%s6986 + $0x70] sm:$0xff]
      %v7002 = vld [vmem:[%s6986 + $0x78] sm:$0xf]
      %v7003 = vld [vmem:[%s6986 + $0x80] sm:$0xff]
      %v7004 = vld [vmem:[%s6986 + $0x88] sm:$0xf]
      %v7005 = vld [vmem:[%s6986 + $0x90] sm:$0xff]
      %v7006 = vld [vmem:[%s6986 + $0x98] sm:$0xf]
      %s7007 = sadd.s32 %s2945, 42
      %s7008 = sld [smem:[#allocation10 + %s7007]]
      %v7009 = vstv %s7008
      %v7010 = vmul.f32 %v6987, %v7009
      %v7011 = vmul.f32 %v6988, %v7009
      %v7012 = vmul.f32 %v6989, %v7009
      %v7013 = vmul.f32 %v6990, %v7009
      %v7014 = vmul.f32 %v6991, %v7009
      %v7015 = vmul.f32 %v6992, %v7009
      %v7016 = vmul.f32 %v6993, %v7009
      %v7017 = vmul.f32 %v6994, %v7009
      %v7018 = vmul.f32 %v6995, %v7009
      %v7019 = vmul.f32 %v6996, %v7009
      %v7020 = vmul.f32 %v6997, %v7009
      %v7021 = vmul.f32 %v6998, %v7009
      %v7022 = vmul.f32 %v6999, %v7009
      %v7023 = vmul.f32 %v7000, %v7009
      %v7024 = vmul.f32 %v7001, %v7009
      %v7025 = vmul.f32 %v7002, %v7009
      %v7026 = vmul.f32 %v7003, %v7009
      %v7027 = vmul.f32 %v7004, %v7009
      %v7028 = vmul.f32 %v7005, %v7009
      %v7029 = vmul.f32 %v7006, %v7009
      %v7030 = vadd.f32 %v6966, %v7010
      %v7031 = vadd.f32 %v6967, %v7011
      %v7032 = vadd.f32 %v6968, %v7012
      %v7033 = vadd.f32 %v6969, %v7013
      %v7034 = vadd.f32 %v6970, %v7014
      %v7035 = vadd.f32 %v6971, %v7015
      %v7036 = vadd.f32 %v6972, %v7016
      %v7037 = vadd.f32 %v6973, %v7017
      %v7038 = vadd.f32 %v6974, %v7018
      %v7039 = vadd.f32 %v6975, %v7019
      %v7040 = vadd.f32 %v6976, %v7020
      %v7041 = vadd.f32 %v6977, %v7021
      %v7042 = vadd.f32 %v6978, %v7022
      %v7043 = vadd.f32 %v6979, %v7023
      %v7044 = vadd.f32 %v6980, %v7024
      %v7045 = vadd.f32 %v6981, %v7025
      %v7046 = vadd.f32 %v6982, %v7026
      %v7047 = vadd.f32 %v6983, %v7027
      %v7048 = vadd.f32 %v6984, %v7028
      %v7049 = vadd.f32 %v6985, %v7029
      %s7050 = sadd.s32 %s2945, 43
      %s7051 = sld [smem:[#allocation10 + %s7050]]
      %v7052 = vstv %s7051
      %v7053 = vmul.f32 %v6987, %v7052
      %v7054 = vmul.f32 %v6988, %v7052
      %v7055 = vmul.f32 %v6989, %v7052
      %v7056 = vmul.f32 %v6990, %v7052
      %v7057 = vmul.f32 %v6991, %v7052
      %v7058 = vmul.f32 %v6992, %v7052
      %v7059 = vmul.f32 %v6993, %v7052
      %v7060 = vmul.f32 %v6994, %v7052
      %v7061 = vmul.f32 %v6995, %v7052
      %v7062 = vmul.f32 %v6996, %v7052
      %v7063 = vmul.f32 %v6997, %v7052
      %v7064 = vmul.f32 %v6998, %v7052
      %v7065 = vmul.f32 %v6999, %v7052
      %v7066 = vmul.f32 %v7000, %v7052
      %v7067 = vmul.f32 %v7001, %v7052
      %v7068 = vmul.f32 %v7002, %v7052
      %v7069 = vmul.f32 %v7003, %v7052
      %v7070 = vmul.f32 %v7004, %v7052
      %v7071 = vmul.f32 %v7005, %v7052
      %v7072 = vmul.f32 %v7006, %v7052
      %v7093 = vrot.slane %v7053, 1
      %v7094 = vrot.slane %v7054, 1
      %v7095 = vsel %vm3031, %v7093, %v7094
      %v7096 = vrot.slane %v7055, 1
      %v7097 = vrot.slane %v7056, 1
      %v7098 = vsel %vm3031, %v7096, %v7097
      %v7099 = vrot.slane %v7057, 1
      %v7100 = vrot.slane %v7058, 1
      %v7101 = vsel %vm3031, %v7099, %v7100
      %v7102 = vrot.slane %v7059, 1
      %v7103 = vrot.slane %v7060, 1
      %v7104 = vsel %vm3031, %v7102, %v7103
      %v7105 = vrot.slane %v7061, 1
      %v7106 = vrot.slane %v7062, 1
      %v7107 = vsel %vm3031, %v7105, %v7106
      %v7108 = vrot.slane %v7063, 1
      %v7109 = vrot.slane %v7064, 1
      %v7110 = vsel %vm3031, %v7108, %v7109
      %v7111 = vrot.slane %v7065, 1
      %v7112 = vrot.slane %v7066, 1
      %v7113 = vsel %vm3031, %v7111, %v7112
      %v7114 = vrot.slane %v7067, 1
      %v7115 = vrot.slane %v7068, 1
      %v7116 = vsel %vm3031, %v7114, %v7115
      %v7117 = vrot.slane %v7069, 1
      %v7118 = vrot.slane %v7070, 1
      %v7119 = vsel %vm3031, %v7117, %v7118
      %v7120 = vrot.slane %v7071, 1
      %v7121 = vrot.slane %v7072, 1
      %v7122 = vsel %vm3031, %v7120, %v7121
      %v7143 = vadd.f32 %v7030, %v7095
      %v7144 = vadd.f32 %v7031, %v7094
      %v7145 = vadd.f32 %v7032, %v7098
      %v7146 = vadd.f32 %v7033, %v7097
      %v7147 = vadd.f32 %v7034, %v7101
      %v7148 = vadd.f32 %v7035, %v7100
      %v7149 = vadd.f32 %v7036, %v7104
      %v7150 = vadd.f32 %v7037, %v7103
      %v7151 = vadd.f32 %v7038, %v7107
      %v7152 = vadd.f32 %v7039, %v7106
      %v7153 = vadd.f32 %v7040, %v7110
      %v7154 = vadd.f32 %v7041, %v7109
      %v7155 = vadd.f32 %v7042, %v7113
      %v7156 = vadd.f32 %v7043, %v7112
      %v7157 = vadd.f32 %v7044, %v7116
      %v7158 = vadd.f32 %v7045, %v7115
      %v7159 = vadd.f32 %v7046, %v7119
      %v7160 = vadd.f32 %v7047, %v7118
      %v7161 = vadd.f32 %v7048, %v7122
      %v7162 = vadd.f32 %v7049, %v7121
      %s7163 = sadd.s32 %s2945, 44
      %s7164 = sld [smem:[#allocation10 + %s7163]]
      %v7165 = vstv %s7164
      %v7166 = vmul.f32 %v6987, %v7165
      %v7167 = vmul.f32 %v6988, %v7165
      %v7168 = vmul.f32 %v6989, %v7165
      %v7169 = vmul.f32 %v6990, %v7165
      %v7170 = vmul.f32 %v6991, %v7165
      %v7171 = vmul.f32 %v6992, %v7165
      %v7172 = vmul.f32 %v6993, %v7165
      %v7173 = vmul.f32 %v6994, %v7165
      %v7174 = vmul.f32 %v6995, %v7165
      %v7175 = vmul.f32 %v6996, %v7165
      %v7176 = vmul.f32 %v6997, %v7165
      %v7177 = vmul.f32 %v6998, %v7165
      %v7178 = vmul.f32 %v6999, %v7165
      %v7179 = vmul.f32 %v7000, %v7165
      %v7180 = vmul.f32 %v7001, %v7165
      %v7181 = vmul.f32 %v7002, %v7165
      %v7182 = vmul.f32 %v7003, %v7165
      %v7183 = vmul.f32 %v7004, %v7165
      %v7184 = vmul.f32 %v7005, %v7165
      %v7185 = vmul.f32 %v7006, %v7165
      %v7206 = vrot.slane %v7166, 2
      %v7207 = vrot.slane %v7167, 2
      %v7208 = vsel %vm3145, %v7206, %v7207
      %v7209 = vrot.slane %v7168, 2
      %v7210 = vrot.slane %v7169, 2
      %v7211 = vsel %vm3145, %v7209, %v7210
      %v7212 = vrot.slane %v7170, 2
      %v7213 = vrot.slane %v7171, 2
      %v7214 = vsel %vm3145, %v7212, %v7213
      %v7215 = vrot.slane %v7172, 2
      %v7216 = vrot.slane %v7173, 2
      %v7217 = vsel %vm3145, %v7215, %v7216
      %v7218 = vrot.slane %v7174, 2
      %v7219 = vrot.slane %v7175, 2
      %v7220 = vsel %vm3145, %v7218, %v7219
      %v7221 = vrot.slane %v7176, 2
      %v7222 = vrot.slane %v7177, 2
      %v7223 = vsel %vm3145, %v7221, %v7222
      %v7224 = vrot.slane %v7178, 2
      %v7225 = vrot.slane %v7179, 2
      %v7226 = vsel %vm3145, %v7224, %v7225
      %v7227 = vrot.slane %v7180, 2
      %v7228 = vrot.slane %v7181, 2
      %v7229 = vsel %vm3145, %v7227, %v7228
      %v7230 = vrot.slane %v7182, 2
      %v7231 = vrot.slane %v7183, 2
      %v7232 = vsel %vm3145, %v7230, %v7231
      %v7233 = vrot.slane %v7184, 2
      %v7234 = vrot.slane %v7185, 2
      %v7235 = vsel %vm3145, %v7233, %v7234
      %v7256 = vadd.f32 %v7143, %v7208
      %v7257 = vadd.f32 %v7144, %v7207
      %v7258 = vadd.f32 %v7145, %v7211
      %v7259 = vadd.f32 %v7146, %v7210
      %v7260 = vadd.f32 %v7147, %v7214
      %v7261 = vadd.f32 %v7148, %v7213
      %v7262 = vadd.f32 %v7149, %v7217
      %v7263 = vadd.f32 %v7150, %v7216
      %v7264 = vadd.f32 %v7151, %v7220
      %v7265 = vadd.f32 %v7152, %v7219
      %v7266 = vadd.f32 %v7153, %v7223
      %v7267 = vadd.f32 %v7154, %v7222
      %v7268 = vadd.f32 %v7155, %v7226
      %v7269 = vadd.f32 %v7156, %v7225
      %v7270 = vadd.f32 %v7157, %v7229
      %v7271 = vadd.f32 %v7158, %v7228
      %v7272 = vadd.f32 %v7159, %v7232
      %v7273 = vadd.f32 %v7160, %v7231
      %v7274 = vadd.f32 %v7161, %v7235
      %v7275 = vadd.f32 %v7162, %v7234
      %s7276 = scalar_lea.vmem [#allocation3], 960
      %v7277 = vld [vmem:[%s7276] sm:$0xff]
      %v7278 = vld [vmem:[%s7276 + $0x8] sm:$0xf]
      %v7279 = vld [vmem:[%s7276 + $0x10] sm:$0xff]
      %v7280 = vld [vmem:[%s7276 + $0x18] sm:$0xf]
      %v7281 = vld [vmem:[%s7276 + $0x20] sm:$0xff]
      %v7282 = vld [vmem:[%s7276 + $0x28] sm:$0xf]
      %v7283 = vld [vmem:[%s7276 + $0x30] sm:$0xff]
      %v7284 = vld [vmem:[%s7276 + $0x38] sm:$0xf]
      %v7285 = vld [vmem:[%s7276 + $0x40] sm:$0xff]
      %v7286 = vld [vmem:[%s7276 + $0x48] sm:$0xf]
      %v7287 = vld [vmem:[%s7276 + $0x50] sm:$0xff]
      %v7288 = vld [vmem:[%s7276 + $0x58] sm:$0xf]
      %v7289 = vld [vmem:[%s7276 + $0x60] sm:$0xff]
      %v7290 = vld [vmem:[%s7276 + $0x68] sm:$0xf]
      %v7291 = vld [vmem:[%s7276 + $0x70] sm:$0xff]
      %v7292 = vld [vmem:[%s7276 + $0x78] sm:$0xf]
      %v7293 = vld [vmem:[%s7276 + $0x80] sm:$0xff]
      %v7294 = vld [vmem:[%s7276 + $0x88] sm:$0xf]
      %v7295 = vld [vmem:[%s7276 + $0x90] sm:$0xff]
      %v7296 = vld [vmem:[%s7276 + $0x98] sm:$0xf]
      %s7297 = sadd.s32 %s2945, 45
      %s7298 = sld [smem:[#allocation10 + %s7297]]
      %v7299 = vstv %s7298
      %v7300 = vmul.f32 %v7277, %v7299
      %v7301 = vmul.f32 %v7278, %v7299
      %v7302 = vmul.f32 %v7279, %v7299
      %v7303 = vmul.f32 %v7280, %v7299
      %v7304 = vmul.f32 %v7281, %v7299
      %v7305 = vmul.f32 %v7282, %v7299
      %v7306 = vmul.f32 %v7283, %v7299
      %v7307 = vmul.f32 %v7284, %v7299
      %v7308 = vmul.f32 %v7285, %v7299
      %v7309 = vmul.f32 %v7286, %v7299
      %v7310 = vmul.f32 %v7287, %v7299
      %v7311 = vmul.f32 %v7288, %v7299
      %v7312 = vmul.f32 %v7289, %v7299
      %v7313 = vmul.f32 %v7290, %v7299
      %v7314 = vmul.f32 %v7291, %v7299
      %v7315 = vmul.f32 %v7292, %v7299
      %v7316 = vmul.f32 %v7293, %v7299
      %v7317 = vmul.f32 %v7294, %v7299
      %v7318 = vmul.f32 %v7295, %v7299
      %v7319 = vmul.f32 %v7296, %v7299
      %v7320 = vadd.f32 %v7256, %v7300
      %v7321 = vadd.f32 %v7257, %v7301
      %v7322 = vadd.f32 %v7258, %v7302
      %v7323 = vadd.f32 %v7259, %v7303
      %v7324 = vadd.f32 %v7260, %v7304
      %v7325 = vadd.f32 %v7261, %v7305
      %v7326 = vadd.f32 %v7262, %v7306
      %v7327 = vadd.f32 %v7263, %v7307
      %v7328 = vadd.f32 %v7264, %v7308
      %v7329 = vadd.f32 %v7265, %v7309
      %v7330 = vadd.f32 %v7266, %v7310
      %v7331 = vadd.f32 %v7267, %v7311
      %v7332 = vadd.f32 %v7268, %v7312
      %v7333 = vadd.f32 %v7269, %v7313
      %v7334 = vadd.f32 %v7270, %v7314
      %v7335 = vadd.f32 %v7271, %v7315
      %v7336 = vadd.f32 %v7272, %v7316
      %v7337 = vadd.f32 %v7273, %v7317
      %v7338 = vadd.f32 %v7274, %v7318
      %v7339 = vadd.f32 %v7275, %v7319
      %s7340 = sadd.s32 %s2945, 46
      %s7341 = sld [smem:[#allocation10 + %s7340]]
      %v7342 = vstv %s7341
      %v7343 = vmul.f32 %v7277, %v7342
      %v7344 = vmul.f32 %v7278, %v7342
      %v7345 = vmul.f32 %v7279, %v7342
      %v7346 = vmul.f32 %v7280, %v7342
      %v7347 = vmul.f32 %v7281, %v7342
      %v7348 = vmul.f32 %v7282, %v7342
      %v7349 = vmul.f32 %v7283, %v7342
      %v7350 = vmul.f32 %v7284, %v7342
      %v7351 = vmul.f32 %v7285, %v7342
      %v7352 = vmul.f32 %v7286, %v7342
      %v7353 = vmul.f32 %v7287, %v7342
      %v7354 = vmul.f32 %v7288, %v7342
      %v7355 = vmul.f32 %v7289, %v7342
      %v7356 = vmul.f32 %v7290, %v7342
      %v7357 = vmul.f32 %v7291, %v7342
      %v7358 = vmul.f32 %v7292, %v7342
      %v7359 = vmul.f32 %v7293, %v7342
      %v7360 = vmul.f32 %v7294, %v7342
      %v7361 = vmul.f32 %v7295, %v7342
      %v7362 = vmul.f32 %v7296, %v7342
      %v7383 = vrot.slane %v7343, 1
      %v7384 = vrot.slane %v7344, 1
      %v7385 = vsel %vm3031, %v7383, %v7384
      %v7386 = vrot.slane %v7345, 1
      %v7387 = vrot.slane %v7346, 1
      %v7388 = vsel %vm3031, %v7386, %v7387
      %v7389 = vrot.slane %v7347, 1
      %v7390 = vrot.slane %v7348, 1
      %v7391 = vsel %vm3031, %v7389, %v7390
      %v7392 = vrot.slane %v7349, 1
      %v7393 = vrot.slane %v7350, 1
      %v7394 = vsel %vm3031, %v7392, %v7393
      %v7395 = vrot.slane %v7351, 1
      %v7396 = vrot.slane %v7352, 1
      %v7397 = vsel %vm3031, %v7395, %v7396
      %v7398 = vrot.slane %v7353, 1
      %v7399 = vrot.slane %v7354, 1
      %v7400 = vsel %vm3031, %v7398, %v7399
      %v7401 = vrot.slane %v7355, 1
      %v7402 = vrot.slane %v7356, 1
      %v7403 = vsel %vm3031, %v7401, %v7402
      %v7404 = vrot.slane %v7357, 1
      %v7405 = vrot.slane %v7358, 1
      %v7406 = vsel %vm3031, %v7404, %v7405
      %v7407 = vrot.slane %v7359, 1
      %v7408 = vrot.slane %v7360, 1
      %v7409 = vsel %vm3031, %v7407, %v7408
      %v7410 = vrot.slane %v7361, 1
      %v7411 = vrot.slane %v7362, 1
      %v7412 = vsel %vm3031, %v7410, %v7411
      %v7433 = vadd.f32 %v7320, %v7385
      %v7434 = vadd.f32 %v7321, %v7384
      %v7435 = vadd.f32 %v7322, %v7388
      %v7436 = vadd.f32 %v7323, %v7387
      %v7437 = vadd.f32 %v7324, %v7391
      %v7438 = vadd.f32 %v7325, %v7390
      %v7439 = vadd.f32 %v7326, %v7394
      %v7440 = vadd.f32 %v7327, %v7393
      %v7441 = vadd.f32 %v7328, %v7397
      %v7442 = vadd.f32 %v7329, %v7396
      %v7443 = vadd.f32 %v7330, %v7400
      %v7444 = vadd.f32 %v7331, %v7399
      %v7445 = vadd.f32 %v7332, %v7403
      %v7446 = vadd.f32 %v7333, %v7402
      %v7447 = vadd.f32 %v7334, %v7406
      %v7448 = vadd.f32 %v7335, %v7405
      %v7449 = vadd.f32 %v7336, %v7409
      %v7450 = vadd.f32 %v7337, %v7408
      %v7451 = vadd.f32 %v7338, %v7412
      %v7452 = vadd.f32 %v7339, %v7411
      %s7453 = sadd.s32 %s2945, 47
      %s7454 = sld [smem:[#allocation10 + %s7453]]
      %v7455 = vstv %s7454
      %v7456 = vmul.f32 %v7277, %v7455
      %v7457 = vmul.f32 %v7278, %v7455
      %v7458 = vmul.f32 %v7279, %v7455
      %v7459 = vmul.f32 %v7280, %v7455
      %v7460 = vmul.f32 %v7281, %v7455
      %v7461 = vmul.f32 %v7282, %v7455
      %v7462 = vmul.f32 %v7283, %v7455
      %v7463 = vmul.f32 %v7284, %v7455
      %v7464 = vmul.f32 %v7285, %v7455
      %v7465 = vmul.f32 %v7286, %v7455
      %v7466 = vmul.f32 %v7287, %v7455
      %v7467 = vmul.f32 %v7288, %v7455
      %v7468 = vmul.f32 %v7289, %v7455
      %v7469 = vmul.f32 %v7290, %v7455
      %v7470 = vmul.f32 %v7291, %v7455
      %v7471 = vmul.f32 %v7292, %v7455
      %v7472 = vmul.f32 %v7293, %v7455
      %v7473 = vmul.f32 %v7294, %v7455
      %v7474 = vmul.f32 %v7295, %v7455
      %v7475 = vmul.f32 %v7296, %v7455
      %v7496 = vrot.slane %v7456, 2
      %v7497 = vrot.slane %v7457, 2
      %v7498 = vsel %vm3145, %v7496, %v7497
      %v7499 = vrot.slane %v7458, 2
      %v7500 = vrot.slane %v7459, 2
      %v7501 = vsel %vm3145, %v7499, %v7500
      %v7502 = vrot.slane %v7460, 2
      %v7503 = vrot.slane %v7461, 2
      %v7504 = vsel %vm3145, %v7502, %v7503
      %v7505 = vrot.slane %v7462, 2
      %v7506 = vrot.slane %v7463, 2
      %v7507 = vsel %vm3145, %v7505, %v7506
      %v7508 = vrot.slane %v7464, 2
      %v7509 = vrot.slane %v7465, 2
      %v7510 = vsel %vm3145, %v7508, %v7509
      %v7511 = vrot.slane %v7466, 2
      %v7512 = vrot.slane %v7467, 2
      %v7513 = vsel %vm3145, %v7511, %v7512
      %v7514 = vrot.slane %v7468, 2
      %v7515 = vrot.slane %v7469, 2
      %v7516 = vsel %vm3145, %v7514, %v7515
      %v7517 = vrot.slane %v7470, 2
      %v7518 = vrot.slane %v7471, 2
      %v7519 = vsel %vm3145, %v7517, %v7518
      %v7520 = vrot.slane %v7472, 2
      %v7521 = vrot.slane %v7473, 2
      %v7522 = vsel %vm3145, %v7520, %v7521
      %v7523 = vrot.slane %v7474, 2
      %v7524 = vrot.slane %v7475, 2
      %v7525 = vsel %vm3145, %v7523, %v7524
      %v7546 = vadd.f32 %v7433, %v7498
      %v7547 = vadd.f32 %v7434, %v7497
      %v7548 = vadd.f32 %v7435, %v7501
      %v7549 = vadd.f32 %v7436, %v7500
      %v7550 = vadd.f32 %v7437, %v7504
      %v7551 = vadd.f32 %v7438, %v7503
      %v7552 = vadd.f32 %v7439, %v7507
      %v7553 = vadd.f32 %v7440, %v7506
      %v7554 = vadd.f32 %v7441, %v7510
      %v7555 = vadd.f32 %v7442, %v7509
      %v7556 = vadd.f32 %v7443, %v7513
      %v7557 = vadd.f32 %v7444, %v7512
      %v7558 = vadd.f32 %v7445, %v7516
      %v7559 = vadd.f32 %v7446, %v7515
      %v7560 = vadd.f32 %v7447, %v7519
      %v7561 = vadd.f32 %v7448, %v7518
      %v7562 = vadd.f32 %v7449, %v7522
      %v7563 = vadd.f32 %v7450, %v7521
      %v7564 = vadd.f32 %v7451, %v7525
      %v7565 = vadd.f32 %v7452, %v7524
      %s7566 = scalar_lea.vmem [#allocation3], 976
      %v7567 = vld [vmem:[%s7566] sm:$0xff]
      %v7568 = vld [vmem:[%s7566 + $0x8] sm:$0xf]
      %v7569 = vld [vmem:[%s7566 + $0x10] sm:$0xff]
      %v7570 = vld [vmem:[%s7566 + $0x18] sm:$0xf]
      %v7571 = vld [vmem:[%s7566 + $0x20] sm:$0xff]
      %v7572 = vld [vmem:[%s7566 + $0x28] sm:$0xf]
      %v7573 = vld [vmem:[%s7566 + $0x30] sm:$0xff]
      %v7574 = vld [vmem:[%s7566 + $0x38] sm:$0xf]
      %v7575 = vld [vmem:[%s7566 + $0x40] sm:$0xff]
      %v7576 = vld [vmem:[%s7566 + $0x48] sm:$0xf]
      %v7577 = vld [vmem:[%s7566 + $0x50] sm:$0xff]
      %v7578 = vld [vmem:[%s7566 + $0x58] sm:$0xf]
      %v7579 = vld [vmem:[%s7566 + $0x60] sm:$0xff]
      %v7580 = vld [vmem:[%s7566 + $0x68] sm:$0xf]
      %v7581 = vld [vmem:[%s7566 + $0x70] sm:$0xff]
      %v7582 = vld [vmem:[%s7566 + $0x78] sm:$0xf]
      %v7583 = vld [vmem:[%s7566 + $0x80] sm:$0xff]
      %v7584 = vld [vmem:[%s7566 + $0x88] sm:$0xf]
      %v7585 = vld [vmem:[%s7566 + $0x90] sm:$0xff]
      %v7586 = vld [vmem:[%s7566 + $0x98] sm:$0xf]
      %s7587 = sadd.s32 %s2945, 48
      %s7588 = sld [smem:[#allocation10 + %s7587]]
      %v7589 = vstv %s7588
      %v7590 = vmul.f32 %v7567, %v7589
      %v7591 = vmul.f32 %v7568, %v7589
      %v7592 = vmul.f32 %v7569, %v7589
      %v7593 = vmul.f32 %v7570, %v7589
      %v7594 = vmul.f32 %v7571, %v7589
      %v7595 = vmul.f32 %v7572, %v7589
      %v7596 = vmul.f32 %v7573, %v7589
      %v7597 = vmul.f32 %v7574, %v7589
      %v7598 = vmul.f32 %v7575, %v7589
      %v7599 = vmul.f32 %v7576, %v7589
      %v7600 = vmul.f32 %v7577, %v7589
      %v7601 = vmul.f32 %v7578, %v7589
      %v7602 = vmul.f32 %v7579, %v7589
      %v7603 = vmul.f32 %v7580, %v7589
      %v7604 = vmul.f32 %v7581, %v7589
      %v7605 = vmul.f32 %v7582, %v7589
      %v7606 = vmul.f32 %v7583, %v7589
      %v7607 = vmul.f32 %v7584, %v7589
      %v7608 = vmul.f32 %v7585, %v7589
      %v7609 = vmul.f32 %v7586, %v7589
      %v7610 = vadd.f32 %v7546, %v7590
      %v7611 = vadd.f32 %v7547, %v7591
      %v7612 = vadd.f32 %v7548, %v7592
      %v7613 = vadd.f32 %v7549, %v7593
      %v7614 = vadd.f32 %v7550, %v7594
      %v7615 = vadd.f32 %v7551, %v7595
      %v7616 = vadd.f32 %v7552, %v7596
      %v7617 = vadd.f32 %v7553, %v7597
      %v7618 = vadd.f32 %v7554, %v7598
      %v7619 = vadd.f32 %v7555, %v7599
      %v7620 = vadd.f32 %v7556, %v7600
      %v7621 = vadd.f32 %v7557, %v7601
      %v7622 = vadd.f32 %v7558, %v7602
      %v7623 = vadd.f32 %v7559, %v7603
      %v7624 = vadd.f32 %v7560, %v7604
      %v7625 = vadd.f32 %v7561, %v7605
      %v7626 = vadd.f32 %v7562, %v7606
      %v7627 = vadd.f32 %v7563, %v7607
      %v7628 = vadd.f32 %v7564, %v7608
      %v7629 = vadd.f32 %v7565, %v7609
      %s7630 = sadd.s32 %s2945, 49
      %s7631 = sld [smem:[#allocation10 + %s7630]]
      %v7632 = vstv %s7631
      %v7633 = vmul.f32 %v7567, %v7632
      %v7634 = vmul.f32 %v7568, %v7632
      %v7635 = vmul.f32 %v7569, %v7632
      %v7636 = vmul.f32 %v7570, %v7632
      %v7637 = vmul.f32 %v7571, %v7632
      %v7638 = vmul.f32 %v7572, %v7632
      %v7639 = vmul.f32 %v7573, %v7632
      %v7640 = vmul.f32 %v7574, %v7632
      %v7641 = vmul.f32 %v7575, %v7632
      %v7642 = vmul.f32 %v7576, %v7632
      %v7643 = vmul.f32 %v7577, %v7632
      %v7644 = vmul.f32 %v7578, %v7632
      %v7645 = vmul.f32 %v7579, %v7632
      %v7646 = vmul.f32 %v7580, %v7632
      %v7647 = vmul.f32 %v7581, %v7632
      %v7648 = vmul.f32 %v7582, %v7632
      %v7649 = vmul.f32 %v7583, %v7632
      %v7650 = vmul.f32 %v7584, %v7632
      %v7651 = vmul.f32 %v7585, %v7632
      %v7652 = vmul.f32 %v7586, %v7632
      %v7673 = vrot.slane %v7633, 1
      %v7674 = vrot.slane %v7634, 1
      %v7675 = vsel %vm3031, %v7673, %v7674
      %v7676 = vrot.slane %v7635, 1
      %v7677 = vrot.slane %v7636, 1
      %v7678 = vsel %vm3031, %v7676, %v7677
      %v7679 = vrot.slane %v7637, 1
      %v7680 = vrot.slane %v7638, 1
      %v7681 = vsel %vm3031, %v7679, %v7680
      %v7682 = vrot.slane %v7639, 1
      %v7683 = vrot.slane %v7640, 1
      %v7684 = vsel %vm3031, %v7682, %v7683
      %v7685 = vrot.slane %v7641, 1
      %v7686 = vrot.slane %v7642, 1
      %v7687 = vsel %vm3031, %v7685, %v7686
      %v7688 = vrot.slane %v7643, 1
      %v7689 = vrot.slane %v7644, 1
      %v7690 = vsel %vm3031, %v7688, %v7689
      %v7691 = vrot.slane %v7645, 1
      %v7692 = vrot.slane %v7646, 1
      %v7693 = vsel %vm3031, %v7691, %v7692
      %v7694 = vrot.slane %v7647, 1
      %v7695 = vrot.slane %v7648, 1
      %v7696 = vsel %vm3031, %v7694, %v7695
      %v7697 = vrot.slane %v7649, 1
      %v7698 = vrot.slane %v7650, 1
      %v7699 = vsel %vm3031, %v7697, %v7698
      %v7700 = vrot.slane %v7651, 1
      %v7701 = vrot.slane %v7652, 1
      %v7702 = vsel %vm3031, %v7700, %v7701
      %v7723 = vadd.f32 %v7610, %v7675
      %v7724 = vadd.f32 %v7611, %v7674
      %v7725 = vadd.f32 %v7612, %v7678
      %v7726 = vadd.f32 %v7613, %v7677
      %v7727 = vadd.f32 %v7614, %v7681
      %v7728 = vadd.f32 %v7615, %v7680
      %v7729 = vadd.f32 %v7616, %v7684
      %v7730 = vadd.f32 %v7617, %v7683
      %v7731 = vadd.f32 %v7618, %v7687
      %v7732 = vadd.f32 %v7619, %v7686
      %v7733 = vadd.f32 %v7620, %v7690
      %v7734 = vadd.f32 %v7621, %v7689
      %v7735 = vadd.f32 %v7622, %v7693
      %v7736 = vadd.f32 %v7623, %v7692
      %v7737 = vadd.f32 %v7624, %v7696
      %v7738 = vadd.f32 %v7625, %v7695
      %v7739 = vadd.f32 %v7626, %v7699
      %v7740 = vadd.f32 %v7627, %v7698
      %v7741 = vadd.f32 %v7628, %v7702
      %v7742 = vadd.f32 %v7629, %v7701
      %s7743 = sadd.s32 %s2945, 50
      %s7744 = sld [smem:[#allocation10 + %s7743]]
      %v7745 = vstv %s7744
      %v7746 = vmul.f32 %v7567, %v7745
      %v7747 = vmul.f32 %v7568, %v7745
      %v7748 = vmul.f32 %v7569, %v7745
      %v7749 = vmul.f32 %v7570, %v7745
      %v7750 = vmul.f32 %v7571, %v7745
      %v7751 = vmul.f32 %v7572, %v7745
      %v7752 = vmul.f32 %v7573, %v7745
      %v7753 = vmul.f32 %v7574, %v7745
      %v7754 = vmul.f32 %v7575, %v7745
      %v7755 = vmul.f32 %v7576, %v7745
      %v7756 = vmul.f32 %v7577, %v7745
      %v7757 = vmul.f32 %v7578, %v7745
      %v7758 = vmul.f32 %v7579, %v7745
      %v7759 = vmul.f32 %v7580, %v7745
      %v7760 = vmul.f32 %v7581, %v7745
      %v7761 = vmul.f32 %v7582, %v7745
      %v7762 = vmul.f32 %v7583, %v7745
      %v7763 = vmul.f32 %v7584, %v7745
      %v7764 = vmul.f32 %v7585, %v7745
      %v7765 = vmul.f32 %v7586, %v7745
      %v7786 = vrot.slane %v7746, 2
      %v7787 = vrot.slane %v7747, 2
      %v7788 = vsel %vm3145, %v7786, %v7787
      %v7789 = vrot.slane %v7748, 2
      %v7790 = vrot.slane %v7749, 2
      %v7791 = vsel %vm3145, %v7789, %v7790
      %v7792 = vrot.slane %v7750, 2
      %v7793 = vrot.slane %v7751, 2
      %v7794 = vsel %vm3145, %v7792, %v7793
      %v7795 = vrot.slane %v7752, 2
      %v7796 = vrot.slane %v7753, 2
      %v7797 = vsel %vm3145, %v7795, %v7796
      %v7798 = vrot.slane %v7754, 2
      %v7799 = vrot.slane %v7755, 2
      %v7800 = vsel %vm3145, %v7798, %v7799
      %v7801 = vrot.slane %v7756, 2
      %v7802 = vrot.slane %v7757, 2
      %v7803 = vsel %vm3145, %v7801, %v7802
      %v7804 = vrot.slane %v7758, 2
      %v7805 = vrot.slane %v7759, 2
      %v7806 = vsel %vm3145, %v7804, %v7805
      %v7807 = vrot.slane %v7760, 2
      %v7808 = vrot.slane %v7761, 2
      %v7809 = vsel %vm3145, %v7807, %v7808
      %v7810 = vrot.slane %v7762, 2
      %v7811 = vrot.slane %v7763, 2
      %v7812 = vsel %vm3145, %v7810, %v7811
      %v7813 = vrot.slane %v7764, 2
      %v7814 = vrot.slane %v7765, 2
      %v7815 = vsel %vm3145, %v7813, %v7814
      %v7836 = vadd.f32 %v7723, %v7788
      %v7837 = vadd.f32 %v7724, %v7787
      %v7838 = vadd.f32 %v7725, %v7791
      %v7839 = vadd.f32 %v7726, %v7790
      %v7840 = vadd.f32 %v7727, %v7794
      %v7841 = vadd.f32 %v7728, %v7793
      %v7842 = vadd.f32 %v7729, %v7797
      %v7843 = vadd.f32 %v7730, %v7796
      %v7844 = vadd.f32 %v7731, %v7800
      %v7845 = vadd.f32 %v7732, %v7799
      %v7846 = vadd.f32 %v7733, %v7803
      %v7847 = vadd.f32 %v7734, %v7802
      %v7848 = vadd.f32 %v7735, %v7806
      %v7849 = vadd.f32 %v7736, %v7805
      %v7850 = vadd.f32 %v7737, %v7809
      %v7851 = vadd.f32 %v7738, %v7808
      %v7852 = vadd.f32 %v7739, %v7812
      %v7853 = vadd.f32 %v7740, %v7811
      %v7854 = vadd.f32 %v7741, %v7815
      %v7855 = vadd.f32 %v7742, %v7814
      %s7856 = scalar_lea.vmem [#allocation3], 992
      %v7857 = vld [vmem:[%s7856] sm:$0xff]
      %v7858 = vld [vmem:[%s7856 + $0x8] sm:$0xf]
      %v7859 = vld [vmem:[%s7856 + $0x10] sm:$0xff]
      %v7860 = vld [vmem:[%s7856 + $0x18] sm:$0xf]
      %v7861 = vld [vmem:[%s7856 + $0x20] sm:$0xff]
      %v7862 = vld [vmem:[%s7856 + $0x28] sm:$0xf]
      %v7863 = vld [vmem:[%s7856 + $0x30] sm:$0xff]
      %v7864 = vld [vmem:[%s7856 + $0x38] sm:$0xf]
      %v7865 = vld [vmem:[%s7856 + $0x40] sm:$0xff]
      %v7866 = vld [vmem:[%s7856 + $0x48] sm:$0xf]
      %v7867 = vld [vmem:[%s7856 + $0x50] sm:$0xff]
      %v7868 = vld [vmem:[%s7856 + $0x58] sm:$0xf]
      %v7869 = vld [vmem:[%s7856 + $0x60] sm:$0xff]
      %v7870 = vld [vmem:[%s7856 + $0x68] sm:$0xf]
      %v7871 = vld [vmem:[%s7856 + $0x70] sm:$0xff]
      %v7872 = vld [vmem:[%s7856 + $0x78] sm:$0xf]
      %v7873 = vld [vmem:[%s7856 + $0x80] sm:$0xff]
      %v7874 = vld [vmem:[%s7856 + $0x88] sm:$0xf]
      %v7875 = vld [vmem:[%s7856 + $0x90] sm:$0xff]
      %v7876 = vld [vmem:[%s7856 + $0x98] sm:$0xf]
      %s7877 = sadd.s32 %s2945, 51
      %s7878 = sld [smem:[#allocation10 + %s7877]]
      %v7879 = vstv %s7878
      %v7880 = vmul.f32 %v7857, %v7879
      %v7881 = vmul.f32 %v7858, %v7879
      %v7882 = vmul.f32 %v7859, %v7879
      %v7883 = vmul.f32 %v7860, %v7879
      %v7884 = vmul.f32 %v7861, %v7879
      %v7885 = vmul.f32 %v7862, %v7879
      %v7886 = vmul.f32 %v7863, %v7879
      %v7887 = vmul.f32 %v7864, %v7879
      %v7888 = vmul.f32 %v7865, %v7879
      %v7889 = vmul.f32 %v7866, %v7879
      %v7890 = vmul.f32 %v7867, %v7879
      %v7891 = vmul.f32 %v7868, %v7879
      %v7892 = vmul.f32 %v7869, %v7879
      %v7893 = vmul.f32 %v7870, %v7879
      %v7894 = vmul.f32 %v7871, %v7879
      %v7895 = vmul.f32 %v7872, %v7879
      %v7896 = vmul.f32 %v7873, %v7879
      %v7897 = vmul.f32 %v7874, %v7879
      %v7898 = vmul.f32 %v7875, %v7879
      %v7899 = vmul.f32 %v7876, %v7879
      %v7900 = vadd.f32 %v7836, %v7880
      %v7901 = vadd.f32 %v7837, %v7881
      %v7902 = vadd.f32 %v7838, %v7882
      %v7903 = vadd.f32 %v7839, %v7883
      %v7904 = vadd.f32 %v7840, %v7884
      %v7905 = vadd.f32 %v7841, %v7885
      %v7906 = vadd.f32 %v7842, %v7886
      %v7907 = vadd.f32 %v7843, %v7887
      %v7908 = vadd.f32 %v7844, %v7888
      %v7909 = vadd.f32 %v7845, %v7889
      %v7910 = vadd.f32 %v7846, %v7890
      %v7911 = vadd.f32 %v7847, %v7891
      %v7912 = vadd.f32 %v7848, %v7892
      %v7913 = vadd.f32 %v7849, %v7893
      %v7914 = vadd.f32 %v7850, %v7894
      %v7915 = vadd.f32 %v7851, %v7895
      %v7916 = vadd.f32 %v7852, %v7896
      %v7917 = vadd.f32 %v7853, %v7897
      %v7918 = vadd.f32 %v7854, %v7898
      %v7919 = vadd.f32 %v7855, %v7899
      %s7920 = sadd.s32 %s2945, 52
      %s7921 = sld [smem:[#allocation10 + %s7920]]
      %v7922 = vstv %s7921
      %v7923 = vmul.f32 %v7857, %v7922
      %v7924 = vmul.f32 %v7858, %v7922
      %v7925 = vmul.f32 %v7859, %v7922
      %v7926 = vmul.f32 %v7860, %v7922
      %v7927 = vmul.f32 %v7861, %v7922
      %v7928 = vmul.f32 %v7862, %v7922
      %v7929 = vmul.f32 %v7863, %v7922
      %v7930 = vmul.f32 %v7864, %v7922
      %v7931 = vmul.f32 %v7865, %v7922
      %v7932 = vmul.f32 %v7866, %v7922
      %v7933 = vmul.f32 %v7867, %v7922
      %v7934 = vmul.f32 %v7868, %v7922
      %v7935 = vmul.f32 %v7869, %v7922
      %v7936 = vmul.f32 %v7870, %v7922
      %v7937 = vmul.f32 %v7871, %v7922
      %v7938 = vmul.f32 %v7872, %v7922
      %v7939 = vmul.f32 %v7873, %v7922
      %v7940 = vmul.f32 %v7874, %v7922
      %v7941 = vmul.f32 %v7875, %v7922
      %v7942 = vmul.f32 %v7876, %v7922
      %v7963 = vrot.slane %v7923, 1
      %v7964 = vrot.slane %v7924, 1
      %v7965 = vsel %vm3031, %v7963, %v7964
      %v7966 = vrot.slane %v7925, 1
      %v7967 = vrot.slane %v7926, 1
      %v7968 = vsel %vm3031, %v7966, %v7967
      %v7969 = vrot.slane %v7927, 1
      %v7970 = vrot.slane %v7928, 1
      %v7971 = vsel %vm3031, %v7969, %v7970
      %v7972 = vrot.slane %v7929, 1
      %v7973 = vrot.slane %v7930, 1
      %v7974 = vsel %vm3031, %v7972, %v7973
      %v7975 = vrot.slane %v7931, 1
      %v7976 = vrot.slane %v7932, 1
      %v7977 = vsel %vm3031, %v7975, %v7976
      %v7978 = vrot.slane %v7933, 1
      %v7979 = vrot.slane %v7934, 1
      %v7980 = vsel %vm3031, %v7978, %v7979
      %v7981 = vrot.slane %v7935, 1
      %v7982 = vrot.slane %v7936, 1
      %v7983 = vsel %vm3031, %v7981, %v7982
      %v7984 = vrot.slane %v7937, 1
      %v7985 = vrot.slane %v7938, 1
      %v7986 = vsel %vm3031, %v7984, %v7985
      %v7987 = vrot.slane %v7939, 1
      %v7988 = vrot.slane %v7940, 1
      %v7989 = vsel %vm3031, %v7987, %v7988
      %v7990 = vrot.slane %v7941, 1
      %v7991 = vrot.slane %v7942, 1
      %v7992 = vsel %vm3031, %v7990, %v7991
      %v8013 = vadd.f32 %v7900, %v7965
      %v8014 = vadd.f32 %v7901, %v7964
      %v8015 = vadd.f32 %v7902, %v7968
      %v8016 = vadd.f32 %v7903, %v7967
      %v8017 = vadd.f32 %v7904, %v7971
      %v8018 = vadd.f32 %v7905, %v7970
      %v8019 = vadd.f32 %v7906, %v7974
      %v8020 = vadd.f32 %v7907, %v7973
      %v8021 = vadd.f32 %v7908, %v7977
      %v8022 = vadd.f32 %v7909, %v7976
      %v8023 = vadd.f32 %v7910, %v7980
      %v8024 = vadd.f32 %v7911, %v7979
      %v8025 = vadd.f32 %v7912, %v7983
      %v8026 = vadd.f32 %v7913, %v7982
      %v8027 = vadd.f32 %v7914, %v7986
      %v8028 = vadd.f32 %v7915, %v7985
      %v8029 = vadd.f32 %v7916, %v7989
      %v8030 = vadd.f32 %v7917, %v7988
      %v8031 = vadd.f32 %v7918, %v7992
      %v8032 = vadd.f32 %v7919, %v7991
      %s8033 = sadd.s32 %s2945, 53
      %s8034 = sld [smem:[#allocation10 + %s8033]]
      %v8035 = vstv %s8034
      %v8036 = vmul.f32 %v7857, %v8035
      %v8037 = vmul.f32 %v7858, %v8035
      %v8038 = vmul.f32 %v7859, %v8035
      %v8039 = vmul.f32 %v7860, %v8035
      %v8040 = vmul.f32 %v7861, %v8035
      %v8041 = vmul.f32 %v7862, %v8035
      %v8042 = vmul.f32 %v7863, %v8035
      %v8043 = vmul.f32 %v7864, %v8035
      %v8044 = vmul.f32 %v7865, %v8035
      %v8045 = vmul.f32 %v7866, %v8035
      %v8046 = vmul.f32 %v7867, %v8035
      %v8047 = vmul.f32 %v7868, %v8035
      %v8048 = vmul.f32 %v7869, %v8035
      %v8049 = vmul.f32 %v7870, %v8035
      %v8050 = vmul.f32 %v7871, %v8035
      %v8051 = vmul.f32 %v7872, %v8035
      %v8052 = vmul.f32 %v7873, %v8035
      %v8053 = vmul.f32 %v7874, %v8035
      %v8054 = vmul.f32 %v7875, %v8035
      %v8055 = vmul.f32 %v7876, %v8035
      %v8076 = vrot.slane %v8036, 2
      %v8077 = vrot.slane %v8037, 2
      %v8078 = vsel %vm3145, %v8076, %v8077
      %v8079 = vrot.slane %v8038, 2
      %v8080 = vrot.slane %v8039, 2
      %v8081 = vsel %vm3145, %v8079, %v8080
      %v8082 = vrot.slane %v8040, 2
      %v8083 = vrot.slane %v8041, 2
      %v8084 = vsel %vm3145, %v8082, %v8083
      %v8085 = vrot.slane %v8042, 2
      %v8086 = vrot.slane %v8043, 2
      %v8087 = vsel %vm3145, %v8085, %v8086
      %v8088 = vrot.slane %v8044, 2
      %v8089 = vrot.slane %v8045, 2
      %v8090 = vsel %vm3145, %v8088, %v8089
      %v8091 = vrot.slane %v8046, 2
      %v8092 = vrot.slane %v8047, 2
      %v8093 = vsel %vm3145, %v8091, %v8092
      %v8094 = vrot.slane %v8048, 2
      %v8095 = vrot.slane %v8049, 2
      %v8096 = vsel %vm3145, %v8094, %v8095
      %v8097 = vrot.slane %v8050, 2
      %v8098 = vrot.slane %v8051, 2
      %v8099 = vsel %vm3145, %v8097, %v8098
      %v8100 = vrot.slane %v8052, 2
      %v8101 = vrot.slane %v8053, 2
      %v8102 = vsel %vm3145, %v8100, %v8101
      %v8103 = vrot.slane %v8054, 2
      %v8104 = vrot.slane %v8055, 2
      %v8105 = vsel %vm3145, %v8103, %v8104
      %v8126 = vadd.f32 %v8013, %v8078
      %v8127 = vadd.f32 %v8014, %v8077
      %v8128 = vadd.f32 %v8015, %v8081
      %v8129 = vadd.f32 %v8016, %v8080
      %v8130 = vadd.f32 %v8017, %v8084
      %v8131 = vadd.f32 %v8018, %v8083
      %v8132 = vadd.f32 %v8019, %v8087
      %v8133 = vadd.f32 %v8020, %v8086
      %v8134 = vadd.f32 %v8021, %v8090
      %v8135 = vadd.f32 %v8022, %v8089
      %v8136 = vadd.f32 %v8023, %v8093
      %v8137 = vadd.f32 %v8024, %v8092
      %v8138 = vadd.f32 %v8025, %v8096
      %v8139 = vadd.f32 %v8026, %v8095
      %v8140 = vadd.f32 %v8027, %v8099
      %v8141 = vadd.f32 %v8028, %v8098
      %v8142 = vadd.f32 %v8029, %v8102
      %v8143 = vadd.f32 %v8030, %v8101
      %v8144 = vadd.f32 %v8031, %v8105
      %v8145 = vadd.f32 %v8032, %v8104
      %s8146 = sld [smem:[#allocation11 + %s2920]]
      %v8147 = vstv %s8146
      %v8148 = vadd.f32 %v8126, %v8147
      %v8149 = vadd.f32 %v8127, %v8147
      %v8150 = vadd.f32 %v8128, %v8147
      %v8151 = vadd.f32 %v8129, %v8147
      %v8152 = vadd.f32 %v8130, %v8147
      %v8153 = vadd.f32 %v8131, %v8147
      %v8154 = vadd.f32 %v8132, %v8147
      %v8155 = vadd.f32 %v8133, %v8147
      %v8156 = vadd.f32 %v8134, %v8147
      %v8157 = vadd.f32 %v8135, %v8147
      %v8158 = vadd.f32 %v8136, %v8147
      %v8159 = vadd.f32 %v8137, %v8147
      %v8160 = vadd.f32 %v8138, %v8147
      %v8161 = vadd.f32 %v8139, %v8147
      %v8162 = vadd.f32 %v8140, %v8147
      %v8163 = vadd.f32 %v8141, %v8147
      %v8164 = vadd.f32 %v8142, %v8147
      %v8165 = vadd.f32 %v8143, %v8147
      %v8166 = vadd.f32 %v8144, %v8147
      %v8167 = vadd.f32 %v8145, %v8147
      %s8168 = smul.u32 %s2920, 160
      %s8169 = scalar_lea.vmem [#allocation4], %s8168
      %8170 = vst [vmem:[%s8169] sm:$0xff] %v8148
      %8171 = vst [vmem:[%s8169 + $0x8] sm:$0x3] %v8149
      %8172 = vst [vmem:[%s8169 + $0x10] sm:$0xff] %v8150
      %8173 = vst [vmem:[%s8169 + $0x18] sm:$0x3] %v8151
      %8174 = vst [vmem:[%s8169 + $0x20] sm:$0xff] %v8152
      %8175 = vst [vmem:[%s8169 + $0x28] sm:$0x3] %v8153
      %8176 = vst [vmem:[%s8169 + $0x30] sm:$0xff] %v8154
      %8177 = vst [vmem:[%s8169 + $0x38] sm:$0x3] %v8155
      %8178 = vst [vmem:[%s8169 + $0x40] sm:$0xff] %v8156
      %8179 = vst [vmem:[%s8169 + $0x48] sm:$0x3] %v8157
      %8180 = vst [vmem:[%s8169 + $0x50] sm:$0xff] %v8158
      %8181 = vst [vmem:[%s8169 + $0x58] sm:$0x3] %v8159
      %8182 = vst [vmem:[%s8169 + $0x60] sm:$0xff] %v8160
      %8183 = vst [vmem:[%s8169 + $0x68] sm:$0x3] %v8161
      %8184 = vst [vmem:[%s8169 + $0x70] sm:$0xff] %v8162
      %8185 = vst [vmem:[%s8169 + $0x78] sm:$0x3] %v8163
      %8186 = vst [vmem:[%s8169 + $0x80] sm:$0xff] %v8164
      %8187 = vst [vmem:[%s8169 + $0x88] sm:$0x3] %v8165
      %8188 = vst [vmem:[%s8169 + $0x90] sm:$0xff] %v8166
      %8189 = vst [vmem:[%s8169 + $0x98] sm:$0x3] %v8167
    $region87: #{net_forward.1} parent=1 // loop_footer
      %s2924 = sadd.s32 1, %s2920
    $region88: #{net_forward.1} parent=1 // loop_footer_branch
      %2919 = sbr.rel target = $region84
    $region89: #{net_forward.1} parent=1 // loop_exit
      _
    %8190 = vst [vmem:[#allocation5] sm:$0xff] 0.0
    %8191 = vst [vmem:[#allocation5 + $0x8] sm:$0xff] 0.0
    %8192 = vst [vmem:[#allocation5 + $0x10] sm:$0xff] 0.0
    %8193 = vst [vmem:[#allocation5 + $0x18] sm:$0xff] 0.0
    %8194 = vst [vmem:[#allocation5 + $0x20] sm:$0xff] 0.0
    %8195 = vst [vmem:[#allocation5 + $0x28] sm:$0xff] 0.0
    %8196 = vst [vmem:[#allocation5 + $0x30] sm:$0xff] 0.0
    %8197 = vst [vmem:[#allocation5 + $0x38] sm:$0xff] 0.0
    %8198 = vst [vmem:[#allocation5 + $0x40] sm:$0xff] 0.0
    %8199 = vst [vmem:[#allocation5 + $0x48] sm:$0xff] 0.0
    %8200 = vst [vmem:[#allocation5 + $0x50] sm:$0xff] 0.0
    %8201 = vst [vmem:[#allocation5 + $0x58] sm:$0xff] 0.0
    %8202 = vst [vmem:[#allocation5 + $0x60] sm:$0xff] 0.0
    %8203 = vst [vmem:[#allocation5 + $0x68] sm:$0xff] 0.0
    %8204 = vst [vmem:[#allocation5 + $0x70] sm:$0xff] 0.0
    %8205 = vst [vmem:[#allocation5 + $0x78] sm:$0xff] 0.0
    %8206 = vst [vmem:[#allocation5 + $0x80] sm:$0xff] 0.0
    %8207 = vst [vmem:[#allocation5 + $0x88] sm:$0xff] 0.0
    %8208 = vst [vmem:[#allocation5 + $0x90] sm:$0xff] 0.0
    %8209 = vst [vmem:[#allocation5 + $0x98] sm:$0xff] 0.0
    %8210 = vst [vmem:[#allocation5 + $0xa0] sm:$0xff] 0.0
    %8211 = vst [vmem:[#allocation5 + $0xa8] sm:$0xff] 0.0
    %8212 = vst [vmem:[#allocation5 + $0xb0] sm:$0xff] 0.0
    %8213 = vst [vmem:[#allocation5 + $0xb8] sm:$0xff] 0.0
    %8214 = vst [vmem:[#allocation5 + $0xc0] sm:$0xff] 0.0
    %8215 = vst [vmem:[#allocation5 + $0xc8] sm:$0xff] 0.0
    %8216 = vst [vmem:[#allocation5 + $0xd0] sm:$0xff] 0.0
    %8217 = vst [vmem:[#allocation5 + $0xd8] sm:$0xff] 0.0
    %8218 = vst [vmem:[#allocation5 + $0xe0] sm:$0xff] 0.0
    %8219 = vst [vmem:[#allocation5 + $0xe8] sm:$0xff] 0.0
    %8220 = vst [vmem:[#allocation5 + $0xf0] sm:$0xff] 0.0
    %8221 = vst [vmem:[#allocation5 + $0xf8] sm:$0xff] 0.0
    %8222 = vst [vmem:[#allocation5 + $0x100] sm:$0xff] 0.0
    %8223 = vst [vmem:[#allocation5 + $0x108] sm:$0xff] 0.0
    %8224 = vst [vmem:[#allocation5 + $0x110] sm:$0xff] 0.0
    %8225 = vst [vmem:[#allocation5 + $0x118] sm:$0xff] 0.0
    %8226 = vst [vmem:[#allocation5 + $0x120] sm:$0xff] 0.0
    %8227 = vst [vmem:[#allocation5 + $0x128] sm:$0xff] 0.0
    %8228 = vst [vmem:[#allocation5 + $0x130] sm:$0xff] 0.0
    %8229 = vst [vmem:[#allocation5 + $0x138] sm:$0xff] 0.0
    %8230 = vst [vmem:[#allocation5 + $0x140] sm:$0xff] 0.0
    %8231 = vst [vmem:[#allocation5 + $0x148] sm:$0xff] 0.0
    %8232 = vst [vmem:[#allocation5 + $0x150] sm:$0xff] 0.0
    %8233 = vst [vmem:[#allocation5 + $0x158] sm:$0xff] 0.0
    %8234 = vst [vmem:[#allocation5 + $0x160] sm:$0xff] 0.0
    %8235 = vst [vmem:[#allocation5 + $0x168] sm:$0xff] 0.0
    %8236 = vst [vmem:[#allocation5 + $0x170] sm:$0xff] 0.0
    %8237 = vst [vmem:[#allocation5 + $0x178] sm:$0xff] 0.0
    %8238 = vst [vmem:[#allocation5 + $0x180] sm:$0xff] 0.0
    %8239 = vst [vmem:[#allocation5 + $0x188] sm:$0xff] 0.0
    %8240 = vst [vmem:[#allocation5 + $0x190] sm:$0xff] 0.0
    %8241 = vst [vmem:[#allocation5 + $0x198] sm:$0xff] 0.0
    %8242 = vst [vmem:[#allocation5 + $0x1a0] sm:$0xff] 0.0
    %8243 = vst [vmem:[#allocation5 + $0x1a8] sm:$0xff] 0.0
    %8244 = vst [vmem:[#allocation5 + $0x1b0] sm:$0xff] 0.0
    %8245 = vst [vmem:[#allocation5 + $0x1b8] sm:$0xff] 0.0
    %8246 = vst [vmem:[#allocation5 + $0x1c0] sm:$0xff] 0.0
    %8247 = vst [vmem:[#allocation5 + $0x1c8] sm:$0xff] 0.0
    %8248 = vst [vmem:[#allocation5 + $0x1d0] sm:$0xff] 0.0
    %8249 = vst [vmem:[#allocation5 + $0x1d8] sm:$0xff] 0.0
    %8250 = vst [vmem:[#allocation5 + $0x1e0] sm:$0xff] 0.0
    %8251 = vst [vmem:[#allocation5 + $0x1e8] sm:$0xff] 0.0
    %8252 = vst [vmem:[#allocation5 + $0x1f0] sm:$0xff] 0.0
    %8253 = vst [vmem:[#allocation5 + $0x1f8] sm:$0xff] 0.0
    %8254 = vst [vmem:[#allocation5 + $0x200] sm:$0xff] 0.0
    %8255 = vst [vmem:[#allocation5 + $0x208] sm:$0xff] 0.0
    %8256 = vst [vmem:[#allocation5 + $0x210] sm:$0xff] 0.0
    %8257 = vst [vmem:[#allocation5 + $0x218] sm:$0xff] 0.0
    %8258 = vst [vmem:[#allocation5 + $0x220] sm:$0xff] 0.0
    %8259 = vst [vmem:[#allocation5 + $0x228] sm:$0xff] 0.0
    %8260 = vst [vmem:[#allocation5 + $0x230] sm:$0xff] 0.0
    %8261 = vst [vmem:[#allocation5 + $0x238] sm:$0xff] 0.0
    %8262 = vst [vmem:[#allocation5 + $0x240] sm:$0xff] 0.0
    %8263 = vst [vmem:[#allocation5 + $0x248] sm:$0xff] 0.0
    %8264 = vst [vmem:[#allocation5 + $0x250] sm:$0xff] 0.0
    %8265 = vst [vmem:[#allocation5 + $0x258] sm:$0xff] 0.0
    %8266 = vst [vmem:[#allocation5 + $0x260] sm:$0xff] 0.0
    %8267 = vst [vmem:[#allocation5 + $0x268] sm:$0xff] 0.0
    %8268 = vst [vmem:[#allocation5 + $0x270] sm:$0xff] 0.0
    %8269 = vst [vmem:[#allocation5 + $0x278] sm:$0xff] 0.0
    loop: start=0, step=1, limit=16
    $region90: #{net_forward.1} parent=1 // loop_pre_header
      _
    $region91: #{net_forward.1} parent=1 // loop_header
      %s8271 = sphi 0, %s8275
      %p8272 = scmp.ge.s32.totalorder %s8271, 16
    $region92: #{net_forward.1} parent=1 // loop_header_branch
      %8274 = sbr.rel (%p8272) target = $region96
    $region93: #{net_forward.1} parent=1 // loop_body
      %s8276 = smul.u32 %s8271, 160
      %s8277 = scalar_lea.vmem [#allocation4], %s8276
      %v8278 = vld [vmem:[%s8277] ss:$2 sm:$0x1f]
      %s8279 = scalar_lea.vmem %s8277, 32 [#allocation4]
      %v8280 = vld [vmem:[%s8279] ss:$2 sm:$0x1f]
      %s8281 = scalar_lea.vmem %s8277, 64 [#allocation4]
      %v8282 = vld [vmem:[%s8281] ss:$2 sm:$0x1f]
      %s8283 = scalar_lea.vmem %s8277, 96 [#allocation4]
      %v8284 = vld [vmem:[%s8283] ss:$2 sm:$0x1f]
      %s8285 = scalar_lea.vmem %s8277, 128 [#allocation4]
      %v8286 = vld [vmem:[%s8285] ss:$2 sm:$0x1f]
      %s8287 = scalar_lea.vmem %s8277, 1 [#allocation4]
      %v8288 = vld [vmem:[%s8287] ss:$2 sm:$0x1f]
      %s8289 = scalar_lea.vmem %s8277, 33 [#allocation4]
      %v8290 = vld [vmem:[%s8289] ss:$2 sm:$0x1f]
      %s8291 = scalar_lea.vmem %s8277, 65 [#allocation4]
      %v8292 = vld [vmem:[%s8291] ss:$2 sm:$0x1f]
      %s8293 = scalar_lea.vmem %s8277, 97 [#allocation4]
      %v8294 = vld [vmem:[%s8293] ss:$2 sm:$0x1f]
      %s8295 = scalar_lea.vmem %s8277, 129 [#allocation4]
      %v8296 = vld [vmem:[%s8295] ss:$2 sm:$0x1f]
      %v8297 = vmax.f32 %v8278, %v8288
      %v8298 = vmax.f32 %v8280, %v8290
      %v8299 = vmax.f32 %v8282, %v8292
      %v8300 = vmax.f32 %v8284, %v8294
      %v8301 = vmax.f32 %v8286, %v8296
      %s8302 = sadd.s32 16, %s8276
      %s8303 = scalar_lea.vmem [#allocation4], %s8302
      %v8304 = vld [vmem:[%s8303] ss:$2 sm:$0x1f]
      %s8305 = scalar_lea.vmem %s8303, 32 [#allocation4]
      %v8306 = vld [vmem:[%s8305] ss:$2 sm:$0x1f]
      %s8307 = scalar_lea.vmem %s8303, 64 [#allocation4]
      %v8308 = vld [vmem:[%s8307] ss:$2 sm:$0x1f]
      %s8309 = scalar_lea.vmem %s8303, 96 [#allocation4]
      %v8310 = vld [vmem:[%s8309] ss:$2 sm:$0x1f]
      %s8311 = scalar_lea.vmem %s8303, 128 [#allocation4]
      %v8312 = vld [vmem:[%s8311] ss:$2 sm:$0x1f]
      %s8313 = scalar_lea.vmem %s8303, 1 [#allocation4]
      %v8314 = vld [vmem:[%s8313] ss:$2 sm:$0x1f]
      %s8315 = scalar_lea.vmem %s8303, 33 [#allocation4]
      %v8316 = vld [vmem:[%s8315] ss:$2 sm:$0x1f]
      %s8317 = scalar_lea.vmem %s8303, 65 [#allocation4]
      %v8318 = vld [vmem:[%s8317] ss:$2 sm:$0x1f]
      %s8319 = scalar_lea.vmem %s8303, 97 [#allocation4]
      %v8320 = vld [vmem:[%s8319] ss:$2 sm:$0x1f]
      %s8321 = scalar_lea.vmem %s8303, 129 [#allocation4]
      %v8322 = vld [vmem:[%s8321] ss:$2 sm:$0x1f]
      %v8323 = vmax.f32 %v8304, %v8314
      %v8324 = vmax.f32 %v8306, %v8316
      %v8325 = vmax.f32 %v8308, %v8318
      %v8326 = vmax.f32 %v8310, %v8320
      %v8327 = vmax.f32 %v8312, %v8322
      %v8328 = vmax.f32 %v8297, %v8323
      %v8329 = vmax.f32 %v8298, %v8324
      %v8330 = vmax.f32 %v8299, %v8325
      %v8331 = vmax.f32 %v8300, %v8326
      %v8332 = vmax.f32 %v8301, %v8327
      %v8333 = vmax.f32 %v8328, 0.0
      %v8334 = vmax.f32 %v8329, 0.0
      %v8335 = vmax.f32 %v8330, 0.0
      %v8336 = vmax.f32 %v8331, 0.0
      %v8337 = vmax.f32 %v8332, 0.0
      %s8338 = smul.u32 %s8271, 40
      %s8339 = scalar_lea.vmem [#allocation5], %s8338
      %8340 = vst [vmem:[%s8339] sm:$0x1f] %v8333
      %s8341 = sadd.s32 %s8338, 8
      %s8342 = scalar_lea.vmem [#allocation5], %s8341
      %8343 = vst [vmem:[%s8342] sm:$0x1f] %v8334
      %s8344 = sadd.s32 %s8338, 16
      %s8345 = scalar_lea.vmem [#allocation5], %s8344
      %8346 = vst [vmem:[%s8345] sm:$0x1f] %v8335
      %s8347 = sadd.s32 %s8338, 24
      %s8348 = scalar_lea.vmem [#allocation5], %s8347
      %8349 = vst [vmem:[%s8348] sm:$0x1f] %v8336
      %s8350 = sadd.s32 %s8338, 32
      %s8351 = scalar_lea.vmem [#allocation5], %s8350
      %8352 = vst [vmem:[%s8351] sm:$0x1f] %v8337
    $region94: #{net_forward.1} parent=1 // loop_footer
      %s8275 = sadd.s32 1, %s8271
    $region95: #{net_forward.1} parent=1 // loop_footer_branch
      %8270 = sbr.rel target = $region91
    $region96: #{net_forward.1} parent=1 // loop_exit
      _
    %v8353 = vld [vmem:[#allocation5] sm:$0xff]
    %v8354 = vld [vmem:[#allocation5 + $0x8] sm:$0xff]
    %v8355 = vld [vmem:[#allocation5 + $0x10] sm:$0xff]
    %v8356 = vld [vmem:[#allocation5 + $0x18] sm:$0xff]
    %v8357 = vld [vmem:[#allocation5 + $0x20] sm:$0xff]
    %v8358 = vld [vmem:[#allocation5 + $0x28] sm:$0xff]
    %v8359 = vld [vmem:[#allocation5 + $0x30] sm:$0xff]
    %v8360 = vld [vmem:[#allocation5 + $0x38] sm:$0xff]
    %v8361 = vld [vmem:[#allocation5 + $0x40] sm:$0xff]
    %v8362 = vld [vmem:[#allocation5 + $0x48] sm:$0xff]
    %v8363 = vld [vmem:[#allocation5 + $0x50] sm:$0xff]
    %v8364 = vld [vmem:[#allocation5 + $0x58] sm:$0xff]
    %v8365 = vld [vmem:[#allocation5 + $0x60] sm:$0xff]
    %v8366 = vld [vmem:[#allocation5 + $0x68] sm:$0xff]
    %v8367 = vld [vmem:[#allocation5 + $0x70] sm:$0xff]
    %v8368 = vld [vmem:[#allocation5 + $0x78] sm:$0xff]
    %v8369 = vld [vmem:[#allocation5 + $0x80] sm:$0xff]
    %v8370 = vld [vmem:[#allocation5 + $0x88] sm:$0xff]
    %v8371 = vld [vmem:[#allocation5 + $0x90] sm:$0xff]
    %v8372 = vld [vmem:[#allocation5 + $0x98] sm:$0xff]
    %v8373 = vld [vmem:[#allocation5 + $0xa0] sm:$0xff]
    %v8374 = vld [vmem:[#allocation5 + $0xa8] sm:$0xff]
    %v8375 = vld [vmem:[#allocation5 + $0xb0] sm:$0xff]
    %v8376 = vld [vmem:[#allocation5 + $0xb8] sm:$0xff]
    %v8377 = vld [vmem:[#allocation5 + $0xc0] sm:$0xff]
    %v8378 = vld [vmem:[#allocation5 + $0xc8] sm:$0xff]
    %v8379 = vld [vmem:[#allocation5 + $0xd0] sm:$0xff]
    %v8380 = vld [vmem:[#allocation5 + $0xd8] sm:$0xff]
    %v8381 = vld [vmem:[#allocation5 + $0xe0] sm:$0xff]
    %v8382 = vld [vmem:[#allocation5 + $0xe8] sm:$0xff]
    %v8383 = vld [vmem:[#allocation5 + $0xf0] sm:$0xff]
    %v8384 = vld [vmem:[#allocation5 + $0xf8] sm:$0xff]
    %v8385 = vld [vmem:[#allocation5 + $0x100] sm:$0xff]
    %v8386 = vld [vmem:[#allocation5 + $0x108] sm:$0xff]
    %v8387 = vld [vmem:[#allocation5 + $0x110] sm:$0xff]
    %v8388 = vld [vmem:[#allocation5 + $0x118] sm:$0xff]
    %v8389 = vld [vmem:[#allocation5 + $0x120] sm:$0xff]
    %v8390 = vld [vmem:[#allocation5 + $0x128] sm:$0xff]
    %v8391 = vld [vmem:[#allocation5 + $0x130] sm:$0xff]
    %v8392 = vld [vmem:[#allocation5 + $0x138] sm:$0xff]
    %v8393 = vld [vmem:[#allocation5 + $0x140] sm:$0xff]
    %v8394 = vld [vmem:[#allocation5 + $0x148] sm:$0xff]
    %v8395 = vld [vmem:[#allocation5 + $0x150] sm:$0xff]
    %v8396 = vld [vmem:[#allocation5 + $0x158] sm:$0xff]
    %v8397 = vld [vmem:[#allocation5 + $0x160] sm:$0xff]
    %v8398 = vld [vmem:[#allocation5 + $0x168] sm:$0xff]
    %v8399 = vld [vmem:[#allocation5 + $0x170] sm:$0xff]
    %v8400 = vld [vmem:[#allocation5 + $0x178] sm:$0xff]
    %v8401 = vld [vmem:[#allocation5 + $0x180] sm:$0xff]
    %v8402 = vld [vmem:[#allocation5 + $0x188] sm:$0xff]
    %v8403 = vld [vmem:[#allocation5 + $0x190] sm:$0xff]
    %v8404 = vld [vmem:[#allocation5 + $0x198] sm:$0xff]
    %v8405 = vld [vmem:[#allocation5 + $0x1a0] sm:$0xff]
    %v8406 = vld [vmem:[#allocation5 + $0x1a8] sm:$0xff]
    %v8407 = vld [vmem:[#allocation5 + $0x1b0] sm:$0xff]
    %v8408 = vld [vmem:[#allocation5 + $0x1b8] sm:$0xff]
    %v8409 = vld [vmem:[#allocation5 + $0x1c0] sm:$0xff]
    %v8410 = vld [vmem:[#allocation5 + $0x1c8] sm:$0xff]
    %v8411 = vld [vmem:[#allocation5 + $0x1d0] sm:$0xff]
    %v8412 = vld [vmem:[#allocation5 + $0x1d8] sm:$0xff]
    %v8413 = vld [vmem:[#allocation5 + $0x1e0] sm:$0xff]
    %v8414 = vld [vmem:[#allocation5 + $0x1e8] sm:$0xff]
    %v8415 = vld [vmem:[#allocation5 + $0x1f0] sm:$0xff]
    %v8416 = vld [vmem:[#allocation5 + $0x1f8] sm:$0xff]
    %v8417 = vld [vmem:[#allocation5 + $0x200] sm:$0xff]
    %v8418 = vld [vmem:[#allocation5 + $0x208] sm:$0xff]
    %v8419 = vld [vmem:[#allocation5 + $0x210] sm:$0xff]
    %v8420 = vld [vmem:[#allocation5 + $0x218] sm:$0xff]
    %v8421 = vld [vmem:[#allocation5 + $0x220] sm:$0xff]
    %v8422 = vld [vmem:[#allocation5 + $0x228] sm:$0xff]
    %v8423 = vld [vmem:[#allocation5 + $0x230] sm:$0xff]
    %v8424 = vld [vmem:[#allocation5 + $0x238] sm:$0xff]
    %v8425 = vld [vmem:[#allocation5 + $0x240] sm:$0xff]
    %v8426 = vld [vmem:[#allocation5 + $0x248] sm:$0xff]
    %v8427 = vld [vmem:[#allocation5 + $0x250] sm:$0xff]
    %v8428 = vld [vmem:[#allocation5 + $0x258] sm:$0xff]
    %v8429 = vld [vmem:[#allocation5 + $0x260] sm:$0xff]
    %v8430 = vld [vmem:[#allocation5 + $0x268] sm:$0xff]
    %v8431 = vld [vmem:[#allocation5 + $0x270] sm:$0xff]
    %v8432 = vld [vmem:[#allocation5 + $0x278] sm:$0xff]
    %v8433 = vld [vmem:[%s5] sm:$0xff]
    %v8434 = vld [vmem:[%s5 + $0x8] sm:$0xff]
    %v8435 = vld [vmem:[%s5 + $0x10] sm:$0xff]
    %v8436 = vld [vmem:[%s5 + $0x18] sm:$0xff]
    %v8437 = vld [vmem:[%s5 + $0x20] sm:$0xff]
    %v8438 = vld [vmem:[%s5 + $0x28] sm:$0xff]
    %v8439 = vld [vmem:[%s5 + $0x30] sm:$0xff]
    %v8440 = vld [vmem:[%s5 + $0x38] sm:$0xff]
    %v8441 = vld [vmem:[%s5 + $0x40] sm:$0xff]
    %v8442 = vld [vmem:[%s5 + $0x48] sm:$0xff]
    %v8443 = vld [vmem:[%s5 + $0x50] sm:$0xff]
    %v8444 = vld [vmem:[%s5 + $0x58] sm:$0xff]
    %v8445 = vld [vmem:[%s5 + $0x60] sm:$0xff]
    %v8446 = vld [vmem:[%s5 + $0x68] sm:$0xff]
    %v8447 = vld [vmem:[%s5 + $0x70] sm:$0xff]
    %v8448 = vld [vmem:[%s5 + $0x78] sm:$0xff]
    %v8449 = vld [vmem:[%s5 + $0x80] sm:$0xff]
    %v8450 = vld [vmem:[%s5 + $0x88] sm:$0xff]
    %v8451 = vld [vmem:[%s5 + $0x90] sm:$0xff]
    %v8452 = vld [vmem:[%s5 + $0x98] sm:$0xff]
    %v8453 = vld [vmem:[%s5 + $0xa0] sm:$0xff]
    %v8454 = vld [vmem:[%s5 + $0xa8] sm:$0xff]
    %v8455 = vld [vmem:[%s5 + $0xb0] sm:$0xff]
    %v8456 = vld [vmem:[%s5 + $0xb8] sm:$0xff]
    %v8457 = vld [vmem:[%s5 + $0xc0] sm:$0xff]
    %v8458 = vld [vmem:[%s5 + $0xc8] sm:$0xff]
    %v8459 = vld [vmem:[%s5 + $0xd0] sm:$0xff]
    %v8460 = vld [vmem:[%s5 + $0xd8] sm:$0xff]
    %v8461 = vld [vmem:[%s5 + $0xe0] sm:$0xff]
    %v8462 = vld [vmem:[%s5 + $0xe8] sm:$0xff]
    %v8463 = vld [vmem:[%s5 + $0xf0] sm:$0xff]
    %v8464 = vld [vmem:[%s5 + $0xf8] sm:$0xff]
    %v8465 = vld [vmem:[%s5 + $0x100] sm:$0xff]
    %v8466 = vld [vmem:[%s5 + $0x108] sm:$0xff]
    %v8467 = vld [vmem:[%s5 + $0x110] sm:$0xff]
    %v8468 = vld [vmem:[%s5 + $0x118] sm:$0xff]
    %v8469 = vld [vmem:[%s5 + $0x120] sm:$0xff]
    %v8470 = vld [vmem:[%s5 + $0x128] sm:$0xff]
    %v8471 = vld [vmem:[%s5 + $0x130] sm:$0xff]
    %v8472 = vld [vmem:[%s5 + $0x138] sm:$0xff]
    %v8473 = vld [vmem:[%s5 + $0x140] sm:$0xff]
    %v8474 = vld [vmem:[%s5 + $0x148] sm:$0xff]
    %v8475 = vld [vmem:[%s5 + $0x150] sm:$0xff]
    %v8476 = vld [vmem:[%s5 + $0x158] sm:$0xff]
    %v8477 = vld [vmem:[%s5 + $0x160] sm:$0xff]
    %v8478 = vld [vmem:[%s5 + $0x168] sm:$0xff]
    %v8479 = vld [vmem:[%s5 + $0x170] sm:$0xff]
    %v8480 = vld [vmem:[%s5 + $0x178] sm:$0xff]
    %v8481 = vld [vmem:[%s5 + $0x180] sm:$0xff]
    %v8482 = vld [vmem:[%s5 + $0x188] sm:$0xff]
    %v8483 = vld [vmem:[%s5 + $0x190] sm:$0xff]
    %v8484 = vld [vmem:[%s5 + $0x198] sm:$0xff]
    %v8485 = vld [vmem:[%s5 + $0x1a0] sm:$0xff]
    %v8486 = vld [vmem:[%s5 + $0x1a8] sm:$0xff]
    %v8487 = vld [vmem:[%s5 + $0x1b0] sm:$0xff]
    %v8488 = vld [vmem:[%s5 + $0x1b8] sm:$0xff]
    %v8489 = vld [vmem:[%s5 + $0x1c0] sm:$0xff]
    %v8490 = vld [vmem:[%s5 + $0x1c8] sm:$0xff]
    %v8491 = vld [vmem:[%s5 + $0x1d0] sm:$0xff]
    %v8492 = vld [vmem:[%s5 + $0x1d8] sm:$0xff]
    %v8493 = vld [vmem:[%s5 + $0x1e0] sm:$0xff]
    %v8494 = vld [vmem:[%s5 + $0x1e8] sm:$0xff]
    %v8495 = vld [vmem:[%s5 + $0x1f0] sm:$0xff]
    %v8496 = vld [vmem:[%s5 + $0x1f8] sm:$0xff]
    %v8497 = vld [vmem:[%s5 + $0x200] sm:$0xff]
    %v8498 = vld [vmem:[%s5 + $0x208] sm:$0xff]
    %v8499 = vld [vmem:[%s5 + $0x210] sm:$0xff]
    %v8500 = vld [vmem:[%s5 + $0x218] sm:$0xff]
    %v8501 = vld [vmem:[%s5 + $0x220] sm:$0xff]
    %v8502 = vld [vmem:[%s5 + $0x228] sm:$0xff]
    %v8503 = vld [vmem:[%s5 + $0x230] sm:$0xff]
    %v8504 = vld [vmem:[%s5 + $0x238] sm:$0xff]
    %v8505 = vld [vmem:[%s5 + $0x240] sm:$0xff]
    %v8506 = vld [vmem:[%s5 + $0x248] sm:$0xff]
    %v8507 = vld [vmem:[%s5 + $0x250] sm:$0xff]
    %v8508 = vld [vmem:[%s6] sm:$0xff]
    %v8509 = vld [vmem:[%s6 + $0x8] sm:$0xff]
    %v8510 = vld [vmem:[%s6 + $0x10] sm:$0xff]
    %v8511 = vld [vmem:[%s6 + $0x18] sm:$0xff]
    %v8512 = vld [vmem:[%s6 + $0x20] sm:$0xff]
    %v8513 = vld [vmem:[%s6 + $0x28] sm:$0xff]
    %v8514 = vld [vmem:[%s6 + $0x30] sm:$0xff]
    %v8515 = vld [vmem:[%s6 + $0x38] sm:$0xff]
    %v8516 = vld [vmem:[%s6 + $0x40] sm:$0xff]
    %v8517 = vld [vmem:[%s6 + $0x48] sm:$0xff]
    %v8518 = vld [vmem:[%s6 + $0x50] sm:$0xff]
    %v8519 = vld [vmem:[%s6 + $0x58] sm:$0xff]
    %v8520 = vld [vmem:[%s6 + $0x60] sm:$0xff]
    %v8521 = vld [vmem:[%s6 + $0x68] sm:$0xff]
    %v8522 = vld [vmem:[%s6 + $0x70] sm:$0xff]
    %8524 = vset.pattern.permute.xlu0 0
    %8525 = vperm.xlu0 %8524, %v8508
    %v8526 = vpop.permute.xlu0 %8525
    %8529 = vset.pattern.permute.xlu0 0
    %8530 = vperm.xlu0 %8529, %v8509
    %v8531 = vpop.permute.xlu0 %8530
    %8534 = vset.pattern.permute.xlu0 0
    %8535 = vperm.xlu0 %8534, %v8510
    %v8536 = vpop.permute.xlu0 %8535
    %8539 = vset.pattern.permute.xlu0 0
    %8540 = vperm.xlu0 %8539, %v8511
    %v8541 = vpop.permute.xlu0 %8540
    %8544 = vset.pattern.permute.xlu0 0
    %8545 = vperm.xlu0 %8544, %v8512
    %v8546 = vpop.permute.xlu0 %8545
    %8549 = vset.pattern.permute.xlu0 0
    %8550 = vperm.xlu0 %8549, %v8513
    %v8551 = vpop.permute.xlu0 %8550
    %8554 = vset.pattern.permute.xlu0 0
    %8555 = vperm.xlu0 %8554, %v8514
    %v8556 = vpop.permute.xlu0 %8555
    %8559 = vset.pattern.permute.xlu0 0
    %8560 = vperm.xlu0 %8559, %v8515
    %v8561 = vpop.permute.xlu0 %8560
    %8564 = vset.pattern.permute.xlu0 0
    %8565 = vperm.xlu0 %8564, %v8516
    %v8566 = vpop.permute.xlu0 %8565
    %8569 = vset.pattern.permute.xlu0 0
    %8570 = vperm.xlu0 %8569, %v8517
    %v8571 = vpop.permute.xlu0 %8570
    %8574 = vset.pattern.permute.xlu0 0
    %8575 = vperm.xlu0 %8574, %v8518
    %v8576 = vpop.permute.xlu0 %8575
    %8579 = vset.pattern.permute.xlu0 0
    %8580 = vperm.xlu0 %8579, %v8519
    %v8581 = vpop.permute.xlu0 %8580
    %8584 = vset.pattern.permute.xlu0 0
    %8585 = vperm.xlu0 %8584, %v8520
    %v8586 = vpop.permute.xlu0 %8585
    %8589 = vset.pattern.permute.xlu0 0
    %8590 = vperm.xlu0 %8589, %v8521
    %v8591 = vpop.permute.xlu0 %8590
    %8594 = vset.pattern.permute.xlu0 0
    %8595 = vperm.xlu0 %8594, %v8522
    %v8596 = vpop.permute.xlu0 %8595
    %8598 = vmatprep.subr.mxu0 0.0
    %8599 = vmatpush1.msra.mxu0 %v8353
    %8600 = vmatprep.subr.mxu0 0.0
    %8601 = vmatpush1.msra.mxu0 %v8354
    %8602 = vmatprep.subr.mxu0 0.0
    %8603 = vmatpush1.msra.mxu0 %v8355
    %8604 = vmatprep.subr.mxu0 0.0
    %8605 = vmatpush1.msra.mxu0 %v8356
    %8606 = vmatprep.subr.mxu0 0.0
    %8607 = vmatpush1.msra.mxu0 %v8357
    %8608 = vmatprep.subr.mxu0 0.0
    %8609 = vmatpush1.msra.mxu0 %v8358
    %8610 = vmatprep.subr.mxu0 0.0
    %8611 = vmatpush1.msra.mxu0 %v8359
    %8612 = vmatprep.subr.mxu0 0.0
    %8613 = vmatpush1.msra.mxu0 %v8360
    %8614 = vmatprep.subr.mxu0 0.0
    %8615 = vmatpush1.msra.mxu0 %v8361
    %8616 = vmatprep.subr.mxu0 0.0
    %8617 = vmatpush1.msra.mxu0 %v8362
    %8618 = vmatprep.subr.mxu0 0.0
    %8619 = vmatpush1.msra.mxu0 %v8363
    %8620 = vmatprep.subr.mxu0 0.0
    %8621 = vmatpush1.msra.mxu0 %v8364
    %8622 = vmatprep.subr.mxu0 0.0
    %8623 = vmatpush1.msra.mxu0 %v8365
    %8624 = vmatprep.subr.mxu0 0.0
    %8625 = vmatpush1.msra.mxu0 %v8366
    %8626 = vmatprep.subr.mxu0 0.0
    %8627 = vmatpush1.msra.mxu0 %v8367
    %8628 = vmatprep.subr.mxu0 0.0
    %8629 = vmatpush1.msra.mxu0 %v8368
    %8630 = vmatprep.subr.mxu0 0.0
    %8631 = vmatpush1.msra.mxu0 %v8369
    %8632 = vmatprep.subr.mxu0 0.0
    %8633 = vmatpush1.msra.mxu0 %v8370
    %8634 = vmatprep.subr.mxu0 0.0
    %8635 = vmatpush1.msra.mxu0 %v8371
    %8636 = vmatprep.subr.mxu0 0.0
    %8637 = vmatpush1.msra.mxu0 %v8372
    %8638 = vmatprep.subr.mxu0 0.0
    %8639 = vmatpush1.msra.mxu0 %v8373
    %8640 = vmatprep.subr.mxu0 0.0
    %8641 = vmatpush1.msra.mxu0 %v8374
    %8642 = vmatprep.subr.mxu0 0.0
    %8643 = vmatpush1.msra.mxu0 %v8375
    %8644 = vmatprep.subr.mxu0 0.0
    %8645 = vmatpush1.msra.mxu0 %v8376
    %8646 = vmatprep.subr.mxu0 0.0
    %8647 = vmatpush1.msra.mxu0 %v8377
    %8648 = vmatprep.subr.mxu0 0.0
    %8649 = vmatpush1.msra.mxu0 %v8378
    %8650 = vmatprep.subr.mxu0 0.0
    %8651 = vmatpush1.msra.mxu0 %v8379
    %8652 = vmatprep.subr.mxu0 0.0
    %8653 = vmatpush1.msra.mxu0 %v8380
    %8654 = vmatprep.subr.mxu0 0.0
    %8655 = vmatpush1.msra.mxu0 %v8381
    %8656 = vmatprep.subr.mxu0 0.0
    %8657 = vmatpush1.msra.mxu0 %v8382
    %8658 = vmatprep.subr.mxu0 0.0
    %8659 = vmatpush1.msra.mxu0 %v8383
    %8660 = vmatprep.subr.mxu0 0.0
    %8661 = vmatpush1.msra.mxu0 %v8384
    %8662 = vmatprep.mubr.f32.mxu0 %v8434
    %8663 = vmatmul.mubr.f32.gmra.mrb[0].mxu0 %v8433
    %v8664 = vpop.f32.mrb[0].mxu0
    %v8665 = vadd.f32 %v8526, %v8664
    %v8666 = vpop.f32.mrb[0].mxu0
    %8667 = vmatprep.mubr.f32.mxu0 %v8439
    %8668 = vmatmul.mubr.f32.gmra.mrb[0].mxu0 %v8438
    %v8669 = vpop.f32.mrb[0].mxu0
    %v8670 = vadd.f32 %v8531, %v8669
    %v8671 = vpop.f32.mrb[0].mxu0
    %8672 = vmatprep.mubr.f32.mxu0 %v8444
    %8673 = vmatmul.mubr.f32.gmra.mrb[0].mxu0 %v8443
    %v8674 = vpop.f32.mrb[0].mxu0
    %v8675 = vadd.f32 %v8536, %v8674
    %v8676 = vpop.f32.mrb[0].mxu0
    %8677 = vmatprep.mubr.f32.mxu0 %v8449
    %8678 = vmatmul.mubr.f32.gmra.mrb[0].mxu0 %v8448
    %v8679 = vpop.f32.mrb[0].mxu0
    %v8680 = vadd.f32 %v8541, %v8679
    %v8681 = vpop.f32.mrb[0].mxu0
    %8682 = vmatprep.mubr.f32.mxu0 %v8454
    %8683 = vmatmul.mubr.f32.gmra.mrb[0].mxu0 %v8453
    %v8684 = vpop.f32.mrb[0].mxu0
    %v8685 = vadd.f32 %v8546, %v8684
    %v8686 = vpop.f32.mrb[0].mxu0
    %8687 = vmatprep.mubr.f32.mxu0 %v8459
    %8688 = vmatmul.mubr.f32.gmra.mrb[0].mxu0 %v8458
    %v8689 = vpop.f32.mrb[0].mxu0
    %v8690 = vadd.f32 %v8551, %v8689
    %v8691 = vpop.f32.mrb[0].mxu0
    %8692 = vmatprep.mubr.f32.mxu0 %v8464
    %8693 = vmatmul.mubr.f32.gmra.mrb[0].mxu0 %v8463
    %v8694 = vpop.f32.mrb[0].mxu0
    %v8695 = vadd.f32 %v8556, %v8694
    %v8696 = vpop.f32.mrb[0].mxu0
    %8697 = vmatprep.mubr.f32.mxu0 %v8469
    %8698 = vmatmul.mubr.f32.gmra.mrb[0].mxu0 %v8468
    %v8699 = vpop.f32.mrb[0].mxu0
    %v8700 = vadd.f32 %v8561, %v8699
    %v8701 = vpop.f32.mrb[0].mxu0
    %8702 = vmatprep.mubr.f32.mxu0 %v8474
    %8703 = vmatmul.mubr.f32.gmra.mrb[0].mxu0 %v8473
    %v8704 = vpop.f32.mrb[0].mxu0
    %v8705 = vadd.f32 %v8566, %v8704
    %v8706 = vpop.f32.mrb[0].mxu0
    %8707 = vmatprep.mubr.f32.mxu0 %v8479
    %8708 = vmatmul.mubr.f32.gmra.mrb[0].mxu0 %v8478
    %v8709 = vpop.f32.mrb[0].mxu0
    %v8710 = vadd.f32 %v8571, %v8709
    %v8711 = vpop.f32.mrb[0].mxu0
    %8712 = vmatprep.mubr.f32.mxu0 %v8484
    %8713 = vmatmul.mubr.f32.gmra.mrb[0].mxu0 %v8483
    %v8714 = vpop.f32.mrb[0].mxu0
    %v8715 = vadd.f32 %v8576, %v8714
    %v8716 = vpop.f32.mrb[0].mxu0
    %8717 = vmatprep.mubr.f32.mxu0 %v8489
    %8718 = vmatmul.mubr.f32.gmra.mrb[0].mxu0 %v8488
    %v8719 = vpop.f32.mrb[0].mxu0
    %v8720 = vadd.f32 %v8581, %v8719
    %v8721 = vpop.f32.mrb[0].mxu0
    %8722 = vmatprep.mubr.f32.mxu0 %v8494
    %8723 = vmatmul.mubr.f32.gmra.mrb[0].mxu0 %v8493
    %v8724 = vpop.f32.mrb[0].mxu0
    %v8725 = vadd.f32 %v8586, %v8724
    %v8726 = vpop.f32.mrb[0].mxu0
    %8727 = vmatprep.mubr.f32.mxu0 %v8499
    %8728 = vmatmul.mubr.f32.gmra.mrb[0].mxu0 %v8498
    %v8729 = vpop.f32.mrb[0].mxu0
    %v8730 = vadd.f32 %v8591, %v8729
    %v8731 = vpop.f32.mrb[0].mxu0
    %8732 = vmatprep.mubr.f32.mxu0 %v8504
    %8733 = vmatmul.mubr.f32.gmra.mrb[0].mxu0 %v8503
    %v8734 = vpop.f32.mrb[0].mxu0
    %v8735 = vadd.f32 %v8596, %v8734
    %v8736 = vpop.f32.mrb[0].mxu0
    %8737 = vdwg.mxu0
    %8738 = vmatprep.subr.mxu0 0.0
    %8739 = vmatpush1.msra.mxu0 %v8385
    %8740 = vmatprep.subr.mxu0 0.0
    %8741 = vmatpush1.msra.mxu0 %v8386
    %8742 = vmatprep.subr.mxu0 0.0
    %8743 = vmatpush1.msra.mxu0 %v8387
    %8744 = vmatprep.subr.mxu0 0.0
    %8745 = vmatpush1.msra.mxu0 %v8388
    %8746 = vmatprep.subr.mxu0 0.0
    %8747 = vmatpush1.msra.mxu0 %v8389
    %8748 = vmatprep.subr.mxu0 0.0
    %8749 = vmatpush1.msra.mxu0 %v8390
    %8750 = vmatprep.subr.mxu0 0.0
    %8751 = vmatpush1.msra.mxu0 %v8391
    %8752 = vmatprep.subr.mxu0 0.0
    %8753 = vmatpush1.msra.mxu0 %v8392
    %8754 = vmatprep.subr.mxu0 0.0
    %8755 = vmatpush1.msra.mxu0 %v8393
    %8756 = vmatprep.subr.mxu0 0.0
    %8757 = vmatpush1.msra.mxu0 %v8394
    %8758 = vmatprep.subr.mxu0 0.0
    %8759 = vmatpush1.msra.mxu0 %v8395
    %8760 = vmatprep.subr.mxu0 0.0
    %8761 = vmatpush1.msra.mxu0 %v8396
    %8762 = vmatprep.subr.mxu0 0.0
    %8763 = vmatpush1.msra.mxu0 %v8397
    %8764 = vmatprep.subr.mxu0 0.0
    %8765 = vmatpush1.msra.mxu0 %v8398
    %8766 = vmatprep.subr.mxu0 0.0
    %8767 = vmatpush1.msra.mxu0 %v8399
    %8768 = vmatprep.subr.mxu0 0.0
    %8769 = vmatpush1.msra.mxu0 %v8400
    %8770 = vmatprep.subr.mxu0 0.0
    %8771 = vmatpush1.msra.mxu0 %v8401
    %8772 = vmatprep.subr.mxu0 0.0
    %8773 = vmatpush1.msra.mxu0 %v8402
    %8774 = vmatprep.subr.mxu0 0.0
    %8775 = vmatpush1.msra.mxu0 %v8403
    %8776 = vmatprep.subr.mxu0 0.0
    %8777 = vmatpush1.msra.mxu0 %v8404
    %8778 = vmatprep.subr.mxu0 0.0
    %8779 = vmatpush1.msra.mxu0 %v8405
    %8780 = vmatprep.subr.mxu0 0.0
    %8781 = vmatpush1.msra.mxu0 %v8406
    %8782 = vmatprep.subr.mxu0 0.0
    %8783 = vmatpush1.msra.mxu0 %v8407
    %8784 = vmatprep.subr.mxu0 0.0
    %8785 = vmatpush1.msra.mxu0 %v8408
    %8786 = vmatprep.subr.mxu0 0.0
    %8787 = vmatpush1.msra.mxu0 %v8409
    %8788 = vmatprep.subr.mxu0 0.0
    %8789 = vmatpush1.msra.mxu0 %v8410
    %8790 = vmatprep.subr.mxu0 0.0
    %8791 = vmatpush1.msra.mxu0 %v8411
    %8792 = vmatprep.subr.mxu0 0.0
    %8793 = vmatpush1.msra.mxu0 %v8412
    %8794 = vmatprep.subr.mxu0 0.0
    %8795 = vmatpush1.msra.mxu0 %v8413
    %8796 = vmatprep.subr.mxu0 0.0
    %8797 = vmatpush1.msra.mxu0 %v8414
    %8798 = vmatprep.subr.mxu0 0.0
    %8799 = vmatpush1.msra.mxu0 %v8415
    %8800 = vmatprep.subr.mxu0 0.0
    %8801 = vmatpush1.msra.mxu0 %v8416
    %8802 = vmatprep.mubr.f32.mxu0 %v8436
    %8803 = vmatmul.mubr.f32.gmra.mrb[0].mxu0 %v8435
    %v8804 = vpop.f32.mrb[0].mxu0
    %v8805 = vadd.f32 %v8665, %v8804
    %v8806 = vpop.f32.mrb[0].mxu0
    %8807 = vmatprep.mubr.f32.mxu0 %v8441
    %8808 = vmatmul.mubr.f32.gmra.mrb[0].mxu0 %v8440
    %v8809 = vpop.f32.mrb[0].mxu0
    %v8810 = vadd.f32 %v8670, %v8809
    %v8811 = vpop.f32.mrb[0].mxu0
    %8812 = vmatprep.mubr.f32.mxu0 %v8446
    %8813 = vmatmul.mubr.f32.gmra.mrb[0].mxu0 %v8445
    %v8814 = vpop.f32.mrb[0].mxu0
    %v8815 = vadd.f32 %v8675, %v8814
    %v8816 = vpop.f32.mrb[0].mxu0
    %8817 = vmatprep.mubr.f32.mxu0 %v8451
    %8818 = vmatmul.mubr.f32.gmra.mrb[0].mxu0 %v8450
    %v8819 = vpop.f32.mrb[0].mxu0
    %v8820 = vadd.f32 %v8680, %v8819
    %v8821 = vpop.f32.mrb[0].mxu0
    %8822 = vmatprep.mubr.f32.mxu0 %v8456
    %8823 = vmatmul.mubr.f32.gmra.mrb[0].mxu0 %v8455
    %v8824 = vpop.f32.mrb[0].mxu0
    %v8825 = vadd.f32 %v8685, %v8824
    %v8826 = vpop.f32.mrb[0].mxu0
    %8827 = vmatprep.mubr.f32.mxu0 %v8461
    %8828 = vmatmul.mubr.f32.gmra.mrb[0].mxu0 %v8460
    %v8829 = vpop.f32.mrb[0].mxu0
    %v8830 = vadd.f32 %v8690, %v8829
    %v8831 = vpop.f32.mrb[0].mxu0
    %8832 = vmatprep.mubr.f32.mxu0 %v8466
    %8833 = vmatmul.mubr.f32.gmra.mrb[0].mxu0 %v8465
    %v8834 = vpop.f32.mrb[0].mxu0
    %v8835 = vadd.f32 %v8695, %v8834
    %v8836 = vpop.f32.mrb[0].mxu0
    %8837 = vmatprep.mubr.f32.mxu0 %v8471
    %8838 = vmatmul.mubr.f32.gmra.mrb[0].mxu0 %v8470
    %v8839 = vpop.f32.mrb[0].mxu0
    %v8840 = vadd.f32 %v8700, %v8839
    %v8841 = vpop.f32.mrb[0].mxu0
    %8842 = vmatprep.mubr.f32.mxu0 %v8476
    %8843 = vmatmul.mubr.f32.gmra.mrb[0].mxu0 %v8475
    %v8844 = vpop.f32.mrb[0].mxu0
    %v8845 = vadd.f32 %v8705, %v8844
    %v8846 = vpop.f32.mrb[0].mxu0
    %8847 = vmatprep.mubr.f32.mxu0 %v8481
    %8848 = vmatmul.mubr.f32.gmra.mrb[0].mxu0 %v8480
    %v8849 = vpop.f32.mrb[0].mxu0
    %v8850 = vadd.f32 %v8710, %v8849
    %v8851 = vpop.f32.mrb[0].mxu0
    %8852 = vmatprep.mubr.f32.mxu0 %v8486
    %8853 = vmatmul.mubr.f32.gmra.mrb[0].mxu0 %v8485
    %v8854 = vpop.f32.mrb[0].mxu0
    %v8855 = vadd.f32 %v8715, %v8854
    %v8856 = vpop.f32.mrb[0].mxu0
    %8857 = vmatprep.mubr.f32.mxu0 %v8491
    %8858 = vmatmul.mubr.f32.gmra.mrb[0].mxu0 %v8490
    %v8859 = vpop.f32.mrb[0].mxu0
    %v8860 = vadd.f32 %v8720, %v8859
    %v8861 = vpop.f32.mrb[0].mxu0
    %8862 = vmatprep.mubr.f32.mxu0 %v8496
    %8863 = vmatmul.mubr.f32.gmra.mrb[0].mxu0 %v8495
    %v8864 = vpop.f32.mrb[0].mxu0
    %v8865 = vadd.f32 %v8725, %v8864
    %v8866 = vpop.f32.mrb[0].mxu0
    %8867 = vmatprep.mubr.f32.mxu0 %v8501
    %8868 = vmatmul.mubr.f32.gmra.mrb[0].mxu0 %v8500
    %v8869 = vpop.f32.mrb[0].mxu0
    %v8870 = vadd.f32 %v8730, %v8869
    %v8871 = vpop.f32.mrb[0].mxu0
    %8872 = vmatprep.mubr.f32.mxu0 %v8506
    %8873 = vmatmul.mubr.f32.gmra.mrb[0].mxu0 %v8505
    %v8874 = vpop.f32.mrb[0].mxu0
    %v8875 = vadd.f32 %v8735, %v8874
    %v8876 = vpop.f32.mrb[0].mxu0
    %8877 = vdwg.mxu0
    %8878 = vmatprep.subr.mxu0 0.0
    %8879 = vmatpush1.msra.mxu0 %v8417
    %8880 = vmatprep.subr.mxu0 0.0
    %8881 = vmatpush1.msra.mxu0 %v8418
    %8882 = vmatprep.subr.mxu0 0.0
    %8883 = vmatpush1.msra.mxu0 %v8419
    %8884 = vmatprep.subr.mxu0 0.0
    %8885 = vmatpush1.msra.mxu0 %v8420
    %8886 = vmatprep.subr.mxu0 0.0
    %8887 = vmatpush1.msra.mxu0 %v8421
    %8888 = vmatprep.subr.mxu0 0.0
    %8889 = vmatpush1.msra.mxu0 %v8422
    %8890 = vmatprep.subr.mxu0 0.0
    %8891 = vmatpush1.msra.mxu0 %v8423
    %8892 = vmatprep.subr.mxu0 0.0
    %8893 = vmatpush1.msra.mxu0 %v8424
    %8894 = vmatprep.subr.mxu0 0.0
    %8895 = vmatpush1.msra.mxu0 %v8425
    %8896 = vmatprep.subr.mxu0 0.0
    %8897 = vmatpush1.msra.mxu0 %v8426
    %8898 = vmatprep.subr.mxu0 0.0
    %8899 = vmatpush1.msra.mxu0 %v8427
    %8900 = vmatprep.subr.mxu0 0.0
    %8901 = vmatpush1.msra.mxu0 %v8428
    %8902 = vmatprep.subr.mxu0 0.0
    %8903 = vmatpush1.msra.mxu0 %v8429
    %8904 = vmatprep.subr.mxu0 0.0
    %8905 = vmatpush1.msra.mxu0 %v8430
    %8906 = vmatprep.subr.mxu0 0.0
    %8907 = vmatpush1.msra.mxu0 %v8431
    %8908 = vmatprep.subr.mxu0 0.0
    %8909 = vmatpush1.msra.mxu0 %v8432
    %8910 = vmatprep.subr.mxu0 0.0
    %8911 = vmatpush1.msra.mxu0 0.0
    %8912 = vmatprep.subr.mxu0 0.0
    %8913 = vmatpush1.msra.mxu0 0.0
    %8914 = vmatprep.subr.mxu0 0.0
    %8915 = vmatpush1.msra.mxu0 0.0
    %8916 = vmatprep.subr.mxu0 0.0
    %8917 = vmatpush1.msra.mxu0 0.0
    %8918 = vmatprep.subr.mxu0 0.0
    %8919 = vmatpush1.msra.mxu0 0.0
    %8920 = vmatprep.subr.mxu0 0.0
    %8921 = vmatpush1.msra.mxu0 0.0
    %8922 = vmatprep.subr.mxu0 0.0
    %8923 = vmatpush1.msra.mxu0 0.0
    %8924 = vmatprep.subr.mxu0 0.0
    %8925 = vmatpush1.msra.mxu0 0.0
    %8926 = vmatprep.subr.mxu0 0.0
    %8927 = vmatpush1.msra.mxu0 0.0
    %8928 = vmatprep.subr.mxu0 0.0
    %8929 = vmatpush1.msra.mxu0 0.0
    %8930 = vmatprep.subr.mxu0 0.0
    %8931 = vmatpush1.msra.mxu0 0.0
    %8932 = vmatprep.subr.mxu0 0.0
    %8933 = vmatpush1.msra.mxu0 0.0
    %8934 = vmatprep.subr.mxu0 0.0
    %8935 = vmatpush1.msra.mxu0 0.0
    %8936 = vmatprep.subr.mxu0 0.0
    %8937 = vmatpush1.msra.mxu0 0.0
    %8938 = vmatprep.subr.mxu0 0.0
    %8939 = vmatpush1.msra.mxu0 0.0
    %8940 = vmatprep.subr.mxu0 0.0
    %8941 = vmatpush1.msra.mxu0 0.0
    %8942 = vmatprep.mubr.f32.mxu0 0.0
    %8943 = vmatmul.mubr.f32.gmra.mrb[0].mxu0 %v8437
    %v8944 = vpop.f32.mrb[0].mxu0
    %v8945 = vadd.f32 %v8805, %v8944
    %v8946 = vpop.f32.mrb[0].mxu0
    %8947 = vmatprep.mubr.f32.mxu0 0.0
    %8948 = vmatmul.mubr.f32.gmra.mrb[0].mxu0 %v8442
    %v8949 = vpop.f32.mrb[0].mxu0
    %v8950 = vadd.f32 %v8810, %v8949
    %v8951 = vpop.f32.mrb[0].mxu0
    %8952 = vmatprep.mubr.f32.mxu0 0.0
    %8953 = vmatmul.mubr.f32.gmra.mrb[0].mxu0 %v8447
    %v8954 = vpop.f32.mrb[0].mxu0
    %v8955 = vadd.f32 %v8815, %v8954
    %v8956 = vpop.f32.mrb[0].mxu0
    %8957 = vmatprep.mubr.f32.mxu0 0.0
    %8958 = vmatmul.mubr.f32.gmra.mrb[0].mxu0 %v8452
    %v8959 = vpop.f32.mrb[0].mxu0
    %v8960 = vadd.f32 %v8820, %v8959
    %v8961 = vpop.f32.mrb[0].mxu0
    %8962 = vmatprep.mubr.f32.mxu0 0.0
    %8963 = vmatmul.mubr.f32.gmra.mrb[0].mxu0 %v8457
    %v8964 = vpop.f32.mrb[0].mxu0
    %v8965 = vadd.f32 %v8825, %v8964
    %v8966 = vpop.f32.mrb[0].mxu0
    %8967 = vmatprep.mubr.f32.mxu0 0.0
    %8968 = vmatmul.mubr.f32.gmra.mrb[0].mxu0 %v8462
    %v8969 = vpop.f32.mrb[0].mxu0
    %v8970 = vadd.f32 %v8830, %v8969
    %v8971 = vpop.f32.mrb[0].mxu0
    %8972 = vmatprep.mubr.f32.mxu0 0.0
    %8973 = vmatmul.mubr.f32.gmra.mrb[0].mxu0 %v8467
    %v8974 = vpop.f32.mrb[0].mxu0
    %v8975 = vadd.f32 %v8835, %v8974
    %v8976 = vpop.f32.mrb[0].mxu0
    %8977 = vmatprep.mubr.f32.mxu0 0.0
    %8978 = vmatmul.mubr.f32.gmra.mrb[0].mxu0 %v8472
    %v8979 = vpop.f32.mrb[0].mxu0
    %v8980 = vadd.f32 %v8840, %v8979
    %v8981 = vpop.f32.mrb[0].mxu0
    %8982 = vmatprep.mubr.f32.mxu0 0.0
    %8983 = vmatmul.mubr.f32.gmra.mrb[0].mxu0 %v8477
    %v8984 = vpop.f32.mrb[0].mxu0
    %v8985 = vadd.f32 %v8845, %v8984
    %v8986 = vpop.f32.mrb[0].mxu0
    %8987 = vmatprep.mubr.f32.mxu0 0.0
    %8988 = vmatmul.mubr.f32.gmra.mrb[0].mxu0 %v8482
    %v8989 = vpop.f32.mrb[0].mxu0
    %v8990 = vadd.f32 %v8850, %v8989
    %v8991 = vpop.f32.mrb[0].mxu0
    %8992 = vmatprep.mubr.f32.mxu0 0.0
    %8993 = vmatmul.mubr.f32.gmra.mrb[0].mxu0 %v8487
    %v8994 = vpop.f32.mrb[0].mxu0
    %v8995 = vadd.f32 %v8855, %v8994
    %v8996 = vpop.f32.mrb[0].mxu0
    %8997 = vmatprep.mubr.f32.mxu0 0.0
    %8998 = vmatmul.mubr.f32.gmra.mrb[0].mxu0 %v8492
    %v8999 = vpop.f32.mrb[0].mxu0
    %v9000 = vadd.f32 %v8860, %v8999
    %v9001 = vpop.f32.mrb[0].mxu0
    %9002 = vmatprep.mubr.f32.mxu0 0.0
    %9003 = vmatmul.mubr.f32.gmra.mrb[0].mxu0 %v8497
    %v9004 = vpop.f32.mrb[0].mxu0
    %v9005 = vadd.f32 %v8865, %v9004
    %v9006 = vpop.f32.mrb[0].mxu0
    %9007 = vmatprep.mubr.f32.mxu0 0.0
    %9008 = vmatmul.mubr.f32.gmra.mrb[0].mxu0 %v8502
    %v9009 = vpop.f32.mrb[0].mxu0
    %v9010 = vadd.f32 %v8870, %v9009
    %v9011 = vpop.f32.mrb[0].mxu0
    %9012 = vmatprep.mubr.f32.mxu0 0.0
    %9013 = vmatmul.mubr.f32.gmra.mrb[0].mxu0 %v8507
    %v9014 = vpop.f32.mrb[0].mxu0
    %v9015 = vadd.f32 %v8875, %v9014
    %v9016 = vpop.f32.mrb[0].mxu0
    %9017 = vdwg.mxu0
    %v9018 = vmax.f32 %v8945, 0.0
    %v9019 = vmax.f32 %v8950, 0.0
    %v9020 = vmax.f32 %v8955, 0.0
    %v9021 = vmax.f32 %v8960, 0.0
    %v9022 = vmax.f32 %v8965, 0.0
    %v9023 = vmax.f32 %v8970, 0.0
    %v9024 = vmax.f32 %v8975, 0.0
    %v9025 = vmax.f32 %v8980, 0.0
    %v9026 = vmax.f32 %v8985, 0.0
    %v9027 = vmax.f32 %v8990, 0.0
    %v9028 = vmax.f32 %v8995, 0.0
    %v9029 = vmax.f32 %v9000, 0.0
    %v9030 = vmax.f32 %v9005, 0.0
    %v9031 = vmax.f32 %v9010, 0.0
    %v9032 = vmax.f32 %v9015, 0.0
    %v9033 = vld [vmem:[%s7] sm:$0xff]
    %v9034 = vld [vmem:[%s7 + $0x8] sm:$0xff]
    %v9035 = vld [vmem:[%s7 + $0x10] sm:$0xff]
    %v9036 = vld [vmem:[%s7 + $0x18] sm:$0xff]
    %v9037 = vld [vmem:[%s7 + $0x20] sm:$0xff]
    %v9038 = vld [vmem:[%s7 + $0x28] sm:$0xff]
    %v9039 = vld [vmem:[%s7 + $0x30] sm:$0xff]
    %v9040 = vld [vmem:[%s7 + $0x38] sm:$0xff]
    %v9041 = vld [vmem:[%s7 + $0x40] sm:$0xff]
    %v9042 = vld [vmem:[%s7 + $0x48] sm:$0xff]
    %v9043 = vld [vmem:[%s7 + $0x50] sm:$0xf]
    %v9044 = vld [vmem:[%s8] sm:$0xff]
    %v9045 = vld [vmem:[%s8 + $0x8] sm:$0xff]
    %v9046 = vld [vmem:[%s8 + $0x10] sm:$0xff]
    %v9047 = vld [vmem:[%s8 + $0x18] sm:$0xff]
    %v9048 = vld [vmem:[%s8 + $0x20] sm:$0xff]
    %v9049 = vld [vmem:[%s8 + $0x28] sm:$0xff]
    %v9050 = vld [vmem:[%s8 + $0x30] sm:$0xff]
    %v9051 = vld [vmem:[%s8 + $0x38] sm:$0xff]
    %v9052 = vld [vmem:[%s8 + $0x40] sm:$0xff]
    %v9053 = vld [vmem:[%s8 + $0x48] sm:$0xff]
    %v9054 = vld [vmem:[%s8 + $0x50] sm:$0xf]
    %9056 = vset.pattern.permute.xlu0 0
    %9057 = vperm.xlu0 %9056, %v9044
    %v9058 = vpop.permute.xlu0 %9057
    %9061 = vset.pattern.permute.xlu0 0
    %9062 = vperm.xlu0 %9061, %v9045
    %v9063 = vpop.permute.xlu0 %9062
    %9066 = vset.pattern.permute.xlu0 0
    %9067 = vperm.xlu0 %9066, %v9046
    %v9068 = vpop.permute.xlu0 %9067
    %9071 = vset.pattern.permute.xlu0 0
    %9072 = vperm.xlu0 %9071, %v9047
    %v9073 = vpop.permute.xlu0 %9072
    %9076 = vset.pattern.permute.xlu0 0
    %9077 = vperm.xlu0 %9076, %v9048
    %v9078 = vpop.permute.xlu0 %9077
    %9081 = vset.pattern.permute.xlu0 0
    %9082 = vperm.xlu0 %9081, %v9049
    %v9083 = vpop.permute.xlu0 %9082
    %9086 = vset.pattern.permute.xlu0 0
    %9087 = vperm.xlu0 %9086, %v9050
    %v9088 = vpop.permute.xlu0 %9087
    %9091 = vset.pattern.permute.xlu0 0
    %9092 = vperm.xlu0 %9091, %v9051
    %v9093 = vpop.permute.xlu0 %9092
    %9096 = vset.pattern.permute.xlu0 0
    %9097 = vperm.xlu0 %9096, %v9052
    %v9098 = vpop.permute.xlu0 %9097
    %9101 = vset.pattern.permute.xlu0 0
    %9102 = vperm.xlu0 %9101, %v9053
    %v9103 = vpop.permute.xlu0 %9102
    %9106 = vset.pattern.permute.xlu0 0
    %9107 = vperm.xlu0 %9106, %v9054
    %v9108 = vpop.permute.xlu0 %9107
    %vm9110 = vcmask 982016
    %v9112 = vsel %vm9110, %v9033, 0
    %v9115 = vsel %vm9110, %v9034, 0
    %v9118 = vsel %vm9110, %v9035, 0
    %v9121 = vsel %vm9110, %v9036, 0
    %v9124 = vsel %vm9110, %v9037, 0
    %v9127 = vsel %vm9110, %v9038, 0
    %v9130 = vsel %vm9110, %v9039, 0
    %v9133 = vsel %vm9110, %v9040, 0
    %v9136 = vsel %vm9110, %v9041, 0
    %v9139 = vsel %vm9110, %v9042, 0
    %v9142 = vsel %vm9110, %v9043, 0
    %9144 = vmatprep.subr.mxu0 0.0
    %9145 = vmatpush1.msra.mxu0 %v9018
    %9146 = vmatprep.subr.mxu0 0.0
    %9147 = vmatpush1.msra.mxu0 %v9019
    %9148 = vmatprep.subr.mxu0 0.0
    %9149 = vmatpush1.msra.mxu0 %v9020
    %9150 = vmatprep.subr.mxu0 0.0
    %9151 = vmatpush1.msra.mxu0 %v9021
    %9152 = vmatprep.subr.mxu0 0.0
    %9153 = vmatpush1.msra.mxu0 %v9022
    %9154 = vmatprep.subr.mxu0 0.0
    %9155 = vmatpush1.msra.mxu0 %v9023
    %9156 = vmatprep.subr.mxu0 0.0
    %9157 = vmatpush1.msra.mxu0 %v9024
    %9158 = vmatprep.subr.mxu0 0.0
    %9159 = vmatpush1.msra.mxu0 %v9025
    %9160 = vmatprep.subr.mxu0 0.0
    %9161 = vmatpush1.msra.mxu0 %v9026
    %9162 = vmatprep.subr.mxu0 0.0
    %9163 = vmatpush1.msra.mxu0 %v9027
    %9164 = vmatprep.subr.mxu0 0.0
    %9165 = vmatpush1.msra.mxu0 %v9028
    %9166 = vmatprep.subr.mxu0 0.0
    %9167 = vmatpush1.msra.mxu0 %v9029
    %9168 = vmatprep.subr.mxu0 0.0
    %9169 = vmatpush1.msra.mxu0 %v9030
    %9170 = vmatprep.subr.mxu0 0.0
    %9171 = vmatpush1.msra.mxu0 %v9031
    %9172 = vmatprep.subr.mxu0 0.0
    %9173 = vmatpush1.msra.mxu0 %v9032
    %9174 = vmatprep.subr.mxu0 0.0
    %9175 = vmatpush1.msra.mxu0 0.0
    %9176 = vmatprep.subr.mxu0 0.0
    %9177 = vmatpush1.msra.mxu0 0.0
    %9178 = vmatprep.subr.mxu0 0.0
    %9179 = vmatpush1.msra.mxu0 0.0
    %9180 = vmatprep.subr.mxu0 0.0
    %9181 = vmatpush1.msra.mxu0 0.0
    %9182 = vmatprep.subr.mxu0 0.0
    %9183 = vmatpush1.msra.mxu0 0.0
    %9184 = vmatprep.subr.mxu0 0.0
    %9185 = vmatpush1.msra.mxu0 0.0
    %9186 = vmatprep.subr.mxu0 0.0
    %9187 = vmatpush1.msra.mxu0 0.0
    %9188 = vmatprep.subr.mxu0 0.0
    %9189 = vmatpush1.msra.mxu0 0.0
    %9190 = vmatprep.subr.mxu0 0.0
    %9191 = vmatpush1.msra.mxu0 0.0
    %9192 = vmatprep.subr.mxu0 0.0
    %9193 = vmatpush1.msra.mxu0 0.0
    %9194 = vmatprep.subr.mxu0 0.0
    %9195 = vmatpush1.msra.mxu0 0.0
    %9196 = vmatprep.subr.mxu0 0.0
    %9197 = vmatpush1.msra.mxu0 0.0
    %9198 = vmatprep.subr.mxu0 0.0
    %9199 = vmatpush1.msra.mxu0 0.0
    %9200 = vmatprep.subr.mxu0 0.0
    %9201 = vmatpush1.msra.mxu0 0.0
    %9202 = vmatprep.subr.mxu0 0.0
    %9203 = vmatpush1.msra.mxu0 0.0
    %9204 = vmatprep.subr.mxu0 0.0
    %9205 = vmatpush1.msra.mxu0 0.0
    %9206 = vmatprep.subr.mxu0 0.0
    %9207 = vmatpush1.msra.mxu0 0.0
    %9208 = vmatprep.mubr.f32.mxu0 0.0
    %9209 = vmatmul.mubr.f32.gmra.mrb[0].mxu0 %v9112
    %v9210 = vpop.f32.mrb[0].mxu0
    %v9211 = vadd.f32 %v9058, %v9210
    %v9212 = vpop.f32.mrb[0].mxu0
    %9213 = vmatprep.mubr.f32.mxu0 0.0
    %9214 = vmatmul.mubr.f32.gmra.mrb[0].mxu0 %v9115
    %v9215 = vpop.f32.mrb[0].mxu0
    %v9216 = vadd.f32 %v9063, %v9215
    %v9217 = vpop.f32.mrb[0].mxu0
    %9218 = vmatprep.mubr.f32.mxu0 0.0
    %9219 = vmatmul.mubr.f32.gmra.mrb[0].mxu0 %v9118
    %v9220 = vpop.f32.mrb[0].mxu0
    %v9221 = vadd.f32 %v9068, %v9220
    %v9222 = vpop.f32.mrb[0].mxu0
    %9223 = vmatprep.mubr.f32.mxu0 0.0
    %9224 = vmatmul.mubr.f32.gmra.mrb[0].mxu0 %v9121
    %v9225 = vpop.f32.mrb[0].mxu0
    %v9226 = vadd.f32 %v9073, %v9225
    %v9227 = vpop.f32.mrb[0].mxu0
    %9228 = vmatprep.mubr.f32.mxu0 0.0
    %9229 = vmatmul.mubr.f32.gmra.mrb[0].mxu0 %v9124
    %v9230 = vpop.f32.mrb[0].mxu0
    %v9231 = vadd.f32 %v9078, %v9230
    %v9232 = vpop.f32.mrb[0].mxu0
    %9233 = vmatprep.mubr.f32.mxu0 0.0
    %9234 = vmatmul.mubr.f32.gmra.mrb[0].mxu0 %v9127
    %v9235 = vpop.f32.mrb[0].mxu0
    %v9236 = vadd.f32 %v9083, %v9235
    %v9237 = vpop.f32.mrb[0].mxu0
    %9238 = vmatprep.mubr.f32.mxu0 0.0
    %9239 = vmatmul.mubr.f32.gmra.mrb[0].mxu0 %v9130
    %v9240 = vpop.f32.mrb[0].mxu0
    %v9241 = vadd.f32 %v9088, %v9240
    %v9242 = vpop.f32.mrb[0].mxu0
    %9243 = vmatprep.mubr.f32.mxu0 0.0
    %9244 = vmatmul.mubr.f32.gmra.mrb[0].mxu0 %v9133
    %v9245 = vpop.f32.mrb[0].mxu0
    %v9246 = vadd.f32 %v9093, %v9245
    %v9247 = vpop.f32.mrb[0].mxu0
    %9248 = vmatprep.mubr.f32.mxu0 0.0
    %9249 = vmatmul.mubr.f32.gmra.mrb[0].mxu0 %v9136
    %v9250 = vpop.f32.mrb[0].mxu0
    %v9251 = vadd.f32 %v9098, %v9250
    %v9252 = vpop.f32.mrb[0].mxu0
    %9253 = vmatprep.mubr.f32.mxu0 0.0
    %9254 = vmatmul.mubr.f32.gmra.mrb[0].mxu0 %v9139
    %v9255 = vpop.f32.mrb[0].mxu0
    %v9256 = vadd.f32 %v9103, %v9255
    %v9257 = vpop.f32.mrb[0].mxu0
    %9258 = vmatprep.mubr.f32.mxu0 0.0
    %9259 = vmatmul.mubr.f32.gmra.mrb[0].mxu0 %v9142
    %v9260 = vpop.f32.mrb[0].mxu0
    %v9261 = vadd.f32 %v9108, %v9260
    %v9262 = vpop.f32.mrb[0].mxu0
    %9263 = vdwg.mxu0
    %v9264 = vmax.f32 %v9211, 0.0
    %v9265 = vmax.f32 %v9216, 0.0
    %v9266 = vmax.f32 %v9221, 0.0
    %v9267 = vmax.f32 %v9226, 0.0
    %v9268 = vmax.f32 %v9231, 0.0
    %v9269 = vmax.f32 %v9236, 0.0
    %v9270 = vmax.f32 %v9241, 0.0
    %v9271 = vmax.f32 %v9246, 0.0
    %v9272 = vmax.f32 %v9251, 0.0
    %v9273 = vmax.f32 %v9256, 0.0
    %v9274 = vmax.f32 %v9261, 0.0
    %v9275 = vld [vmem:[%s9] sm:$0xff]
    %v9276 = vld [vmem:[%s9 + $0x8] sm:$0x3]
    %v9277 = vld [vmem:[%s10] sm:$0xff]
    %v9278 = vld [vmem:[%s10 + $0x8] sm:$0x3]
    %9280 = vset.pattern.permute.xlu0 0
    %9281 = vperm.xlu0 %9280, %v9277
    %v9282 = vpop.permute.xlu0 %9281
    %9285 = vset.pattern.permute.xlu0 0
    %9286 = vperm.xlu0 %9285, %v9278
    %v9287 = vpop.permute.xlu0 %9286
    %vm9289 = vcmask 687104
    %v9291 = vsel %vm9289, %v9275, 0
    %v9294 = vsel %vm9289, %v9276, 0
    %vm9296 = vcmask 1043456
    %v9298 = vsel %vm9296, %v9274, 0
    %9300 = vmatprep.subr.mxu0 0.0
    %9301 = vmatpush1.msra.mxu0 %v9264
    %9302 = vmatprep.subr.mxu0 0.0
    %9303 = vmatpush1.msra.mxu0 %v9265
    %9304 = vmatprep.subr.mxu0 0.0
    %9305 = vmatpush1.msra.mxu0 %v9266
    %9306 = vmatprep.subr.mxu0 0.0
    %9307 = vmatpush1.msra.mxu0 %v9267
    %9308 = vmatprep.subr.mxu0 0.0
    %9309 = vmatpush1.msra.mxu0 %v9268
    %9310 = vmatprep.subr.mxu0 0.0
    %9311 = vmatpush1.msra.mxu0 %v9269
    %9312 = vmatprep.subr.mxu0 0.0
    %9313 = vmatpush1.msra.mxu0 %v9270
    %9314 = vmatprep.subr.mxu0 0.0
    %9315 = vmatpush1.msra.mxu0 %v9271
    %9316 = vmatprep.subr.mxu0 0.0
    %9317 = vmatpush1.msra.mxu0 %v9272
    %9318 = vmatprep.subr.mxu0 0.0
    %9319 = vmatpush1.msra.mxu0 %v9273
    %9320 = vmatprep.subr.mxu0 0.0
    %9321 = vmatpush1.msra.mxu0 %v9298
    %9322 = vmatprep.subr.mxu0 0.0
    %9323 = vmatpush1.msra.mxu0 0.0
    %9324 = vmatprep.subr.mxu0 0.0
    %9325 = vmatpush1.msra.mxu0 0.0
    %9326 = vmatprep.subr.mxu0 0.0
    %9327 = vmatpush1.msra.mxu0 0.0
    %9328 = vmatprep.subr.mxu0 0.0
    %9329 = vmatpush1.msra.mxu0 0.0
    %9330 = vmatprep.subr.mxu0 0.0
    %9331 = vmatpush1.msra.mxu0 0.0
    %9332 = vmatprep.subr.mxu0 0.0
    %9333 = vmatpush1.msra.mxu0 0.0
    %9334 = vmatprep.subr.mxu0 0.0
    %9335 = vmatpush1.msra.mxu0 0.0
    %9336 = vmatprep.subr.mxu0 0.0
    %9337 = vmatpush1.msra.mxu0 0.0
    %9338 = vmatprep.subr.mxu0 0.0
    %9339 = vmatpush1.msra.mxu0 0.0
    %9340 = vmatprep.subr.mxu0 0.0
    %9341 = vmatpush1.msra.mxu0 0.0
    %9342 = vmatprep.subr.mxu0 0.0
    %9343 = vmatpush1.msra.mxu0 0.0
    %9344 = vmatprep.subr.mxu0 0.0
    %9345 = vmatpush1.msra.mxu0 0.0
    %9346 = vmatprep.subr.mxu0 0.0
    %9347 = vmatpush1.msra.mxu0 0.0
    %9348 = vmatprep.subr.mxu0 0.0
    %9349 = vmatpush1.msra.mxu0 0.0
    %9350 = vmatprep.subr.mxu0 0.0
    %9351 = vmatpush1.msra.mxu0 0.0
    %9352 = vmatprep.subr.mxu0 0.0
    %9353 = vmatpush1.msra.mxu0 0.0
    %9354 = vmatprep.subr.mxu0 0.0
    %9355 = vmatpush1.msra.mxu0 0.0
    %9356 = vmatprep.subr.mxu0 0.0
    %9357 = vmatpush1.msra.mxu0 0.0
    %9358 = vmatprep.subr.mxu0 0.0
    %9359 = vmatpush1.msra.mxu0 0.0
    %9360 = vmatprep.subr.mxu0 0.0
    %9361 = vmatpush1.msra.mxu0 0.0
    %9362 = vmatprep.subr.mxu0 0.0
    %9363 = vmatpush1.msra.mxu0 0.0
    %9364 = vmatprep.mubr.f32.mxu0 0.0
    %9365 = vmatmul.mubr.f32.gmra.mrb[0].mxu0 %v9291
    %v9366 = vpop.f32.mrb[0].mxu0
    %v9367 = vadd.f32 %v9282, %v9366
    %v9368 = vpop.f32.mrb[0].mxu0
    %9369 = vmatprep.mubr.f32.mxu0 0.0
    %9370 = vmatmul.mubr.f32.gmra.mrb[0].mxu0 %v9294
    %v9371 = vpop.f32.mrb[0].mxu0
    %v9372 = vadd.f32 %v9287, %v9371
    %v9373 = vpop.f32.mrb[0].mxu0
    %9374 = vdwg.mxu0
    %9375 = vst [vmem:[%s11] sm:$0xff] %v9367
    %9376 = vst [vmem:[%s11 + $0x8] sm:$0x3] %v9372
    // Predicated region
    $region97: #{net_forward.1} parent=1 // pred_check
      _
    $region98: #{net_forward.1} parent=1 // pred_check_branch
      %9378 = sbr.rel (0) target = $region100
    $region99: #{net_forward.1} parent=1 // pred_region
      _
    $region100: #{net_forward.1} parent=1 // pred_fallthru
      _
    // Predicated region
    $region101: #{net_forward.1} parent=1 // pred_check
      _
    $region102: #{net_forward.1} parent=1 // pred_check_branch
      %9380 = sbr.rel (0) target = $region104
    $region103: #{net_forward.1} parent=1 // pred_region
      _
    $region104: #{net_forward.1} parent=1 // pred_fallthru
      _
    %9381 = vsyncpa [#allocation7], 1
    %9382 = vsyncpa [#allocation9], 1
    %9383 = vsyncpa [#allocation12], 1

</llo_original>
